<compile_context>
chip_gen: v7x
topology: tpu7x:2x2x1
jax: 0.10.0
libtpu: 0.0.40
codegen_flags: <defaults>
</compile_context>

<pallas_src>
import functools

import jax
import jax.numpy as jnp
from jax.experimental import pallas as pl
from jax.experimental.pallas import tpu as pltpu


# ----------------------------------------------------------------------------
# Pallas kernel: one grid point per (batch b, prediction-row tile t).
# All cases and all refinement iterations are fused.
#   base[i, c*S+j] = h[i] @ W[c] @ h[j]                (iteration invariant)
#   s_it           = base + pre_w[c] * pre_it + (~mask) * -1024
#   pre_{t+1}      = s_t
#   num           += sum(-log_softmax(s) * target * (1 - softmax(s)))
# ----------------------------------------------------------------------------
def _refine_kernel(prew_ref, h_ref, ht_ref, wstack_ref, mask_ref, tgt_ref,
                   out_ref, num_ref, x_scratch,
                   *, num_cases, hidden, seq, num_iter):
    C, H, S = num_cases, hidden, seq

    h = h_ref[0]                                    # (TS, H)    bf16
    ht = ht_ref[0]                                  # (H, S)     bf16
    wstack = wstack_ref[...]                        # (C*H, H)   bf16
    m = mask_ref[0].astype(jnp.float32)             # (TS, C*S)  {0,1}
    tgt = tgt_ref[0].astype(jnp.float32)            # (TS, C*S)

    # ---- bilinear term: two large MXU matmuls --------------------------------
    # Stage 1 (all cases at once): (C*H, H) @ (H, S) -> (C*H, S).
    g = jnp.dot(wstack, ht, preferred_element_type=jnp.float32)
    g = g.astype(jnp.bfloat16)
    # Repack (C*H, S) -> lane-packed (H, C*S) in VMEM scratch (static slices).
    for c in range(C):
        x_scratch[:, c * S:(c + 1) * S] = g[c * H:(c + 1) * H, :]
    # Stage 2: (TS, H) @ (H, C*S) -> (TS, C*S); lands directly lane-packed.
    base = jnp.dot(h, x_scratch[...], preferred_element_type=jnp.float32)

    # Per-case pre_output weight (SMEM scalars) broadcast to the packed lanes.
    prew_row = jnp.concatenate(
        [jnp.full((1, S), prew_ref[c], jnp.float32) for c in range(C)],
        axis=-1)                                    # (1, C*S)

    neg_pen = (1.0 - m) * (-1024.0)                 # NG / padding-token penalty
    num_acc = jnp.zeros((1, S), jnp.float32)

    pre = None
    for it in range(num_iter):                      # num_iter is small & static
        if it == 0:
            # pre_output of iteration 0 is exactly neg_pen -> fold.
            s = base + (1.0 + prew_row) * neg_pen
        else:
            s = base + prew_row * pre + neg_pen     # (TS, C*S)
        out_ref[it, 0] = s

        # softmax / log-softmax over the candidate axis, one case slice at a
        # time (bounds live temps to (TS, S) instead of (C, TS, S)).
        for c in range(C):
            sc = s[:, c * S:(c + 1) * S]
            tc = tgt[:, c * S:(c + 1) * S]
            smax = jnp.max(sc, axis=-1, keepdims=True)
            z = sc - smax
            ez = jnp.exp(z)
            denom = jnp.sum(ez, axis=-1, keepdims=True)
            p = ez * pl.reciprocal(denom, approx=True)
            logp = z - jnp.log(denom)
            val = -logp * tc * (1.0 - p)            # confidence-weighted CE
            num_acc = num_acc + jnp.sum(val, axis=0, keepdims=True)   # (1, S)

        pre = s                                     # detached previous output

    num_ref[0, 0] = num_acc


def _run_all_iterations(pre_w, h, W, mask_b, tgt_b, num_iter):
    B, S, H = h.shape
    C = W.shape[0]
    TS = min(S, 128)
    assert S % TS == 0, "S must be a multiple of the prediction tile"
    n_t = S // TS

    # bf16 matmul operands, f32 accumulation (precision absorbed by tolerance).
    h_b = h.astype(jnp.bfloat16)                               # (B, S, H)
    ht_b = jnp.transpose(h, (0, 2, 1)).astype(jnp.bfloat16)    # (B, H, S) small
    w_stack = W.reshape(C * H, H).astype(jnp.bfloat16)         # free reshape
    prew = pre_w.astype(jnp.float32)                           # (C,) -> SMEM

    kernel = functools.partial(_refine_kernel, num_cases=C, hidden=H,
                               seq=S, num_iter=num_iter)

    grid_spec = pltpu.PrefetchScalarGridSpec(
        num_scalar_prefetch=0,
        grid=(B, n_t),
        in_specs=[
            pl.BlockSpec(memory_space=pltpu.MemorySpace.SMEM),       # pre_w
            pl.BlockSpec((1, TS, H), lambda b, t: (b, t, 0)),        # h    bf16
            pl.BlockSpec((1, H, S), lambda b, t: (b, 0, 0)),         # h^T  bf16
            pl.BlockSpec((C * H, H), lambda b, t: (0, 0)),           # W stack
            pl.BlockSpec((1, TS, C * S), lambda b, t: (b, t, 0)),    # mask bf16
            pl.BlockSpec((1, TS, C * S), lambda b, t: (b, t, 0)),    # tgt  bf16
        ],
        out_specs=[
            pl.BlockSpec((num_iter, 1, TS, C * S),
                         lambda b, t: (0, b, t, 0)),                 # scores
            pl.BlockSpec((1, 1, 1, S), lambda b, t: (b, t, 0, 0)),   # loss num
        ],
        scratch_shapes=[pltpu.VMEM((H, C * S), jnp.bfloat16)],
    )

    out, num = pl.pallas_call(
        kernel,
        out_shape=(
            jax.ShapeDtypeStruct((num_iter, B, S, C * S), jnp.float32),
            jax.ShapeDtypeStruct((B, n_t, 1, S), jnp.float32),
        ),
        grid_spec=grid_spec,
        compiler_params=pltpu.CompilerParams(
            dimension_semantics=("parallel", "parallel")),
    )(prew, h_b, ht_b, w_stack, mask_b, tgt_b)
    return out, num


# ----------------------------------------------------------------------------
# Full forward (matches WeightedIterativeRefinementModel.forward semantics)
# ----------------------------------------------------------------------------
def weighted_iterative_refinement_forward(params, input_ids, attention_mask,
                                          segment_ids, ng_token_mask, target,
                                          num_iter):
    emb, seg_emb, W, pre_w = (params["emb"], params["seg"],
                              params["W"], params["pre_w"])

    # Glue: token + segment embedding (stand-in for the encoder).
    h = emb[input_ids] + seg_emb[segment_ids]                  # (B, S, H)
    B, S, _ = h.shape
    C = W.shape[0]

    # get_mask(attention_mask, ng_token_mask): broadcast over candidate axis.
    # Keep bf16 and lane-pack (B, S, C*S) -- a FREE reshape of the PT layout.
    mask_b = (attention_mask[:, None, None, :] & ng_token_mask).astype(
        jnp.bfloat16).reshape(B, S, C * S)
    tgt_b = target.astype(jnp.bfloat16).reshape(B, S, C * S)

    out, num = _run_all_iterations(pre_w, h, W, mask_b, tgt_b, num_iter)

    # den = sum(target) is iteration invariant -> computed once outside.
    den = jnp.sum(target.astype(jnp.float32))
    loss = (jnp.sum(num) / num_iter) / (den + 1e-6)

    out = out.reshape(num_iter, B, S, C, S)                    # free reshape
    return (loss, *[out[i] for i in range(num_iter)])


# ----------------------------------------------------------------------------
# Pure-JAX reference (for correctness check only)
# ----------------------------------------------------------------------------
def reference_forward(params, input_ids, attention_mask, segment_ids,
                      ng_token_mask, target, num_iter):
    emb, seg_emb, W, pre_w = (params["emb"], params["seg"],
                              params["W"], params["pre_w"])
    h = emb[input_ids] + seg_emb[segment_ids]
    mask_f = (attention_mask[:, None, None, :] & ng_token_mask).astype(jnp.float32)
    tgt = target.astype(jnp.float32)
    pre = (1.0 - mask_f) * (-1024.0)
    outputs, losses = [], []
    for _ in range(num_iter):
        s = jnp.einsum("bih,chk,bjk->bicj", h, W, h)
        s = s + pre_w[None, None, :, None] * pre
        s = s + (1.0 - mask_f) * (-1024.0)
        logp = jax.nn.log_softmax(s, axis=3)
        p = jax.nn.softmax(s, axis=3)
        num = jnp.sum(-logp * tgt * (1.0 - p))
        den = jnp.sum(tgt)
        losses.append(num / (den + 1e-6))
        outputs.append(s)
        pre = s
    return (jnp.mean(jnp.stack(losses)), *outputs)


if __name__ == "__main__":
    B, S, C, H, V = 2, 128, 4, 128, 100
    NUM_ITER = 2

    key = jax.random.PRNGKey(0)
    k1, k2, k3, k4, k5, k6, k7 = jax.random.split(key, 7)

    # Deterministic synthetic parameters.
    params = {
        "emb": 0.05 * jax.random.normal(k1, (V, H), jnp.float32),
        "seg": 0.05 * jax.random.normal(k2, (2, H), jnp.float32),
        "W": 0.05 * jax.random.normal(k3, (C, H, H), jnp.float32),
        "pre_w": jnp.full((C,), 0.1, jnp.float32),
    }

    # Deterministic synthetic inputs (PyTorch layout: (B, S, C, S) for 4-D).
    input_ids = jax.random.randint(k4, (B, S), 0, V, dtype=jnp.int32)
    segment_ids = jax.random.randint(k5, (B, S), 0, 2, dtype=jnp.int32)
    lengths = jnp.array([S, S - 32], dtype=jnp.int32)
    attention_mask = jnp.arange(S)[None, :] < lengths[:, None]        # (B, S) bool
    ng_token_mask = jax.random.bernoulli(k6, 0.85, (B, S, C, S))      # bool
    tgt_idx = jax.random.randint(k7, (B, S, C), 0, S)
    target = (jax.nn.one_hot(tgt_idx, S, dtype=jnp.float32)
              * (attention_mask[:, None, None, :] & ng_token_mask).astype(jnp.float32))

    fwd = jax.jit(functools.partial(weighted_iterative_refinement_forward,
                                    num_iter=NUM_ITER))
    result = fwd(params, input_ids, attention_mask, segment_ids,
                 ng_token_mask, target)
    result = jax.block_until_ready(result)
    loss, *outs = result

    # Correctness check against the pure-JAX (f32) reference.
    ref_loss, *ref_outs = reference_forward(params, input_ids, attention_mask,
                                            segment_ids, ng_token_mask, target,
                                            NUM_ITER)
    assert jnp.allclose(loss, ref_loss, rtol=5e-2, atol=5e-2), (loss, ref_loss)
    for o, ro in zip(outs, ref_outs):
        assert o.shape == (B, S, C, S)
        assert jnp.allclose(o, ro, rtol=5e-2, atol=5e-2)

    print("KERNEL_OK")
</pallas_src>

<mosaic_0001>
module attributes {stable_mosaic.version = 11 : i64} {
  func.func @_refine_kernel(%arg0: i32, %arg1: i32, %arg2: memref<4xf32, #tpu.memory_space<smem>>, %arg3: memref<1x128x128xbf16, #tpu.memory_space<vmem>>, %arg4: memref<1x128x128xbf16, #tpu.memory_space<vmem>>, %arg5: memref<512x128xbf16, #tpu.memory_space<vmem>>, %arg6: memref<1x128x512xbf16, #tpu.memory_space<vmem>>, %arg7: memref<1x128x512xbf16, #tpu.memory_space<vmem>>, %arg8: memref<2x1x128x512xf32, #tpu.memory_space<vmem>>, %arg9: memref<1x1x1x128xf32, #tpu.memory_space<vmem>>, %arg10: memref<128x512xbf16, #tpu.memory_space<vmem>>) attributes {dimension_semantics = [#tpu.dimension_semantics<parallel>, #tpu.dimension_semantics<parallel>], iteration_bounds = array<i64: 2, 1>, scalar_prefetch = 0 : i64, scratch_operands = 1 : i64, tpu.core_type = #tpu.core_type<tc>, window_params = [{transform_indices = @transform_0, window_bounds = array<i64: 4>}, {transform_indices = @transform_1, window_bounds = array<i64: 1, 128, 128>}, {transform_indices = @transform_2, window_bounds = array<i64: 1, 128, 128>}, {pipeline_mode = #tpu.pipeline_mode<synchronous>, transform_indices = @transform_3, window_bounds = array<i64: 512, 128>}, {transform_indices = @transform_4, window_bounds = array<i64: 1, 128, 512>}, {transform_indices = @transform_5, window_bounds = array<i64: 1, 128, 512>}, {transform_indices = @transform_6, window_bounds = array<i64: 2, 1, 128, 512>}, {transform_indices = @transform_7, window_bounds = array<i64: 1, 1, 1, 128>}]} {
    %c0 = arith.constant 0 : index
    %c0_0 = arith.constant 0 : index
    %c0_1 = arith.constant 0 : index
    %0 = vector.load %arg3[%c0, %c0_0, %c0_1] : memref<1x128x128xbf16, #tpu.memory_space<vmem>>, vector<1x128x128xbf16>
    %1 = vector.shape_cast %0 : vector<1x128x128xbf16> to vector<128x128xbf16>
    %c0_2 = arith.constant 0 : index
    %c0_3 = arith.constant 0 : index
    %c0_4 = arith.constant 0 : index
    %2 = vector.load %arg4[%c0_2, %c0_3, %c0_4] : memref<1x128x128xbf16, #tpu.memory_space<vmem>>, vector<1x128x128xbf16>
    %3 = vector.shape_cast %2 : vector<1x128x128xbf16> to vector<128x128xbf16>
    %c0_5 = arith.constant 0 : index
    %c0_6 = arith.constant 0 : index
    %4 = vector.load %arg5[%c0_5, %c0_6] : memref<512x128xbf16, #tpu.memory_space<vmem>>, vector<512x128xbf16>
    %c0_7 = arith.constant 0 : index
    %c0_8 = arith.constant 0 : index
    %c0_9 = arith.constant 0 : index
    %5 = vector.load %arg6[%c0_7, %c0_8, %c0_9] : memref<1x128x512xbf16, #tpu.memory_space<vmem>>, vector<1x128x512xbf16>
    %6 = vector.shape_cast %5 : vector<1x128x512xbf16> to vector<128x512xbf16>
    %7 = arith.extf %6 : vector<128x512xbf16> to vector<128x512xf32>
    %c0_10 = arith.constant 0 : index
    %c0_11 = arith.constant 0 : index
    %c0_12 = arith.constant 0 : index
    %8 = vector.load %arg7[%c0_10, %c0_11, %c0_12] : memref<1x128x512xbf16, #tpu.memory_space<vmem>>, vector<1x128x512xbf16>
    %9 = vector.shape_cast %8 : vector<1x128x512xbf16> to vector<128x512xbf16>
    %10 = arith.extf %9 : vector<128x512xbf16> to vector<128x512xf32>
    %cst = arith.constant dense<0.000000e+00> : vector<512x128xf32>
    %11 = tpu.matmul %4, %3, %cst {dimension_numbers = #tpu.dot_dimension_numbers<[1], [0], [0], [1], [0, 0, 1, 1], [], []>} : vector<512x128xbf16>, vector<128x128xbf16>, vector<512x128xf32> -> vector<512x128xf32>
    %12 = arith.truncf %11 : vector<512x128xf32> to vector<512x128xbf16>
    %13 = vector.extract_strided_slice %12 {offsets = [0, 0], sizes = [128, 128], strides = [1, 1]} : vector<512x128xbf16> to vector<128x128xbf16>
    %c0_13 = arith.constant 0 : index
    %c0_14 = arith.constant 0 : index
    %14 = vector.load %arg10[%c0_13, %c0_14] : memref<128x512xbf16, #tpu.memory_space<vmem>>, vector<128x128xbf16>
    tpu.vector_store %arg10[%c0_13, %c0_14], %13 {strides = array<i32>} : memref<128x512xbf16, #tpu.memory_space<vmem>>, vector<128x128xbf16>,
    %15 = vector.extract_strided_slice %12 {offsets = [128, 0], sizes = [128, 128], strides = [1, 1]} : vector<512x128xbf16> to vector<128x128xbf16>
    %c0_15 = arith.constant 0 : index
    %c128 = arith.constant 128 : index
    %16 = vector.load %arg10[%c0_15, %c128] : memref<128x512xbf16, #tpu.memory_space<vmem>>, vector<128x128xbf16>
    tpu.vector_store %arg10[%c0_15, %c128], %15 {strides = array<i32>} : memref<128x512xbf16, #tpu.memory_space<vmem>>, vector<128x128xbf16>,
    %17 = vector.extract_strided_slice %12 {offsets = [256, 0], sizes = [128, 128], strides = [1, 1]} : vector<512x128xbf16> to vector<128x128xbf16>
    %c0_16 = arith.constant 0 : index
    %c256 = arith.constant 256 : index
    %18 = vector.load %arg10[%c0_16, %c256] : memref<128x512xbf16, #tpu.memory_space<vmem>>, vector<128x128xbf16>
    tpu.vector_store %arg10[%c0_16, %c256], %17 {strides = array<i32>} : memref<128x512xbf16, #tpu.memory_space<vmem>>, vector<128x128xbf16>,
    %19 = vector.extract_strided_slice %12 {offsets = [384, 0], sizes = [128, 128], strides = [1, 1]} : vector<512x128xbf16> to vector<128x128xbf16>
    %c0_17 = arith.constant 0 : index
    %c384 = arith.constant 384 : index
    %20 = vector.load %arg10[%c0_17, %c384] : memref<128x512xbf16, #tpu.memory_space<vmem>>, vector<128x128xbf16>
    tpu.vector_store %arg10[%c0_17, %c384], %19 {strides = array<i32>} : memref<128x512xbf16, #tpu.memory_space<vmem>>, vector<128x128xbf16>,
    %c0_18 = arith.constant 0 : index
    %c0_19 = arith.constant 0 : index
    %21 = vector.load %arg10[%c0_18, %c0_19] : memref<128x512xbf16, #tpu.memory_space<vmem>>, vector<128x512xbf16>
    %cst_20 = arith.constant dense<0.000000e+00> : vector<128x512xf32>
    %22 = tpu.matmul %1, %21, %cst_20 {dimension_numbers = #tpu.dot_dimension_numbers<[1], [0], [0], [1], [0, 0, 1, 1], [], []>} : vector<128x128xbf16>, vector<128x512xbf16>, vector<128x512xf32> -> vector<128x512xf32>
    %c0_21 = arith.constant 0 : index
    %23 = memref.load %arg2[%c0_21] : memref<4xf32, #tpu.memory_space<smem>>
    %24 = vector.broadcast %23 : f32 to vector<1x128xf32>
    %c1 = arith.constant 1 : index
    %25 = memref.load %arg2[%c1] : memref<4xf32, #tpu.memory_space<smem>>
    %26 = vector.broadcast %25 : f32 to vector<1x128xf32>
    %c2 = arith.constant 2 : index
    %27 = memref.load %arg2[%c2] : memref<4xf32, #tpu.memory_space<smem>>
    %28 = vector.broadcast %27 : f32 to vector<1x128xf32>
    %c3 = arith.constant 3 : index
    %29 = memref.load %arg2[%c3] : memref<4xf32, #tpu.memory_space<smem>>
    %30 = vector.broadcast %29 : f32 to vector<1x128xf32>
    %31 = tpu.concatenate %24, %26, %28, %30 in 1 : vector<1x128xf32>, vector<1x128xf32>, vector<1x128xf32>, vector<1x128xf32> -> vector<1x512xf32>
    %cst_22 = arith.constant 1.000000e+00 : f32
    %32 = vector.broadcast %cst_22 : f32 to vector<128x512xf32>
    %33 = arith.subf %32, %7 : vector<128x512xf32>
    %cst_23 = arith.constant -1.024000e+03 : f32
    %34 = vector.broadcast %cst_23 : f32 to vector<128x512xf32>
    %35 = arith.mulf %33, %34 : vector<128x512xf32>
    %cst_24 = arith.constant 0.000000e+00 : f32
    %36 = vector.broadcast %cst_24 : f32 to vector<1x128xf32>
    %cst_25 = arith.constant 1.000000e+00 : f32
    %37 = vector.broadcast %cst_25 : f32 to vector<1x512xf32>
    %38 = arith.addf %37, %31 : vector<1x512xf32>
    %39 = vector.broadcast %38 : vector<1x512xf32> to vector<128x512xf32>
    %40 = arith.mulf %39, %35 : vector<128x512xf32>
    %41 = arith.addf %22, %40 : vector<128x512xf32>
    %c0_26 = arith.constant 0 : index
    %c0_27 = arith.constant 0 : index
    %c0_28 = arith.constant 0 : index
    %c0_29 = arith.constant 0 : index
    %42 = vector.load %arg8[%c0_26, %c0_27, %c0_28, %c0_29] : memref<2x1x128x512xf32, #tpu.memory_space<vmem>>, vector<1x1x128x512xf32>
    %43 = vector.shape_cast %42 : vector<1x1x128x512xf32> to vector<128x512xf32>
    %44 = vector.shape_cast %41 : vector<128x512xf32> to vector<1x1x128x512xf32>
    tpu.vector_store %arg8[%c0_26, %c0_27, %c0_28, %c0_29], %44 {strides = array<i32>} : memref<2x1x128x512xf32, #tpu.memory_space<vmem>>, vector<1x1x128x512xf32>,
    %45 = vector.extract_strided_slice %41 {offsets = [0, 0], sizes = [128, 128], strides = [1, 1]} : vector<128x512xf32> to vector<128x128xf32>
    %46 = vector.extract_strided_slice %10 {offsets = [0, 0], sizes = [128, 128], strides = [1, 1]} : vector<128x512xf32> to vector<128x128xf32>
    %cst_30 = arith.constant dense<0xFF800000> : vector<128xf32>
    %47 = vector.multi_reduction <maximumf>, %45, %cst_30 [1] : vector<128x128xf32> to vector<128xf32>
    %48 = vector.shape_cast %47 : vector<128xf32> to vector<128x1xf32>
    %49 = vector.broadcast %48 : vector<128x1xf32> to vector<128x128xf32>
    %50 = arith.subf %45, %49 : vector<128x128xf32>
    %51 = math.exp %50 : vector<128x128xf32>
    %cst_31 = arith.constant dense<0.000000e+00> : vector<128xf32>
    %52 = vector.multi_reduction <add>, %51, %cst_31 [1] : vector<128x128xf32> to vector<128xf32>
    %53 = vector.shape_cast %52 : vector<128xf32> to vector<128x1xf32>
    %54 = tpu.reciprocal %53 {approx = true} : vector<128x1xf32> -> vector<128x1xf32>
    %55 = vector.broadcast %54 : vector<128x1xf32> to vector<128x128xf32>
    %56 = arith.mulf %51, %55 : vector<128x128xf32>
    %57 = math.log %53 : vector<128x1xf32>
    %58 = vector.broadcast %57 : vector<128x1xf32> to vector<128x128xf32>
    %59 = arith.subf %50, %58 : vector<128x128xf32>
    %cst_32 = arith.constant 0.000000e+00 : f32
    %60 = vector.broadcast %cst_32 : f32 to vector<128x128xf32>
    %61 = arith.subf %60, %59 : vector<128x128xf32>
    %62 = arith.mulf %61, %46 : vector<128x128xf32>
    %cst_33 = arith.constant 1.000000e+00 : f32
    %63 = vector.broadcast %cst_33 : f32 to vector<128x128xf32>
    %64 = arith.subf %63, %56 : vector<128x128xf32>
    %65 = arith.mulf %62, %64 : vector<128x128xf32>
    %cst_34 = arith.constant dense<0.000000e+00> : vector<128xf32>
    %66 = vector.multi_reduction <add>, %65, %cst_34 [0] : vector<128x128xf32> to vector<128xf32>
    %67 = vector.shape_cast %66 : vector<128xf32> to vector<1x128xf32>
    %68 = arith.addf %36, %67 : vector<1x128xf32>
    %69 = vector.extract_strided_slice %41 {offsets = [0, 128], sizes = [128, 128], strides = [1, 1]} : vector<128x512xf32> to vector<128x128xf32>
    %70 = vector.extract_strided_slice %10 {offsets = [0, 128], sizes = [128, 128], strides = [1, 1]} : vector<128x512xf32> to vector<128x128xf32>
    %cst_35 = arith.constant dense<0xFF800000> : vector<128xf32>
    %71 = vector.multi_reduction <maximumf>, %69, %cst_35 [1] : vector<128x128xf32> to vector<128xf32>
    %72 = vector.shape_cast %71 : vector<128xf32> to vector<128x1xf32>
    %73 = vector.broadcast %72 : vector<128x1xf32> to vector<128x128xf32>
    %74 = arith.subf %69, %73 : vector<128x128xf32>
    %75 = math.exp %74 : vector<128x128xf32>
    %cst_36 = arith.constant dense<0.000000e+00> : vector<128xf32>
    %76 = vector.multi_reduction <add>, %75, %cst_36 [1] : vector<128x128xf32> to vector<128xf32>
    %77 = vector.shape_cast %76 : vector<128xf32> to vector<128x1xf32>
    %78 = tpu.reciprocal %77 {approx = true} : vector<128x1xf32> -> vector<128x1xf32>
    %79 = vector.broadcast %78 : vector<128x1xf32> to vector<128x128xf32>
    %80 = arith.mulf %75, %79 : vector<128x128xf32>
    %81 = math.log %77 : vector<128x1xf32>
    %82 = vector.broadcast %81 : vector<128x1xf32> to vector<128x128xf32>
    %83 = arith.subf %74, %82 : vector<128x128xf32>
    %cst_37 = arith.constant 0.000000e+00 : f32
    %84 = vector.broadcast %cst_37 : f32 to vector<128x128xf32>
    %85 = arith.subf %84, %83 : vector<128x128xf32>
    %86 = arith.mulf %85, %70 : vector<128x128xf32>
    %cst_38 = arith.constant 1.000000e+00 : f32
    %87 = vector.broadcast %cst_38 : f32 to vector<128x128xf32>
    %88 = arith.subf %87, %80 : vector<128x128xf32>
    %89 = arith.mulf %86, %88 : vector<128x128xf32>
    %cst_39 = arith.constant dense<0.000000e+00> : vector<128xf32>
    %90 = vector.multi_reduction <add>, %89, %cst_39 [0] : vector<128x128xf32> to vector<128xf32>
    %91 = vector.shape_cast %90 : vector<128xf32> to vector<1x128xf32>
    %92 = arith.addf %68, %91 : vector<1x128xf32>
    %93 = vector.extract_strided_slice %41 {offsets = [0, 256], sizes = [128, 128], strides = [1, 1]} : vector<128x512xf32> to vector<128x128xf32>
    %94 = vector.extract_strided_slice %10 {offsets = [0, 256], sizes = [128, 128], strides = [1, 1]} : vector<128x512xf32> to vector<128x128xf32>
    %cst_40 = arith.constant dense<0xFF800000> : vector<128xf32>
    %95 = vector.multi_reduction <maximumf>, %93, %cst_40 [1] : vector<128x128xf32> to vector<128xf32>
    %96 = vector.shape_cast %95 : vector<128xf32> to vector<128x1xf32>
    %97 = vector.broadcast %96 : vector<128x1xf32> to vector<128x128xf32>
    %98 = arith.subf %93, %97 : vector<128x128xf32>
    %99 = math.exp %98 : vector<128x128xf32>
    %cst_41 = arith.constant dense<0.000000e+00> : vector<128xf32>
    %100 = vector.multi_reduction <add>, %99, %cst_41 [1] : vector<128x128xf32> to vector<128xf32>
    %101 = vector.shape_cast %100 : vector<128xf32> to vector<128x1xf32>
    %102 = tpu.reciprocal %101 {approx = true} : vector<128x1xf32> -> vector<128x1xf32>
    %103 = vector.broadcast %102 : vector<128x1xf32> to vector<128x128xf32>
    %104 = arith.mulf %99, %103 : vector<128x128xf32>
    %105 = math.log %101 : vector<128x1xf32>
    %106 = vector.broadcast %105 : vector<128x1xf32> to vector<128x128xf32>
    %107 = arith.subf %98, %106 : vector<128x128xf32>
    %cst_42 = arith.constant 0.000000e+00 : f32
    %108 = vector.broadcast %cst_42 : f32 to vector<128x128xf32>
    %109 = arith.subf %108, %107 : vector<128x128xf32>
    %110 = arith.mulf %109, %94 : vector<128x128xf32>
    %cst_43 = arith.constant 1.000000e+00 : f32
    %111 = vector.broadcast %cst_43 : f32 to vector<128x128xf32>
    %112 = arith.subf %111, %104 : vector<128x128xf32>
    %113 = arith.mulf %110, %112 : vector<128x128xf32>
    %cst_44 = arith.constant dense<0.000000e+00> : vector<128xf32>
    %114 = vector.multi_reduction <add>, %113, %cst_44 [0] : vector<128x128xf32> to vector<128xf32>
    %115 = vector.shape_cast %114 : vector<128xf32> to vector<1x128xf32>
    %116 = arith.addf %92, %115 : vector<1x128xf32>
    %117 = vector.extract_strided_slice %41 {offsets = [0, 384], sizes = [128, 128], strides = [1, 1]} : vector<128x512xf32> to vector<128x128xf32>
    %118 = vector.extract_strided_slice %10 {offsets = [0, 384], sizes = [128, 128], strides = [1, 1]} : vector<128x512xf32> to vector<128x128xf32>
    %cst_45 = arith.constant dense<0xFF800000> : vector<128xf32>
    %119 = vector.multi_reduction <maximumf>, %117, %cst_45 [1] : vector<128x128xf32> to vector<128xf32>
    %120 = vector.shape_cast %119 : vector<128xf32> to vector<128x1xf32>
    %121 = vector.broadcast %120 : vector<128x1xf32> to vector<128x128xf32>
    %122 = arith.subf %117, %121 : vector<128x128xf32>
    %123 = math.exp %122 : vector<128x128xf32>
    %cst_46 = arith.constant dense<0.000000e+00> : vector<128xf32>
    %124 = vector.multi_reduction <add>, %123, %cst_46 [1] : vector<128x128xf32> to vector<128xf32>
    %125 = vector.shape_cast %124 : vector<128xf32> to vector<128x1xf32>
    %126 = tpu.reciprocal %125 {approx = true} : vector<128x1xf32> -> vector<128x1xf32>
    %127 = vector.broadcast %126 : vector<128x1xf32> to vector<128x128xf32>
    %128 = arith.mulf %123, %127 : vector<128x128xf32>
    %129 = math.log %125 : vector<128x1xf32>
    %130 = vector.broadcast %129 : vector<128x1xf32> to vector<128x128xf32>
    %131 = arith.subf %122, %130 : vector<128x128xf32>
    %cst_47 = arith.constant 0.000000e+00 : f32
    %132 = vector.broadcast %cst_47 : f32 to vector<128x128xf32>
    %133 = arith.subf %132, %131 : vector<128x128xf32>
    %134 = arith.mulf %133, %118 : vector<128x128xf32>
    %cst_48 = arith.constant 1.000000e+00 : f32
    %135 = vector.broadcast %cst_48 : f32 to vector<128x128xf32>
    %136 = arith.subf %135, %128 : vector<128x128xf32>
    %137 = arith.mulf %134, %136 : vector<128x128xf32>
    %cst_49 = arith.constant dense<0.000000e+00> : vector<128xf32>
    %138 = vector.multi_reduction <add>, %137, %cst_49 [0] : vector<128x128xf32> to vector<128xf32>
    %139 = vector.shape_cast %138 : vector<128xf32> to vector<1x128xf32>
    %140 = arith.addf %116, %139 : vector<1x128xf32>
    %141 = vector.broadcast %31 : vector<1x512xf32> to vector<128x512xf32>
    %142 = arith.mulf %141, %41 : vector<128x512xf32>
    %143 = arith.addf %22, %142 : vector<128x512xf32>
    %144 = arith.addf %143, %35 : vector<128x512xf32>
    %c1_50 = arith.constant 1 : index
    %c0_51 = arith.constant 0 : index
    %c0_52 = arith.constant 0 : index
    %c0_53 = arith.constant 0 : index
    %145 = vector.load %arg8[%c1_50, %c0_51, %c0_52, %c0_53] : memref<2x1x128x512xf32, #tpu.memory_space<vmem>>, vector<1x1x128x512xf32>
    %146 = vector.shape_cast %145 : vector<1x1x128x512xf32> to vector<128x512xf32>
    %147 = vector.shape_cast %144 : vector<128x512xf32> to vector<1x1x128x512xf32>
    tpu.vector_store %arg8[%c1_50, %c0_51, %c0_52, %c0_53], %147 {strides = array<i32>} : memref<2x1x128x512xf32, #tpu.memory_space<vmem>>, vector<1x1x128x512xf32>,
    %148 = vector.extract_strided_slice %144 {offsets = [0, 0], sizes = [128, 128], strides = [1, 1]} : vector<128x512xf32> to vector<128x128xf32>
    %149 = vector.extract_strided_slice %10 {offsets = [0, 0], sizes = [128, 128], strides = [1, 1]} : vector<128x512xf32> to vector<128x128xf32>
    %cst_54 = arith.constant dense<0xFF800000> : vector<128xf32>
    %150 = vector.multi_reduction <maximumf>, %148, %cst_54 [1] : vector<128x128xf32> to vector<128xf32>
    %151 = vector.shape_cast %150 : vector<128xf32> to vector<128x1xf32>
    %152 = vector.broadcast %151 : vector<128x1xf32> to vector<128x128xf32>
    %153 = arith.subf %148, %152 : vector<128x128xf32>
    %154 = math.exp %153 : vector<128x128xf32>
    %cst_55 = arith.constant dense<0.000000e+00> : vector<128xf32>
    %155 = vector.multi_reduction <add>, %154, %cst_55 [1] : vector<128x128xf32> to vector<128xf32>
    %156 = vector.shape_cast %155 : vector<128xf32> to vector<128x1xf32>
    %157 = tpu.reciprocal %156 {approx = true} : vector<128x1xf32> -> vector<128x1xf32>
    %158 = vector.broadcast %157 : vector<128x1xf32> to vector<128x128xf32>
    %159 = arith.mulf %154, %158 : vector<128x128xf32>
    %160 = math.log %156 : vector<128x1xf32>
    %161 = vector.broadcast %160 : vector<128x1xf32> to vector<128x128xf32>
    %162 = arith.subf %153, %161 : vector<128x128xf32>
    %cst_56 = arith.constant 0.000000e+00 : f32
    %163 = vector.broadcast %cst_56 : f32 to vector<128x128xf32>
    %164 = arith.subf %163, %162 : vector<128x128xf32>
    %165 = arith.mulf %164, %149 : vector<128x128xf32>
    %cst_57 = arith.constant 1.000000e+00 : f32
    %166 = vector.broadcast %cst_57 : f32 to vector<128x128xf32>
    %167 = arith.subf %166, %159 : vector<128x128xf32>
    %168 = arith.mulf %165, %167 : vector<128x128xf32>
    %cst_58 = arith.constant dense<0.000000e+00> : vector<128xf32>
    %169 = vector.multi_reduction <add>, %168, %cst_58 [0] : vector<128x128xf32> to vector<128xf32>
    %170 = vector.shape_cast %169 : vector<128xf32> to vector<1x128xf32>
    %171 = arith.addf %140, %170 : vector<1x128xf32>
    %172 = vector.extract_strided_slice %144 {offsets = [0, 128], sizes = [128, 128], strides = [1, 1]} : vector<128x512xf32> to vector<128x128xf32>
    %173 = vector.extract_strided_slice %10 {offsets = [0, 128], sizes = [128, 128], strides = [1, 1]} : vector<128x512xf32> to vector<128x128xf32>
    %cst_59 = arith.constant dense<0xFF800000> : vector<128xf32>
    %174 = vector.multi_reduction <maximumf>, %172, %cst_59 [1] : vector<128x128xf32> to vector<128xf32>
    %175 = vector.shape_cast %174 : vector<128xf32> to vector<128x1xf32>
    %176 = vector.broadcast %175 : vector<128x1xf32> to vector<128x128xf32>
    %177 = arith.subf %172, %176 : vector<128x128xf32>
    %178 = math.exp %177 : vector<128x128xf32>
    %cst_60 = arith.constant dense<0.000000e+00> : vector<128xf32>
    %179 = vector.multi_reduction <add>, %178, %cst_60 [1] : vector<128x128xf32> to vector<128xf32>
    %180 = vector.shape_cast %179 : vector<128xf32> to vector<128x1xf32>
    %181 = tpu.reciprocal %180 {approx = true} : vector<128x1xf32> -> vector<128x1xf32>
    %182 = vector.broadcast %181 : vector<128x1xf32> to vector<128x128xf32>
    %183 = arith.mulf %178, %182 : vector<128x128xf32>
    %184 = math.log %180 : vector<128x1xf32>
    %185 = vector.broadcast %184 : vector<128x1xf32> to vector<128x128xf32>
    %186 = arith.subf %177, %185 : vector<128x128xf32>
    %cst_61 = arith.constant 0.000000e+00 : f32
    %187 = vector.broadcast %cst_61 : f32 to vector<128x128xf32>
    %188 = arith.subf %187, %186 : vector<128x128xf32>
    %189 = arith.mulf %188, %173 : vector<128x128xf32>
    %cst_62 = arith.constant 1.000000e+00 : f32
    %190 = vector.broadcast %cst_62 : f32 to vector<128x128xf32>
    %191 = arith.subf %190, %183 : vector<128x128xf32>
    %192 = arith.mulf %189, %191 : vector<128x128xf32>
    %cst_63 = arith.constant dense<0.000000e+00> : vector<128xf32>
    %193 = vector.multi_reduction <add>, %192, %cst_63 [0] : vector<128x128xf32> to vector<128xf32>
    %194 = vector.shape_cast %193 : vector<128xf32> to vector<1x128xf32>
    %195 = arith.addf %171, %194 : vector<1x128xf32>
    %196 = vector.extract_strided_slice %144 {offsets = [0, 256], sizes = [128, 128], strides = [1, 1]} : vector<128x512xf32> to vector<128x128xf32>
    %197 = vector.extract_strided_slice %10 {offsets = [0, 256], sizes = [128, 128], strides = [1, 1]} : vector<128x512xf32> to vector<128x128xf32>
    %cst_64 = arith.constant dense<0xFF800000> : vector<128xf32>
    %198 = vector.multi_reduction <maximumf>, %196, %cst_64 [1] : vector<128x128xf32> to vector<128xf32>
    %199 = vector.shape_cast %198 : vector<128xf32> to vector<128x1xf32>
    %200 = vector.broadcast %199 : vector<128x1xf32> to vector<128x128xf32>
    %201 = arith.subf %196, %200 : vector<128x128xf32>
    %202 = math.exp %201 : vector<128x128xf32>
    %cst_65 = arith.constant dense<0.000000e+00> : vector<128xf32>
    %203 = vector.multi_reduction <add>, %202, %cst_65 [1] : vector<128x128xf32> to vector<128xf32>
    %204 = vector.shape_cast %203 : vector<128xf32> to vector<128x1xf32>
    %205 = tpu.reciprocal %204 {approx = true} : vector<128x1xf32> -> vector<128x1xf32>
    %206 = vector.broadcast %205 : vector<128x1xf32> to vector<128x128xf32>
    %207 = arith.mulf %202, %206 : vector<128x128xf32>
    %208 = math.log %204 : vector<128x1xf32>
    %209 = vector.broadcast %208 : vector<128x1xf32> to vector<128x128xf32>
    %210 = arith.subf %201, %209 : vector<128x128xf32>
    %cst_66 = arith.constant 0.000000e+00 : f32
    %211 = vector.broadcast %cst_66 : f32 to vector<128x128xf32>
    %212 = arith.subf %211, %210 : vector<128x128xf32>
    %213 = arith.mulf %212, %197 : vector<128x128xf32>
    %cst_67 = arith.constant 1.000000e+00 : f32
    %214 = vector.broadcast %cst_67 : f32 to vector<128x128xf32>
    %215 = arith.subf %214, %207 : vector<128x128xf32>
    %216 = arith.mulf %213, %215 : vector<128x128xf32>
    %cst_68 = arith.constant dense<0.000000e+00> : vector<128xf32>
    %217 = vector.multi_reduction <add>, %216, %cst_68 [0] : vector<128x128xf32> to vector<128xf32>
    %218 = vector.shape_cast %217 : vector<128xf32> to vector<1x128xf32>
    %219 = arith.addf %195, %218 : vector<1x128xf32>
    %220 = vector.extract_strided_slice %144 {offsets = [0, 384], sizes = [128, 128], strides = [1, 1]} : vector<128x512xf32> to vector<128x128xf32>
    %221 = vector.extract_strided_slice %10 {offsets = [0, 384], sizes = [128, 128], strides = [1, 1]} : vector<128x512xf32> to vector<128x128xf32>
    %cst_69 = arith.constant dense<0xFF800000> : vector<128xf32>
    %222 = vector.multi_reduction <maximumf>, %220, %cst_69 [1] : vector<128x128xf32> to vector<128xf32>
    %223 = vector.shape_cast %222 : vector<128xf32> to vector<128x1xf32>
    %224 = vector.broadcast %223 : vector<128x1xf32> to vector<128x128xf32>
    %225 = arith.subf %220, %224 : vector<128x128xf32>
    %226 = math.exp %225 : vector<128x128xf32>
    %cst_70 = arith.constant dense<0.000000e+00> : vector<128xf32>
    %227 = vector.multi_reduction <add>, %226, %cst_70 [1] : vector<128x128xf32> to vector<128xf32>
    %228 = vector.shape_cast %227 : vector<128xf32> to vector<128x1xf32>
    %229 = tpu.reciprocal %228 {approx = true} : vector<128x1xf32> -> vector<128x1xf32>
    %230 = vector.broadcast %229 : vector<128x1xf32> to vector<128x128xf32>
    %231 = arith.mulf %226, %230 : vector<128x128xf32>
    %232 = math.log %228 : vector<128x1xf32>
    %233 = vector.broadcast %232 : vector<128x1xf32> to vector<128x128xf32>
    %234 = arith.subf %225, %233 : vector<128x128xf32>
    %cst_71 = arith.constant 0.000000e+00 : f32
    %235 = vector.broadcast %cst_71 : f32 to vector<128x128xf32>
    %236 = arith.subf %235, %234 : vector<128x128xf32>
    %237 = arith.mulf %236, %221 : vector<128x128xf32>
    %cst_72 = arith.constant 1.000000e+00 : f32
    %238 = vector.broadcast %cst_72 : f32 to vector<128x128xf32>
    %239 = arith.subf %238, %231 : vector<128x128xf32>
    %240 = arith.mulf %237, %239 : vector<128x128xf32>
    %cst_73 = arith.constant dense<0.000000e+00> : vector<128xf32>
    %241 = vector.multi_reduction <add>, %240, %cst_73 [0] : vector<128x128xf32> to vector<128xf32>
    %242 = vector.shape_cast %241 : vector<128xf32> to vector<1x128xf32>
    %243 = arith.addf %219, %242 : vector<1x128xf32>
    %c0_74 = arith.constant 0 : index
    %c0_75 = arith.constant 0 : index
    %c0_76 = arith.constant 0 : index
    %c0_77 = arith.constant 0 : index
    %244 = vector.load %arg9[%c0_74, %c0_75, %c0_76, %c0_77] : memref<1x1x1x128xf32, #tpu.memory_space<vmem>>, vector<1x1x1x128xf32>
    %245 = vector.shape_cast %244 : vector<1x1x1x128xf32> to vector<1x128xf32>
    %246 = vector.shape_cast %243 : vector<1x128xf32> to vector<1x1x1x128xf32>
    tpu.vector_store %arg9[%c0_74, %c0_75, %c0_76, %c0_77], %246 {strides = array<i32>} : memref<1x1x1x128xf32, #tpu.memory_space<vmem>>, vector<1x1x1x128xf32>,
    return
  }
  func.func @transform_0(%arg0: i32, %arg1: i32) -> i32 {
    %c0_i32 = arith.constant 0 : i32
    %c0_i32_0 = arith.constant 0 : i32
    return %c0_i32 : i32
  }
  func.func @transform_1(%arg0: i32, %arg1: i32) -> (i32, i32, i32) {
    %c0_i32 = arith.constant 0 : i32
    %c0_i32_0 = arith.constant 0 : i32
    return %arg0, %arg1, %c0_i32 : i32, i32, i32
  }
  func.func @transform_2(%arg0: i32, %arg1: i32) -> (i32, i32, i32) {
    %c0_i32 = arith.constant 0 : i32
    %c0_i32_0 = arith.constant 0 : i32
    %c0_i32_1 = arith.constant 0 : i32
    return %arg0, %c0_i32, %c0_i32_0 : i32, i32, i32
  }
  func.func @transform_3(%arg0: i32, %arg1: i32) -> (i32, i32) {
    %c0_i32 = arith.constant 0 : i32
    %c0_i32_0 = arith.constant 0 : i32
    %c0_i32_1 = arith.constant 0 : i32
    return %c0_i32, %c0_i32_0 : i32, i32
  }
  func.func @transform_4(%arg0: i32, %arg1: i32) -> (i32, i32, i32) {
    %c0_i32 = arith.constant 0 : i32
    %c0_i32_0 = arith.constant 0 : i32
    return %arg0, %arg1, %c0_i32 : i32, i32, i32
  }
  func.func @transform_5(%arg0: i32, %arg1: i32) -> (i32, i32, i32) {
    %c0_i32 = arith.constant 0 : i32
    %c0_i32_0 = arith.constant 0 : i32
    return %arg0, %arg1, %c0_i32 : i32, i32, i32
  }
  func.func @transform_6(%arg0: i32, %arg1: i32) -> (i32, i32, i32, i32) {
    %c0_i32 = arith.constant 0 : i32
    %c0_i32_0 = arith.constant 0 : i32
    %c0_i32_1 = arith.constant 0 : i32
    return %c0_i32, %arg0, %arg1, %c0_i32_0 : i32, i32, i32, i32
  }
  func.func @transform_7(%arg0: i32, %arg1: i32) -> (i32, i32, i32, i32) {
    %c0_i32 = arith.constant 0 : i32
    %c0_i32_0 = arith.constant 0 : i32
    %c0_i32_1 = arith.constant 0 : i32
    return %arg0, %arg1, %c0_i32, %c0_i32_0 : i32, i32, i32, i32
  }
}

</mosaic_0001>

<llo_original>
// kernel: squeeze.2
$region0: #{squeeze.2}
  %s0 = inlined_call_operand.vmem [shape: f32[1,2,128,512], index: 0, kind: input, shape index: {}]
  %s1 = inlined_call_operand.hbm [shape: f32[2,128,4,128], index: 1, kind: output, shape index: {}]
  $region1: #{squeeze.2} parent=0
    #allocation0 [shape = 'u8[524288]{0}', space=vmem, size = 0x80000, scoped, tag = 'operand span for operand 1']
    #allocation1 [shape = 's32[1]{0}', space=sflag, size = 0x4, scoped, tag = 'scoped memory for squeeze.2']
    #allocation2 [shape = 'u8[1048576]{0}', space=vmem, size = 0x100000, scoped, tag = 'scoped mem for output reshape']
    %2 = vsyncpa [#allocation1], 0
    %v3 = vld [vmem:[%s0] sm:$0xff]
    %4 = vst [vmem:[#allocation2] ss:$8 sm:$0xf] %v3
    %5 = vst [vmem:[#allocation2] ss:$8 sm:$0xf0] %v3
    %s6 = scalar_lea.vmem %s0, 8
    %v7 = vld [vmem:[%s6] sm:$0xff]
    %s8 = scalar_lea.vmem [#allocation2], 1
    %9 = vst [vmem:[%s8] ss:$8 sm:$0xf] %v7
    %s10 = scalar_lea.vmem [#allocation2], 1
    %11 = vst [vmem:[%s10] ss:$8 sm:$0xf0] %v7
    %s12 = scalar_lea.vmem %s0, 16
    %v13 = vld [vmem:[%s12] sm:$0xff]
    %s14 = scalar_lea.vmem [#allocation2], 2
    %15 = vst [vmem:[%s14] ss:$8 sm:$0xf] %v13
    %s16 = scalar_lea.vmem [#allocation2], 2
    %17 = vst [vmem:[%s16] ss:$8 sm:$0xf0] %v13
    %s18 = scalar_lea.vmem %s0, 24
    %v19 = vld [vmem:[%s18] sm:$0xff]
    %s20 = scalar_lea.vmem [#allocation2], 3
    %21 = vst [vmem:[%s20] ss:$8 sm:$0xf] %v19
    %s22 = scalar_lea.vmem [#allocation2], 3
    %23 = vst [vmem:[%s22] ss:$8 sm:$0xf0] %v19
    %s24 = scalar_lea.vmem %s0, 32
    %v25 = vld [vmem:[%s24] sm:$0xff]
    %s26 = scalar_lea.vmem [#allocation2], 64
    %27 = vst [vmem:[%s26] ss:$8 sm:$0xf] %v25
    %s28 = scalar_lea.vmem [#allocation2], 64
    %29 = vst [vmem:[%s28] ss:$8 sm:$0xf0] %v25
    %s30 = scalar_lea.vmem %s0, 40
    %v31 = vld [vmem:[%s30] sm:$0xff]
    %s32 = scalar_lea.vmem [#allocation2], 65
    %33 = vst [vmem:[%s32] ss:$8 sm:$0xf] %v31
    %s34 = scalar_lea.vmem [#allocation2], 65
    %35 = vst [vmem:[%s34] ss:$8 sm:$0xf0] %v31
    %s36 = scalar_lea.vmem %s0, 48
    %v37 = vld [vmem:[%s36] sm:$0xff]
    %s38 = scalar_lea.vmem [#allocation2], 66
    %39 = vst [vmem:[%s38] ss:$8 sm:$0xf] %v37
    %s40 = scalar_lea.vmem [#allocation2], 66
    %41 = vst [vmem:[%s40] ss:$8 sm:$0xf0] %v37
    %s42 = scalar_lea.vmem %s0, 56
    %v43 = vld [vmem:[%s42] sm:$0xff]
    %s44 = scalar_lea.vmem [#allocation2], 67
    %45 = vst [vmem:[%s44] ss:$8 sm:$0xf] %v43
    %s46 = scalar_lea.vmem [#allocation2], 67
    %47 = vst [vmem:[%s46] ss:$8 sm:$0xf0] %v43
    %s48 = scalar_lea.vmem %s0, 64
    %v49 = vld [vmem:[%s48] sm:$0xff]
    %s50 = scalar_lea.vmem [#allocation2], 128
    %51 = vst [vmem:[%s50] ss:$8 sm:$0xf] %v49
    %s52 = scalar_lea.vmem [#allocation2], 128
    %53 = vst [vmem:[%s52] ss:$8 sm:$0xf0] %v49
    %s54 = scalar_lea.vmem %s0, 72
    %v55 = vld [vmem:[%s54] sm:$0xff]
    %s56 = scalar_lea.vmem [#allocation2], 129
    %57 = vst [vmem:[%s56] ss:$8 sm:$0xf] %v55
    %s58 = scalar_lea.vmem [#allocation2], 129
    %59 = vst [vmem:[%s58] ss:$8 sm:$0xf0] %v55
    %s60 = scalar_lea.vmem %s0, 80
    %v61 = vld [vmem:[%s60] sm:$0xff]
    %s62 = scalar_lea.vmem [#allocation2], 130
    %63 = vst [vmem:[%s62] ss:$8 sm:$0xf] %v61
    %s64 = scalar_lea.vmem [#allocation2], 130
    %65 = vst [vmem:[%s64] ss:$8 sm:$0xf0] %v61
    %s66 = scalar_lea.vmem %s0, 88
    %v67 = vld [vmem:[%s66] sm:$0xff]
    %s68 = scalar_lea.vmem [#allocation2], 131
    %69 = vst [vmem:[%s68] ss:$8 sm:$0xf] %v67
    %s70 = scalar_lea.vmem [#allocation2], 131
    %71 = vst [vmem:[%s70] ss:$8 sm:$0xf0] %v67
    %s72 = scalar_lea.vmem %s0, 96
    %v73 = vld [vmem:[%s72] sm:$0xff]
    %s74 = scalar_lea.vmem [#allocation2], 192
    %75 = vst [vmem:[%s74] ss:$8 sm:$0xf] %v73
    %s76 = scalar_lea.vmem [#allocation2], 192
    %77 = vst [vmem:[%s76] ss:$8 sm:$0xf0] %v73
    %s78 = scalar_lea.vmem %s0, 104
    %v79 = vld [vmem:[%s78] sm:$0xff]
    %s80 = scalar_lea.vmem [#allocation2], 193
    %81 = vst [vmem:[%s80] ss:$8 sm:$0xf] %v79
    %s82 = scalar_lea.vmem [#allocation2], 193
    %83 = vst [vmem:[%s82] ss:$8 sm:$0xf0] %v79
    %s84 = scalar_lea.vmem %s0, 112
    %v85 = vld [vmem:[%s84] sm:$0xff]
    %s86 = scalar_lea.vmem [#allocation2], 194
    %87 = vst [vmem:[%s86] ss:$8 sm:$0xf] %v85
    %s88 = scalar_lea.vmem [#allocation2], 194
    %89 = vst [vmem:[%s88] ss:$8 sm:$0xf0] %v85
    %s90 = scalar_lea.vmem %s0, 120
    %v91 = vld [vmem:[%s90] sm:$0xff]
    %s92 = scalar_lea.vmem [#allocation2], 195
    %93 = vst [vmem:[%s92] ss:$8 sm:$0xf] %v91
    %s94 = scalar_lea.vmem [#allocation2], 195
    %95 = vst [vmem:[%s94] ss:$8 sm:$0xf0] %v91
    %s96 = scalar_lea.vmem %s0, 128
    %v97 = vld [vmem:[%s96] sm:$0xff]
    %s98 = scalar_lea.vmem [#allocation2], 256
    %99 = vst [vmem:[%s98] ss:$8 sm:$0xf] %v97
    %s100 = scalar_lea.vmem [#allocation2], 256
    %101 = vst [vmem:[%s100] ss:$8 sm:$0xf0] %v97
    %s102 = scalar_lea.vmem %s0, 136
    %v103 = vld [vmem:[%s102] sm:$0xff]
    %s104 = scalar_lea.vmem [#allocation2], 257
    %105 = vst [vmem:[%s104] ss:$8 sm:$0xf] %v103
    %s106 = scalar_lea.vmem [#allocation2], 257
    %107 = vst [vmem:[%s106] ss:$8 sm:$0xf0] %v103
    %s108 = scalar_lea.vmem %s0, 144
    %v109 = vld [vmem:[%s108] sm:$0xff]
    %s110 = scalar_lea.vmem [#allocation2], 258
    %111 = vst [vmem:[%s110] ss:$8 sm:$0xf] %v109
    %s112 = scalar_lea.vmem [#allocation2], 258
    %113 = vst [vmem:[%s112] ss:$8 sm:$0xf0] %v109
    %s114 = scalar_lea.vmem %s0, 152
    %v115 = vld [vmem:[%s114] sm:$0xff]
    %s116 = scalar_lea.vmem [#allocation2], 259
    %117 = vst [vmem:[%s116] ss:$8 sm:$0xf] %v115
    %s118 = scalar_lea.vmem [#allocation2], 259
    %119 = vst [vmem:[%s118] ss:$8 sm:$0xf0] %v115
    %s120 = scalar_lea.vmem %s0, 160
    %v121 = vld [vmem:[%s120] sm:$0xff]
    %s122 = scalar_lea.vmem [#allocation2], 320
    %123 = vst [vmem:[%s122] ss:$8 sm:$0xf] %v121
    %s124 = scalar_lea.vmem [#allocation2], 320
    %125 = vst [vmem:[%s124] ss:$8 sm:$0xf0] %v121
    %s126 = scalar_lea.vmem %s0, 168
    %v127 = vld [vmem:[%s126] sm:$0xff]
    %s128 = scalar_lea.vmem [#allocation2], 321
    %129 = vst [vmem:[%s128] ss:$8 sm:$0xf] %v127
    %s130 = scalar_lea.vmem [#allocation2], 321
    %131 = vst [vmem:[%s130] ss:$8 sm:$0xf0] %v127
    %s132 = scalar_lea.vmem %s0, 176
    %v133 = vld [vmem:[%s132] sm:$0xff]
    %s134 = scalar_lea.vmem [#allocation2], 322
    %135 = vst [vmem:[%s134] ss:$8 sm:$0xf] %v133
    %s136 = scalar_lea.vmem [#allocation2], 322
    %137 = vst [vmem:[%s136] ss:$8 sm:$0xf0] %v133
    %s138 = scalar_lea.vmem %s0, 184
    %v139 = vld [vmem:[%s138] sm:$0xff]
    %s140 = scalar_lea.vmem [#allocation2], 323
    %141 = vst [vmem:[%s140] ss:$8 sm:$0xf] %v139
    %s142 = scalar_lea.vmem [#allocation2], 323
    %143 = vst [vmem:[%s142] ss:$8 sm:$0xf0] %v139
    %s144 = scalar_lea.vmem %s0, 192
    %v145 = vld [vmem:[%s144] sm:$0xff]
    %s146 = scalar_lea.vmem [#allocation2], 384
    %147 = vst [vmem:[%s146] ss:$8 sm:$0xf] %v145
    %s148 = scalar_lea.vmem [#allocation2], 384
    %149 = vst [vmem:[%s148] ss:$8 sm:$0xf0] %v145
    %s150 = scalar_lea.vmem %s0, 200
    %v151 = vld [vmem:[%s150] sm:$0xff]
    %s152 = scalar_lea.vmem [#allocation2], 385
    %153 = vst [vmem:[%s152] ss:$8 sm:$0xf] %v151
    %s154 = scalar_lea.vmem [#allocation2], 385
    %155 = vst [vmem:[%s154] ss:$8 sm:$0xf0] %v151
    %s156 = scalar_lea.vmem %s0, 208
    %v157 = vld [vmem:[%s156] sm:$0xff]
    %s158 = scalar_lea.vmem [#allocation2], 386
    %159 = vst [vmem:[%s158] ss:$8 sm:$0xf] %v157
    %s160 = scalar_lea.vmem [#allocation2], 386
    %161 = vst [vmem:[%s160] ss:$8 sm:$0xf0] %v157
    %s162 = scalar_lea.vmem %s0, 216
    %v163 = vld [vmem:[%s162] sm:$0xff]
    %s164 = scalar_lea.vmem [#allocation2], 387
    %165 = vst [vmem:[%s164] ss:$8 sm:$0xf] %v163
    %s166 = scalar_lea.vmem [#allocation2], 387
    %167 = vst [vmem:[%s166] ss:$8 sm:$0xf0] %v163
    %s168 = scalar_lea.vmem %s0, 224
    %v169 = vld [vmem:[%s168] sm:$0xff]
    %s170 = scalar_lea.vmem [#allocation2], 448
    %171 = vst [vmem:[%s170] ss:$8 sm:$0xf] %v169
    %s172 = scalar_lea.vmem [#allocation2], 448
    %173 = vst [vmem:[%s172] ss:$8 sm:$0xf0] %v169
    %s174 = scalar_lea.vmem %s0, 232
    %v175 = vld [vmem:[%s174] sm:$0xff]
    %s176 = scalar_lea.vmem [#allocation2], 449
    %177 = vst [vmem:[%s176] ss:$8 sm:$0xf] %v175
    %s178 = scalar_lea.vmem [#allocation2], 449
    %179 = vst [vmem:[%s178] ss:$8 sm:$0xf0] %v175
    %s180 = scalar_lea.vmem %s0, 240
    %v181 = vld [vmem:[%s180] sm:$0xff]
    %s182 = scalar_lea.vmem [#allocation2], 450
    %183 = vst [vmem:[%s182] ss:$8 sm:$0xf] %v181
    %s184 = scalar_lea.vmem [#allocation2], 450
    %185 = vst [vmem:[%s184] ss:$8 sm:$0xf0] %v181
    %s186 = scalar_lea.vmem %s0, 248
    %v187 = vld [vmem:[%s186] sm:$0xff]
    %s188 = scalar_lea.vmem [#allocation2], 451
    %189 = vst [vmem:[%s188] ss:$8 sm:$0xf] %v187
    %s190 = scalar_lea.vmem [#allocation2], 451
    %191 = vst [vmem:[%s190] ss:$8 sm:$0xf0] %v187
    %s192 = scalar_lea.vmem %s0, 256
    %v193 = vld [vmem:[%s192] sm:$0xff]
    %s194 = scalar_lea.vmem [#allocation2], 512
    %195 = vst [vmem:[%s194] ss:$8 sm:$0xf] %v193
    %s196 = scalar_lea.vmem [#allocation2], 512
    %197 = vst [vmem:[%s196] ss:$8 sm:$0xf0] %v193
    %s198 = scalar_lea.vmem %s0, 264
    %v199 = vld [vmem:[%s198] sm:$0xff]
    %s200 = scalar_lea.vmem [#allocation2], 513
    %201 = vst [vmem:[%s200] ss:$8 sm:$0xf] %v199
    %s202 = scalar_lea.vmem [#allocation2], 513
    %203 = vst [vmem:[%s202] ss:$8 sm:$0xf0] %v199
    %s204 = scalar_lea.vmem %s0, 272
    %v205 = vld [vmem:[%s204] sm:$0xff]
    %s206 = scalar_lea.vmem [#allocation2], 514
    %207 = vst [vmem:[%s206] ss:$8 sm:$0xf] %v205
    %s208 = scalar_lea.vmem [#allocation2], 514
    %209 = vst [vmem:[%s208] ss:$8 sm:$0xf0] %v205
    %s210 = scalar_lea.vmem %s0, 280
    %v211 = vld [vmem:[%s210] sm:$0xff]
    %s212 = scalar_lea.vmem [#allocation2], 515
    %213 = vst [vmem:[%s212] ss:$8 sm:$0xf] %v211
    %s214 = scalar_lea.vmem [#allocation2], 515
    %215 = vst [vmem:[%s214] ss:$8 sm:$0xf0] %v211
    %s216 = scalar_lea.vmem %s0, 288
    %v217 = vld [vmem:[%s216] sm:$0xff]
    %s218 = scalar_lea.vmem [#allocation2], 576
    %219 = vst [vmem:[%s218] ss:$8 sm:$0xf] %v217
    %s220 = scalar_lea.vmem [#allocation2], 576
    %221 = vst [vmem:[%s220] ss:$8 sm:$0xf0] %v217
    %s222 = scalar_lea.vmem %s0, 296
    %v223 = vld [vmem:[%s222] sm:$0xff]
    %s224 = scalar_lea.vmem [#allocation2], 577
    %225 = vst [vmem:[%s224] ss:$8 sm:$0xf] %v223
    %s226 = scalar_lea.vmem [#allocation2], 577
    %227 = vst [vmem:[%s226] ss:$8 sm:$0xf0] %v223
    %s228 = scalar_lea.vmem %s0, 304
    %v229 = vld [vmem:[%s228] sm:$0xff]
    %s230 = scalar_lea.vmem [#allocation2], 578
    %231 = vst [vmem:[%s230] ss:$8 sm:$0xf] %v229
    %s232 = scalar_lea.vmem [#allocation2], 578
    %233 = vst [vmem:[%s232] ss:$8 sm:$0xf0] %v229
    %s234 = scalar_lea.vmem %s0, 312
    %v235 = vld [vmem:[%s234] sm:$0xff]
    %s236 = scalar_lea.vmem [#allocation2], 579
    %237 = vst [vmem:[%s236] ss:$8 sm:$0xf] %v235
    %s238 = scalar_lea.vmem [#allocation2], 579
    %239 = vst [vmem:[%s238] ss:$8 sm:$0xf0] %v235
    %s240 = scalar_lea.vmem %s0, 320
    %v241 = vld [vmem:[%s240] sm:$0xff]
    %s242 = scalar_lea.vmem [#allocation2], 640
    %243 = vst [vmem:[%s242] ss:$8 sm:$0xf] %v241
    %s244 = scalar_lea.vmem [#allocation2], 640
    %245 = vst [vmem:[%s244] ss:$8 sm:$0xf0] %v241
    %s246 = scalar_lea.vmem %s0, 328
    %v247 = vld [vmem:[%s246] sm:$0xff]
    %s248 = scalar_lea.vmem [#allocation2], 641
    %249 = vst [vmem:[%s248] ss:$8 sm:$0xf] %v247
    %s250 = scalar_lea.vmem [#allocation2], 641
    %251 = vst [vmem:[%s250] ss:$8 sm:$0xf0] %v247
    %s252 = scalar_lea.vmem %s0, 336
    %v253 = vld [vmem:[%s252] sm:$0xff]
    %s254 = scalar_lea.vmem [#allocation2], 642
    %255 = vst [vmem:[%s254] ss:$8 sm:$0xf] %v253
    %s256 = scalar_lea.vmem [#allocation2], 642
    %257 = vst [vmem:[%s256] ss:$8 sm:$0xf0] %v253
    %s258 = scalar_lea.vmem %s0, 344
    %v259 = vld [vmem:[%s258] sm:$0xff]
    %s260 = scalar_lea.vmem [#allocation2], 643
    %261 = vst [vmem:[%s260] ss:$8 sm:$0xf] %v259
    %s262 = scalar_lea.vmem [#allocation2], 643
    %263 = vst [vmem:[%s262] ss:$8 sm:$0xf0] %v259
    %s264 = scalar_lea.vmem %s0, 352
    %v265 = vld [vmem:[%s264] sm:$0xff]
    %s266 = scalar_lea.vmem [#allocation2], 704
    %267 = vst [vmem:[%s266] ss:$8 sm:$0xf] %v265
    %s268 = scalar_lea.vmem [#allocation2], 704
    %269 = vst [vmem:[%s268] ss:$8 sm:$0xf0] %v265
    %s270 = scalar_lea.vmem %s0, 360
    %v271 = vld [vmem:[%s270] sm:$0xff]
    %s272 = scalar_lea.vmem [#allocation2], 705
    %273 = vst [vmem:[%s272] ss:$8 sm:$0xf] %v271
    %s274 = scalar_lea.vmem [#allocation2], 705
    %275 = vst [vmem:[%s274] ss:$8 sm:$0xf0] %v271
    %s276 = scalar_lea.vmem %s0, 368
    %v277 = vld [vmem:[%s276] sm:$0xff]
    %s278 = scalar_lea.vmem [#allocation2], 706
    %279 = vst [vmem:[%s278] ss:$8 sm:$0xf] %v277
    %s280 = scalar_lea.vmem [#allocation2], 706
    %281 = vst [vmem:[%s280] ss:$8 sm:$0xf0] %v277
    %s282 = scalar_lea.vmem %s0, 376
    %v283 = vld [vmem:[%s282] sm:$0xff]
    %s284 = scalar_lea.vmem [#allocation2], 707
    %285 = vst [vmem:[%s284] ss:$8 sm:$0xf] %v283
    %s286 = scalar_lea.vmem [#allocation2], 707
    %287 = vst [vmem:[%s286] ss:$8 sm:$0xf0] %v283
    %s288 = scalar_lea.vmem %s0, 384
    %v289 = vld [vmem:[%s288] sm:$0xff]
    %s290 = scalar_lea.vmem [#allocation2], 768
    %291 = vst [vmem:[%s290] ss:$8 sm:$0xf] %v289
    %s292 = scalar_lea.vmem [#allocation2], 768
    %293 = vst [vmem:[%s292] ss:$8 sm:$0xf0] %v289
    %s294 = scalar_lea.vmem %s0, 392
    %v295 = vld [vmem:[%s294] sm:$0xff]
    %s296 = scalar_lea.vmem [#allocation2], 769
    %297 = vst [vmem:[%s296] ss:$8 sm:$0xf] %v295
    %s298 = scalar_lea.vmem [#allocation2], 769
    %299 = vst [vmem:[%s298] ss:$8 sm:$0xf0] %v295
    %s300 = scalar_lea.vmem %s0, 400
    %v301 = vld [vmem:[%s300] sm:$0xff]
    %s302 = scalar_lea.vmem [#allocation2], 770
    %303 = vst [vmem:[%s302] ss:$8 sm:$0xf] %v301
    %s304 = scalar_lea.vmem [#allocation2], 770
    %305 = vst [vmem:[%s304] ss:$8 sm:$0xf0] %v301
    %s306 = scalar_lea.vmem %s0, 408
    %v307 = vld [vmem:[%s306] sm:$0xff]
    %s308 = scalar_lea.vmem [#allocation2], 771
    %309 = vst [vmem:[%s308] ss:$8 sm:$0xf] %v307
    %s310 = scalar_lea.vmem [#allocation2], 771
    %311 = vst [vmem:[%s310] ss:$8 sm:$0xf0] %v307
    %s312 = scalar_lea.vmem %s0, 416
    %v313 = vld [vmem:[%s312] sm:$0xff]
    %s314 = scalar_lea.vmem [#allocation2], 832
    %315 = vst [vmem:[%s314] ss:$8 sm:$0xf] %v313
    %s316 = scalar_lea.vmem [#allocation2], 832
    %317 = vst [vmem:[%s316] ss:$8 sm:$0xf0] %v313
    %s318 = scalar_lea.vmem %s0, 424
    %v319 = vld [vmem:[%s318] sm:$0xff]
    %s320 = scalar_lea.vmem [#allocation2], 833
    %321 = vst [vmem:[%s320] ss:$8 sm:$0xf] %v319
    %s322 = scalar_lea.vmem [#allocation2], 833
    %323 = vst [vmem:[%s322] ss:$8 sm:$0xf0] %v319
    %s324 = scalar_lea.vmem %s0, 432
    %v325 = vld [vmem:[%s324] sm:$0xff]
    %s326 = scalar_lea.vmem [#allocation2], 834
    %327 = vst [vmem:[%s326] ss:$8 sm:$0xf] %v325
    %s328 = scalar_lea.vmem [#allocation2], 834
    %329 = vst [vmem:[%s328] ss:$8 sm:$0xf0] %v325
    %s330 = scalar_lea.vmem %s0, 440
    %v331 = vld [vmem:[%s330] sm:$0xff]
    %s332 = scalar_lea.vmem [#allocation2], 835
    %333 = vst [vmem:[%s332] ss:$8 sm:$0xf] %v331
    %s334 = scalar_lea.vmem [#allocation2], 835
    %335 = vst [vmem:[%s334] ss:$8 sm:$0xf0] %v331
    %s336 = scalar_lea.vmem %s0, 448
    %v337 = vld [vmem:[%s336] sm:$0xff]
    %s338 = scalar_lea.vmem [#allocation2], 896
    %339 = vst [vmem:[%s338] ss:$8 sm:$0xf] %v337
    %s340 = scalar_lea.vmem [#allocation2], 896
    %341 = vst [vmem:[%s340] ss:$8 sm:$0xf0] %v337
    %s342 = scalar_lea.vmem %s0, 456
    %v343 = vld [vmem:[%s342] sm:$0xff]
    %s344 = scalar_lea.vmem [#allocation2], 897
    %345 = vst [vmem:[%s344] ss:$8 sm:$0xf] %v343
    %s346 = scalar_lea.vmem [#allocation2], 897
    %347 = vst [vmem:[%s346] ss:$8 sm:$0xf0] %v343
    %s348 = scalar_lea.vmem %s0, 464
    %v349 = vld [vmem:[%s348] sm:$0xff]
    %s350 = scalar_lea.vmem [#allocation2], 898
    %351 = vst [vmem:[%s350] ss:$8 sm:$0xf] %v349
    %s352 = scalar_lea.vmem [#allocation2], 898
    %353 = vst [vmem:[%s352] ss:$8 sm:$0xf0] %v349
    %s354 = scalar_lea.vmem %s0, 472
    %v355 = vld [vmem:[%s354] sm:$0xff]
    %s356 = scalar_lea.vmem [#allocation2], 899
    %357 = vst [vmem:[%s356] ss:$8 sm:$0xf] %v355
    %s358 = scalar_lea.vmem [#allocation2], 899
    %359 = vst [vmem:[%s358] ss:$8 sm:$0xf0] %v355
    %s360 = scalar_lea.vmem %s0, 480
    %v361 = vld [vmem:[%s360] sm:$0xff]
    %s362 = scalar_lea.vmem [#allocation2], 960
    %363 = vst [vmem:[%s362] ss:$8 sm:$0xf] %v361
    %s364 = scalar_lea.vmem [#allocation2], 960
    %365 = vst [vmem:[%s364] ss:$8 sm:$0xf0] %v361
    %s366 = scalar_lea.vmem %s0, 488
    %v367 = vld [vmem:[%s366] sm:$0xff]
    %s368 = scalar_lea.vmem [#allocation2], 961
    %369 = vst [vmem:[%s368] ss:$8 sm:$0xf] %v367
    %s370 = scalar_lea.vmem [#allocation2], 961
    %371 = vst [vmem:[%s370] ss:$8 sm:$0xf0] %v367
    %s372 = scalar_lea.vmem %s0, 496
    %v373 = vld [vmem:[%s372] sm:$0xff]
    %s374 = scalar_lea.vmem [#allocation2], 962
    %375 = vst [vmem:[%s374] ss:$8 sm:$0xf] %v373
    %s376 = scalar_lea.vmem [#allocation2], 962
    %377 = vst [vmem:[%s376] ss:$8 sm:$0xf0] %v373
    %s378 = scalar_lea.vmem %s0, 504
    %v379 = vld [vmem:[%s378] sm:$0xff]
    %s380 = scalar_lea.vmem [#allocation2], 963
    %381 = vst [vmem:[%s380] ss:$8 sm:$0xf] %v379
    %s382 = scalar_lea.vmem [#allocation2], 963
    %383 = vst [vmem:[%s382] ss:$8 sm:$0xf0] %v379
    %s384 = scalar_lea.vmem %s0, 512
    %v385 = vld [vmem:[%s384] sm:$0xff]
    %s386 = scalar_lea.vmem [#allocation2], 1024
    %387 = vst [vmem:[%s386] ss:$8 sm:$0xf] %v385
    %s388 = scalar_lea.vmem [#allocation2], 1024
    %389 = vst [vmem:[%s388] ss:$8 sm:$0xf0] %v385
    %s390 = scalar_lea.vmem %s0, 520
    %v391 = vld [vmem:[%s390] sm:$0xff]
    %s392 = scalar_lea.vmem [#allocation2], 1025
    %393 = vst [vmem:[%s392] ss:$8 sm:$0xf] %v391
    %s394 = scalar_lea.vmem [#allocation2], 1025
    %395 = vst [vmem:[%s394] ss:$8 sm:$0xf0] %v391
    %s396 = scalar_lea.vmem %s0, 528
    %v397 = vld [vmem:[%s396] sm:$0xff]
    %s398 = scalar_lea.vmem [#allocation2], 1026
    %399 = vst [vmem:[%s398] ss:$8 sm:$0xf] %v397
    %s400 = scalar_lea.vmem [#allocation2], 1026
    %401 = vst [vmem:[%s400] ss:$8 sm:$0xf0] %v397
    %s402 = scalar_lea.vmem %s0, 536
    %v403 = vld [vmem:[%s402] sm:$0xff]
    %s404 = scalar_lea.vmem [#allocation2], 1027
    %405 = vst [vmem:[%s404] ss:$8 sm:$0xf] %v403
    %s406 = scalar_lea.vmem [#allocation2], 1027
    %407 = vst [vmem:[%s406] ss:$8 sm:$0xf0] %v403
    %s408 = scalar_lea.vmem %s0, 544
    %v409 = vld [vmem:[%s408] sm:$0xff]
    %s410 = scalar_lea.vmem [#allocation2], 1088
    %411 = vst [vmem:[%s410] ss:$8 sm:$0xf] %v409
    %s412 = scalar_lea.vmem [#allocation2], 1088
    %413 = vst [vmem:[%s412] ss:$8 sm:$0xf0] %v409
    %s414 = scalar_lea.vmem %s0, 552
    %v415 = vld [vmem:[%s414] sm:$0xff]
    %s416 = scalar_lea.vmem [#allocation2], 1089
    %417 = vst [vmem:[%s416] ss:$8 sm:$0xf] %v415
    %s418 = scalar_lea.vmem [#allocation2], 1089
    %419 = vst [vmem:[%s418] ss:$8 sm:$0xf0] %v415
    %s420 = scalar_lea.vmem %s0, 560
    %v421 = vld [vmem:[%s420] sm:$0xff]
    %s422 = scalar_lea.vmem [#allocation2], 1090
    %423 = vst [vmem:[%s422] ss:$8 sm:$0xf] %v421
    %s424 = scalar_lea.vmem [#allocation2], 1090
    %425 = vst [vmem:[%s424] ss:$8 sm:$0xf0] %v421
    %s426 = scalar_lea.vmem %s0, 568
    %v427 = vld [vmem:[%s426] sm:$0xff]
    %s428 = scalar_lea.vmem [#allocation2], 1091
    %429 = vst [vmem:[%s428] ss:$8 sm:$0xf] %v427
    %s430 = scalar_lea.vmem [#allocation2], 1091
    %431 = vst [vmem:[%s430] ss:$8 sm:$0xf0] %v427
    %s432 = scalar_lea.vmem %s0, 576
    %v433 = vld [vmem:[%s432] sm:$0xff]
    %s434 = scalar_lea.vmem [#allocation2], 1152
    %435 = vst [vmem:[%s434] ss:$8 sm:$0xf] %v433
    %s436 = scalar_lea.vmem [#allocation2], 1152
    %437 = vst [vmem:[%s436] ss:$8 sm:$0xf0] %v433
    %s438 = scalar_lea.vmem %s0, 584
    %v439 = vld [vmem:[%s438] sm:$0xff]
    %s440 = scalar_lea.vmem [#allocation2], 1153
    %441 = vst [vmem:[%s440] ss:$8 sm:$0xf] %v439
    %s442 = scalar_lea.vmem [#allocation2], 1153
    %443 = vst [vmem:[%s442] ss:$8 sm:$0xf0] %v439
    %s444 = scalar_lea.vmem %s0, 592
    %v445 = vld [vmem:[%s444] sm:$0xff]
    %s446 = scalar_lea.vmem [#allocation2], 1154
    %447 = vst [vmem:[%s446] ss:$8 sm:$0xf] %v445
    %s448 = scalar_lea.vmem [#allocation2], 1154
    %449 = vst [vmem:[%s448] ss:$8 sm:$0xf0] %v445
    %s450 = scalar_lea.vmem %s0, 600
    %v451 = vld [vmem:[%s450] sm:$0xff]
    %s452 = scalar_lea.vmem [#allocation2], 1155
    %453 = vst [vmem:[%s452] ss:$8 sm:$0xf] %v451
    %s454 = scalar_lea.vmem [#allocation2], 1155
    %455 = vst [vmem:[%s454] ss:$8 sm:$0xf0] %v451
    %s456 = scalar_lea.vmem %s0, 608
    %v457 = vld [vmem:[%s456] sm:$0xff]
    %s458 = scalar_lea.vmem [#allocation2], 1216
    %459 = vst [vmem:[%s458] ss:$8 sm:$0xf] %v457
    %s460 = scalar_lea.vmem [#allocation2], 1216
    %461 = vst [vmem:[%s460] ss:$8 sm:$0xf0] %v457
    %s462 = scalar_lea.vmem %s0, 616
    %v463 = vld [vmem:[%s462] sm:$0xff]
    %s464 = scalar_lea.vmem [#allocation2], 1217
    %465 = vst [vmem:[%s464] ss:$8 sm:$0xf] %v463
    %s466 = scalar_lea.vmem [#allocation2], 1217
    %467 = vst [vmem:[%s466] ss:$8 sm:$0xf0] %v463
    %s468 = scalar_lea.vmem %s0, 624
    %v469 = vld [vmem:[%s468] sm:$0xff]
    %s470 = scalar_lea.vmem [#allocation2], 1218
    %471 = vst [vmem:[%s470] ss:$8 sm:$0xf] %v469
    %s472 = scalar_lea.vmem [#allocation2], 1218
    %473 = vst [vmem:[%s472] ss:$8 sm:$0xf0] %v469
    %s474 = scalar_lea.vmem %s0, 632
    %v475 = vld [vmem:[%s474] sm:$0xff]
    %s476 = scalar_lea.vmem [#allocation2], 1219
    %477 = vst [vmem:[%s476] ss:$8 sm:$0xf] %v475
    %s478 = scalar_lea.vmem [#allocation2], 1219
    %479 = vst [vmem:[%s478] ss:$8 sm:$0xf0] %v475
    %s480 = scalar_lea.vmem %s0, 640
    %v481 = vld [vmem:[%s480] sm:$0xff]
    %s482 = scalar_lea.vmem [#allocation2], 1280
    %483 = vst [vmem:[%s482] ss:$8 sm:$0xf] %v481
    %s484 = scalar_lea.vmem [#allocation2], 1280
    %485 = vst [vmem:[%s484] ss:$8 sm:$0xf0] %v481
    %s486 = scalar_lea.vmem %s0, 648
    %v487 = vld [vmem:[%s486] sm:$0xff]
    %s488 = scalar_lea.vmem [#allocation2], 1281
    %489 = vst [vmem:[%s488] ss:$8 sm:$0xf] %v487
    %s490 = scalar_lea.vmem [#allocation2], 1281
    %491 = vst [vmem:[%s490] ss:$8 sm:$0xf0] %v487
    %s492 = scalar_lea.vmem %s0, 656
    %v493 = vld [vmem:[%s492] sm:$0xff]
    %s494 = scalar_lea.vmem [#allocation2], 1282
    %495 = vst [vmem:[%s494] ss:$8 sm:$0xf] %v493
    %s496 = scalar_lea.vmem [#allocation2], 1282
    %497 = vst [vmem:[%s496] ss:$8 sm:$0xf0] %v493
    %s498 = scalar_lea.vmem %s0, 664
    %v499 = vld [vmem:[%s498] sm:$0xff]
    %s500 = scalar_lea.vmem [#allocation2], 1283
    %501 = vst [vmem:[%s500] ss:$8 sm:$0xf] %v499
    %s502 = scalar_lea.vmem [#allocation2], 1283
    %503 = vst [vmem:[%s502] ss:$8 sm:$0xf0] %v499
    %s504 = scalar_lea.vmem %s0, 672
    %v505 = vld [vmem:[%s504] sm:$0xff]
    %s506 = scalar_lea.vmem [#allocation2], 1344
    %507 = vst [vmem:[%s506] ss:$8 sm:$0xf] %v505
    %s508 = scalar_lea.vmem [#allocation2], 1344
    %509 = vst [vmem:[%s508] ss:$8 sm:$0xf0] %v505
    %s510 = scalar_lea.vmem %s0, 680
    %v511 = vld [vmem:[%s510] sm:$0xff]
    %s512 = scalar_lea.vmem [#allocation2], 1345
    %513 = vst [vmem:[%s512] ss:$8 sm:$0xf] %v511
    %s514 = scalar_lea.vmem [#allocation2], 1345
    %515 = vst [vmem:[%s514] ss:$8 sm:$0xf0] %v511
    %s516 = scalar_lea.vmem %s0, 688
    %v517 = vld [vmem:[%s516] sm:$0xff]
    %s518 = scalar_lea.vmem [#allocation2], 1346
    %519 = vst [vmem:[%s518] ss:$8 sm:$0xf] %v517
    %s520 = scalar_lea.vmem [#allocation2], 1346
    %521 = vst [vmem:[%s520] ss:$8 sm:$0xf0] %v517
    %s522 = scalar_lea.vmem %s0, 696
    %v523 = vld [vmem:[%s522] sm:$0xff]
    %s524 = scalar_lea.vmem [#allocation2], 1347
    %525 = vst [vmem:[%s524] ss:$8 sm:$0xf] %v523
    %s526 = scalar_lea.vmem [#allocation2], 1347
    %527 = vst [vmem:[%s526] ss:$8 sm:$0xf0] %v523
    %s528 = scalar_lea.vmem %s0, 704
    %v529 = vld [vmem:[%s528] sm:$0xff]
    %s530 = scalar_lea.vmem [#allocation2], 1408
    %531 = vst [vmem:[%s530] ss:$8 sm:$0xf] %v529
    %s532 = scalar_lea.vmem [#allocation2], 1408
    %533 = vst [vmem:[%s532] ss:$8 sm:$0xf0] %v529
    %s534 = scalar_lea.vmem %s0, 712
    %v535 = vld [vmem:[%s534] sm:$0xff]
    %s536 = scalar_lea.vmem [#allocation2], 1409
    %537 = vst [vmem:[%s536] ss:$8 sm:$0xf] %v535
    %s538 = scalar_lea.vmem [#allocation2], 1409
    %539 = vst [vmem:[%s538] ss:$8 sm:$0xf0] %v535
    %s540 = scalar_lea.vmem %s0, 720
    %v541 = vld [vmem:[%s540] sm:$0xff]
    %s542 = scalar_lea.vmem [#allocation2], 1410
    %543 = vst [vmem:[%s542] ss:$8 sm:$0xf] %v541
    %s544 = scalar_lea.vmem [#allocation2], 1410
    %545 = vst [vmem:[%s544] ss:$8 sm:$0xf0] %v541
    %s546 = scalar_lea.vmem %s0, 728
    %v547 = vld [vmem:[%s546] sm:$0xff]
    %s548 = scalar_lea.vmem [#allocation2], 1411
    %549 = vst [vmem:[%s548] ss:$8 sm:$0xf] %v547
    %s550 = scalar_lea.vmem [#allocation2], 1411
    %551 = vst [vmem:[%s550] ss:$8 sm:$0xf0] %v547
    %s552 = scalar_lea.vmem %s0, 736
    %v553 = vld [vmem:[%s552] sm:$0xff]
    %s554 = scalar_lea.vmem [#allocation2], 1472
    %555 = vst [vmem:[%s554] ss:$8 sm:$0xf] %v553
    %s556 = scalar_lea.vmem [#allocation2], 1472
    %557 = vst [vmem:[%s556] ss:$8 sm:$0xf0] %v553
    %s558 = scalar_lea.vmem %s0, 744
    %v559 = vld [vmem:[%s558] sm:$0xff]
    %s560 = scalar_lea.vmem [#allocation2], 1473
    %561 = vst [vmem:[%s560] ss:$8 sm:$0xf] %v559
    %s562 = scalar_lea.vmem [#allocation2], 1473
    %563 = vst [vmem:[%s562] ss:$8 sm:$0xf0] %v559
    %s564 = scalar_lea.vmem %s0, 752
    %v565 = vld [vmem:[%s564] sm:$0xff]
    %s566 = scalar_lea.vmem [#allocation2], 1474
    %567 = vst [vmem:[%s566] ss:$8 sm:$0xf] %v565
    %s568 = scalar_lea.vmem [#allocation2], 1474
    %569 = vst [vmem:[%s568] ss:$8 sm:$0xf0] %v565
    %s570 = scalar_lea.vmem %s0, 760
    %v571 = vld [vmem:[%s570] sm:$0xff]
    %s572 = scalar_lea.vmem [#allocation2], 1475
    %573 = vst [vmem:[%s572] ss:$8 sm:$0xf] %v571
    %s574 = scalar_lea.vmem [#allocation2], 1475
    %575 = vst [vmem:[%s574] ss:$8 sm:$0xf0] %v571
    %s576 = scalar_lea.vmem %s0, 768
    %v577 = vld [vmem:[%s576] sm:$0xff]
    %s578 = scalar_lea.vmem [#allocation2], 1536
    %579 = vst [vmem:[%s578] ss:$8 sm:$0xf] %v577
    %s580 = scalar_lea.vmem [#allocation2], 1536
    %581 = vst [vmem:[%s580] ss:$8 sm:$0xf0] %v577
    %s582 = scalar_lea.vmem %s0, 776
    %v583 = vld [vmem:[%s582] sm:$0xff]
    %s584 = scalar_lea.vmem [#allocation2], 1537
    %585 = vst [vmem:[%s584] ss:$8 sm:$0xf] %v583
    %s586 = scalar_lea.vmem [#allocation2], 1537
    %587 = vst [vmem:[%s586] ss:$8 sm:$0xf0] %v583
    %s588 = scalar_lea.vmem %s0, 784
    %v589 = vld [vmem:[%s588] sm:$0xff]
    %s590 = scalar_lea.vmem [#allocation2], 1538
    %591 = vst [vmem:[%s590] ss:$8 sm:$0xf] %v589
    %s592 = scalar_lea.vmem [#allocation2], 1538
    %593 = vst [vmem:[%s592] ss:$8 sm:$0xf0] %v589
    %s594 = scalar_lea.vmem %s0, 792
    %v595 = vld [vmem:[%s594] sm:$0xff]
    %s596 = scalar_lea.vmem [#allocation2], 1539
    %597 = vst [vmem:[%s596] ss:$8 sm:$0xf] %v595
    %s598 = scalar_lea.vmem [#allocation2], 1539
    %599 = vst [vmem:[%s598] ss:$8 sm:$0xf0] %v595
    %s600 = scalar_lea.vmem %s0, 800
    %v601 = vld [vmem:[%s600] sm:$0xff]
    %s602 = scalar_lea.vmem [#allocation2], 1600
    %603 = vst [vmem:[%s602] ss:$8 sm:$0xf] %v601
    %s604 = scalar_lea.vmem [#allocation2], 1600
    %605 = vst [vmem:[%s604] ss:$8 sm:$0xf0] %v601
    %s606 = scalar_lea.vmem %s0, 808
    %v607 = vld [vmem:[%s606] sm:$0xff]
    %s608 = scalar_lea.vmem [#allocation2], 1601
    %609 = vst [vmem:[%s608] ss:$8 sm:$0xf] %v607
    %s610 = scalar_lea.vmem [#allocation2], 1601
    %611 = vst [vmem:[%s610] ss:$8 sm:$0xf0] %v607
    %s612 = scalar_lea.vmem %s0, 816
    %v613 = vld [vmem:[%s612] sm:$0xff]
    %s614 = scalar_lea.vmem [#allocation2], 1602
    %615 = vst [vmem:[%s614] ss:$8 sm:$0xf] %v613
    %s616 = scalar_lea.vmem [#allocation2], 1602
    %617 = vst [vmem:[%s616] ss:$8 sm:$0xf0] %v613
    %s618 = scalar_lea.vmem %s0, 824
    %v619 = vld [vmem:[%s618] sm:$0xff]
    %s620 = scalar_lea.vmem [#allocation2], 1603
    %621 = vst [vmem:[%s620] ss:$8 sm:$0xf] %v619
    %s622 = scalar_lea.vmem [#allocation2], 1603
    %623 = vst [vmem:[%s622] ss:$8 sm:$0xf0] %v619
    %s624 = scalar_lea.vmem %s0, 832
    %v625 = vld [vmem:[%s624] sm:$0xff]
    %s626 = scalar_lea.vmem [#allocation2], 1664
    %627 = vst [vmem:[%s626] ss:$8 sm:$0xf] %v625
    %s628 = scalar_lea.vmem [#allocation2], 1664
    %629 = vst [vmem:[%s628] ss:$8 sm:$0xf0] %v625
    %s630 = scalar_lea.vmem %s0, 840
    %v631 = vld [vmem:[%s630] sm:$0xff]
    %s632 = scalar_lea.vmem [#allocation2], 1665
    %633 = vst [vmem:[%s632] ss:$8 sm:$0xf] %v631
    %s634 = scalar_lea.vmem [#allocation2], 1665
    %635 = vst [vmem:[%s634] ss:$8 sm:$0xf0] %v631
    %s636 = scalar_lea.vmem %s0, 848
    %v637 = vld [vmem:[%s636] sm:$0xff]
    %s638 = scalar_lea.vmem [#allocation2], 1666
    %639 = vst [vmem:[%s638] ss:$8 sm:$0xf] %v637
    %s640 = scalar_lea.vmem [#allocation2], 1666
    %641 = vst [vmem:[%s640] ss:$8 sm:$0xf0] %v637
    %s642 = scalar_lea.vmem %s0, 856
    %v643 = vld [vmem:[%s642] sm:$0xff]
    %s644 = scalar_lea.vmem [#allocation2], 1667
    %645 = vst [vmem:[%s644] ss:$8 sm:$0xf] %v643
    %s646 = scalar_lea.vmem [#allocation2], 1667
    %647 = vst [vmem:[%s646] ss:$8 sm:$0xf0] %v643
    %s648 = scalar_lea.vmem %s0, 864
    %v649 = vld [vmem:[%s648] sm:$0xff]
    %s650 = scalar_lea.vmem [#allocation2], 1728
    %651 = vst [vmem:[%s650] ss:$8 sm:$0xf] %v649
    %s652 = scalar_lea.vmem [#allocation2], 1728
    %653 = vst [vmem:[%s652] ss:$8 sm:$0xf0] %v649
    %s654 = scalar_lea.vmem %s0, 872
    %v655 = vld [vmem:[%s654] sm:$0xff]
    %s656 = scalar_lea.vmem [#allocation2], 1729
    %657 = vst [vmem:[%s656] ss:$8 sm:$0xf] %v655
    %s658 = scalar_lea.vmem [#allocation2], 1729
    %659 = vst [vmem:[%s658] ss:$8 sm:$0xf0] %v655
    %s660 = scalar_lea.vmem %s0, 880
    %v661 = vld [vmem:[%s660] sm:$0xff]
    %s662 = scalar_lea.vmem [#allocation2], 1730
    %663 = vst [vmem:[%s662] ss:$8 sm:$0xf] %v661
    %s664 = scalar_lea.vmem [#allocation2], 1730
    %665 = vst [vmem:[%s664] ss:$8 sm:$0xf0] %v661
    %s666 = scalar_lea.vmem %s0, 888
    %v667 = vld [vmem:[%s666] sm:$0xff]
    %s668 = scalar_lea.vmem [#allocation2], 1731
    %669 = vst [vmem:[%s668] ss:$8 sm:$0xf] %v667
    %s670 = scalar_lea.vmem [#allocation2], 1731
    %671 = vst [vmem:[%s670] ss:$8 sm:$0xf0] %v667
    %s672 = scalar_lea.vmem %s0, 896
    %v673 = vld [vmem:[%s672] sm:$0xff]
    %s674 = scalar_lea.vmem [#allocation2], 1792
    %675 = vst [vmem:[%s674] ss:$8 sm:$0xf] %v673
    %s676 = scalar_lea.vmem [#allocation2], 1792
    %677 = vst [vmem:[%s676] ss:$8 sm:$0xf0] %v673
    %s678 = scalar_lea.vmem %s0, 904
    %v679 = vld [vmem:[%s678] sm:$0xff]
    %s680 = scalar_lea.vmem [#allocation2], 1793
    %681 = vst [vmem:[%s680] ss:$8 sm:$0xf] %v679
    %s682 = scalar_lea.vmem [#allocation2], 1793
    %683 = vst [vmem:[%s682] ss:$8 sm:$0xf0] %v679
    %s684 = scalar_lea.vmem %s0, 912
    %v685 = vld [vmem:[%s684] sm:$0xff]
    %s686 = scalar_lea.vmem [#allocation2], 1794
    %687 = vst [vmem:[%s686] ss:$8 sm:$0xf] %v685
    %s688 = scalar_lea.vmem [#allocation2], 1794
    %689 = vst [vmem:[%s688] ss:$8 sm:$0xf0] %v685
    %s690 = scalar_lea.vmem %s0, 920
    %v691 = vld [vmem:[%s690] sm:$0xff]
    %s692 = scalar_lea.vmem [#allocation2], 1795
    %693 = vst [vmem:[%s692] ss:$8 sm:$0xf] %v691
    %s694 = scalar_lea.vmem [#allocation2], 1795
    %695 = vst [vmem:[%s694] ss:$8 sm:$0xf0] %v691
    %s696 = scalar_lea.vmem %s0, 928
    %v697 = vld [vmem:[%s696] sm:$0xff]
    %s698 = scalar_lea.vmem [#allocation2], 1856
    %699 = vst [vmem:[%s698] ss:$8 sm:$0xf] %v697
    %s700 = scalar_lea.vmem [#allocation2], 1856
    %701 = vst [vmem:[%s700] ss:$8 sm:$0xf0] %v697
    %s702 = scalar_lea.vmem %s0, 936
    %v703 = vld [vmem:[%s702] sm:$0xff]
    %s704 = scalar_lea.vmem [#allocation2], 1857
    %705 = vst [vmem:[%s704] ss:$8 sm:$0xf] %v703
    %s706 = scalar_lea.vmem [#allocation2], 1857
    %707 = vst [vmem:[%s706] ss:$8 sm:$0xf0] %v703
    %s708 = scalar_lea.vmem %s0, 944
    %v709 = vld [vmem:[%s708] sm:$0xff]
    %s710 = scalar_lea.vmem [#allocation2], 1858
    %711 = vst [vmem:[%s710] ss:$8 sm:$0xf] %v709
    %s712 = scalar_lea.vmem [#allocation2], 1858
    %713 = vst [vmem:[%s712] ss:$8 sm:$0xf0] %v709
    %s714 = scalar_lea.vmem %s0, 952
    %v715 = vld [vmem:[%s714] sm:$0xff]
    %s716 = scalar_lea.vmem [#allocation2], 1859
    %717 = vst [vmem:[%s716] ss:$8 sm:$0xf] %v715
    %s718 = scalar_lea.vmem [#allocation2], 1859
    %719 = vst [vmem:[%s718] ss:$8 sm:$0xf0] %v715
    %s720 = scalar_lea.vmem %s0, 960
    %v721 = vld [vmem:[%s720] sm:$0xff]
    %s722 = scalar_lea.vmem [#allocation2], 1920
    %723 = vst [vmem:[%s722] ss:$8 sm:$0xf] %v721
    %s724 = scalar_lea.vmem [#allocation2], 1920
    %725 = vst [vmem:[%s724] ss:$8 sm:$0xf0] %v721
    %s726 = scalar_lea.vmem %s0, 968
    %v727 = vld [vmem:[%s726] sm:$0xff]
    %s728 = scalar_lea.vmem [#allocation2], 1921
    %729 = vst [vmem:[%s728] ss:$8 sm:$0xf] %v727
    %s730 = scalar_lea.vmem [#allocation2], 1921
    %731 = vst [vmem:[%s730] ss:$8 sm:$0xf0] %v727
    %s732 = scalar_lea.vmem %s0, 976
    %v733 = vld [vmem:[%s732] sm:$0xff]
    %s734 = scalar_lea.vmem [#allocation2], 1922
    %735 = vst [vmem:[%s734] ss:$8 sm:$0xf] %v733
    %s736 = scalar_lea.vmem [#allocation2], 1922
    %737 = vst [vmem:[%s736] ss:$8 sm:$0xf0] %v733
    %s738 = scalar_lea.vmem %s0, 984
    %v739 = vld [vmem:[%s738] sm:$0xff]
    %s740 = scalar_lea.vmem [#allocation2], 1923
    %741 = vst [vmem:[%s740] ss:$8 sm:$0xf] %v739
    %s742 = scalar_lea.vmem [#allocation2], 1923
    %743 = vst [vmem:[%s742] ss:$8 sm:$0xf0] %v739
    %s744 = scalar_lea.vmem %s0, 992
    %v745 = vld [vmem:[%s744] sm:$0xff]
    %s746 = scalar_lea.vmem [#allocation2], 1984
    %747 = vst [vmem:[%s746] ss:$8 sm:$0xf] %v745
    %s748 = scalar_lea.vmem [#allocation2], 1984
    %749 = vst [vmem:[%s748] ss:$8 sm:$0xf0] %v745
    %s750 = scalar_lea.vmem %s0, 1000
    %v751 = vld [vmem:[%s750] sm:$0xff]
    %s752 = scalar_lea.vmem [#allocation2], 1985
    %753 = vst [vmem:[%s752] ss:$8 sm:$0xf] %v751
    %s754 = scalar_lea.vmem [#allocation2], 1985
    %755 = vst [vmem:[%s754] ss:$8 sm:$0xf0] %v751
    %s756 = scalar_lea.vmem %s0, 1008
    %v757 = vld [vmem:[%s756] sm:$0xff]
    %s758 = scalar_lea.vmem [#allocation2], 1986
    %759 = vst [vmem:[%s758] ss:$8 sm:$0xf] %v757
    %s760 = scalar_lea.vmem [#allocation2], 1986
    %761 = vst [vmem:[%s760] ss:$8 sm:$0xf0] %v757
    %s762 = scalar_lea.vmem %s0, 1016
    %v763 = vld [vmem:[%s762] sm:$0xff]
    %s764 = scalar_lea.vmem [#allocation2], 1987
    %765 = vst [vmem:[%s764] ss:$8 sm:$0xf] %v763
    %s766 = scalar_lea.vmem [#allocation2], 1987
    %767 = vst [vmem:[%s766] ss:$8 sm:$0xf0] %v763
    %s769 = sshllo.u32 0, 4
    %v771 = vld [vmem:[#allocation2] sm:%s769]
    %s772 = sshllo.u32 0, 4
    %773 = vst [vmem:[#allocation0] sm:%s772] %v771
    %s774 = scalar_lea.vmem [#allocation2], 8
    %v775 = vld [vmem:[%s774] sm:%s769]
    %s776 = sshllo.u32 0, 4
    %s777 = scalar_lea.vmem [#allocation0], 4
    %778 = vst [vmem:[%s777] sm:%s776] %v775
    %s779 = scalar_lea.vmem [#allocation2], 16
    %v780 = vld [vmem:[%s779] sm:%s769]
    %s781 = sshllo.u32 0, 4
    %s782 = smul.addr 4, 2
    %s783 = scalar_lea.vmem [#allocation0], %s782
    %784 = vst [vmem:[%s783] sm:%s781] %v780
    %s785 = scalar_lea.vmem [#allocation2], 24
    %v786 = vld [vmem:[%s785] sm:%s769]
    %s787 = sshllo.u32 0, 4
    %s788 = smul.addr 4, 3
    %s789 = scalar_lea.vmem [#allocation0], %s788
    %790 = vst [vmem:[%s789] sm:%s787] %v786
    %s791 = scalar_lea.vmem [#allocation2], 32
    %v792 = vld [vmem:[%s791] sm:%s769]
    %s793 = sshllo.u32 0, 4
    %s794 = smul.addr 4, 4
    %s795 = scalar_lea.vmem [#allocation0], %s794
    %796 = vst [vmem:[%s795] sm:%s793] %v792
    %s797 = scalar_lea.vmem [#allocation2], 40
    %v798 = vld [vmem:[%s797] sm:%s769]
    %s799 = sshllo.u32 0, 4
    %s800 = smul.addr 4, 5
    %s801 = scalar_lea.vmem [#allocation0], %s800
    %802 = vst [vmem:[%s801] sm:%s799] %v798
    %s803 = scalar_lea.vmem [#allocation2], 48
    %v804 = vld [vmem:[%s803] sm:%s769]
    %s805 = sshllo.u32 0, 4
    %s806 = smul.addr 4, 6
    %s807 = scalar_lea.vmem [#allocation0], %s806
    %808 = vst [vmem:[%s807] sm:%s805] %v804
    %s809 = scalar_lea.vmem [#allocation2], 56
    %v810 = vld [vmem:[%s809] sm:%s769]
    %s811 = sshllo.u32 0, 4
    %s812 = smul.addr 4, 7
    %s813 = scalar_lea.vmem [#allocation0], %s812
    %814 = vst [vmem:[%s813] sm:%s811] %v810
    %s815 = scalar_lea.vmem [#allocation2], 64
    %v816 = vld [vmem:[%s815] sm:%s769]
    %s817 = sshllo.u32 0, 4
    %s818 = smul.addr 4, 8
    %s819 = scalar_lea.vmem [#allocation0], %s818
    %820 = vst [vmem:[%s819] sm:%s817] %v816
    %s821 = scalar_lea.vmem [#allocation2], 72
    %v822 = vld [vmem:[%s821] sm:%s769]
    %s823 = sshllo.u32 0, 4
    %s824 = smul.addr 4, 9
    %s825 = scalar_lea.vmem [#allocation0], %s824
    %826 = vst [vmem:[%s825] sm:%s823] %v822
    %s827 = scalar_lea.vmem [#allocation2], 80
    %v828 = vld [vmem:[%s827] sm:%s769]
    %s829 = sshllo.u32 0, 4
    %s830 = smul.addr 4, 10
    %s831 = scalar_lea.vmem [#allocation0], %s830
    %832 = vst [vmem:[%s831] sm:%s829] %v828
    %s833 = scalar_lea.vmem [#allocation2], 88
    %v834 = vld [vmem:[%s833] sm:%s769]
    %s835 = sshllo.u32 0, 4
    %s836 = smul.addr 4, 11
    %s837 = scalar_lea.vmem [#allocation0], %s836
    %838 = vst [vmem:[%s837] sm:%s835] %v834
    %s839 = scalar_lea.vmem [#allocation2], 96
    %v840 = vld [vmem:[%s839] sm:%s769]
    %s841 = sshllo.u32 0, 4
    %s842 = smul.addr 4, 12
    %s843 = scalar_lea.vmem [#allocation0], %s842
    %844 = vst [vmem:[%s843] sm:%s841] %v840
    %s845 = scalar_lea.vmem [#allocation2], 104
    %v846 = vld [vmem:[%s845] sm:%s769]
    %s847 = sshllo.u32 0, 4
    %s848 = smul.addr 4, 13
    %s849 = scalar_lea.vmem [#allocation0], %s848
    %850 = vst [vmem:[%s849] sm:%s847] %v846
    %s851 = scalar_lea.vmem [#allocation2], 112
    %v852 = vld [vmem:[%s851] sm:%s769]
    %s853 = sshllo.u32 0, 4
    %s854 = smul.addr 4, 14
    %s855 = scalar_lea.vmem [#allocation0], %s854
    %856 = vst [vmem:[%s855] sm:%s853] %v852
    %s857 = scalar_lea.vmem [#allocation2], 120
    %v858 = vld [vmem:[%s857] sm:%s769]
    %s859 = sshllo.u32 0, 4
    %s860 = smul.addr 4, 15
    %s861 = scalar_lea.vmem [#allocation0], %s860
    %862 = vst [vmem:[%s861] sm:%s859] %v858
    %s863 = scalar_lea.vmem [#allocation2], 128
    %v864 = vld [vmem:[%s863] sm:%s769]
    %s865 = sshllo.u32 0, 4
    %s866 = smul.addr 4, 16
    %s867 = scalar_lea.vmem [#allocation0], %s866
    %868 = vst [vmem:[%s867] sm:%s865] %v864
    %s869 = scalar_lea.vmem [#allocation2], 136
    %v870 = vld [vmem:[%s869] sm:%s769]
    %s871 = sshllo.u32 0, 4
    %s872 = smul.addr 4, 17
    %s873 = scalar_lea.vmem [#allocation0], %s872
    %874 = vst [vmem:[%s873] sm:%s871] %v870
    %s875 = scalar_lea.vmem [#allocation2], 144
    %v876 = vld [vmem:[%s875] sm:%s769]
    %s877 = sshllo.u32 0, 4
    %s878 = smul.addr 4, 18
    %s879 = scalar_lea.vmem [#allocation0], %s878
    %880 = vst [vmem:[%s879] sm:%s877] %v876
    %s881 = scalar_lea.vmem [#allocation2], 152
    %v882 = vld [vmem:[%s881] sm:%s769]
    %s883 = sshllo.u32 0, 4
    %s884 = smul.addr 4, 19
    %s885 = scalar_lea.vmem [#allocation0], %s884
    %886 = vst [vmem:[%s885] sm:%s883] %v882
    %s887 = scalar_lea.vmem [#allocation2], 160
    %v888 = vld [vmem:[%s887] sm:%s769]
    %s889 = sshllo.u32 0, 4
    %s890 = smul.addr 4, 20
    %s891 = scalar_lea.vmem [#allocation0], %s890
    %892 = vst [vmem:[%s891] sm:%s889] %v888
    %s893 = scalar_lea.vmem [#allocation2], 168
    %v894 = vld [vmem:[%s893] sm:%s769]
    %s895 = sshllo.u32 0, 4
    %s896 = smul.addr 4, 21
    %s897 = scalar_lea.vmem [#allocation0], %s896
    %898 = vst [vmem:[%s897] sm:%s895] %v894
    %s899 = scalar_lea.vmem [#allocation2], 176
    %v900 = vld [vmem:[%s899] sm:%s769]
    %s901 = sshllo.u32 0, 4
    %s902 = smul.addr 4, 22
    %s903 = scalar_lea.vmem [#allocation0], %s902
    %904 = vst [vmem:[%s903] sm:%s901] %v900
    %s905 = scalar_lea.vmem [#allocation2], 184
    %v906 = vld [vmem:[%s905] sm:%s769]
    %s907 = sshllo.u32 0, 4
    %s908 = smul.addr 4, 23
    %s909 = scalar_lea.vmem [#allocation0], %s908
    %910 = vst [vmem:[%s909] sm:%s907] %v906
    %s911 = scalar_lea.vmem [#allocation2], 192
    %v912 = vld [vmem:[%s911] sm:%s769]
    %s913 = sshllo.u32 0, 4
    %s914 = smul.addr 4, 24
    %s915 = scalar_lea.vmem [#allocation0], %s914
    %916 = vst [vmem:[%s915] sm:%s913] %v912
    %s917 = scalar_lea.vmem [#allocation2], 200
    %v918 = vld [vmem:[%s917] sm:%s769]
    %s919 = sshllo.u32 0, 4
    %s920 = smul.addr 4, 25
    %s921 = scalar_lea.vmem [#allocation0], %s920
    %922 = vst [vmem:[%s921] sm:%s919] %v918
    %s923 = scalar_lea.vmem [#allocation2], 208
    %v924 = vld [vmem:[%s923] sm:%s769]
    %s925 = sshllo.u32 0, 4
    %s926 = smul.addr 4, 26
    %s927 = scalar_lea.vmem [#allocation0], %s926
    %928 = vst [vmem:[%s927] sm:%s925] %v924
    %s929 = scalar_lea.vmem [#allocation2], 216
    %v930 = vld [vmem:[%s929] sm:%s769]
    %s931 = sshllo.u32 0, 4
    %s932 = smul.addr 4, 27
    %s933 = scalar_lea.vmem [#allocation0], %s932
    %934 = vst [vmem:[%s933] sm:%s931] %v930
    %s935 = scalar_lea.vmem [#allocation2], 224
    %v936 = vld [vmem:[%s935] sm:%s769]
    %s937 = sshllo.u32 0, 4
    %s938 = smul.addr 4, 28
    %s939 = scalar_lea.vmem [#allocation0], %s938
    %940 = vst [vmem:[%s939] sm:%s937] %v936
    %s941 = scalar_lea.vmem [#allocation2], 232
    %v942 = vld [vmem:[%s941] sm:%s769]
    %s943 = sshllo.u32 0, 4
    %s944 = smul.addr 4, 29
    %s945 = scalar_lea.vmem [#allocation0], %s944
    %946 = vst [vmem:[%s945] sm:%s943] %v942
    %s947 = scalar_lea.vmem [#allocation2], 240
    %v948 = vld [vmem:[%s947] sm:%s769]
    %s949 = sshllo.u32 0, 4
    %s950 = smul.addr 4, 30
    %s951 = scalar_lea.vmem [#allocation0], %s950
    %952 = vst [vmem:[%s951] sm:%s949] %v948
    %s953 = scalar_lea.vmem [#allocation2], 248
    %v954 = vld [vmem:[%s953] sm:%s769]
    %s955 = sshllo.u32 0, 4
    %s956 = smul.addr 4, 31
    %s957 = scalar_lea.vmem [#allocation0], %s956
    %958 = vst [vmem:[%s957] sm:%s955] %v954
    %s959 = scalar_lea.vmem [#allocation2], 256
    %v960 = vld [vmem:[%s959] sm:%s769]
    %s961 = sshllo.u32 0, 4
    %s962 = smul.addr 4, 32
    %s963 = scalar_lea.vmem [#allocation0], %s962
    %964 = vst [vmem:[%s963] sm:%s961] %v960
    %s965 = scalar_lea.vmem [#allocation2], 264
    %v966 = vld [vmem:[%s965] sm:%s769]
    %s967 = sshllo.u32 0, 4
    %s968 = smul.addr 4, 33
    %s969 = scalar_lea.vmem [#allocation0], %s968
    %970 = vst [vmem:[%s969] sm:%s967] %v966
    %s971 = scalar_lea.vmem [#allocation2], 272
    %v972 = vld [vmem:[%s971] sm:%s769]
    %s973 = sshllo.u32 0, 4
    %s974 = smul.addr 4, 34
    %s975 = scalar_lea.vmem [#allocation0], %s974
    %976 = vst [vmem:[%s975] sm:%s973] %v972
    %s977 = scalar_lea.vmem [#allocation2], 280
    %v978 = vld [vmem:[%s977] sm:%s769]
    %s979 = sshllo.u32 0, 4
    %s980 = smul.addr 4, 35
    %s981 = scalar_lea.vmem [#allocation0], %s980
    %982 = vst [vmem:[%s981] sm:%s979] %v978
    %s983 = scalar_lea.vmem [#allocation2], 288
    %v984 = vld [vmem:[%s983] sm:%s769]
    %s985 = sshllo.u32 0, 4
    %s986 = smul.addr 4, 36
    %s987 = scalar_lea.vmem [#allocation0], %s986
    %988 = vst [vmem:[%s987] sm:%s985] %v984
    %s989 = scalar_lea.vmem [#allocation2], 296
    %v990 = vld [vmem:[%s989] sm:%s769]
    %s991 = sshllo.u32 0, 4
    %s992 = smul.addr 4, 37
    %s993 = scalar_lea.vmem [#allocation0], %s992
    %994 = vst [vmem:[%s993] sm:%s991] %v990
    %s995 = scalar_lea.vmem [#allocation2], 304
    %v996 = vld [vmem:[%s995] sm:%s769]
    %s997 = sshllo.u32 0, 4
    %s998 = smul.addr 4, 38
    %s999 = scalar_lea.vmem [#allocation0], %s998
    %1000 = vst [vmem:[%s999] sm:%s997] %v996
    %s1001 = scalar_lea.vmem [#allocation2], 312
    %v1002 = vld [vmem:[%s1001] sm:%s769]
    %s1003 = sshllo.u32 0, 4
    %s1004 = smul.addr 4, 39
    %s1005 = scalar_lea.vmem [#allocation0], %s1004
    %1006 = vst [vmem:[%s1005] sm:%s1003] %v1002
    %s1007 = scalar_lea.vmem [#allocation2], 320
    %v1008 = vld [vmem:[%s1007] sm:%s769]
    %s1009 = sshllo.u32 0, 4
    %s1010 = smul.addr 4, 40
    %s1011 = scalar_lea.vmem [#allocation0], %s1010
    %1012 = vst [vmem:[%s1011] sm:%s1009] %v1008
    %s1013 = scalar_lea.vmem [#allocation2], 328
    %v1014 = vld [vmem:[%s1013] sm:%s769]
    %s1015 = sshllo.u32 0, 4
    %s1016 = smul.addr 4, 41
    %s1017 = scalar_lea.vmem [#allocation0], %s1016
    %1018 = vst [vmem:[%s1017] sm:%s1015] %v1014
    %s1019 = scalar_lea.vmem [#allocation2], 336
    %v1020 = vld [vmem:[%s1019] sm:%s769]
    %s1021 = sshllo.u32 0, 4
    %s1022 = smul.addr 4, 42
    %s1023 = scalar_lea.vmem [#allocation0], %s1022
    %1024 = vst [vmem:[%s1023] sm:%s1021] %v1020
    %s1025 = scalar_lea.vmem [#allocation2], 344
    %v1026 = vld [vmem:[%s1025] sm:%s769]
    %s1027 = sshllo.u32 0, 4
    %s1028 = smul.addr 4, 43
    %s1029 = scalar_lea.vmem [#allocation0], %s1028
    %1030 = vst [vmem:[%s1029] sm:%s1027] %v1026
    %s1031 = scalar_lea.vmem [#allocation2], 352
    %v1032 = vld [vmem:[%s1031] sm:%s769]
    %s1033 = sshllo.u32 0, 4
    %s1034 = smul.addr 4, 44
    %s1035 = scalar_lea.vmem [#allocation0], %s1034
    %1036 = vst [vmem:[%s1035] sm:%s1033] %v1032
    %s1037 = scalar_lea.vmem [#allocation2], 360
    %v1038 = vld [vmem:[%s1037] sm:%s769]
    %s1039 = sshllo.u32 0, 4
    %s1040 = smul.addr 4, 45
    %s1041 = scalar_lea.vmem [#allocation0], %s1040
    %1042 = vst [vmem:[%s1041] sm:%s1039] %v1038
    %s1043 = scalar_lea.vmem [#allocation2], 368
    %v1044 = vld [vmem:[%s1043] sm:%s769]
    %s1045 = sshllo.u32 0, 4
    %s1046 = smul.addr 4, 46
    %s1047 = scalar_lea.vmem [#allocation0], %s1046
    %1048 = vst [vmem:[%s1047] sm:%s1045] %v1044
    %s1049 = scalar_lea.vmem [#allocation2], 376
    %v1050 = vld [vmem:[%s1049] sm:%s769]
    %s1051 = sshllo.u32 0, 4
    %s1052 = smul.addr 4, 47
    %s1053 = scalar_lea.vmem [#allocation0], %s1052
    %1054 = vst [vmem:[%s1053] sm:%s1051] %v1050
    %s1055 = scalar_lea.vmem [#allocation2], 384
    %v1056 = vld [vmem:[%s1055] sm:%s769]
    %s1057 = sshllo.u32 0, 4
    %s1058 = smul.addr 4, 48
    %s1059 = scalar_lea.vmem [#allocation0], %s1058
    %1060 = vst [vmem:[%s1059] sm:%s1057] %v1056
    %s1061 = scalar_lea.vmem [#allocation2], 392
    %v1062 = vld [vmem:[%s1061] sm:%s769]
    %s1063 = sshllo.u32 0, 4
    %s1064 = smul.addr 4, 49
    %s1065 = scalar_lea.vmem [#allocation0], %s1064
    %1066 = vst [vmem:[%s1065] sm:%s1063] %v1062
    %s1067 = scalar_lea.vmem [#allocation2], 400
    %v1068 = vld [vmem:[%s1067] sm:%s769]
    %s1069 = sshllo.u32 0, 4
    %s1070 = smul.addr 4, 50
    %s1071 = scalar_lea.vmem [#allocation0], %s1070
    %1072 = vst [vmem:[%s1071] sm:%s1069] %v1068
    %s1073 = scalar_lea.vmem [#allocation2], 408
    %v1074 = vld [vmem:[%s1073] sm:%s769]
    %s1075 = sshllo.u32 0, 4
    %s1076 = smul.addr 4, 51
    %s1077 = scalar_lea.vmem [#allocation0], %s1076
    %1078 = vst [vmem:[%s1077] sm:%s1075] %v1074
    %s1079 = scalar_lea.vmem [#allocation2], 416
    %v1080 = vld [vmem:[%s1079] sm:%s769]
    %s1081 = sshllo.u32 0, 4
    %s1082 = smul.addr 4, 52
    %s1083 = scalar_lea.vmem [#allocation0], %s1082
    %1084 = vst [vmem:[%s1083] sm:%s1081] %v1080
    %s1085 = scalar_lea.vmem [#allocation2], 424
    %v1086 = vld [vmem:[%s1085] sm:%s769]
    %s1087 = sshllo.u32 0, 4
    %s1088 = smul.addr 4, 53
    %s1089 = scalar_lea.vmem [#allocation0], %s1088
    %1090 = vst [vmem:[%s1089] sm:%s1087] %v1086
    %s1091 = scalar_lea.vmem [#allocation2], 432
    %v1092 = vld [vmem:[%s1091] sm:%s769]
    %s1093 = sshllo.u32 0, 4
    %s1094 = smul.addr 4, 54
    %s1095 = scalar_lea.vmem [#allocation0], %s1094
    %1096 = vst [vmem:[%s1095] sm:%s1093] %v1092
    %s1097 = scalar_lea.vmem [#allocation2], 440
    %v1098 = vld [vmem:[%s1097] sm:%s769]
    %s1099 = sshllo.u32 0, 4
    %s1100 = smul.addr 4, 55
    %s1101 = scalar_lea.vmem [#allocation0], %s1100
    %1102 = vst [vmem:[%s1101] sm:%s1099] %v1098
    %s1103 = scalar_lea.vmem [#allocation2], 448
    %v1104 = vld [vmem:[%s1103] sm:%s769]
    %s1105 = sshllo.u32 0, 4
    %s1106 = smul.addr 4, 56
    %s1107 = scalar_lea.vmem [#allocation0], %s1106
    %1108 = vst [vmem:[%s1107] sm:%s1105] %v1104
    %s1109 = scalar_lea.vmem [#allocation2], 456
    %v1110 = vld [vmem:[%s1109] sm:%s769]
    %s1111 = sshllo.u32 0, 4
    %s1112 = smul.addr 4, 57
    %s1113 = scalar_lea.vmem [#allocation0], %s1112
    %1114 = vst [vmem:[%s1113] sm:%s1111] %v1110
    %s1115 = scalar_lea.vmem [#allocation2], 464
    %v1116 = vld [vmem:[%s1115] sm:%s769]
    %s1117 = sshllo.u32 0, 4
    %s1118 = smul.addr 4, 58
    %s1119 = scalar_lea.vmem [#allocation0], %s1118
    %1120 = vst [vmem:[%s1119] sm:%s1117] %v1116
    %s1121 = scalar_lea.vmem [#allocation2], 472
    %v1122 = vld [vmem:[%s1121] sm:%s769]
    %s1123 = sshllo.u32 0, 4
    %s1124 = smul.addr 4, 59
    %s1125 = scalar_lea.vmem [#allocation0], %s1124
    %1126 = vst [vmem:[%s1125] sm:%s1123] %v1122
    %s1127 = scalar_lea.vmem [#allocation2], 480
    %v1128 = vld [vmem:[%s1127] sm:%s769]
    %s1129 = sshllo.u32 0, 4
    %s1130 = smul.addr 4, 60
    %s1131 = scalar_lea.vmem [#allocation0], %s1130
    %1132 = vst [vmem:[%s1131] sm:%s1129] %v1128
    %s1133 = scalar_lea.vmem [#allocation2], 488
    %v1134 = vld [vmem:[%s1133] sm:%s769]
    %s1135 = sshllo.u32 0, 4
    %s1136 = smul.addr 4, 61
    %s1137 = scalar_lea.vmem [#allocation0], %s1136
    %1138 = vst [vmem:[%s1137] sm:%s1135] %v1134
    %s1139 = scalar_lea.vmem [#allocation2], 496
    %v1140 = vld [vmem:[%s1139] sm:%s769]
    %s1141 = sshllo.u32 0, 4
    %s1142 = smul.addr 4, 62
    %s1143 = scalar_lea.vmem [#allocation0], %s1142
    %1144 = vst [vmem:[%s1143] sm:%s1141] %v1140
    %s1145 = scalar_lea.vmem [#allocation2], 504
    %v1146 = vld [vmem:[%s1145] sm:%s769]
    %s1147 = sshllo.u32 0, 4
    %s1148 = smul.addr 4, 63
    %s1149 = scalar_lea.vmem [#allocation0], %s1148
    %1150 = vst [vmem:[%s1149] sm:%s1147] %v1146
    %s1151 = scalar_lea.vmem [#allocation2], 512
    %v1152 = vld [vmem:[%s1151] sm:%s769]
    %s1153 = sshllo.u32 0, 4
    %s1154 = smul.addr 4, 64
    %s1155 = scalar_lea.vmem [#allocation0], %s1154
    %1156 = vst [vmem:[%s1155] sm:%s1153] %v1152
    %s1157 = scalar_lea.vmem [#allocation2], 520
    %v1158 = vld [vmem:[%s1157] sm:%s769]
    %s1159 = sshllo.u32 0, 4
    %s1160 = smul.addr 4, 65
    %s1161 = scalar_lea.vmem [#allocation0], %s1160
    %1162 = vst [vmem:[%s1161] sm:%s1159] %v1158
    %s1163 = scalar_lea.vmem [#allocation2], 528
    %v1164 = vld [vmem:[%s1163] sm:%s769]
    %s1165 = sshllo.u32 0, 4
    %s1166 = smul.addr 4, 66
    %s1167 = scalar_lea.vmem [#allocation0], %s1166
    %1168 = vst [vmem:[%s1167] sm:%s1165] %v1164
    %s1169 = scalar_lea.vmem [#allocation2], 536
    %v1170 = vld [vmem:[%s1169] sm:%s769]
    %s1171 = sshllo.u32 0, 4
    %s1172 = smul.addr 4, 67
    %s1173 = scalar_lea.vmem [#allocation0], %s1172
    %1174 = vst [vmem:[%s1173] sm:%s1171] %v1170
    %s1175 = scalar_lea.vmem [#allocation2], 544
    %v1176 = vld [vmem:[%s1175] sm:%s769]
    %s1177 = sshllo.u32 0, 4
    %s1178 = smul.addr 4, 68
    %s1179 = scalar_lea.vmem [#allocation0], %s1178
    %1180 = vst [vmem:[%s1179] sm:%s1177] %v1176
    %s1181 = scalar_lea.vmem [#allocation2], 552
    %v1182 = vld [vmem:[%s1181] sm:%s769]
    %s1183 = sshllo.u32 0, 4
    %s1184 = smul.addr 4, 69
    %s1185 = scalar_lea.vmem [#allocation0], %s1184
    %1186 = vst [vmem:[%s1185] sm:%s1183] %v1182
    %s1187 = scalar_lea.vmem [#allocation2], 560
    %v1188 = vld [vmem:[%s1187] sm:%s769]
    %s1189 = sshllo.u32 0, 4
    %s1190 = smul.addr 4, 70
    %s1191 = scalar_lea.vmem [#allocation0], %s1190
    %1192 = vst [vmem:[%s1191] sm:%s1189] %v1188
    %s1193 = scalar_lea.vmem [#allocation2], 568
    %v1194 = vld [vmem:[%s1193] sm:%s769]
    %s1195 = sshllo.u32 0, 4
    %s1196 = smul.addr 4, 71
    %s1197 = scalar_lea.vmem [#allocation0], %s1196
    %1198 = vst [vmem:[%s1197] sm:%s1195] %v1194
    %s1199 = scalar_lea.vmem [#allocation2], 576
    %v1200 = vld [vmem:[%s1199] sm:%s769]
    %s1201 = sshllo.u32 0, 4
    %s1202 = smul.addr 4, 72
    %s1203 = scalar_lea.vmem [#allocation0], %s1202
    %1204 = vst [vmem:[%s1203] sm:%s1201] %v1200
    %s1205 = scalar_lea.vmem [#allocation2], 584
    %v1206 = vld [vmem:[%s1205] sm:%s769]
    %s1207 = sshllo.u32 0, 4
    %s1208 = smul.addr 4, 73
    %s1209 = scalar_lea.vmem [#allocation0], %s1208
    %1210 = vst [vmem:[%s1209] sm:%s1207] %v1206
    %s1211 = scalar_lea.vmem [#allocation2], 592
    %v1212 = vld [vmem:[%s1211] sm:%s769]
    %s1213 = sshllo.u32 0, 4
    %s1214 = smul.addr 4, 74
    %s1215 = scalar_lea.vmem [#allocation0], %s1214
    %1216 = vst [vmem:[%s1215] sm:%s1213] %v1212
    %s1217 = scalar_lea.vmem [#allocation2], 600
    %v1218 = vld [vmem:[%s1217] sm:%s769]
    %s1219 = sshllo.u32 0, 4
    %s1220 = smul.addr 4, 75
    %s1221 = scalar_lea.vmem [#allocation0], %s1220
    %1222 = vst [vmem:[%s1221] sm:%s1219] %v1218
    %s1223 = scalar_lea.vmem [#allocation2], 608
    %v1224 = vld [vmem:[%s1223] sm:%s769]
    %s1225 = sshllo.u32 0, 4
    %s1226 = smul.addr 4, 76
    %s1227 = scalar_lea.vmem [#allocation0], %s1226
    %1228 = vst [vmem:[%s1227] sm:%s1225] %v1224
    %s1229 = scalar_lea.vmem [#allocation2], 616
    %v1230 = vld [vmem:[%s1229] sm:%s769]
    %s1231 = sshllo.u32 0, 4
    %s1232 = smul.addr 4, 77
    %s1233 = scalar_lea.vmem [#allocation0], %s1232
    %1234 = vst [vmem:[%s1233] sm:%s1231] %v1230
    %s1235 = scalar_lea.vmem [#allocation2], 624
    %v1236 = vld [vmem:[%s1235] sm:%s769]
    %s1237 = sshllo.u32 0, 4
    %s1238 = smul.addr 4, 78
    %s1239 = scalar_lea.vmem [#allocation0], %s1238
    %1240 = vst [vmem:[%s1239] sm:%s1237] %v1236
    %s1241 = scalar_lea.vmem [#allocation2], 632
    %v1242 = vld [vmem:[%s1241] sm:%s769]
    %s1243 = sshllo.u32 0, 4
    %s1244 = smul.addr 4, 79
    %s1245 = scalar_lea.vmem [#allocation0], %s1244
    %1246 = vst [vmem:[%s1245] sm:%s1243] %v1242
    %s1247 = scalar_lea.vmem [#allocation2], 640
    %v1248 = vld [vmem:[%s1247] sm:%s769]
    %s1249 = sshllo.u32 0, 4
    %s1250 = smul.addr 4, 80
    %s1251 = scalar_lea.vmem [#allocation0], %s1250
    %1252 = vst [vmem:[%s1251] sm:%s1249] %v1248
    %s1253 = scalar_lea.vmem [#allocation2], 648
    %v1254 = vld [vmem:[%s1253] sm:%s769]
    %s1255 = sshllo.u32 0, 4
    %s1256 = smul.addr 4, 81
    %s1257 = scalar_lea.vmem [#allocation0], %s1256
    %1258 = vst [vmem:[%s1257] sm:%s1255] %v1254
    %s1259 = scalar_lea.vmem [#allocation2], 656
    %v1260 = vld [vmem:[%s1259] sm:%s769]
    %s1261 = sshllo.u32 0, 4
    %s1262 = smul.addr 4, 82
    %s1263 = scalar_lea.vmem [#allocation0], %s1262
    %1264 = vst [vmem:[%s1263] sm:%s1261] %v1260
    %s1265 = scalar_lea.vmem [#allocation2], 664
    %v1266 = vld [vmem:[%s1265] sm:%s769]
    %s1267 = sshllo.u32 0, 4
    %s1268 = smul.addr 4, 83
    %s1269 = scalar_lea.vmem [#allocation0], %s1268
    %1270 = vst [vmem:[%s1269] sm:%s1267] %v1266
    %s1271 = scalar_lea.vmem [#allocation2], 672
    %v1272 = vld [vmem:[%s1271] sm:%s769]
    %s1273 = sshllo.u32 0, 4
    %s1274 = smul.addr 4, 84
    %s1275 = scalar_lea.vmem [#allocation0], %s1274
    %1276 = vst [vmem:[%s1275] sm:%s1273] %v1272
    %s1277 = scalar_lea.vmem [#allocation2], 680
    %v1278 = vld [vmem:[%s1277] sm:%s769]
    %s1279 = sshllo.u32 0, 4
    %s1280 = smul.addr 4, 85
    %s1281 = scalar_lea.vmem [#allocation0], %s1280
    %1282 = vst [vmem:[%s1281] sm:%s1279] %v1278
    %s1283 = scalar_lea.vmem [#allocation2], 688
    %v1284 = vld [vmem:[%s1283] sm:%s769]
    %s1285 = sshllo.u32 0, 4
    %s1286 = smul.addr 4, 86
    %s1287 = scalar_lea.vmem [#allocation0], %s1286
    %1288 = vst [vmem:[%s1287] sm:%s1285] %v1284
    %s1289 = scalar_lea.vmem [#allocation2], 696
    %v1290 = vld [vmem:[%s1289] sm:%s769]
    %s1291 = sshllo.u32 0, 4
    %s1292 = smul.addr 4, 87
    %s1293 = scalar_lea.vmem [#allocation0], %s1292
    %1294 = vst [vmem:[%s1293] sm:%s1291] %v1290
    %s1295 = scalar_lea.vmem [#allocation2], 704
    %v1296 = vld [vmem:[%s1295] sm:%s769]
    %s1297 = sshllo.u32 0, 4
    %s1298 = smul.addr 4, 88
    %s1299 = scalar_lea.vmem [#allocation0], %s1298
    %1300 = vst [vmem:[%s1299] sm:%s1297] %v1296
    %s1301 = scalar_lea.vmem [#allocation2], 712
    %v1302 = vld [vmem:[%s1301] sm:%s769]
    %s1303 = sshllo.u32 0, 4
    %s1304 = smul.addr 4, 89
    %s1305 = scalar_lea.vmem [#allocation0], %s1304
    %1306 = vst [vmem:[%s1305] sm:%s1303] %v1302
    %s1307 = scalar_lea.vmem [#allocation2], 720
    %v1308 = vld [vmem:[%s1307] sm:%s769]
    %s1309 = sshllo.u32 0, 4
    %s1310 = smul.addr 4, 90
    %s1311 = scalar_lea.vmem [#allocation0], %s1310
    %1312 = vst [vmem:[%s1311] sm:%s1309] %v1308
    %s1313 = scalar_lea.vmem [#allocation2], 728
    %v1314 = vld [vmem:[%s1313] sm:%s769]
    %s1315 = sshllo.u32 0, 4
    %s1316 = smul.addr 4, 91
    %s1317 = scalar_lea.vmem [#allocation0], %s1316
    %1318 = vst [vmem:[%s1317] sm:%s1315] %v1314
    %s1319 = scalar_lea.vmem [#allocation2], 736
    %v1320 = vld [vmem:[%s1319] sm:%s769]
    %s1321 = sshllo.u32 0, 4
    %s1322 = smul.addr 4, 92
    %s1323 = scalar_lea.vmem [#allocation0], %s1322
    %1324 = vst [vmem:[%s1323] sm:%s1321] %v1320
    %s1325 = scalar_lea.vmem [#allocation2], 744
    %v1326 = vld [vmem:[%s1325] sm:%s769]
    %s1327 = sshllo.u32 0, 4
    %s1328 = smul.addr 4, 93
    %s1329 = scalar_lea.vmem [#allocation0], %s1328
    %1330 = vst [vmem:[%s1329] sm:%s1327] %v1326
    %s1331 = scalar_lea.vmem [#allocation2], 752
    %v1332 = vld [vmem:[%s1331] sm:%s769]
    %s1333 = sshllo.u32 0, 4
    %s1334 = smul.addr 4, 94
    %s1335 = scalar_lea.vmem [#allocation0], %s1334
    %1336 = vst [vmem:[%s1335] sm:%s1333] %v1332
    %s1337 = scalar_lea.vmem [#allocation2], 760
    %v1338 = vld [vmem:[%s1337] sm:%s769]
    %s1339 = sshllo.u32 0, 4
    %s1340 = smul.addr 4, 95
    %s1341 = scalar_lea.vmem [#allocation0], %s1340
    %1342 = vst [vmem:[%s1341] sm:%s1339] %v1338
    %s1343 = scalar_lea.vmem [#allocation2], 768
    %v1344 = vld [vmem:[%s1343] sm:%s769]
    %s1345 = sshllo.u32 0, 4
    %s1346 = smul.addr 4, 96
    %s1347 = scalar_lea.vmem [#allocation0], %s1346
    %1348 = vst [vmem:[%s1347] sm:%s1345] %v1344
    %s1349 = scalar_lea.vmem [#allocation2], 776
    %v1350 = vld [vmem:[%s1349] sm:%s769]
    %s1351 = sshllo.u32 0, 4
    %s1352 = smul.addr 4, 97
    %s1353 = scalar_lea.vmem [#allocation0], %s1352
    %1354 = vst [vmem:[%s1353] sm:%s1351] %v1350
    %s1355 = scalar_lea.vmem [#allocation2], 784
    %v1356 = vld [vmem:[%s1355] sm:%s769]
    %s1357 = sshllo.u32 0, 4
    %s1358 = smul.addr 4, 98
    %s1359 = scalar_lea.vmem [#allocation0], %s1358
    %1360 = vst [vmem:[%s1359] sm:%s1357] %v1356
    %s1361 = scalar_lea.vmem [#allocation2], 792
    %v1362 = vld [vmem:[%s1361] sm:%s769]
    %s1363 = sshllo.u32 0, 4
    %s1364 = smul.addr 4, 99
    %s1365 = scalar_lea.vmem [#allocation0], %s1364
    %1366 = vst [vmem:[%s1365] sm:%s1363] %v1362
    %s1367 = scalar_lea.vmem [#allocation2], 800
    %v1368 = vld [vmem:[%s1367] sm:%s769]
    %s1369 = sshllo.u32 0, 4
    %s1370 = smul.addr 4, 100
    %s1371 = scalar_lea.vmem [#allocation0], %s1370
    %1372 = vst [vmem:[%s1371] sm:%s1369] %v1368
    %s1373 = scalar_lea.vmem [#allocation2], 808
    %v1374 = vld [vmem:[%s1373] sm:%s769]
    %s1375 = sshllo.u32 0, 4
    %s1376 = smul.addr 4, 101
    %s1377 = scalar_lea.vmem [#allocation0], %s1376
    %1378 = vst [vmem:[%s1377] sm:%s1375] %v1374
    %s1379 = scalar_lea.vmem [#allocation2], 816
    %v1380 = vld [vmem:[%s1379] sm:%s769]
    %s1381 = sshllo.u32 0, 4
    %s1382 = smul.addr 4, 102
    %s1383 = scalar_lea.vmem [#allocation0], %s1382
    %1384 = vst [vmem:[%s1383] sm:%s1381] %v1380
    %s1385 = scalar_lea.vmem [#allocation2], 824
    %v1386 = vld [vmem:[%s1385] sm:%s769]
    %s1387 = sshllo.u32 0, 4
    %s1388 = smul.addr 4, 103
    %s1389 = scalar_lea.vmem [#allocation0], %s1388
    %1390 = vst [vmem:[%s1389] sm:%s1387] %v1386
    %s1391 = scalar_lea.vmem [#allocation2], 832
    %v1392 = vld [vmem:[%s1391] sm:%s769]
    %s1393 = sshllo.u32 0, 4
    %s1394 = smul.addr 4, 104
    %s1395 = scalar_lea.vmem [#allocation0], %s1394
    %1396 = vst [vmem:[%s1395] sm:%s1393] %v1392
    %s1397 = scalar_lea.vmem [#allocation2], 840
    %v1398 = vld [vmem:[%s1397] sm:%s769]
    %s1399 = sshllo.u32 0, 4
    %s1400 = smul.addr 4, 105
    %s1401 = scalar_lea.vmem [#allocation0], %s1400
    %1402 = vst [vmem:[%s1401] sm:%s1399] %v1398
    %s1403 = scalar_lea.vmem [#allocation2], 848
    %v1404 = vld [vmem:[%s1403] sm:%s769]
    %s1405 = sshllo.u32 0, 4
    %s1406 = smul.addr 4, 106
    %s1407 = scalar_lea.vmem [#allocation0], %s1406
    %1408 = vst [vmem:[%s1407] sm:%s1405] %v1404
    %s1409 = scalar_lea.vmem [#allocation2], 856
    %v1410 = vld [vmem:[%s1409] sm:%s769]
    %s1411 = sshllo.u32 0, 4
    %s1412 = smul.addr 4, 107
    %s1413 = scalar_lea.vmem [#allocation0], %s1412
    %1414 = vst [vmem:[%s1413] sm:%s1411] %v1410
    %s1415 = scalar_lea.vmem [#allocation2], 864
    %v1416 = vld [vmem:[%s1415] sm:%s769]
    %s1417 = sshllo.u32 0, 4
    %s1418 = smul.addr 4, 108
    %s1419 = scalar_lea.vmem [#allocation0], %s1418
    %1420 = vst [vmem:[%s1419] sm:%s1417] %v1416
    %s1421 = scalar_lea.vmem [#allocation2], 872
    %v1422 = vld [vmem:[%s1421] sm:%s769]
    %s1423 = sshllo.u32 0, 4
    %s1424 = smul.addr 4, 109
    %s1425 = scalar_lea.vmem [#allocation0], %s1424
    %1426 = vst [vmem:[%s1425] sm:%s1423] %v1422
    %s1427 = scalar_lea.vmem [#allocation2], 880
    %v1428 = vld [vmem:[%s1427] sm:%s769]
    %s1429 = sshllo.u32 0, 4
    %s1430 = smul.addr 4, 110
    %s1431 = scalar_lea.vmem [#allocation0], %s1430
    %1432 = vst [vmem:[%s1431] sm:%s1429] %v1428
    %s1433 = scalar_lea.vmem [#allocation2], 888
    %v1434 = vld [vmem:[%s1433] sm:%s769]
    %s1435 = sshllo.u32 0, 4
    %s1436 = smul.addr 4, 111
    %s1437 = scalar_lea.vmem [#allocation0], %s1436
    %1438 = vst [vmem:[%s1437] sm:%s1435] %v1434
    %s1439 = scalar_lea.vmem [#allocation2], 896
    %v1440 = vld [vmem:[%s1439] sm:%s769]
    %s1441 = sshllo.u32 0, 4
    %s1442 = smul.addr 4, 112
    %s1443 = scalar_lea.vmem [#allocation0], %s1442
    %1444 = vst [vmem:[%s1443] sm:%s1441] %v1440
    %s1445 = scalar_lea.vmem [#allocation2], 904
    %v1446 = vld [vmem:[%s1445] sm:%s769]
    %s1447 = sshllo.u32 0, 4
    %s1448 = smul.addr 4, 113
    %s1449 = scalar_lea.vmem [#allocation0], %s1448
    %1450 = vst [vmem:[%s1449] sm:%s1447] %v1446
    %s1451 = scalar_lea.vmem [#allocation2], 912
    %v1452 = vld [vmem:[%s1451] sm:%s769]
    %s1453 = sshllo.u32 0, 4
    %s1454 = smul.addr 4, 114
    %s1455 = scalar_lea.vmem [#allocation0], %s1454
    %1456 = vst [vmem:[%s1455] sm:%s1453] %v1452
    %s1457 = scalar_lea.vmem [#allocation2], 920
    %v1458 = vld [vmem:[%s1457] sm:%s769]
    %s1459 = sshllo.u32 0, 4
    %s1460 = smul.addr 4, 115
    %s1461 = scalar_lea.vmem [#allocation0], %s1460
    %1462 = vst [vmem:[%s1461] sm:%s1459] %v1458
    %s1463 = scalar_lea.vmem [#allocation2], 928
    %v1464 = vld [vmem:[%s1463] sm:%s769]
    %s1465 = sshllo.u32 0, 4
    %s1466 = smul.addr 4, 116
    %s1467 = scalar_lea.vmem [#allocation0], %s1466
    %1468 = vst [vmem:[%s1467] sm:%s1465] %v1464
    %s1469 = scalar_lea.vmem [#allocation2], 936
    %v1470 = vld [vmem:[%s1469] sm:%s769]
    %s1471 = sshllo.u32 0, 4
    %s1472 = smul.addr 4, 117
    %s1473 = scalar_lea.vmem [#allocation0], %s1472
    %1474 = vst [vmem:[%s1473] sm:%s1471] %v1470
    %s1475 = scalar_lea.vmem [#allocation2], 944
    %v1476 = vld [vmem:[%s1475] sm:%s769]
    %s1477 = sshllo.u32 0, 4
    %s1478 = smul.addr 4, 118
    %s1479 = scalar_lea.vmem [#allocation0], %s1478
    %1480 = vst [vmem:[%s1479] sm:%s1477] %v1476
    %s1481 = scalar_lea.vmem [#allocation2], 952
    %v1482 = vld [vmem:[%s1481] sm:%s769]
    %s1483 = sshllo.u32 0, 4
    %s1484 = smul.addr 4, 119
    %s1485 = scalar_lea.vmem [#allocation0], %s1484
    %1486 = vst [vmem:[%s1485] sm:%s1483] %v1482
    %s1487 = scalar_lea.vmem [#allocation2], 960
    %v1488 = vld [vmem:[%s1487] sm:%s769]
    %s1489 = sshllo.u32 0, 4
    %s1490 = smul.addr 4, 120
    %s1491 = scalar_lea.vmem [#allocation0], %s1490
    %1492 = vst [vmem:[%s1491] sm:%s1489] %v1488
    %s1493 = scalar_lea.vmem [#allocation2], 968
    %v1494 = vld [vmem:[%s1493] sm:%s769]
    %s1495 = sshllo.u32 0, 4
    %s1496 = smul.addr 4, 121
    %s1497 = scalar_lea.vmem [#allocation0], %s1496
    %1498 = vst [vmem:[%s1497] sm:%s1495] %v1494
    %s1499 = scalar_lea.vmem [#allocation2], 976
    %v1500 = vld [vmem:[%s1499] sm:%s769]
    %s1501 = sshllo.u32 0, 4
    %s1502 = smul.addr 4, 122
    %s1503 = scalar_lea.vmem [#allocation0], %s1502
    %1504 = vst [vmem:[%s1503] sm:%s1501] %v1500
    %s1505 = scalar_lea.vmem [#allocation2], 984
    %v1506 = vld [vmem:[%s1505] sm:%s769]
    %s1507 = sshllo.u32 0, 4
    %s1508 = smul.addr 4, 123
    %s1509 = scalar_lea.vmem [#allocation0], %s1508
    %1510 = vst [vmem:[%s1509] sm:%s1507] %v1506
    %s1511 = scalar_lea.vmem [#allocation2], 992
    %v1512 = vld [vmem:[%s1511] sm:%s769]
    %s1513 = sshllo.u32 0, 4
    %s1514 = smul.addr 4, 124
    %s1515 = scalar_lea.vmem [#allocation0], %s1514
    %1516 = vst [vmem:[%s1515] sm:%s1513] %v1512
    %s1517 = scalar_lea.vmem [#allocation2], 1000
    %v1518 = vld [vmem:[%s1517] sm:%s769]
    %s1519 = sshllo.u32 0, 4
    %s1520 = smul.addr 4, 125
    %s1521 = scalar_lea.vmem [#allocation0], %s1520
    %1522 = vst [vmem:[%s1521] sm:%s1519] %v1518
    %s1523 = scalar_lea.vmem [#allocation2], 1008
    %v1524 = vld [vmem:[%s1523] sm:%s769]
    %s1525 = sshllo.u32 0, 4
    %s1526 = smul.addr 4, 126
    %s1527 = scalar_lea.vmem [#allocation0], %s1526
    %1528 = vst [vmem:[%s1527] sm:%s1525] %v1524
    %s1529 = scalar_lea.vmem [#allocation2], 1016
    %v1530 = vld [vmem:[%s1529] sm:%s769]
    %s1531 = sshllo.u32 0, 4
    %s1532 = smul.addr 4, 127
    %s1533 = scalar_lea.vmem [#allocation0], %s1532
    %1534 = vst [vmem:[%s1533] sm:%s1531] %v1530
    %s1535 = scalar_lea.vmem [#allocation2], 1024
    %v1536 = vld [vmem:[%s1535] sm:%s769]
    %s1537 = sshllo.u32 0, 4
    %s1538 = smul.addr 4, 128
    %s1539 = scalar_lea.vmem [#allocation0], %s1538
    %1540 = vst [vmem:[%s1539] sm:%s1537] %v1536
    %s1541 = scalar_lea.vmem [#allocation2], 1032
    %v1542 = vld [vmem:[%s1541] sm:%s769]
    %s1543 = sshllo.u32 0, 4
    %s1544 = smul.addr 4, 129
    %s1545 = scalar_lea.vmem [#allocation0], %s1544
    %1546 = vst [vmem:[%s1545] sm:%s1543] %v1542
    %s1547 = scalar_lea.vmem [#allocation2], 1040
    %v1548 = vld [vmem:[%s1547] sm:%s769]
    %s1549 = sshllo.u32 0, 4
    %s1550 = smul.addr 4, 130
    %s1551 = scalar_lea.vmem [#allocation0], %s1550
    %1552 = vst [vmem:[%s1551] sm:%s1549] %v1548
    %s1553 = scalar_lea.vmem [#allocation2], 1048
    %v1554 = vld [vmem:[%s1553] sm:%s769]
    %s1555 = sshllo.u32 0, 4
    %s1556 = smul.addr 4, 131
    %s1557 = scalar_lea.vmem [#allocation0], %s1556
    %1558 = vst [vmem:[%s1557] sm:%s1555] %v1554
    %s1559 = scalar_lea.vmem [#allocation2], 1056
    %v1560 = vld [vmem:[%s1559] sm:%s769]
    %s1561 = sshllo.u32 0, 4
    %s1562 = smul.addr 4, 132
    %s1563 = scalar_lea.vmem [#allocation0], %s1562
    %1564 = vst [vmem:[%s1563] sm:%s1561] %v1560
    %s1565 = scalar_lea.vmem [#allocation2], 1064
    %v1566 = vld [vmem:[%s1565] sm:%s769]
    %s1567 = sshllo.u32 0, 4
    %s1568 = smul.addr 4, 133
    %s1569 = scalar_lea.vmem [#allocation0], %s1568
    %1570 = vst [vmem:[%s1569] sm:%s1567] %v1566
    %s1571 = scalar_lea.vmem [#allocation2], 1072
    %v1572 = vld [vmem:[%s1571] sm:%s769]
    %s1573 = sshllo.u32 0, 4
    %s1574 = smul.addr 4, 134
    %s1575 = scalar_lea.vmem [#allocation0], %s1574
    %1576 = vst [vmem:[%s1575] sm:%s1573] %v1572
    %s1577 = scalar_lea.vmem [#allocation2], 1080
    %v1578 = vld [vmem:[%s1577] sm:%s769]
    %s1579 = sshllo.u32 0, 4
    %s1580 = smul.addr 4, 135
    %s1581 = scalar_lea.vmem [#allocation0], %s1580
    %1582 = vst [vmem:[%s1581] sm:%s1579] %v1578
    %s1583 = scalar_lea.vmem [#allocation2], 1088
    %v1584 = vld [vmem:[%s1583] sm:%s769]
    %s1585 = sshllo.u32 0, 4
    %s1586 = smul.addr 4, 136
    %s1587 = scalar_lea.vmem [#allocation0], %s1586
    %1588 = vst [vmem:[%s1587] sm:%s1585] %v1584
    %s1589 = scalar_lea.vmem [#allocation2], 1096
    %v1590 = vld [vmem:[%s1589] sm:%s769]
    %s1591 = sshllo.u32 0, 4
    %s1592 = smul.addr 4, 137
    %s1593 = scalar_lea.vmem [#allocation0], %s1592
    %1594 = vst [vmem:[%s1593] sm:%s1591] %v1590
    %s1595 = scalar_lea.vmem [#allocation2], 1104
    %v1596 = vld [vmem:[%s1595] sm:%s769]
    %s1597 = sshllo.u32 0, 4
    %s1598 = smul.addr 4, 138
    %s1599 = scalar_lea.vmem [#allocation0], %s1598
    %1600 = vst [vmem:[%s1599] sm:%s1597] %v1596
    %s1601 = scalar_lea.vmem [#allocation2], 1112
    %v1602 = vld [vmem:[%s1601] sm:%s769]
    %s1603 = sshllo.u32 0, 4
    %s1604 = smul.addr 4, 139
    %s1605 = scalar_lea.vmem [#allocation0], %s1604
    %1606 = vst [vmem:[%s1605] sm:%s1603] %v1602
    %s1607 = scalar_lea.vmem [#allocation2], 1120
    %v1608 = vld [vmem:[%s1607] sm:%s769]
    %s1609 = sshllo.u32 0, 4
    %s1610 = smul.addr 4, 140
    %s1611 = scalar_lea.vmem [#allocation0], %s1610
    %1612 = vst [vmem:[%s1611] sm:%s1609] %v1608
    %s1613 = scalar_lea.vmem [#allocation2], 1128
    %v1614 = vld [vmem:[%s1613] sm:%s769]
    %s1615 = sshllo.u32 0, 4
    %s1616 = smul.addr 4, 141
    %s1617 = scalar_lea.vmem [#allocation0], %s1616
    %1618 = vst [vmem:[%s1617] sm:%s1615] %v1614
    %s1619 = scalar_lea.vmem [#allocation2], 1136
    %v1620 = vld [vmem:[%s1619] sm:%s769]
    %s1621 = sshllo.u32 0, 4
    %s1622 = smul.addr 4, 142
    %s1623 = scalar_lea.vmem [#allocation0], %s1622
    %1624 = vst [vmem:[%s1623] sm:%s1621] %v1620
    %s1625 = scalar_lea.vmem [#allocation2], 1144
    %v1626 = vld [vmem:[%s1625] sm:%s769]
    %s1627 = sshllo.u32 0, 4
    %s1628 = smul.addr 4, 143
    %s1629 = scalar_lea.vmem [#allocation0], %s1628
    %1630 = vst [vmem:[%s1629] sm:%s1627] %v1626
    %s1631 = scalar_lea.vmem [#allocation2], 1152
    %v1632 = vld [vmem:[%s1631] sm:%s769]
    %s1633 = sshllo.u32 0, 4
    %s1634 = smul.addr 4, 144
    %s1635 = scalar_lea.vmem [#allocation0], %s1634
    %1636 = vst [vmem:[%s1635] sm:%s1633] %v1632
    %s1637 = scalar_lea.vmem [#allocation2], 1160
    %v1638 = vld [vmem:[%s1637] sm:%s769]
    %s1639 = sshllo.u32 0, 4
    %s1640 = smul.addr 4, 145
    %s1641 = scalar_lea.vmem [#allocation0], %s1640
    %1642 = vst [vmem:[%s1641] sm:%s1639] %v1638
    %s1643 = scalar_lea.vmem [#allocation2], 1168
    %v1644 = vld [vmem:[%s1643] sm:%s769]
    %s1645 = sshllo.u32 0, 4
    %s1646 = smul.addr 4, 146
    %s1647 = scalar_lea.vmem [#allocation0], %s1646
    %1648 = vst [vmem:[%s1647] sm:%s1645] %v1644
    %s1649 = scalar_lea.vmem [#allocation2], 1176
    %v1650 = vld [vmem:[%s1649] sm:%s769]
    %s1651 = sshllo.u32 0, 4
    %s1652 = smul.addr 4, 147
    %s1653 = scalar_lea.vmem [#allocation0], %s1652
    %1654 = vst [vmem:[%s1653] sm:%s1651] %v1650
    %s1655 = scalar_lea.vmem [#allocation2], 1184
    %v1656 = vld [vmem:[%s1655] sm:%s769]
    %s1657 = sshllo.u32 0, 4
    %s1658 = smul.addr 4, 148
    %s1659 = scalar_lea.vmem [#allocation0], %s1658
    %1660 = vst [vmem:[%s1659] sm:%s1657] %v1656
    %s1661 = scalar_lea.vmem [#allocation2], 1192
    %v1662 = vld [vmem:[%s1661] sm:%s769]
    %s1663 = sshllo.u32 0, 4
    %s1664 = smul.addr 4, 149
    %s1665 = scalar_lea.vmem [#allocation0], %s1664
    %1666 = vst [vmem:[%s1665] sm:%s1663] %v1662
    %s1667 = scalar_lea.vmem [#allocation2], 1200
    %v1668 = vld [vmem:[%s1667] sm:%s769]
    %s1669 = sshllo.u32 0, 4
    %s1670 = smul.addr 4, 150
    %s1671 = scalar_lea.vmem [#allocation0], %s1670
    %1672 = vst [vmem:[%s1671] sm:%s1669] %v1668
    %s1673 = scalar_lea.vmem [#allocation2], 1208
    %v1674 = vld [vmem:[%s1673] sm:%s769]
    %s1675 = sshllo.u32 0, 4
    %s1676 = smul.addr 4, 151
    %s1677 = scalar_lea.vmem [#allocation0], %s1676
    %1678 = vst [vmem:[%s1677] sm:%s1675] %v1674
    %s1679 = scalar_lea.vmem [#allocation2], 1216
    %v1680 = vld [vmem:[%s1679] sm:%s769]
    %s1681 = sshllo.u32 0, 4
    %s1682 = smul.addr 4, 152
    %s1683 = scalar_lea.vmem [#allocation0], %s1682
    %1684 = vst [vmem:[%s1683] sm:%s1681] %v1680
    %s1685 = scalar_lea.vmem [#allocation2], 1224
    %v1686 = vld [vmem:[%s1685] sm:%s769]
    %s1687 = sshllo.u32 0, 4
    %s1688 = smul.addr 4, 153
    %s1689 = scalar_lea.vmem [#allocation0], %s1688
    %1690 = vst [vmem:[%s1689] sm:%s1687] %v1686
    %s1691 = scalar_lea.vmem [#allocation2], 1232
    %v1692 = vld [vmem:[%s1691] sm:%s769]
    %s1693 = sshllo.u32 0, 4
    %s1694 = smul.addr 4, 154
    %s1695 = scalar_lea.vmem [#allocation0], %s1694
    %1696 = vst [vmem:[%s1695] sm:%s1693] %v1692
    %s1697 = scalar_lea.vmem [#allocation2], 1240
    %v1698 = vld [vmem:[%s1697] sm:%s769]
    %s1699 = sshllo.u32 0, 4
    %s1700 = smul.addr 4, 155
    %s1701 = scalar_lea.vmem [#allocation0], %s1700
    %1702 = vst [vmem:[%s1701] sm:%s1699] %v1698
    %s1703 = scalar_lea.vmem [#allocation2], 1248
    %v1704 = vld [vmem:[%s1703] sm:%s769]
    %s1705 = sshllo.u32 0, 4
    %s1706 = smul.addr 4, 156
    %s1707 = scalar_lea.vmem [#allocation0], %s1706
    %1708 = vst [vmem:[%s1707] sm:%s1705] %v1704
    %s1709 = scalar_lea.vmem [#allocation2], 1256
    %v1710 = vld [vmem:[%s1709] sm:%s769]
    %s1711 = sshllo.u32 0, 4
    %s1712 = smul.addr 4, 157
    %s1713 = scalar_lea.vmem [#allocation0], %s1712
    %1714 = vst [vmem:[%s1713] sm:%s1711] %v1710
    %s1715 = scalar_lea.vmem [#allocation2], 1264
    %v1716 = vld [vmem:[%s1715] sm:%s769]
    %s1717 = sshllo.u32 0, 4
    %s1718 = smul.addr 4, 158
    %s1719 = scalar_lea.vmem [#allocation0], %s1718
    %1720 = vst [vmem:[%s1719] sm:%s1717] %v1716
    %s1721 = scalar_lea.vmem [#allocation2], 1272
    %v1722 = vld [vmem:[%s1721] sm:%s769]
    %s1723 = sshllo.u32 0, 4
    %s1724 = smul.addr 4, 159
    %s1725 = scalar_lea.vmem [#allocation0], %s1724
    %1726 = vst [vmem:[%s1725] sm:%s1723] %v1722
    %s1727 = scalar_lea.vmem [#allocation2], 1280
    %v1728 = vld [vmem:[%s1727] sm:%s769]
    %s1729 = sshllo.u32 0, 4
    %s1730 = smul.addr 4, 160
    %s1731 = scalar_lea.vmem [#allocation0], %s1730
    %1732 = vst [vmem:[%s1731] sm:%s1729] %v1728
    %s1733 = scalar_lea.vmem [#allocation2], 1288
    %v1734 = vld [vmem:[%s1733] sm:%s769]
    %s1735 = sshllo.u32 0, 4
    %s1736 = smul.addr 4, 161
    %s1737 = scalar_lea.vmem [#allocation0], %s1736
    %1738 = vst [vmem:[%s1737] sm:%s1735] %v1734
    %s1739 = scalar_lea.vmem [#allocation2], 1296
    %v1740 = vld [vmem:[%s1739] sm:%s769]
    %s1741 = sshllo.u32 0, 4
    %s1742 = smul.addr 4, 162
    %s1743 = scalar_lea.vmem [#allocation0], %s1742
    %1744 = vst [vmem:[%s1743] sm:%s1741] %v1740
    %s1745 = scalar_lea.vmem [#allocation2], 1304
    %v1746 = vld [vmem:[%s1745] sm:%s769]
    %s1747 = sshllo.u32 0, 4
    %s1748 = smul.addr 4, 163
    %s1749 = scalar_lea.vmem [#allocation0], %s1748
    %1750 = vst [vmem:[%s1749] sm:%s1747] %v1746
    %s1751 = scalar_lea.vmem [#allocation2], 1312
    %v1752 = vld [vmem:[%s1751] sm:%s769]
    %s1753 = sshllo.u32 0, 4
    %s1754 = smul.addr 4, 164
    %s1755 = scalar_lea.vmem [#allocation0], %s1754
    %1756 = vst [vmem:[%s1755] sm:%s1753] %v1752
    %s1757 = scalar_lea.vmem [#allocation2], 1320
    %v1758 = vld [vmem:[%s1757] sm:%s769]
    %s1759 = sshllo.u32 0, 4
    %s1760 = smul.addr 4, 165
    %s1761 = scalar_lea.vmem [#allocation0], %s1760
    %1762 = vst [vmem:[%s1761] sm:%s1759] %v1758
    %s1763 = scalar_lea.vmem [#allocation2], 1328
    %v1764 = vld [vmem:[%s1763] sm:%s769]
    %s1765 = sshllo.u32 0, 4
    %s1766 = smul.addr 4, 166
    %s1767 = scalar_lea.vmem [#allocation0], %s1766
    %1768 = vst [vmem:[%s1767] sm:%s1765] %v1764
    %s1769 = scalar_lea.vmem [#allocation2], 1336
    %v1770 = vld [vmem:[%s1769] sm:%s769]
    %s1771 = sshllo.u32 0, 4
    %s1772 = smul.addr 4, 167
    %s1773 = scalar_lea.vmem [#allocation0], %s1772
    %1774 = vst [vmem:[%s1773] sm:%s1771] %v1770
    %s1775 = scalar_lea.vmem [#allocation2], 1344
    %v1776 = vld [vmem:[%s1775] sm:%s769]
    %s1777 = sshllo.u32 0, 4
    %s1778 = smul.addr 4, 168
    %s1779 = scalar_lea.vmem [#allocation0], %s1778
    %1780 = vst [vmem:[%s1779] sm:%s1777] %v1776
    %s1781 = scalar_lea.vmem [#allocation2], 1352
    %v1782 = vld [vmem:[%s1781] sm:%s769]
    %s1783 = sshllo.u32 0, 4
    %s1784 = smul.addr 4, 169
    %s1785 = scalar_lea.vmem [#allocation0], %s1784
    %1786 = vst [vmem:[%s1785] sm:%s1783] %v1782
    %s1787 = scalar_lea.vmem [#allocation2], 1360
    %v1788 = vld [vmem:[%s1787] sm:%s769]
    %s1789 = sshllo.u32 0, 4
    %s1790 = smul.addr 4, 170
    %s1791 = scalar_lea.vmem [#allocation0], %s1790
    %1792 = vst [vmem:[%s1791] sm:%s1789] %v1788
    %s1793 = scalar_lea.vmem [#allocation2], 1368
    %v1794 = vld [vmem:[%s1793] sm:%s769]
    %s1795 = sshllo.u32 0, 4
    %s1796 = smul.addr 4, 171
    %s1797 = scalar_lea.vmem [#allocation0], %s1796
    %1798 = vst [vmem:[%s1797] sm:%s1795] %v1794
    %s1799 = scalar_lea.vmem [#allocation2], 1376
    %v1800 = vld [vmem:[%s1799] sm:%s769]
    %s1801 = sshllo.u32 0, 4
    %s1802 = smul.addr 4, 172
    %s1803 = scalar_lea.vmem [#allocation0], %s1802
    %1804 = vst [vmem:[%s1803] sm:%s1801] %v1800
    %s1805 = scalar_lea.vmem [#allocation2], 1384
    %v1806 = vld [vmem:[%s1805] sm:%s769]
    %s1807 = sshllo.u32 0, 4
    %s1808 = smul.addr 4, 173
    %s1809 = scalar_lea.vmem [#allocation0], %s1808
    %1810 = vst [vmem:[%s1809] sm:%s1807] %v1806
    %s1811 = scalar_lea.vmem [#allocation2], 1392
    %v1812 = vld [vmem:[%s1811] sm:%s769]
    %s1813 = sshllo.u32 0, 4
    %s1814 = smul.addr 4, 174
    %s1815 = scalar_lea.vmem [#allocation0], %s1814
    %1816 = vst [vmem:[%s1815] sm:%s1813] %v1812
    %s1817 = scalar_lea.vmem [#allocation2], 1400
    %v1818 = vld [vmem:[%s1817] sm:%s769]
    %s1819 = sshllo.u32 0, 4
    %s1820 = smul.addr 4, 175
    %s1821 = scalar_lea.vmem [#allocation0], %s1820
    %1822 = vst [vmem:[%s1821] sm:%s1819] %v1818
    %s1823 = scalar_lea.vmem [#allocation2], 1408
    %v1824 = vld [vmem:[%s1823] sm:%s769]
    %s1825 = sshllo.u32 0, 4
    %s1826 = smul.addr 4, 176
    %s1827 = scalar_lea.vmem [#allocation0], %s1826
    %1828 = vst [vmem:[%s1827] sm:%s1825] %v1824
    %s1829 = scalar_lea.vmem [#allocation2], 1416
    %v1830 = vld [vmem:[%s1829] sm:%s769]
    %s1831 = sshllo.u32 0, 4
    %s1832 = smul.addr 4, 177
    %s1833 = scalar_lea.vmem [#allocation0], %s1832
    %1834 = vst [vmem:[%s1833] sm:%s1831] %v1830
    %s1835 = scalar_lea.vmem [#allocation2], 1424
    %v1836 = vld [vmem:[%s1835] sm:%s769]
    %s1837 = sshllo.u32 0, 4
    %s1838 = smul.addr 4, 178
    %s1839 = scalar_lea.vmem [#allocation0], %s1838
    %1840 = vst [vmem:[%s1839] sm:%s1837] %v1836
    %s1841 = scalar_lea.vmem [#allocation2], 1432
    %v1842 = vld [vmem:[%s1841] sm:%s769]
    %s1843 = sshllo.u32 0, 4
    %s1844 = smul.addr 4, 179
    %s1845 = scalar_lea.vmem [#allocation0], %s1844
    %1846 = vst [vmem:[%s1845] sm:%s1843] %v1842
    %s1847 = scalar_lea.vmem [#allocation2], 1440
    %v1848 = vld [vmem:[%s1847] sm:%s769]
    %s1849 = sshllo.u32 0, 4
    %s1850 = smul.addr 4, 180
    %s1851 = scalar_lea.vmem [#allocation0], %s1850
    %1852 = vst [vmem:[%s1851] sm:%s1849] %v1848
    %s1853 = scalar_lea.vmem [#allocation2], 1448
    %v1854 = vld [vmem:[%s1853] sm:%s769]
    %s1855 = sshllo.u32 0, 4
    %s1856 = smul.addr 4, 181
    %s1857 = scalar_lea.vmem [#allocation0], %s1856
    %1858 = vst [vmem:[%s1857] sm:%s1855] %v1854
    %s1859 = scalar_lea.vmem [#allocation2], 1456
    %v1860 = vld [vmem:[%s1859] sm:%s769]
    %s1861 = sshllo.u32 0, 4
    %s1862 = smul.addr 4, 182
    %s1863 = scalar_lea.vmem [#allocation0], %s1862
    %1864 = vst [vmem:[%s1863] sm:%s1861] %v1860
    %s1865 = scalar_lea.vmem [#allocation2], 1464
    %v1866 = vld [vmem:[%s1865] sm:%s769]
    %s1867 = sshllo.u32 0, 4
    %s1868 = smul.addr 4, 183
    %s1869 = scalar_lea.vmem [#allocation0], %s1868
    %1870 = vst [vmem:[%s1869] sm:%s1867] %v1866
    %s1871 = scalar_lea.vmem [#allocation2], 1472
    %v1872 = vld [vmem:[%s1871] sm:%s769]
    %s1873 = sshllo.u32 0, 4
    %s1874 = smul.addr 4, 184
    %s1875 = scalar_lea.vmem [#allocation0], %s1874
    %1876 = vst [vmem:[%s1875] sm:%s1873] %v1872
    %s1877 = scalar_lea.vmem [#allocation2], 1480
    %v1878 = vld [vmem:[%s1877] sm:%s769]
    %s1879 = sshllo.u32 0, 4
    %s1880 = smul.addr 4, 185
    %s1881 = scalar_lea.vmem [#allocation0], %s1880
    %1882 = vst [vmem:[%s1881] sm:%s1879] %v1878
    %s1883 = scalar_lea.vmem [#allocation2], 1488
    %v1884 = vld [vmem:[%s1883] sm:%s769]
    %s1885 = sshllo.u32 0, 4
    %s1886 = smul.addr 4, 186
    %s1887 = scalar_lea.vmem [#allocation0], %s1886
    %1888 = vst [vmem:[%s1887] sm:%s1885] %v1884
    %s1889 = scalar_lea.vmem [#allocation2], 1496
    %v1890 = vld [vmem:[%s1889] sm:%s769]
    %s1891 = sshllo.u32 0, 4
    %s1892 = smul.addr 4, 187
    %s1893 = scalar_lea.vmem [#allocation0], %s1892
    %1894 = vst [vmem:[%s1893] sm:%s1891] %v1890
    %s1895 = scalar_lea.vmem [#allocation2], 1504
    %v1896 = vld [vmem:[%s1895] sm:%s769]
    %s1897 = sshllo.u32 0, 4
    %s1898 = smul.addr 4, 188
    %s1899 = scalar_lea.vmem [#allocation0], %s1898
    %1900 = vst [vmem:[%s1899] sm:%s1897] %v1896
    %s1901 = scalar_lea.vmem [#allocation2], 1512
    %v1902 = vld [vmem:[%s1901] sm:%s769]
    %s1903 = sshllo.u32 0, 4
    %s1904 = smul.addr 4, 189
    %s1905 = scalar_lea.vmem [#allocation0], %s1904
    %1906 = vst [vmem:[%s1905] sm:%s1903] %v1902
    %s1907 = scalar_lea.vmem [#allocation2], 1520
    %v1908 = vld [vmem:[%s1907] sm:%s769]
    %s1909 = sshllo.u32 0, 4
    %s1910 = smul.addr 4, 190
    %s1911 = scalar_lea.vmem [#allocation0], %s1910
    %1912 = vst [vmem:[%s1911] sm:%s1909] %v1908
    %s1913 = scalar_lea.vmem [#allocation2], 1528
    %v1914 = vld [vmem:[%s1913] sm:%s769]
    %s1915 = sshllo.u32 0, 4
    %s1916 = smul.addr 4, 191
    %s1917 = scalar_lea.vmem [#allocation0], %s1916
    %1918 = vst [vmem:[%s1917] sm:%s1915] %v1914
    %s1919 = scalar_lea.vmem [#allocation2], 1536
    %v1920 = vld [vmem:[%s1919] sm:%s769]
    %s1921 = sshllo.u32 0, 4
    %s1922 = smul.addr 4, 192
    %s1923 = scalar_lea.vmem [#allocation0], %s1922
    %1924 = vst [vmem:[%s1923] sm:%s1921] %v1920
    %s1925 = scalar_lea.vmem [#allocation2], 1544
    %v1926 = vld [vmem:[%s1925] sm:%s769]
    %s1927 = sshllo.u32 0, 4
    %s1928 = smul.addr 4, 193
    %s1929 = scalar_lea.vmem [#allocation0], %s1928
    %1930 = vst [vmem:[%s1929] sm:%s1927] %v1926
    %s1931 = scalar_lea.vmem [#allocation2], 1552
    %v1932 = vld [vmem:[%s1931] sm:%s769]
    %s1933 = sshllo.u32 0, 4
    %s1934 = smul.addr 4, 194
    %s1935 = scalar_lea.vmem [#allocation0], %s1934
    %1936 = vst [vmem:[%s1935] sm:%s1933] %v1932
    %s1937 = scalar_lea.vmem [#allocation2], 1560
    %v1938 = vld [vmem:[%s1937] sm:%s769]
    %s1939 = sshllo.u32 0, 4
    %s1940 = smul.addr 4, 195
    %s1941 = scalar_lea.vmem [#allocation0], %s1940
    %1942 = vst [vmem:[%s1941] sm:%s1939] %v1938
    %s1943 = scalar_lea.vmem [#allocation2], 1568
    %v1944 = vld [vmem:[%s1943] sm:%s769]
    %s1945 = sshllo.u32 0, 4
    %s1946 = smul.addr 4, 196
    %s1947 = scalar_lea.vmem [#allocation0], %s1946
    %1948 = vst [vmem:[%s1947] sm:%s1945] %v1944
    %s1949 = scalar_lea.vmem [#allocation2], 1576
    %v1950 = vld [vmem:[%s1949] sm:%s769]
    %s1951 = sshllo.u32 0, 4
    %s1952 = smul.addr 4, 197
    %s1953 = scalar_lea.vmem [#allocation0], %s1952
    %1954 = vst [vmem:[%s1953] sm:%s1951] %v1950
    %s1955 = scalar_lea.vmem [#allocation2], 1584
    %v1956 = vld [vmem:[%s1955] sm:%s769]
    %s1957 = sshllo.u32 0, 4
    %s1958 = smul.addr 4, 198
    %s1959 = scalar_lea.vmem [#allocation0], %s1958
    %1960 = vst [vmem:[%s1959] sm:%s1957] %v1956
    %s1961 = scalar_lea.vmem [#allocation2], 1592
    %v1962 = vld [vmem:[%s1961] sm:%s769]
    %s1963 = sshllo.u32 0, 4
    %s1964 = smul.addr 4, 199
    %s1965 = scalar_lea.vmem [#allocation0], %s1964
    %1966 = vst [vmem:[%s1965] sm:%s1963] %v1962
    %s1967 = scalar_lea.vmem [#allocation2], 1600
    %v1968 = vld [vmem:[%s1967] sm:%s769]
    %s1969 = sshllo.u32 0, 4
    %s1970 = smul.addr 4, 200
    %s1971 = scalar_lea.vmem [#allocation0], %s1970
    %1972 = vst [vmem:[%s1971] sm:%s1969] %v1968
    %s1973 = scalar_lea.vmem [#allocation2], 1608
    %v1974 = vld [vmem:[%s1973] sm:%s769]
    %s1975 = sshllo.u32 0, 4
    %s1976 = smul.addr 4, 201
    %s1977 = scalar_lea.vmem [#allocation0], %s1976
    %1978 = vst [vmem:[%s1977] sm:%s1975] %v1974
    %s1979 = scalar_lea.vmem [#allocation2], 1616
    %v1980 = vld [vmem:[%s1979] sm:%s769]
    %s1981 = sshllo.u32 0, 4
    %s1982 = smul.addr 4, 202
    %s1983 = scalar_lea.vmem [#allocation0], %s1982
    %1984 = vst [vmem:[%s1983] sm:%s1981] %v1980
    %s1985 = scalar_lea.vmem [#allocation2], 1624
    %v1986 = vld [vmem:[%s1985] sm:%s769]
    %s1987 = sshllo.u32 0, 4
    %s1988 = smul.addr 4, 203
    %s1989 = scalar_lea.vmem [#allocation0], %s1988
    %1990 = vst [vmem:[%s1989] sm:%s1987] %v1986
    %s1991 = scalar_lea.vmem [#allocation2], 1632
    %v1992 = vld [vmem:[%s1991] sm:%s769]
    %s1993 = sshllo.u32 0, 4
    %s1994 = smul.addr 4, 204
    %s1995 = scalar_lea.vmem [#allocation0], %s1994
    %1996 = vst [vmem:[%s1995] sm:%s1993] %v1992
    %s1997 = scalar_lea.vmem [#allocation2], 1640
    %v1998 = vld [vmem:[%s1997] sm:%s769]
    %s1999 = sshllo.u32 0, 4
    %s2000 = smul.addr 4, 205
    %s2001 = scalar_lea.vmem [#allocation0], %s2000
    %2002 = vst [vmem:[%s2001] sm:%s1999] %v1998
    %s2003 = scalar_lea.vmem [#allocation2], 1648
    %v2004 = vld [vmem:[%s2003] sm:%s769]
    %s2005 = sshllo.u32 0, 4
    %s2006 = smul.addr 4, 206
    %s2007 = scalar_lea.vmem [#allocation0], %s2006
    %2008 = vst [vmem:[%s2007] sm:%s2005] %v2004
    %s2009 = scalar_lea.vmem [#allocation2], 1656
    %v2010 = vld [vmem:[%s2009] sm:%s769]
    %s2011 = sshllo.u32 0, 4
    %s2012 = smul.addr 4, 207
    %s2013 = scalar_lea.vmem [#allocation0], %s2012
    %2014 = vst [vmem:[%s2013] sm:%s2011] %v2010
    %s2015 = scalar_lea.vmem [#allocation2], 1664
    %v2016 = vld [vmem:[%s2015] sm:%s769]
    %s2017 = sshllo.u32 0, 4
    %s2018 = smul.addr 4, 208
    %s2019 = scalar_lea.vmem [#allocation0], %s2018
    %2020 = vst [vmem:[%s2019] sm:%s2017] %v2016
    %s2021 = scalar_lea.vmem [#allocation2], 1672
    %v2022 = vld [vmem:[%s2021] sm:%s769]
    %s2023 = sshllo.u32 0, 4
    %s2024 = smul.addr 4, 209
    %s2025 = scalar_lea.vmem [#allocation0], %s2024
    %2026 = vst [vmem:[%s2025] sm:%s2023] %v2022
    %s2027 = scalar_lea.vmem [#allocation2], 1680
    %v2028 = vld [vmem:[%s2027] sm:%s769]
    %s2029 = sshllo.u32 0, 4
    %s2030 = smul.addr 4, 210
    %s2031 = scalar_lea.vmem [#allocation0], %s2030
    %2032 = vst [vmem:[%s2031] sm:%s2029] %v2028
    %s2033 = scalar_lea.vmem [#allocation2], 1688
    %v2034 = vld [vmem:[%s2033] sm:%s769]
    %s2035 = sshllo.u32 0, 4
    %s2036 = smul.addr 4, 211
    %s2037 = scalar_lea.vmem [#allocation0], %s2036
    %2038 = vst [vmem:[%s2037] sm:%s2035] %v2034
    %s2039 = scalar_lea.vmem [#allocation2], 1696
    %v2040 = vld [vmem:[%s2039] sm:%s769]
    %s2041 = sshllo.u32 0, 4
    %s2042 = smul.addr 4, 212
    %s2043 = scalar_lea.vmem [#allocation0], %s2042
    %2044 = vst [vmem:[%s2043] sm:%s2041] %v2040
    %s2045 = scalar_lea.vmem [#allocation2], 1704
    %v2046 = vld [vmem:[%s2045] sm:%s769]
    %s2047 = sshllo.u32 0, 4
    %s2048 = smul.addr 4, 213
    %s2049 = scalar_lea.vmem [#allocation0], %s2048
    %2050 = vst [vmem:[%s2049] sm:%s2047] %v2046
    %s2051 = scalar_lea.vmem [#allocation2], 1712
    %v2052 = vld [vmem:[%s2051] sm:%s769]
    %s2053 = sshllo.u32 0, 4
    %s2054 = smul.addr 4, 214
    %s2055 = scalar_lea.vmem [#allocation0], %s2054
    %2056 = vst [vmem:[%s2055] sm:%s2053] %v2052
    %s2057 = scalar_lea.vmem [#allocation2], 1720
    %v2058 = vld [vmem:[%s2057] sm:%s769]
    %s2059 = sshllo.u32 0, 4
    %s2060 = smul.addr 4, 215
    %s2061 = scalar_lea.vmem [#allocation0], %s2060
    %2062 = vst [vmem:[%s2061] sm:%s2059] %v2058
    %s2063 = scalar_lea.vmem [#allocation2], 1728
    %v2064 = vld [vmem:[%s2063] sm:%s769]
    %s2065 = sshllo.u32 0, 4
    %s2066 = smul.addr 4, 216
    %s2067 = scalar_lea.vmem [#allocation0], %s2066
    %2068 = vst [vmem:[%s2067] sm:%s2065] %v2064
    %s2069 = scalar_lea.vmem [#allocation2], 1736
    %v2070 = vld [vmem:[%s2069] sm:%s769]
    %s2071 = sshllo.u32 0, 4
    %s2072 = smul.addr 4, 217
    %s2073 = scalar_lea.vmem [#allocation0], %s2072
    %2074 = vst [vmem:[%s2073] sm:%s2071] %v2070
    %s2075 = scalar_lea.vmem [#allocation2], 1744
    %v2076 = vld [vmem:[%s2075] sm:%s769]
    %s2077 = sshllo.u32 0, 4
    %s2078 = smul.addr 4, 218
    %s2079 = scalar_lea.vmem [#allocation0], %s2078
    %2080 = vst [vmem:[%s2079] sm:%s2077] %v2076
    %s2081 = scalar_lea.vmem [#allocation2], 1752
    %v2082 = vld [vmem:[%s2081] sm:%s769]
    %s2083 = sshllo.u32 0, 4
    %s2084 = smul.addr 4, 219
    %s2085 = scalar_lea.vmem [#allocation0], %s2084
    %2086 = vst [vmem:[%s2085] sm:%s2083] %v2082
    %s2087 = scalar_lea.vmem [#allocation2], 1760
    %v2088 = vld [vmem:[%s2087] sm:%s769]
    %s2089 = sshllo.u32 0, 4
    %s2090 = smul.addr 4, 220
    %s2091 = scalar_lea.vmem [#allocation0], %s2090
    %2092 = vst [vmem:[%s2091] sm:%s2089] %v2088
    %s2093 = scalar_lea.vmem [#allocation2], 1768
    %v2094 = vld [vmem:[%s2093] sm:%s769]
    %s2095 = sshllo.u32 0, 4
    %s2096 = smul.addr 4, 221
    %s2097 = scalar_lea.vmem [#allocation0], %s2096
    %2098 = vst [vmem:[%s2097] sm:%s2095] %v2094
    %s2099 = scalar_lea.vmem [#allocation2], 1776
    %v2100 = vld [vmem:[%s2099] sm:%s769]
    %s2101 = sshllo.u32 0, 4
    %s2102 = smul.addr 4, 222
    %s2103 = scalar_lea.vmem [#allocation0], %s2102
    %2104 = vst [vmem:[%s2103] sm:%s2101] %v2100
    %s2105 = scalar_lea.vmem [#allocation2], 1784
    %v2106 = vld [vmem:[%s2105] sm:%s769]
    %s2107 = sshllo.u32 0, 4
    %s2108 = smul.addr 4, 223
    %s2109 = scalar_lea.vmem [#allocation0], %s2108
    %2110 = vst [vmem:[%s2109] sm:%s2107] %v2106
    %s2111 = scalar_lea.vmem [#allocation2], 1792
    %v2112 = vld [vmem:[%s2111] sm:%s769]
    %s2113 = sshllo.u32 0, 4
    %s2114 = smul.addr 4, 224
    %s2115 = scalar_lea.vmem [#allocation0], %s2114
    %2116 = vst [vmem:[%s2115] sm:%s2113] %v2112
    %s2117 = scalar_lea.vmem [#allocation2], 1800
    %v2118 = vld [vmem:[%s2117] sm:%s769]
    %s2119 = sshllo.u32 0, 4
    %s2120 = smul.addr 4, 225
    %s2121 = scalar_lea.vmem [#allocation0], %s2120
    %2122 = vst [vmem:[%s2121] sm:%s2119] %v2118
    %s2123 = scalar_lea.vmem [#allocation2], 1808
    %v2124 = vld [vmem:[%s2123] sm:%s769]
    %s2125 = sshllo.u32 0, 4
    %s2126 = smul.addr 4, 226
    %s2127 = scalar_lea.vmem [#allocation0], %s2126
    %2128 = vst [vmem:[%s2127] sm:%s2125] %v2124
    %s2129 = scalar_lea.vmem [#allocation2], 1816
    %v2130 = vld [vmem:[%s2129] sm:%s769]
    %s2131 = sshllo.u32 0, 4
    %s2132 = smul.addr 4, 227
    %s2133 = scalar_lea.vmem [#allocation0], %s2132
    %2134 = vst [vmem:[%s2133] sm:%s2131] %v2130
    %s2135 = scalar_lea.vmem [#allocation2], 1824
    %v2136 = vld [vmem:[%s2135] sm:%s769]
    %s2137 = sshllo.u32 0, 4
    %s2138 = smul.addr 4, 228
    %s2139 = scalar_lea.vmem [#allocation0], %s2138
    %2140 = vst [vmem:[%s2139] sm:%s2137] %v2136
    %s2141 = scalar_lea.vmem [#allocation2], 1832
    %v2142 = vld [vmem:[%s2141] sm:%s769]
    %s2143 = sshllo.u32 0, 4
    %s2144 = smul.addr 4, 229
    %s2145 = scalar_lea.vmem [#allocation0], %s2144
    %2146 = vst [vmem:[%s2145] sm:%s2143] %v2142
    %s2147 = scalar_lea.vmem [#allocation2], 1840
    %v2148 = vld [vmem:[%s2147] sm:%s769]
    %s2149 = sshllo.u32 0, 4
    %s2150 = smul.addr 4, 230
    %s2151 = scalar_lea.vmem [#allocation0], %s2150
    %2152 = vst [vmem:[%s2151] sm:%s2149] %v2148
    %s2153 = scalar_lea.vmem [#allocation2], 1848
    %v2154 = vld [vmem:[%s2153] sm:%s769]
    %s2155 = sshllo.u32 0, 4
    %s2156 = smul.addr 4, 231
    %s2157 = scalar_lea.vmem [#allocation0], %s2156
    %2158 = vst [vmem:[%s2157] sm:%s2155] %v2154
    %s2159 = scalar_lea.vmem [#allocation2], 1856
    %v2160 = vld [vmem:[%s2159] sm:%s769]
    %s2161 = sshllo.u32 0, 4
    %s2162 = smul.addr 4, 232
    %s2163 = scalar_lea.vmem [#allocation0], %s2162
    %2164 = vst [vmem:[%s2163] sm:%s2161] %v2160
    %s2165 = scalar_lea.vmem [#allocation2], 1864
    %v2166 = vld [vmem:[%s2165] sm:%s769]
    %s2167 = sshllo.u32 0, 4
    %s2168 = smul.addr 4, 233
    %s2169 = scalar_lea.vmem [#allocation0], %s2168
    %2170 = vst [vmem:[%s2169] sm:%s2167] %v2166
    %s2171 = scalar_lea.vmem [#allocation2], 1872
    %v2172 = vld [vmem:[%s2171] sm:%s769]
    %s2173 = sshllo.u32 0, 4
    %s2174 = smul.addr 4, 234
    %s2175 = scalar_lea.vmem [#allocation0], %s2174
    %2176 = vst [vmem:[%s2175] sm:%s2173] %v2172
    %s2177 = scalar_lea.vmem [#allocation2], 1880
    %v2178 = vld [vmem:[%s2177] sm:%s769]
    %s2179 = sshllo.u32 0, 4
    %s2180 = smul.addr 4, 235
    %s2181 = scalar_lea.vmem [#allocation0], %s2180
    %2182 = vst [vmem:[%s2181] sm:%s2179] %v2178
    %s2183 = scalar_lea.vmem [#allocation2], 1888
    %v2184 = vld [vmem:[%s2183] sm:%s769]
    %s2185 = sshllo.u32 0, 4
    %s2186 = smul.addr 4, 236
    %s2187 = scalar_lea.vmem [#allocation0], %s2186
    %2188 = vst [vmem:[%s2187] sm:%s2185] %v2184
    %s2189 = scalar_lea.vmem [#allocation2], 1896
    %v2190 = vld [vmem:[%s2189] sm:%s769]
    %s2191 = sshllo.u32 0, 4
    %s2192 = smul.addr 4, 237
    %s2193 = scalar_lea.vmem [#allocation0], %s2192
    %2194 = vst [vmem:[%s2193] sm:%s2191] %v2190
    %s2195 = scalar_lea.vmem [#allocation2], 1904
    %v2196 = vld [vmem:[%s2195] sm:%s769]
    %s2197 = sshllo.u32 0, 4
    %s2198 = smul.addr 4, 238
    %s2199 = scalar_lea.vmem [#allocation0], %s2198
    %2200 = vst [vmem:[%s2199] sm:%s2197] %v2196
    %s2201 = scalar_lea.vmem [#allocation2], 1912
    %v2202 = vld [vmem:[%s2201] sm:%s769]
    %s2203 = sshllo.u32 0, 4
    %s2204 = smul.addr 4, 239
    %s2205 = scalar_lea.vmem [#allocation0], %s2204
    %2206 = vst [vmem:[%s2205] sm:%s2203] %v2202
    %s2207 = scalar_lea.vmem [#allocation2], 1920
    %v2208 = vld [vmem:[%s2207] sm:%s769]
    %s2209 = sshllo.u32 0, 4
    %s2210 = smul.addr 4, 240
    %s2211 = scalar_lea.vmem [#allocation0], %s2210
    %2212 = vst [vmem:[%s2211] sm:%s2209] %v2208
    %s2213 = scalar_lea.vmem [#allocation2], 1928
    %v2214 = vld [vmem:[%s2213] sm:%s769]
    %s2215 = sshllo.u32 0, 4
    %s2216 = smul.addr 4, 241
    %s2217 = scalar_lea.vmem [#allocation0], %s2216
    %2218 = vst [vmem:[%s2217] sm:%s2215] %v2214
    %s2219 = scalar_lea.vmem [#allocation2], 1936
    %v2220 = vld [vmem:[%s2219] sm:%s769]
    %s2221 = sshllo.u32 0, 4
    %s2222 = smul.addr 4, 242
    %s2223 = scalar_lea.vmem [#allocation0], %s2222
    %2224 = vst [vmem:[%s2223] sm:%s2221] %v2220
    %s2225 = scalar_lea.vmem [#allocation2], 1944
    %v2226 = vld [vmem:[%s2225] sm:%s769]
    %s2227 = sshllo.u32 0, 4
    %s2228 = smul.addr 4, 243
    %s2229 = scalar_lea.vmem [#allocation0], %s2228
    %2230 = vst [vmem:[%s2229] sm:%s2227] %v2226
    %s2231 = scalar_lea.vmem [#allocation2], 1952
    %v2232 = vld [vmem:[%s2231] sm:%s769]
    %s2233 = sshllo.u32 0, 4
    %s2234 = smul.addr 4, 244
    %s2235 = scalar_lea.vmem [#allocation0], %s2234
    %2236 = vst [vmem:[%s2235] sm:%s2233] %v2232
    %s2237 = scalar_lea.vmem [#allocation2], 1960
    %v2238 = vld [vmem:[%s2237] sm:%s769]
    %s2239 = sshllo.u32 0, 4
    %s2240 = smul.addr 4, 245
    %s2241 = scalar_lea.vmem [#allocation0], %s2240
    %2242 = vst [vmem:[%s2241] sm:%s2239] %v2238
    %s2243 = scalar_lea.vmem [#allocation2], 1968
    %v2244 = vld [vmem:[%s2243] sm:%s769]
    %s2245 = sshllo.u32 0, 4
    %s2246 = smul.addr 4, 246
    %s2247 = scalar_lea.vmem [#allocation0], %s2246
    %2248 = vst [vmem:[%s2247] sm:%s2245] %v2244
    %s2249 = scalar_lea.vmem [#allocation2], 1976
    %v2250 = vld [vmem:[%s2249] sm:%s769]
    %s2251 = sshllo.u32 0, 4
    %s2252 = smul.addr 4, 247
    %s2253 = scalar_lea.vmem [#allocation0], %s2252
    %2254 = vst [vmem:[%s2253] sm:%s2251] %v2250
    %s2255 = scalar_lea.vmem [#allocation2], 1984
    %v2256 = vld [vmem:[%s2255] sm:%s769]
    %s2257 = sshllo.u32 0, 4
    %s2258 = smul.addr 4, 248
    %s2259 = scalar_lea.vmem [#allocation0], %s2258
    %2260 = vst [vmem:[%s2259] sm:%s2257] %v2256
    %s2261 = scalar_lea.vmem [#allocation2], 1992
    %v2262 = vld [vmem:[%s2261] sm:%s769]
    %s2263 = sshllo.u32 0, 4
    %s2264 = smul.addr 4, 249
    %s2265 = scalar_lea.vmem [#allocation0], %s2264
    %2266 = vst [vmem:[%s2265] sm:%s2263] %v2262
    %s2267 = scalar_lea.vmem [#allocation2], 2000
    %v2268 = vld [vmem:[%s2267] sm:%s769]
    %s2269 = sshllo.u32 0, 4
    %s2270 = smul.addr 4, 250
    %s2271 = scalar_lea.vmem [#allocation0], %s2270
    %2272 = vst [vmem:[%s2271] sm:%s2269] %v2268
    %s2273 = scalar_lea.vmem [#allocation2], 2008
    %v2274 = vld [vmem:[%s2273] sm:%s769]
    %s2275 = sshllo.u32 0, 4
    %s2276 = smul.addr 4, 251
    %s2277 = scalar_lea.vmem [#allocation0], %s2276
    %2278 = vst [vmem:[%s2277] sm:%s2275] %v2274
    %s2279 = scalar_lea.vmem [#allocation2], 2016
    %v2280 = vld [vmem:[%s2279] sm:%s769]
    %s2281 = sshllo.u32 0, 4
    %s2282 = smul.addr 4, 252
    %s2283 = scalar_lea.vmem [#allocation0], %s2282
    %2284 = vst [vmem:[%s2283] sm:%s2281] %v2280
    %s2285 = scalar_lea.vmem [#allocation2], 2024
    %v2286 = vld [vmem:[%s2285] sm:%s769]
    %s2287 = sshllo.u32 0, 4
    %s2288 = smul.addr 4, 253
    %s2289 = scalar_lea.vmem [#allocation0], %s2288
    %2290 = vst [vmem:[%s2289] sm:%s2287] %v2286
    %s2291 = scalar_lea.vmem [#allocation2], 2032
    %v2292 = vld [vmem:[%s2291] sm:%s769]
    %s2293 = sshllo.u32 0, 4
    %s2294 = smul.addr 4, 254
    %s2295 = scalar_lea.vmem [#allocation0], %s2294
    %2296 = vst [vmem:[%s2295] sm:%s2293] %v2292
    %s2297 = scalar_lea.vmem [#allocation2], 2040
    %v2298 = vld [vmem:[%s2297] sm:%s769]
    %s2299 = sshllo.u32 0, 4
    %s2300 = smul.addr 4, 255
    %s2301 = scalar_lea.vmem [#allocation0], %s2300
    %2302 = vst [vmem:[%s2301] sm:%s2299] %v2298
    %s2304 = ssub.s32 16384, 16384
    %2305 = vsyncadd [#allocation1], %s2304
    %s2307 = sshll.u32 [#allocation0], 4
    %s2308 = int_to_ptr.vmem [resolvable:$true] %s2307
    %2310 = dma.vmem_to_hbm [thread:$0]  %s2308, 16384, %s1, [#allocation1]
    %2311 = dma.done [#allocation1], 16384
    %2312 = vsyncpa [#allocation1], 1

// kernel: weighted_iterative_refinement_forward.1
$region0: #{weighted_iterative_refinement_forward.1}
  #allocation0 [shape = 'u32[]', space=smem, size = 0x4, offset = 0x4, fixed_abs, tag = 'smem constant byte address 0x4 - core index']
  #allocation1 [shape = 'u32[144,128]{1,0:T(1,128)}', space=vmem, size = 0x12000, scoped, tag = 'internal scratch']
  #allocation2 [shape = 'bf16[128,512]{1,0:T(16,128)(2,1)}', space=vmem, size = 0x20000, scoped, tag = 'scratch operand']
  %s0 = inlined_call_operand.vmem [shape: f32[4], index: 0, kind: input, shape index: {}]
  %s1 = inlined_call_operand.vmem [shape: bf16[2,128,128], index: 1, kind: input, shape index: {}]
  %s2 = inlined_call_operand.vmem [shape: bf16[2,128,128], index: 2, kind: input, shape index: {}]
  %s3 = inlined_call_operand.vmem [shape: bf16[512,128], index: 3, kind: input, shape index: {}]
  %s4 = inlined_call_operand.vmem [shape: bf16[2,128,512], index: 4, kind: input, shape index: {}]
  %s5 = inlined_call_operand.vmem [shape: bf16[2,128,512], index: 5, kind: input, shape index: {}]
  %s6 = inlined_call_operand.vmem [shape: f32[2,2,128,512], index: 6, kind: output, shape index: {0}]
  %s7 = inlined_call_operand.vmem [shape: f32[2,1,1,128], index: 7, kind: output, shape index: {1}]
  %8 = xla_tuple %s6, %s7
  %s9 = sld [smem:[#allocation0]]
  $region88: #{weighted_iterative_refinement_forward.1} parent=0
    _
  %s11 = ssub.s32 1, %s9
  %s12 = scalar_select 0, %s11, %s9
  $region1: #{weighted_iterative_refinement_forward.1} parent=0
    #allocation3 [shape = 'u8[512]{0}', space=smem, size = 0x200, scoped, tag = 'input window, operand 0, single buffered']
    #allocation4 [shape = 's32[2]{0}', space=sflag, size = 0x8, scoped, tag = 'scoped memory for weighted_iterative_refinement_forward.1']
    #allocation5 [shape = 'u8[1048576]{0}', space=vmem, size = 0x100000, scoped, tag = 'output window, operand 0']
    %13 = vsyncpa [#allocation4], 0
    loop: start=0, step=1, limit=4
    $region2: #{weighted_iterative_refinement_forward.1} parent=1 // loop_pre_header
      _
    $region3: #{weighted_iterative_refinement_forward.1} parent=1 // loop_header
      %s15 = sphi 0, %s19
      %p16 = scmp.ge.s32.totalorder %s15, 4
      %s22 = sphi 0, %s34
      %s23 = sphi 0, %s30
      %s24 = sphi 0, %s22
      %s25 = sphi 0, %s23
      %s26 = sphi 0, %s24
      %s27 = sphi 0, %s25
      %s35 = sphi 0, %s35
      %s37 = sphi 0, %s35
      %s38 = sphi 0, %s37
      %s52 = sphi 0, %s38
      %s60 = sphi 0, %s62
      %s63 = sphi 0, %s60
      %s64 = sphi 0, %s63
      %s80 = sphi 0, %s64
      %s86 = sphi 0, %s88
      %s89 = sphi 0, %s86
      %s90 = sphi 0, %s89
      %s106 = sphi 0, %s90
      %s110 = sphi 0, %s110
      %s112 = sphi 0, %s110
      %s113 = sphi 0, %s112
      %s127 = sphi 0, %s113
      %s135 = sphi 0, %s137
      %s138 = sphi 0, %s135
      %s139 = sphi 0, %s138
      %s155 = sphi 0, %s139
      %s163 = sphi 0, %s165
      %s166 = sphi 0, %s163
      %s167 = sphi 0, %s166
      %s183 = sphi 0, %s167
      %s191 = sphi 0, %s193
      %s194 = sphi 0, %s191
      %s195 = sphi 0, %s194
      %s211 = sphi 0, %s195
      %s219 = sphi 0, %s221
      %s222 = sphi 0, %s219
      %s223 = sphi 0, %s222
      %s239 = sphi 0, %s223
    $region4: #{weighted_iterative_refinement_forward.1} parent=1 // loop_header_branch
      %18 = sbr.rel (%p16) target = $region8
    $region5: #{weighted_iterative_refinement_forward.1} parent=1 // loop_body
      %s20 = ssub.s32 %s15, 1
      %s21 = ssub.s32 %s15, 2
      %s28 = sadd.s32 1, %s23
      %p29 = scmp.ge.s32.totalorder %s28, 1
      %s30 = scalar_select %p29, 0, %s28
      %s31 = sadd.s32 1, %s22
      %s32 = scalar_select %p29, %s31, %s22
      %p33 = scmp.ge.s32.totalorder %s32, 2
      %s34 = scalar_select %p33, 0, %s32
      %s36 = sadd.s32 %s35, 1
      %p39 = scmp.eq.s32.totalorder %s15, 1
      %p40 = scmp.ne.s32.totalorder %s35, %s37
      %p41 = scmp.eq.s32.totalorder %s15, 0
      %p42 = por %p40, %p41
      %p43 = scmp.ne.s32.totalorder %s35, %s37
      %p44 = scmp.eq.s32.totalorder %s20, 1
      %p45 = por %p43, %p44
      %p46 = scmp.ne.s32.totalorder %s37, %s38
      %p47 = scmp.eq.s32.totalorder %s20, 0
      %p48 = por %p46, %p47
      %p49 = scmp.ne.s32.totalorder %s37, %s38
      %p50 = scmp.eq.s32.totalorder %s21, 1
      %p51 = por %p49, %p50
      %p53 = scmp.ne.s32.totalorder %s38, %s52
      %p54 = scmp.eq.s32.totalorder %s21, 0
      %p55 = por %p53, %p54
      %s56 = ssub.s32 %s22, %s34
      %s57 = ssub.s32 %s23, %s30
      %s58 = sor.u32 %s56, %s57
      %p59 = scmp.eq.s32.totalorder %s58, 0
      %s61 = sadd.s32 %s60, 1
      %s62 = scalar_select %p59, %s60, %s61
      %p65 = pneg %p59
      %p66 = scmp.eq.s32.totalorder %s15, 1
      %p67 = por %p65, %p66
      %p68 = scmp.ne.s32.totalorder %s60, %s63
      %p69 = scmp.eq.s32.totalorder %s15, 0
      %p70 = por %p68, %p69
      %p71 = scmp.ne.s32.totalorder %s60, %s63
      %p72 = scmp.eq.s32.totalorder %s20, 1
      %p73 = por %p71, %p72
      %p74 = scmp.ne.s32.totalorder %s63, %s64
      %p75 = scmp.eq.s32.totalorder %s20, 0
      %p76 = por %p74, %p75
      %p77 = scmp.ne.s32.totalorder %s63, %s64
      %p78 = scmp.eq.s32.totalorder %s21, 1
      %p79 = por %p77, %p78
      %p81 = scmp.ne.s32.totalorder %s64, %s80
      %p82 = scmp.eq.s32.totalorder %s21, 0
      %p83 = por %p81, %p82
      %s84 = ssub.s32 %s22, %s34
      %p85 = scmp.eq.s32.totalorder %s84, 0
      %s87 = sadd.s32 %s86, 1
      %s88 = scalar_select %p85, %s86, %s87
      %p91 = pneg %p85
      %p92 = scmp.eq.s32.totalorder %s15, 1
      %p93 = por %p91, %p92
      %p94 = scmp.ne.s32.totalorder %s86, %s89
      %p95 = scmp.eq.s32.totalorder %s15, 0
      %p96 = por %p94, %p95
      %p97 = scmp.ne.s32.totalorder %s86, %s89
      %p98 = scmp.eq.s32.totalorder %s20, 1
      %p99 = por %p97, %p98
      %p100 = scmp.ne.s32.totalorder %s89, %s90
      %p101 = scmp.eq.s32.totalorder %s20, 0
      %p102 = por %p100, %p101
      %p103 = scmp.ne.s32.totalorder %s89, %s90
      %p104 = scmp.eq.s32.totalorder %s21, 1
      %p105 = por %p103, %p104
      %p107 = scmp.ne.s32.totalorder %s90, %s106
      %p108 = scmp.eq.s32.totalorder %s21, 0
      %p109 = por %p107, %p108
      %s111 = sadd.s32 %s110, 1
      %p114 = scmp.eq.s32.totalorder %s15, 1
      %p115 = scmp.ne.s32.totalorder %s110, %s112
      %p116 = scmp.eq.s32.totalorder %s15, 0
      %p117 = por %p115, %p116
      %p118 = scmp.ne.s32.totalorder %s110, %s112
      %p119 = scmp.eq.s32.totalorder %s20, 1
      %p120 = por %p118, %p119
      %p121 = scmp.ne.s32.totalorder %s112, %s113
      %p122 = scmp.eq.s32.totalorder %s20, 0
      %p123 = por %p121, %p122
      %p124 = scmp.ne.s32.totalorder %s112, %s113
      %p125 = scmp.eq.s32.totalorder %s21, 1
      %p126 = por %p124, %p125
      %p128 = scmp.ne.s32.totalorder %s113, %s127
      %p129 = scmp.eq.s32.totalorder %s21, 0
      %p130 = por %p128, %p129
      %s131 = ssub.s32 %s22, %s34
      %s132 = ssub.s32 %s23, %s30
      %s133 = sor.u32 %s131, %s132
      %p134 = scmp.eq.s32.totalorder %s133, 0
      %s136 = sadd.s32 %s135, 1
      %s137 = scalar_select %p134, %s135, %s136
      %p140 = pneg %p134
      %p141 = scmp.eq.s32.totalorder %s15, 1
      %p142 = por %p140, %p141
      %p143 = scmp.ne.s32.totalorder %s135, %s138
      %p144 = scmp.eq.s32.totalorder %s15, 0
      %p145 = por %p143, %p144
      %p146 = scmp.ne.s32.totalorder %s135, %s138
      %p147 = scmp.eq.s32.totalorder %s20, 1
      %p148 = por %p146, %p147
      %p149 = scmp.ne.s32.totalorder %s138, %s139
      %p150 = scmp.eq.s32.totalorder %s20, 0
      %p151 = por %p149, %p150
      %p152 = scmp.ne.s32.totalorder %s138, %s139
      %p153 = scmp.eq.s32.totalorder %s21, 1
      %p154 = por %p152, %p153
      %p156 = scmp.ne.s32.totalorder %s139, %s155
      %p157 = scmp.eq.s32.totalorder %s21, 0
      %p158 = por %p156, %p157
      %s159 = ssub.s32 %s22, %s34
      %s160 = ssub.s32 %s23, %s30
      %s161 = sor.u32 %s159, %s160
      %p162 = scmp.eq.s32.totalorder %s161, 0
      %s164 = sadd.s32 %s163, 1
      %s165 = scalar_select %p162, %s163, %s164
      %p168 = pneg %p162
      %p169 = scmp.eq.s32.totalorder %s15, 1
      %p170 = por %p168, %p169
      %p171 = scmp.ne.s32.totalorder %s163, %s166
      %p172 = scmp.eq.s32.totalorder %s15, 0
      %p173 = por %p171, %p172
      %p174 = scmp.ne.s32.totalorder %s163, %s166
      %p175 = scmp.eq.s32.totalorder %s20, 1
      %p176 = por %p174, %p175
      %p177 = scmp.ne.s32.totalorder %s166, %s167
      %p178 = scmp.eq.s32.totalorder %s20, 0
      %p179 = por %p177, %p178
      %p180 = scmp.ne.s32.totalorder %s166, %s167
      %p181 = scmp.eq.s32.totalorder %s21, 1
      %p182 = por %p180, %p181
      %p184 = scmp.ne.s32.totalorder %s167, %s183
      %p185 = scmp.eq.s32.totalorder %s21, 0
      %p186 = por %p184, %p185
      %s187 = ssub.s32 %s22, %s34
      %s188 = ssub.s32 %s23, %s30
      %s189 = sor.u32 %s187, %s188
      %p190 = scmp.eq.s32.totalorder %s189, 0
      %s192 = sadd.s32 %s191, 1
      %s193 = scalar_select %p190, %s191, %s192
      %p196 = pneg %p190
      %p197 = scmp.eq.s32.totalorder %s15, 1
      %p198 = por %p196, %p197
      %p199 = scmp.ne.s32.totalorder %s191, %s194
      %p200 = scmp.eq.s32.totalorder %s15, 0
      %p201 = por %p199, %p200
      %p202 = scmp.ne.s32.totalorder %s191, %s194
      %p203 = scmp.eq.s32.totalorder %s20, 1
      %p204 = por %p202, %p203
      %p205 = scmp.ne.s32.totalorder %s194, %s195
      %p206 = scmp.eq.s32.totalorder %s20, 0
      %p207 = por %p205, %p206
      %p208 = scmp.ne.s32.totalorder %s194, %s195
      %p209 = scmp.eq.s32.totalorder %s21, 1
      %p210 = por %p208, %p209
      %p212 = scmp.ne.s32.totalorder %s195, %s211
      %p213 = scmp.eq.s32.totalorder %s21, 0
      %p214 = por %p212, %p213
      %s215 = ssub.s32 %s22, %s34
      %s216 = ssub.s32 %s23, %s30
      %s217 = sor.u32 %s215, %s216
      %p218 = scmp.eq.s32.totalorder %s217, 0
      %s220 = sadd.s32 %s219, 1
      %s221 = scalar_select %p218, %s219, %s220
      %p224 = pneg %p218
      %p225 = scmp.eq.s32.totalorder %s15, 1
      %p226 = por %p224, %p225
      %p227 = scmp.ne.s32.totalorder %s219, %s222
      %p228 = scmp.eq.s32.totalorder %s15, 0
      %p229 = por %p227, %p228
      %p230 = scmp.ne.s32.totalorder %s219, %s222
      %p231 = scmp.eq.s32.totalorder %s20, 1
      %p232 = por %p230, %p231
      %p233 = scmp.ne.s32.totalorder %s222, %s223
      %p234 = scmp.eq.s32.totalorder %s20, 0
      %p235 = por %p233, %p234
      %p236 = scmp.ne.s32.totalorder %s222, %s223
      %p237 = scmp.eq.s32.totalorder %s21, 1
      %p238 = por %p236, %p237
      %p240 = scmp.ne.s32.totalorder %s223, %s239
      %p241 = scmp.eq.s32.totalorder %s21, 0
      %p242 = por %p240, %p241
      %p243 = scmp.le.s32.totalorder 1, %s15
      %p244 = scmp.lt.s32.totalorder %s15, 3
      %p245 = pnand %p243, %p244
      %p246 = pneg %p245
      // Predicated region
      $region9: #{weighted_iterative_refinement_forward.1} parent=5 // pred_check
        _
      $region10: #{weighted_iterative_refinement_forward.1} parent=5 // pred_check_branch
        %248 = sbr.rel (%p245) target = $region12
      $region11: #{weighted_iterative_refinement_forward.1} parent=5 // pred_region
        %s249 = ssub.s32 %s15, 1
        // Predicated region
        $region13: #{weighted_iterative_refinement_forward.1} parent=11 // pred_check
          %p250 = pneg %p48
        $region14: #{weighted_iterative_refinement_forward.1} parent=11 // pred_check_branch
          %252 = sbr.rel (%p250) target = $region16
        $region15: #{weighted_iterative_refinement_forward.1} parent=11 // pred_region
          %s254 = ssub.s32 16, 16
          %255 = vsyncadd [#allocation4], %s254
          %s257 = sshll.u32 %s0, 4
          %s258 = int_to_ptr.vmem [resolvable:$true] %s257
          %260 = dma.vmem_to_smem %s258, 16, [#allocation3], [#allocation4]
        $region16: #{weighted_iterative_refinement_forward.1} parent=11 // pred_fallthru
          _
        // Predicated region
        $region17: #{weighted_iterative_refinement_forward.1} parent=11 // pred_check
          %p261 = pneg %p123
        $region18: #{weighted_iterative_refinement_forward.1} parent=11 // pred_check_branch
          %263 = sbr.rel (%p261) target = $region20
        $region19: #{weighted_iterative_refinement_forward.1} parent=11 // pred_region
          _
        $region20: #{weighted_iterative_refinement_forward.1} parent=11 // pred_fallthru
          _
      $region12: #{weighted_iterative_refinement_forward.1} parent=5 // pred_fallthru
        _
      %p264 = scmp.lt.s32.totalorder %s15, 2
      // Predicated region
      $region21: #{weighted_iterative_refinement_forward.1} parent=5 // pred_check
        %p265 = pneg %p264
      $region22: #{weighted_iterative_refinement_forward.1} parent=5 // pred_check_branch
        %267 = sbr.rel (%p265) target = $region24
      $region23: #{weighted_iterative_refinement_forward.1} parent=5 // pred_region
        // Predicated region
        $region25: #{weighted_iterative_refinement_forward.1} parent=23 // pred_check
          %p268 = pneg %p70
        $region26: #{weighted_iterative_refinement_forward.1} parent=23 // pred_check_branch
          %270 = sbr.rel (%p268) target = $region28
        $region27: #{weighted_iterative_refinement_forward.1} parent=23 // pred_region
          %s271 = smul.u32 16, %s23
          %p272 = scmp.lt.s32.totalorder %s22, 1
          %s273 = scalar_select %p272, %s22, 1
          %p274 = scmp.lt.s32.totalorder %s271, 15
          %s275 = scalar_select %p274, %s271, 15
          %s276 = smul.addr %s273, 16
          %s277 = sadd.s32 %s275, %s276
          %s278 = smul.addr %s277, 4
          %s279 = scalar_lea.vmem %s1, %s278
          %s280 = smul.u32 16, %s23
        $region28: #{weighted_iterative_refinement_forward.1} parent=23 // pred_fallthru
          _
        // Predicated region
        $region29: #{weighted_iterative_refinement_forward.1} parent=23 // pred_check
          %p281 = pneg %p96
        $region30: #{weighted_iterative_refinement_forward.1} parent=23 // pred_check_branch
          %283 = sbr.rel (%p281) target = $region32
        $region31: #{weighted_iterative_refinement_forward.1} parent=23 // pred_region
          %p284 = scmp.lt.s32.totalorder %s22, 1
          %s285 = scalar_select %p284, %s22, 1
          %s286 = smul.addr %s285, 16
          %s287 = smul.addr %s286, 4
          %s288 = scalar_lea.vmem %s2, %s287
        $region32: #{weighted_iterative_refinement_forward.1} parent=23 // pred_fallthru
          _
        // Predicated region
        $region33: #{weighted_iterative_refinement_forward.1} parent=23 // pred_check
          %p289 = pneg %p145
        $region34: #{weighted_iterative_refinement_forward.1} parent=23 // pred_check_branch
          %291 = sbr.rel (%p289) target = $region36
        $region35: #{weighted_iterative_refinement_forward.1} parent=23 // pred_region
          %s292 = smul.u32 16, %s23
          %p293 = scmp.lt.s32.totalorder %s22, 1
          %s294 = scalar_select %p293, %s22, 1
          %p295 = scmp.lt.s32.totalorder %s292, 15
          %s296 = scalar_select %p295, %s292, 15
          %s297 = smul.addr %s296, 4
          %s298 = smul.addr %s294, 64
          %s299 = sadd.s32 %s297, %s298
          %s300 = smul.addr %s299, 4
          %s301 = scalar_lea.vmem %s4, %s300
          %s302 = smul.u32 16, %s23
        $region36: #{weighted_iterative_refinement_forward.1} parent=23 // pred_fallthru
          _
        // Predicated region
        $region37: #{weighted_iterative_refinement_forward.1} parent=23 // pred_check
          %p303 = pneg %p173
        $region38: #{weighted_iterative_refinement_forward.1} parent=23 // pred_check_branch
          %305 = sbr.rel (%p303) target = $region40
        $region39: #{weighted_iterative_refinement_forward.1} parent=23 // pred_region
          %s306 = smul.u32 16, %s23
          %p307 = scmp.lt.s32.totalorder %s22, 1
          %s308 = scalar_select %p307, %s22, 1
          %p309 = scmp.lt.s32.totalorder %s306, 15
          %s310 = scalar_select %p309, %s306, 15
          %s311 = smul.addr %s310, 4
          %s312 = smul.addr %s308, 64
          %s313 = sadd.s32 %s311, %s312
          %s314 = smul.addr %s313, 4
          %s315 = scalar_lea.vmem %s5, %s314
          %s316 = smul.u32 16, %s23
        $region40: #{weighted_iterative_refinement_forward.1} parent=23 // pred_fallthru
          _
      $region24: #{weighted_iterative_refinement_forward.1} parent=5 // pred_fallthru
        _
      %p317 = scmp.le.s32.totalorder 1, %s15
      %p318 = scmp.lt.s32.totalorder %s15, 3
      %p319 = pnand %p317, %p318
      %p320 = pneg %p319
      // Predicated region
      $region41: #{weighted_iterative_refinement_forward.1} parent=5 // pred_check
        _
      $region42: #{weighted_iterative_refinement_forward.1} parent=5 // pred_check_branch
        %322 = sbr.rel (%p319) target = $region44
      $region43: #{weighted_iterative_refinement_forward.1} parent=5 // pred_region
        %s323 = ssub.s32 %s15, 1
        // Predicated region
        $region45: #{weighted_iterative_refinement_forward.1} parent=43 // pred_check
          %p324 = pneg %p48
        $region46: #{weighted_iterative_refinement_forward.1} parent=43 // pred_check_branch
          %326 = sbr.rel (%p324) target = $region48
        $region47: #{weighted_iterative_refinement_forward.1} parent=43 // pred_region
          %327 = dma.done [#allocation4], 16
        $region48: #{weighted_iterative_refinement_forward.1} parent=43 // pred_fallthru
          _
        %328 = sfence
        %p329 = pneg %p48
        %p330 = pneg %p45
        %s331 = smul.u32 16, %s25
        %p332 = scmp.lt.s32.totalorder %s24, 1
        %s333 = scalar_select %p332, %s24, 1
        %p334 = scmp.lt.s32.totalorder %s331, 15
        %s335 = scalar_select %p334, %s331, 15
        %s336 = smul.addr %s333, 16
        %s337 = sadd.s32 %s335, %s336
        %s338 = smul.addr %s337, 4
        %s339 = scalar_lea.vmem %s1, %s338
        %p340 = pneg %p76
        %p341 = pneg %p73
        %p342 = scmp.lt.s32.totalorder %s24, 1
        %s343 = scalar_select %p342, %s24, 1
        %s344 = smul.addr %s343, 16
        %s345 = smul.addr %s344, 4
        %s346 = scalar_lea.vmem %s2, %s345
        %p347 = pneg %p102
        %p348 = pneg %p99
        %p349 = pneg %p123
        %p350 = pneg %p120
        %s351 = smul.u32 16, %s25
        %p352 = scmp.lt.s32.totalorder %s24, 1
        %s353 = scalar_select %p352, %s24, 1
        %p354 = scmp.lt.s32.totalorder %s351, 15
        %s355 = scalar_select %p354, %s351, 15
        %s356 = smul.addr %s355, 4
        %s357 = smul.addr %s353, 64
        %s358 = sadd.s32 %s356, %s357
        %s359 = smul.addr %s358, 4
        %s360 = scalar_lea.vmem %s4, %s359
        %p361 = pneg %p151
        %p362 = pneg %p148
        %s363 = smul.u32 16, %s25
        %p364 = scmp.lt.s32.totalorder %s24, 1
        %s365 = scalar_select %p364, %s24, 1
        %p366 = scmp.lt.s32.totalorder %s363, 15
        %s367 = scalar_select %p366, %s363, 15
        %s368 = smul.addr %s367, 4
        %s369 = smul.addr %s365, 64
        %s370 = sadd.s32 %s368, %s369
        %s371 = smul.addr %s370, 4
        %s372 = scalar_lea.vmem %s5, %s371
        %p373 = pneg %p179
        %p374 = pneg %p176
        %p375 = pneg %p207
        %p376 = pneg %p204
        %s377 = sand.u32 %s194, 1
        %s378 = sand.u32 %s194, 1
        %s379 = smul.addr %s378, 1024
        %s380 = scalar_lea.vmem [#allocation5], %s379
        %p381 = pneg %p235
        %p382 = pneg %p232
        %p383 = scmp.lt.s32.totalorder %s24, 1
        %s384 = scalar_select %p383, %s24, 1
        %p385 = scmp.lt.s32.totalorder %s25, 0
        %s386 = scalar_select %p385, %s25, 0
        %s387 = sadd.s32 %s386, %s384
        %s388 = scalar_lea.vmem %s7, %s387
        %s389 = smul.u32 16, %s25
        %p390 = scmp.lt.s32.totalorder %s24, 1
        %s391 = scalar_select %p390, %s24, 1
        %p392 = scmp.lt.s32.totalorder %s389, 15
        %s393 = scalar_select %p392, %s389, 15
        %s394 = smul.addr %s391, 16
        %s395 = sadd.s32 %s393, %s394
        %s396 = smul.addr %s395, 4
        %s397 = scalar_lea.vmem %s1, %s396
        %s398 = smul.u32 16, %s25
        %p399 = scmp.lt.s32.totalorder %s24, 1
        %s400 = scalar_select %p399, %s24, 1
        %s401 = smul.addr %s400, 16
        %s402 = smul.addr %s401, 4
        %s403 = scalar_lea.vmem %s2, %s402
        %s404 = smul.u32 16, %s25
        %p405 = scmp.lt.s32.totalorder %s24, 1
        %s406 = scalar_select %p405, %s24, 1
        %p407 = scmp.lt.s32.totalorder %s404, 15
        %s408 = scalar_select %p407, %s404, 15
        %s409 = smul.addr %s408, 4
        %s410 = smul.addr %s406, 64
        %s411 = sadd.s32 %s409, %s410
        %s412 = smul.addr %s411, 4
        %s413 = scalar_lea.vmem %s4, %s412
        %s414 = smul.u32 16, %s25
        %s415 = smul.u32 16, %s25
        %p416 = scmp.lt.s32.totalorder %s24, 1
        %s417 = scalar_select %p416, %s24, 1
        %p418 = scmp.lt.s32.totalorder %s415, 15
        %s419 = scalar_select %p418, %s415, 15
        %s420 = smul.addr %s419, 4
        %s421 = smul.addr %s417, 64
        %s422 = sadd.s32 %s420, %s421
        %s423 = smul.addr %s422, 4
        %s424 = scalar_lea.vmem %s5, %s423
        %s425 = smul.u32 16, %s25
        %s426 = smul.u32 16, %s25
        %p427 = scmp.lt.s32.totalorder %s24, 1
        %s428 = scalar_select %p427, %s24, 1
        %p429 = scmp.lt.s32.totalorder %s25, 0
        %s430 = scalar_select %p429, %s25, 0
        %s431 = sadd.s32 %s430, %s428
        %s432 = scalar_lea.vmem %s7, %s431
        %v434 = vld [vmem:[%s397] sm:$0xf]
        %v435 = vld [vmem:[%s397 + $0x4] sm:$0xf]
        %v436 = vld [vmem:[%s397 + $0x8] sm:$0xf]
        %v437 = vld [vmem:[%s397 + $0xc] sm:$0xf]
        %v438 = vld [vmem:[%s397 + $0x10] sm:$0xf]
        %v439 = vld [vmem:[%s397 + $0x14] sm:$0xf]
        %v440 = vld [vmem:[%s397 + $0x18] sm:$0xf]
        %v441 = vld [vmem:[%s397 + $0x1c] sm:$0xf]
        %v442 = vld [vmem:[%s397 + $0x20] sm:$0xf]
        %v443 = vld [vmem:[%s397 + $0x24] sm:$0xf]
        %v444 = vld [vmem:[%s397 + $0x28] sm:$0xf]
        %v445 = vld [vmem:[%s397 + $0x2c] sm:$0xf]
        %v446 = vld [vmem:[%s397 + $0x30] sm:$0xf]
        %v447 = vld [vmem:[%s397 + $0x34] sm:$0xf]
        %v448 = vld [vmem:[%s397 + $0x38] sm:$0xf]
        %v449 = vld [vmem:[%s397 + $0x3c] sm:$0xf]
        %v450 = vld [vmem:[%s403] sm:$0xf]
        %v451 = vld [vmem:[%s403 + $0x4] sm:$0xf]
        %v452 = vld [vmem:[%s403 + $0x8] sm:$0xf]
        %v453 = vld [vmem:[%s403 + $0xc] sm:$0xf]
        %v454 = vld [vmem:[%s403 + $0x10] sm:$0xf]
        %v455 = vld [vmem:[%s403 + $0x14] sm:$0xf]
        %v456 = vld [vmem:[%s403 + $0x18] sm:$0xf]
        %v457 = vld [vmem:[%s403 + $0x1c] sm:$0xf]
        %v458 = vld [vmem:[%s403 + $0x20] sm:$0xf]
        %v459 = vld [vmem:[%s403 + $0x24] sm:$0xf]
        %v460 = vld [vmem:[%s403 + $0x28] sm:$0xf]
        %v461 = vld [vmem:[%s403 + $0x2c] sm:$0xf]
        %v462 = vld [vmem:[%s403 + $0x30] sm:$0xf]
        %v463 = vld [vmem:[%s403 + $0x34] sm:$0xf]
        %v464 = vld [vmem:[%s403 + $0x38] sm:$0xf]
        %v465 = vld [vmem:[%s403 + $0x3c] sm:$0xf]
        %v466 = vld [vmem:[%s3] sm:$0xf]
        %v467 = vld [vmem:[%s3 + $0x4] sm:$0xf]
        %v468 = vld [vmem:[%s3 + $0x8] sm:$0xf]
        %v469 = vld [vmem:[%s3 + $0xc] sm:$0xf]
        %v470 = vld [vmem:[%s3 + $0x10] sm:$0xf]
        %v471 = vld [vmem:[%s3 + $0x14] sm:$0xf]
        %v472 = vld [vmem:[%s3 + $0x18] sm:$0xf]
        %v473 = vld [vmem:[%s3 + $0x1c] sm:$0xf]
        %v474 = vld [vmem:[%s3 + $0x20] sm:$0xf]
        %v475 = vld [vmem:[%s3 + $0x24] sm:$0xf]
        %v476 = vld [vmem:[%s3 + $0x28] sm:$0xf]
        %v477 = vld [vmem:[%s3 + $0x2c] sm:$0xf]
        %v478 = vld [vmem:[%s3 + $0x30] sm:$0xf]
        %v479 = vld [vmem:[%s3 + $0x34] sm:$0xf]
        %v480 = vld [vmem:[%s3 + $0x38] sm:$0xf]
        %v481 = vld [vmem:[%s3 + $0x3c] sm:$0xf]
        %v482 = vld [vmem:[%s3 + $0x40] sm:$0xf]
        %v483 = vld [vmem:[%s3 + $0x44] sm:$0xf]
        %v484 = vld [vmem:[%s3 + $0x48] sm:$0xf]
        %v485 = vld [vmem:[%s3 + $0x4c] sm:$0xf]
        %v486 = vld [vmem:[%s3 + $0x50] sm:$0xf]
        %v487 = vld [vmem:[%s3 + $0x54] sm:$0xf]
        %v488 = vld [vmem:[%s3 + $0x58] sm:$0xf]
        %v489 = vld [vmem:[%s3 + $0x5c] sm:$0xf]
        %v490 = vld [vmem:[%s3 + $0x60] sm:$0xf]
        %v491 = vld [vmem:[%s3 + $0x64] sm:$0xf]
        %v492 = vld [vmem:[%s3 + $0x68] sm:$0xf]
        %v493 = vld [vmem:[%s3 + $0x6c] sm:$0xf]
        %v494 = vld [vmem:[%s3 + $0x70] sm:$0xf]
        %v495 = vld [vmem:[%s3 + $0x74] sm:$0xf]
        %v496 = vld [vmem:[%s3 + $0x78] sm:$0xf]
        %v497 = vld [vmem:[%s3 + $0x7c] sm:$0xf]
        %v498 = vld [vmem:[%s3 + $0x80] sm:$0xf]
        %v499 = vld [vmem:[%s3 + $0x84] sm:$0xf]
        %v500 = vld [vmem:[%s3 + $0x88] sm:$0xf]
        %v501 = vld [vmem:[%s3 + $0x8c] sm:$0xf]
        %v502 = vld [vmem:[%s3 + $0x90] sm:$0xf]
        %v503 = vld [vmem:[%s3 + $0x94] sm:$0xf]
        %v504 = vld [vmem:[%s3 + $0x98] sm:$0xf]
        %v505 = vld [vmem:[%s3 + $0x9c] sm:$0xf]
        %v506 = vld [vmem:[%s3 + $0xa0] sm:$0xf]
        %v507 = vld [vmem:[%s3 + $0xa4] sm:$0xf]
        %v508 = vld [vmem:[%s3 + $0xa8] sm:$0xf]
        %v509 = vld [vmem:[%s3 + $0xac] sm:$0xf]
        %v510 = vld [vmem:[%s3 + $0xb0] sm:$0xf]
        %v511 = vld [vmem:[%s3 + $0xb4] sm:$0xf]
        %v512 = vld [vmem:[%s3 + $0xb8] sm:$0xf]
        %v513 = vld [vmem:[%s3 + $0xbc] sm:$0xf]
        %v514 = vld [vmem:[%s3 + $0xc0] sm:$0xf]
        %v515 = vld [vmem:[%s3 + $0xc4] sm:$0xf]
        %v516 = vld [vmem:[%s3 + $0xc8] sm:$0xf]
        %v517 = vld [vmem:[%s3 + $0xcc] sm:$0xf]
        %v518 = vld [vmem:[%s3 + $0xd0] sm:$0xf]
        %v519 = vld [vmem:[%s3 + $0xd4] sm:$0xf]
        %v520 = vld [vmem:[%s3 + $0xd8] sm:$0xf]
        %v521 = vld [vmem:[%s3 + $0xdc] sm:$0xf]
        %v522 = vld [vmem:[%s3 + $0xe0] sm:$0xf]
        %v523 = vld [vmem:[%s3 + $0xe4] sm:$0xf]
        %v524 = vld [vmem:[%s3 + $0xe8] sm:$0xf]
        %v525 = vld [vmem:[%s3 + $0xec] sm:$0xf]
        %v526 = vld [vmem:[%s3 + $0xf0] sm:$0xf]
        %v527 = vld [vmem:[%s3 + $0xf4] sm:$0xf]
        %v528 = vld [vmem:[%s3 + $0xf8] sm:$0xf]
        %v529 = vld [vmem:[%s3 + $0xfc] sm:$0xf]
        %v530 = vld [vmem:[%s413] sm:$0xff]
        %v531 = vld [vmem:[%s413 + $0x8] sm:$0xff]
        %v532 = vld [vmem:[%s413 + $0x10] sm:$0xff]
        %v533 = vld [vmem:[%s413 + $0x18] sm:$0xff]
        %v534 = vld [vmem:[%s413 + $0x20] sm:$0xff]
        %v535 = vld [vmem:[%s413 + $0x28] sm:$0xff]
        %v536 = vld [vmem:[%s413 + $0x30] sm:$0xff]
        %v537 = vld [vmem:[%s413 + $0x38] sm:$0xff]
        %v538 = vld [vmem:[%s413 + $0x40] sm:$0xff]
        %v539 = vld [vmem:[%s413 + $0x48] sm:$0xff]
        %v540 = vld [vmem:[%s413 + $0x50] sm:$0xff]
        %v541 = vld [vmem:[%s413 + $0x58] sm:$0xff]
        %v542 = vld [vmem:[%s413 + $0x60] sm:$0xff]
        %v543 = vld [vmem:[%s413 + $0x68] sm:$0xff]
        %v544 = vld [vmem:[%s413 + $0x70] sm:$0xff]
        %v545 = vld [vmem:[%s413 + $0x78] sm:$0xff]
        %v546 = vld [vmem:[%s413 + $0x80] sm:$0xff]
        %v547 = vld [vmem:[%s413 + $0x88] sm:$0xff]
        %v548 = vld [vmem:[%s413 + $0x90] sm:$0xff]
        %v549 = vld [vmem:[%s413 + $0x98] sm:$0xff]
        %v550 = vld [vmem:[%s413 + $0xa0] sm:$0xff]
        %v551 = vld [vmem:[%s413 + $0xa8] sm:$0xff]
        %v552 = vld [vmem:[%s413 + $0xb0] sm:$0xff]
        %v553 = vld [vmem:[%s413 + $0xb8] sm:$0xff]
        %v554 = vld [vmem:[%s413 + $0xc0] sm:$0xff]
        %v555 = vld [vmem:[%s413 + $0xc8] sm:$0xff]
        %v556 = vld [vmem:[%s413 + $0xd0] sm:$0xff]
        %v557 = vld [vmem:[%s413 + $0xd8] sm:$0xff]
        %v558 = vld [vmem:[%s413 + $0xe0] sm:$0xff]
        %v559 = vld [vmem:[%s413 + $0xe8] sm:$0xff]
        %v560 = vld [vmem:[%s413 + $0xf0] sm:$0xff]
        %v561 = vld [vmem:[%s413 + $0xf8] sm:$0xff]
        %v562 = vunpack.c.l.bf16 %v530
        %v563 = vunpack.c.h.bf16 %v530
        %v564 = vunpack.c.l.bf16 %v531
        %v565 = vunpack.c.h.bf16 %v531
        %v566 = vunpack.c.l.bf16 %v532
        %v567 = vunpack.c.h.bf16 %v532
        %v568 = vunpack.c.l.bf16 %v533
        %v569 = vunpack.c.h.bf16 %v533
        %v570 = vunpack.c.l.bf16 %v534
        %v571 = vunpack.c.h.bf16 %v534
        %v572 = vunpack.c.l.bf16 %v535
        %v573 = vunpack.c.h.bf16 %v535
        %v574 = vunpack.c.l.bf16 %v536
        %v575 = vunpack.c.h.bf16 %v536
        %v576 = vunpack.c.l.bf16 %v537
        %v577 = vunpack.c.h.bf16 %v537
        %v578 = vunpack.c.l.bf16 %v538
        %v579 = vunpack.c.h.bf16 %v538
        %v580 = vunpack.c.l.bf16 %v539
        %v581 = vunpack.c.h.bf16 %v539
        %v582 = vunpack.c.l.bf16 %v540
        %v583 = vunpack.c.h.bf16 %v540
        %v584 = vunpack.c.l.bf16 %v541
        %v585 = vunpack.c.h.bf16 %v541
        %v586 = vunpack.c.l.bf16 %v542
        %v587 = vunpack.c.h.bf16 %v542
        %v588 = vunpack.c.l.bf16 %v543
        %v589 = vunpack.c.h.bf16 %v543
        %v590 = vunpack.c.l.bf16 %v544
        %v591 = vunpack.c.h.bf16 %v544
        %v592 = vunpack.c.l.bf16 %v545
        %v593 = vunpack.c.h.bf16 %v545
        %v594 = vunpack.c.l.bf16 %v546
        %v595 = vunpack.c.h.bf16 %v546
        %v596 = vunpack.c.l.bf16 %v547
        %v597 = vunpack.c.h.bf16 %v547
        %v598 = vunpack.c.l.bf16 %v548
        %v599 = vunpack.c.h.bf16 %v548
        %v600 = vunpack.c.l.bf16 %v549
        %v601 = vunpack.c.h.bf16 %v549
        %v602 = vunpack.c.l.bf16 %v550
        %v603 = vunpack.c.h.bf16 %v550
        %v604 = vunpack.c.l.bf16 %v551
        %v605 = vunpack.c.h.bf16 %v551
        %v606 = vunpack.c.l.bf16 %v552
        %v607 = vunpack.c.h.bf16 %v552
        %v608 = vunpack.c.l.bf16 %v553
        %v609 = vunpack.c.h.bf16 %v553
        %v610 = vunpack.c.l.bf16 %v554
        %v611 = vunpack.c.h.bf16 %v554
        %v612 = vunpack.c.l.bf16 %v555
        %v613 = vunpack.c.h.bf16 %v555
        %v614 = vunpack.c.l.bf16 %v556
        %v615 = vunpack.c.h.bf16 %v556
        %v616 = vunpack.c.l.bf16 %v557
        %v617 = vunpack.c.h.bf16 %v557
        %v618 = vunpack.c.l.bf16 %v558
        %v619 = vunpack.c.h.bf16 %v558
        %v620 = vunpack.c.l.bf16 %v559
        %v621 = vunpack.c.h.bf16 %v559
        %v622 = vunpack.c.l.bf16 %v560
        %v623 = vunpack.c.h.bf16 %v560
        %v624 = vunpack.c.l.bf16 %v561
        %v625 = vunpack.c.h.bf16 %v561
        %v626 = vld [vmem:[%s424] sm:$0xff]
        %v627 = vld [vmem:[%s424 + $0x8] sm:$0xff]
        %v628 = vld [vmem:[%s424 + $0x10] sm:$0xff]
        %v629 = vld [vmem:[%s424 + $0x18] sm:$0xff]
        %v630 = vld [vmem:[%s424 + $0x20] sm:$0xff]
        %v631 = vld [vmem:[%s424 + $0x28] sm:$0xff]
        %v632 = vld [vmem:[%s424 + $0x30] sm:$0xff]
        %v633 = vld [vmem:[%s424 + $0x38] sm:$0xff]
        %v634 = vld [vmem:[%s424 + $0x40] sm:$0xff]
        %v635 = vld [vmem:[%s424 + $0x48] sm:$0xff]
        %v636 = vld [vmem:[%s424 + $0x50] sm:$0xff]
        %v637 = vld [vmem:[%s424 + $0x58] sm:$0xff]
        %v638 = vld [vmem:[%s424 + $0x60] sm:$0xff]
        %v639 = vld [vmem:[%s424 + $0x68] sm:$0xff]
        %v640 = vld [vmem:[%s424 + $0x70] sm:$0xff]
        %v641 = vld [vmem:[%s424 + $0x78] sm:$0xff]
        %v642 = vld [vmem:[%s424 + $0x80] sm:$0xff]
        %v643 = vld [vmem:[%s424 + $0x88] sm:$0xff]
        %v644 = vld [vmem:[%s424 + $0x90] sm:$0xff]
        %v645 = vld [vmem:[%s424 + $0x98] sm:$0xff]
        %v646 = vld [vmem:[%s424 + $0xa0] sm:$0xff]
        %v647 = vld [vmem:[%s424 + $0xa8] sm:$0xff]
        %v648 = vld [vmem:[%s424 + $0xb0] sm:$0xff]
        %v649 = vld [vmem:[%s424 + $0xb8] sm:$0xff]
        %v650 = vld [vmem:[%s424 + $0xc0] sm:$0xff]
        %v651 = vld [vmem:[%s424 + $0xc8] sm:$0xff]
        %v652 = vld [vmem:[%s424 + $0xd0] sm:$0xff]
        %v653 = vld [vmem:[%s424 + $0xd8] sm:$0xff]
        %v654 = vld [vmem:[%s424 + $0xe0] sm:$0xff]
        %v655 = vld [vmem:[%s424 + $0xe8] sm:$0xff]
        %v656 = vld [vmem:[%s424 + $0xf0] sm:$0xff]
        %v657 = vld [vmem:[%s424 + $0xf8] sm:$0xff]
        %v658 = vunpack.c.l.bf16 %v626
        %v659 = vunpack.c.h.bf16 %v626
        %v660 = vunpack.c.l.bf16 %v627
        %v661 = vunpack.c.h.bf16 %v627
        %v662 = vunpack.c.l.bf16 %v628
        %v663 = vunpack.c.h.bf16 %v628
        %v664 = vunpack.c.l.bf16 %v629
        %v665 = vunpack.c.h.bf16 %v629
        %v666 = vunpack.c.l.bf16 %v630
        %v667 = vunpack.c.h.bf16 %v630
        %v668 = vunpack.c.l.bf16 %v631
        %v669 = vunpack.c.h.bf16 %v631
        %v670 = vunpack.c.l.bf16 %v632
        %v671 = vunpack.c.h.bf16 %v632
        %v672 = vunpack.c.l.bf16 %v633
        %v673 = vunpack.c.h.bf16 %v633
        %v674 = vunpack.c.l.bf16 %v634
        %v675 = vunpack.c.h.bf16 %v634
        %v676 = vunpack.c.l.bf16 %v635
        %v677 = vunpack.c.h.bf16 %v635
        %v678 = vunpack.c.l.bf16 %v636
        %v679 = vunpack.c.h.bf16 %v636
        %v680 = vunpack.c.l.bf16 %v637
        %v681 = vunpack.c.h.bf16 %v637
        %v682 = vunpack.c.l.bf16 %v638
        %v683 = vunpack.c.h.bf16 %v638
        %v684 = vunpack.c.l.bf16 %v639
        %v685 = vunpack.c.h.bf16 %v639
        %v686 = vunpack.c.l.bf16 %v640
        %v687 = vunpack.c.h.bf16 %v640
        %v688 = vunpack.c.l.bf16 %v641
        %v689 = vunpack.c.h.bf16 %v641
        %v690 = vunpack.c.l.bf16 %v642
        %v691 = vunpack.c.h.bf16 %v642
        %v692 = vunpack.c.l.bf16 %v643
        %v693 = vunpack.c.h.bf16 %v643
        %v694 = vunpack.c.l.bf16 %v644
        %v695 = vunpack.c.h.bf16 %v644
        %v696 = vunpack.c.l.bf16 %v645
        %v697 = vunpack.c.h.bf16 %v645
        %v698 = vunpack.c.l.bf16 %v646
        %v699 = vunpack.c.h.bf16 %v646
        %v700 = vunpack.c.l.bf16 %v647
        %v701 = vunpack.c.h.bf16 %v647
        %v702 = vunpack.c.l.bf16 %v648
        %v703 = vunpack.c.h.bf16 %v648
        %v704 = vunpack.c.l.bf16 %v649
        %v705 = vunpack.c.h.bf16 %v649
        %v706 = vunpack.c.l.bf16 %v650
        %v707 = vunpack.c.h.bf16 %v650
        %v708 = vunpack.c.l.bf16 %v651
        %v709 = vunpack.c.h.bf16 %v651
        %v710 = vunpack.c.l.bf16 %v652
        %v711 = vunpack.c.h.bf16 %v652
        %v712 = vunpack.c.l.bf16 %v653
        %v713 = vunpack.c.h.bf16 %v653
        %v714 = vunpack.c.l.bf16 %v654
        %v715 = vunpack.c.h.bf16 %v654
        %v716 = vunpack.c.l.bf16 %v655
        %v717 = vunpack.c.h.bf16 %v655
        %v718 = vunpack.c.l.bf16 %v656
        %v719 = vunpack.c.h.bf16 %v656
        %v720 = vunpack.c.l.bf16 %v657
        %v721 = vunpack.c.h.bf16 %v657
        %v786 = vunpack.c.l.b16 %v466
        %v787 = vunpack.c.l.b16 %v467
        %v788 = vunpack.c.l.b16 %v468
        %v789 = vunpack.c.l.b16 %v469
        %v790 = vunpack.c.l.b16 %v470
        %v791 = vunpack.c.l.b16 %v471
        %v792 = vunpack.c.l.b16 %v472
        %v793 = vunpack.c.l.b16 %v473
        %v794 = vunpack.c.l.b16 %v474
        %v795 = vunpack.c.l.b16 %v475
        %v796 = vunpack.c.l.b16 %v476
        %v797 = vunpack.c.l.b16 %v477
        %v798 = vunpack.c.l.b16 %v478
        %v799 = vunpack.c.l.b16 %v479
        %v800 = vunpack.c.l.b16 %v480
        %v801 = vunpack.c.l.b16 %v481
        %v802 = vunpack.c.l.b16 %v482
        %v803 = vunpack.c.l.b16 %v483
        %v804 = vunpack.c.l.b16 %v484
        %v805 = vunpack.c.l.b16 %v485
        %v806 = vunpack.c.l.b16 %v486
        %v807 = vunpack.c.l.b16 %v487
        %v808 = vunpack.c.l.b16 %v488
        %v809 = vunpack.c.l.b16 %v489
        %v810 = vunpack.c.l.b16 %v490
        %v811 = vunpack.c.l.b16 %v491
        %v812 = vunpack.c.l.b16 %v492
        %v813 = vunpack.c.l.b16 %v493
        %v814 = vunpack.c.l.b16 %v494
        %v815 = vunpack.c.l.b16 %v495
        %v816 = vunpack.c.l.b16 %v496
        %v817 = vunpack.c.l.b16 %v497
        %v818 = vunpack.c.l.b16 %v498
        %v819 = vunpack.c.l.b16 %v499
        %v820 = vunpack.c.l.b16 %v500
        %v821 = vunpack.c.l.b16 %v501
        %v822 = vunpack.c.l.b16 %v502
        %v823 = vunpack.c.l.b16 %v503
        %v824 = vunpack.c.l.b16 %v504
        %v825 = vunpack.c.l.b16 %v505
        %v826 = vunpack.c.l.b16 %v506
        %v827 = vunpack.c.l.b16 %v507
        %v828 = vunpack.c.l.b16 %v508
        %v829 = vunpack.c.l.b16 %v509
        %v830 = vunpack.c.l.b16 %v510
        %v831 = vunpack.c.l.b16 %v511
        %v832 = vunpack.c.l.b16 %v512
        %v833 = vunpack.c.l.b16 %v513
        %v834 = vunpack.c.l.b16 %v514
        %v835 = vunpack.c.l.b16 %v515
        %v836 = vunpack.c.l.b16 %v516
        %v837 = vunpack.c.l.b16 %v517
        %v838 = vunpack.c.l.b16 %v518
        %v839 = vunpack.c.l.b16 %v519
        %v840 = vunpack.c.l.b16 %v520
        %v841 = vunpack.c.l.b16 %v521
        %v842 = vunpack.c.l.b16 %v522
        %v843 = vunpack.c.l.b16 %v523
        %v844 = vunpack.c.l.b16 %v524
        %v845 = vunpack.c.l.b16 %v525
        %v846 = vunpack.c.l.b16 %v526
        %v847 = vunpack.c.l.b16 %v527
        %v848 = vunpack.c.l.b16 %v528
        %v849 = vunpack.c.l.b16 %v529
        %v850 = vpack.c.b16 %v787, %v786
        %v851 = vpack.c.b16 %v789, %v788
        %v852 = vpack.c.b16 %v791, %v790
        %v853 = vpack.c.b16 %v793, %v792
        %v854 = vpack.c.b16 %v795, %v794
        %v855 = vpack.c.b16 %v797, %v796
        %v856 = vpack.c.b16 %v799, %v798
        %v857 = vpack.c.b16 %v801, %v800
        %v858 = vpack.c.b16 %v803, %v802
        %v859 = vpack.c.b16 %v805, %v804
        %v860 = vpack.c.b16 %v807, %v806
        %v861 = vpack.c.b16 %v809, %v808
        %v862 = vpack.c.b16 %v811, %v810
        %v863 = vpack.c.b16 %v813, %v812
        %v864 = vpack.c.b16 %v815, %v814
        %v865 = vpack.c.b16 %v817, %v816
        %v866 = vpack.c.b16 %v819, %v818
        %v867 = vpack.c.b16 %v821, %v820
        %v868 = vpack.c.b16 %v823, %v822
        %v869 = vpack.c.b16 %v825, %v824
        %v870 = vpack.c.b16 %v827, %v826
        %v871 = vpack.c.b16 %v829, %v828
        %v872 = vpack.c.b16 %v831, %v830
        %v873 = vpack.c.b16 %v833, %v832
        %v874 = vpack.c.b16 %v835, %v834
        %v875 = vpack.c.b16 %v837, %v836
        %v876 = vpack.c.b16 %v839, %v838
        %v877 = vpack.c.b16 %v841, %v840
        %v878 = vpack.c.b16 %v843, %v842
        %v879 = vpack.c.b16 %v845, %v844
        %v880 = vpack.c.b16 %v847, %v846
        %v881 = vpack.c.b16 %v849, %v848
        %v930 = vunpack.c.l.b16 %v450
        %v931 = vunpack.c.l.b16 %v451
        %v932 = vunpack.c.l.b16 %v452
        %v933 = vunpack.c.l.b16 %v453
        %v934 = vunpack.c.l.b16 %v454
        %v935 = vunpack.c.l.b16 %v455
        %v936 = vunpack.c.l.b16 %v456
        %v937 = vunpack.c.l.b16 %v457
        %v938 = vunpack.c.l.b16 %v458
        %v939 = vunpack.c.l.b16 %v459
        %v940 = vunpack.c.l.b16 %v460
        %v941 = vunpack.c.l.b16 %v461
        %v942 = vunpack.c.l.b16 %v462
        %v943 = vunpack.c.l.b16 %v463
        %v944 = vunpack.c.l.b16 %v464
        %v945 = vunpack.c.l.b16 %v465
        %v946 = vpack.c.b16 %v931, %v930
        %v947 = vpack.c.b16 %v933, %v932
        %v948 = vpack.c.b16 %v935, %v934
        %v949 = vpack.c.b16 %v937, %v936
        %v950 = vpack.c.b16 %v939, %v938
        %v951 = vpack.c.b16 %v941, %v940
        %v952 = vpack.c.b16 %v943, %v942
        %v953 = vpack.c.b16 %v945, %v944
        %962 = vmatprep.subr.bf16.mxu0 0
        %963 = vmatpush1.bf16.msra.mxu0 %v946
        %964 = vmatprep.subr.bf16.mxu0 0
        %965 = vmatpush1.bf16.msra.mxu0 %v947
        %966 = vmatprep.subr.bf16.mxu0 0
        %967 = vmatpush1.bf16.msra.mxu0 %v948
        %968 = vmatprep.subr.bf16.mxu0 0
        %969 = vmatpush1.bf16.msra.mxu0 %v949
        %970 = vmatprep.subr.bf16.mxu0 0
        %971 = vmatpush1.bf16.msra.mxu0 %v950
        %972 = vmatprep.subr.bf16.mxu0 0
        %973 = vmatpush1.bf16.msra.mxu0 %v951
        %974 = vmatprep.subr.bf16.mxu0 0
        %975 = vmatpush1.bf16.msra.mxu0 %v952
        %976 = vmatprep.subr.bf16.mxu0 0
        %977 = vmatpush1.bf16.msra.mxu0 %v953
        %978 = vmatprep.subr.bf16.mxu0 0
        %979 = vmatpush1.bf16.msra.mxu0 0
        %980 = vmatprep.subr.bf16.mxu0 0
        %981 = vmatpush1.bf16.msra.mxu0 0
        %982 = vmatprep.subr.bf16.mxu0 0
        %983 = vmatpush1.bf16.msra.mxu0 0
        %984 = vmatprep.subr.bf16.mxu0 0
        %985 = vmatpush1.bf16.msra.mxu0 0
        %986 = vmatprep.subr.bf16.mxu0 0
        %987 = vmatpush1.bf16.msra.mxu0 0
        %988 = vmatprep.subr.bf16.mxu0 0
        %989 = vmatpush1.bf16.msra.mxu0 0
        %990 = vmatprep.subr.bf16.mxu0 0
        %991 = vmatpush1.bf16.msra.mxu0 0
        %992 = vmatprep.subr.bf16.mxu0 0
        %993 = vmatpush1.bf16.msra.mxu0 0
        %994 = vmatprep.mubr.bf16.mxu0 0
        %995 = vmatmul.mubr.bf16.gmra.mrb[0].mxu0 %v850
        %v996 = vpop.f32.mrb[0].mxu0
        %v997 = vadd.f32 0.0, %v996
        %v998 = vpop.f32.mrb[0].mxu0
        %v999 = vpop.f32.mrb[0].mxu0
        %v1000 = vadd.f32 0.0, %v999
        %v1001 = vpop.f32.mrb[0].mxu0
        %1002 = vmatprep.mubr.bf16.mxu0 0
        %1003 = vmatmul.mubr.bf16.gmra.mrb[0].mxu0 %v851
        %v1004 = vpop.f32.mrb[0].mxu0
        %v1005 = vadd.f32 0.0, %v1004
        %v1006 = vpop.f32.mrb[0].mxu0
        %v1007 = vpop.f32.mrb[0].mxu0
        %v1008 = vadd.f32 0.0, %v1007
        %v1009 = vpop.f32.mrb[0].mxu0
        %1010 = vmatprep.mubr.bf16.mxu0 0
        %1011 = vmatmul.mubr.bf16.gmra.mrb[0].mxu0 %v852
        %v1012 = vpop.f32.mrb[0].mxu0
        %v1013 = vadd.f32 0.0, %v1012
        %v1014 = vpop.f32.mrb[0].mxu0
        %v1015 = vpop.f32.mrb[0].mxu0
        %v1016 = vadd.f32 0.0, %v1015
        %v1017 = vpop.f32.mrb[0].mxu0
        %1018 = vmatprep.mubr.bf16.mxu0 0
        %1019 = vmatmul.mubr.bf16.gmra.mrb[0].mxu0 %v853
        %v1020 = vpop.f32.mrb[0].mxu0
        %v1021 = vadd.f32 0.0, %v1020
        %v1022 = vpop.f32.mrb[0].mxu0
        %v1023 = vpop.f32.mrb[0].mxu0
        %v1024 = vadd.f32 0.0, %v1023
        %v1025 = vpop.f32.mrb[0].mxu0
        %1026 = vmatprep.mubr.bf16.mxu0 0
        %1027 = vmatmul.mubr.bf16.gmra.mrb[0].mxu0 %v854
        %v1028 = vpop.f32.mrb[0].mxu0
        %v1029 = vadd.f32 0.0, %v1028
        %v1030 = vpop.f32.mrb[0].mxu0
        %v1031 = vpop.f32.mrb[0].mxu0
        %v1032 = vadd.f32 0.0, %v1031
        %v1033 = vpop.f32.mrb[0].mxu0
        %1034 = vmatprep.mubr.bf16.mxu0 0
        %1035 = vmatmul.mubr.bf16.gmra.mrb[0].mxu0 %v855
        %v1036 = vpop.f32.mrb[0].mxu0
        %v1037 = vadd.f32 0.0, %v1036
        %v1038 = vpop.f32.mrb[0].mxu0
        %v1039 = vpop.f32.mrb[0].mxu0
        %v1040 = vadd.f32 0.0, %v1039
        %v1041 = vpop.f32.mrb[0].mxu0
        %1042 = vmatprep.mubr.bf16.mxu0 0
        %1043 = vmatmul.mubr.bf16.gmra.mrb[0].mxu0 %v856
        %v1044 = vpop.f32.mrb[0].mxu0
        %v1045 = vadd.f32 0.0, %v1044
        %v1046 = vpop.f32.mrb[0].mxu0
        %v1047 = vpop.f32.mrb[0].mxu0
        %v1048 = vadd.f32 0.0, %v1047
        %v1049 = vpop.f32.mrb[0].mxu0
        %1050 = vmatprep.mubr.bf16.mxu0 0
        %1051 = vmatmul.mubr.bf16.gmra.mrb[0].mxu0 %v857
        %v1052 = vpop.f32.mrb[0].mxu0
        %v1053 = vadd.f32 0.0, %v1052
        %v1054 = vpop.f32.mrb[0].mxu0
        %v1055 = vpop.f32.mrb[0].mxu0
        %v1056 = vadd.f32 0.0, %v1055
        %v1057 = vpop.f32.mrb[0].mxu0
        %1058 = vmatprep.mubr.bf16.mxu0 0
        %1059 = vmatmul.mubr.bf16.gmra.mrb[0].mxu0 %v858
        %v1060 = vpop.f32.mrb[0].mxu0
        %v1061 = vadd.f32 0.0, %v1060
        %v1062 = vpop.f32.mrb[0].mxu0
        %v1063 = vpop.f32.mrb[0].mxu0
        %v1064 = vadd.f32 0.0, %v1063
        %v1065 = vpop.f32.mrb[0].mxu0
        %1066 = vmatprep.mubr.bf16.mxu0 0
        %1067 = vmatmul.mubr.bf16.gmra.mrb[0].mxu0 %v859
        %v1068 = vpop.f32.mrb[0].mxu0
        %v1069 = vadd.f32 0.0, %v1068
        %v1070 = vpop.f32.mrb[0].mxu0
        %v1071 = vpop.f32.mrb[0].mxu0
        %v1072 = vadd.f32 0.0, %v1071
        %v1073 = vpop.f32.mrb[0].mxu0
        %1074 = vmatprep.mubr.bf16.mxu0 0
        %1075 = vmatmul.mubr.bf16.gmra.mrb[0].mxu0 %v860
        %v1076 = vpop.f32.mrb[0].mxu0
        %v1077 = vadd.f32 0.0, %v1076
        %v1078 = vpop.f32.mrb[0].mxu0
        %v1079 = vpop.f32.mrb[0].mxu0
        %v1080 = vadd.f32 0.0, %v1079
        %v1081 = vpop.f32.mrb[0].mxu0
        %1082 = vmatprep.mubr.bf16.mxu0 0
        %1083 = vmatmul.mubr.bf16.gmra.mrb[0].mxu0 %v861
        %v1084 = vpop.f32.mrb[0].mxu0
        %v1085 = vadd.f32 0.0, %v1084
        %v1086 = vpop.f32.mrb[0].mxu0
        %v1087 = vpop.f32.mrb[0].mxu0
        %v1088 = vadd.f32 0.0, %v1087
        %v1089 = vpop.f32.mrb[0].mxu0
        %1090 = vmatprep.mubr.bf16.mxu0 0
        %1091 = vmatmul.mubr.bf16.gmra.mrb[0].mxu0 %v862
        %v1092 = vpop.f32.mrb[0].mxu0
        %v1093 = vadd.f32 0.0, %v1092
        %v1094 = vpop.f32.mrb[0].mxu0
        %v1095 = vpop.f32.mrb[0].mxu0
        %v1096 = vadd.f32 0.0, %v1095
        %v1097 = vpop.f32.mrb[0].mxu0
        %1098 = vmatprep.mubr.bf16.mxu0 0
        %1099 = vmatmul.mubr.bf16.gmra.mrb[0].mxu0 %v863
        %v1100 = vpop.f32.mrb[0].mxu0
        %v1101 = vadd.f32 0.0, %v1100
        %v1102 = vpop.f32.mrb[0].mxu0
        %v1103 = vpop.f32.mrb[0].mxu0
        %v1104 = vadd.f32 0.0, %v1103
        %v1105 = vpop.f32.mrb[0].mxu0
        %1106 = vmatprep.mubr.bf16.mxu0 0
        %1107 = vmatmul.mubr.bf16.gmra.mrb[0].mxu0 %v864
        %v1108 = vpop.f32.mrb[0].mxu0
        %v1109 = vadd.f32 0.0, %v1108
        %v1110 = vpop.f32.mrb[0].mxu0
        %v1111 = vpop.f32.mrb[0].mxu0
        %v1112 = vadd.f32 0.0, %v1111
        %v1113 = vpop.f32.mrb[0].mxu0
        %1114 = vmatprep.mubr.bf16.mxu0 0
        %1115 = vmatmul.mubr.bf16.gmra.mrb[0].mxu0 %v865
        %v1116 = vpop.f32.mrb[0].mxu0
        %v1117 = vadd.f32 0.0, %v1116
        %v1118 = vpop.f32.mrb[0].mxu0
        %v1119 = vpop.f32.mrb[0].mxu0
        %v1120 = vadd.f32 0.0, %v1119
        %v1121 = vpop.f32.mrb[0].mxu0
        %1122 = vmatprep.mubr.bf16.mxu0 0
        %1123 = vmatmul.mubr.bf16.gmra.mrb[0].mxu0 %v866
        %v1124 = vpop.f32.mrb[0].mxu0
        %v1125 = vadd.f32 0.0, %v1124
        %v1126 = vpop.f32.mrb[0].mxu0
        %v1127 = vpop.f32.mrb[0].mxu0
        %v1128 = vadd.f32 0.0, %v1127
        %v1129 = vpop.f32.mrb[0].mxu0
        %1130 = vmatprep.mubr.bf16.mxu0 0
        %1131 = vmatmul.mubr.bf16.gmra.mrb[0].mxu0 %v867
        %v1132 = vpop.f32.mrb[0].mxu0
        %v1133 = vadd.f32 0.0, %v1132
        %v1134 = vpop.f32.mrb[0].mxu0
        %v1135 = vpop.f32.mrb[0].mxu0
        %v1136 = vadd.f32 0.0, %v1135
        %v1137 = vpop.f32.mrb[0].mxu0
        %1138 = vmatprep.mubr.bf16.mxu0 0
        %1139 = vmatmul.mubr.bf16.gmra.mrb[0].mxu0 %v868
        %v1140 = vpop.f32.mrb[0].mxu0
        %v1141 = vadd.f32 0.0, %v1140
        %v1142 = vpop.f32.mrb[0].mxu0
        %v1143 = vpop.f32.mrb[0].mxu0
        %v1144 = vadd.f32 0.0, %v1143
        %v1145 = vpop.f32.mrb[0].mxu0
        %1146 = vmatprep.mubr.bf16.mxu0 0
        %1147 = vmatmul.mubr.bf16.gmra.mrb[0].mxu0 %v869
        %v1148 = vpop.f32.mrb[0].mxu0
        %v1149 = vadd.f32 0.0, %v1148
        %v1150 = vpop.f32.mrb[0].mxu0
        %v1151 = vpop.f32.mrb[0].mxu0
        %v1152 = vadd.f32 0.0, %v1151
        %v1153 = vpop.f32.mrb[0].mxu0
        %1154 = vmatprep.mubr.bf16.mxu0 0
        %1155 = vmatmul.mubr.bf16.gmra.mrb[0].mxu0 %v870
        %v1156 = vpop.f32.mrb[0].mxu0
        %v1157 = vadd.f32 0.0, %v1156
        %v1158 = vpop.f32.mrb[0].mxu0
        %v1159 = vpop.f32.mrb[0].mxu0
        %v1160 = vadd.f32 0.0, %v1159
        %v1161 = vpop.f32.mrb[0].mxu0
        %1162 = vmatprep.mubr.bf16.mxu0 0
        %1163 = vmatmul.mubr.bf16.gmra.mrb[0].mxu0 %v871
        %v1164 = vpop.f32.mrb[0].mxu0
        %v1165 = vadd.f32 0.0, %v1164
        %v1166 = vpop.f32.mrb[0].mxu0
        %v1167 = vpop.f32.mrb[0].mxu0
        %v1168 = vadd.f32 0.0, %v1167
        %v1169 = vpop.f32.mrb[0].mxu0
        %1170 = vmatprep.mubr.bf16.mxu0 0
        %1171 = vmatmul.mubr.bf16.gmra.mrb[0].mxu0 %v872
        %v1172 = vpop.f32.mrb[0].mxu0
        %v1173 = vadd.f32 0.0, %v1172
        %v1174 = vpop.f32.mrb[0].mxu0
        %v1175 = vpop.f32.mrb[0].mxu0
        %v1176 = vadd.f32 0.0, %v1175
        %v1177 = vpop.f32.mrb[0].mxu0
        %1178 = vmatprep.mubr.bf16.mxu0 0
        %1179 = vmatmul.mubr.bf16.gmra.mrb[0].mxu0 %v873
        %v1180 = vpop.f32.mrb[0].mxu0
        %v1181 = vadd.f32 0.0, %v1180
        %v1182 = vpop.f32.mrb[0].mxu0
        %v1183 = vpop.f32.mrb[0].mxu0
        %v1184 = vadd.f32 0.0, %v1183
        %v1185 = vpop.f32.mrb[0].mxu0
        %1186 = vmatprep.mubr.bf16.mxu0 0
        %1187 = vmatmul.mubr.bf16.gmra.mrb[0].mxu0 %v874
        %v1188 = vpop.f32.mrb[0].mxu0
        %v1189 = vadd.f32 0.0, %v1188
        %v1190 = vpop.f32.mrb[0].mxu0
        %v1191 = vpop.f32.mrb[0].mxu0
        %v1192 = vadd.f32 0.0, %v1191
        %v1193 = vpop.f32.mrb[0].mxu0
        %1194 = vmatprep.mubr.bf16.mxu0 0
        %1195 = vmatmul.mubr.bf16.gmra.mrb[0].mxu0 %v875
        %v1196 = vpop.f32.mrb[0].mxu0
        %v1197 = vadd.f32 0.0, %v1196
        %v1198 = vpop.f32.mrb[0].mxu0
        %v1199 = vpop.f32.mrb[0].mxu0
        %v1200 = vadd.f32 0.0, %v1199
        %v1201 = vpop.f32.mrb[0].mxu0
        %1202 = vmatprep.mubr.bf16.mxu0 0
        %1203 = vmatmul.mubr.bf16.gmra.mrb[0].mxu0 %v876
        %v1204 = vpop.f32.mrb[0].mxu0
        %v1205 = vadd.f32 0.0, %v1204
        %v1206 = vpop.f32.mrb[0].mxu0
        %v1207 = vpop.f32.mrb[0].mxu0
        %v1208 = vadd.f32 0.0, %v1207
        %v1209 = vpop.f32.mrb[0].mxu0
        %1210 = vmatprep.mubr.bf16.mxu0 0
        %1211 = vmatmul.mubr.bf16.gmra.mrb[0].mxu0 %v877
        %v1212 = vpop.f32.mrb[0].mxu0
        %v1213 = vadd.f32 0.0, %v1212
        %v1214 = vpop.f32.mrb[0].mxu0
        %v1215 = vpop.f32.mrb[0].mxu0
        %v1216 = vadd.f32 0.0, %v1215
        %v1217 = vpop.f32.mrb[0].mxu0
        %1218 = vmatprep.mubr.bf16.mxu0 0
        %1219 = vmatmul.mubr.bf16.gmra.mrb[0].mxu0 %v878
        %v1220 = vpop.f32.mrb[0].mxu0
        %v1221 = vadd.f32 0.0, %v1220
        %v1222 = vpop.f32.mrb[0].mxu0
        %v1223 = vpop.f32.mrb[0].mxu0
        %v1224 = vadd.f32 0.0, %v1223
        %v1225 = vpop.f32.mrb[0].mxu0
        %1226 = vmatprep.mubr.bf16.mxu0 0
        %1227 = vmatmul.mubr.bf16.gmra.mrb[0].mxu0 %v879
        %v1228 = vpop.f32.mrb[0].mxu0
        %v1229 = vadd.f32 0.0, %v1228
        %v1230 = vpop.f32.mrb[0].mxu0
        %v1231 = vpop.f32.mrb[0].mxu0
        %v1232 = vadd.f32 0.0, %v1231
        %v1233 = vpop.f32.mrb[0].mxu0
        %1234 = vmatprep.mubr.bf16.mxu0 0
        %1235 = vmatmul.mubr.bf16.gmra.mrb[0].mxu0 %v880
        %v1236 = vpop.f32.mrb[0].mxu0
        %v1237 = vadd.f32 0.0, %v1236
        %v1238 = vpop.f32.mrb[0].mxu0
        %v1239 = vpop.f32.mrb[0].mxu0
        %v1240 = vadd.f32 0.0, %v1239
        %v1241 = vpop.f32.mrb[0].mxu0
        %1242 = vmatprep.mubr.bf16.mxu0 0
        %1243 = vmatmul.mubr.bf16.gmra.mrb[0].mxu0 %v881
        %v1244 = vpop.f32.mrb[0].mxu0
        %v1245 = vadd.f32 0.0, %v1244
        %v1246 = vpop.f32.mrb[0].mxu0
        %v1247 = vpop.f32.mrb[0].mxu0
        %v1248 = vadd.f32 0.0, %v1247
        %v1249 = vpop.f32.mrb[0].mxu0
        %1250 = vdwg.mxu0
        %v1251 = vpack.c.bf16 %v1000, %v997
        %v1252 = vpack.c.bf16 %v1008, %v1005
        %v1253 = vpack.c.bf16 %v1016, %v1013
        %v1254 = vpack.c.bf16 %v1024, %v1021
        %v1255 = vpack.c.bf16 %v1032, %v1029
        %v1256 = vpack.c.bf16 %v1040, %v1037
        %v1257 = vpack.c.bf16 %v1048, %v1045
        %v1258 = vpack.c.bf16 %v1056, %v1053
        %v1259 = vpack.c.bf16 %v1064, %v1061
        %v1260 = vpack.c.bf16 %v1072, %v1069
        %v1261 = vpack.c.bf16 %v1080, %v1077
        %v1262 = vpack.c.bf16 %v1088, %v1085
        %v1263 = vpack.c.bf16 %v1096, %v1093
        %v1264 = vpack.c.bf16 %v1104, %v1101
        %v1265 = vpack.c.bf16 %v1112, %v1109
        %v1266 = vpack.c.bf16 %v1120, %v1117
        %v1267 = vpack.c.bf16 %v1128, %v1125
        %v1268 = vpack.c.bf16 %v1136, %v1133
        %v1269 = vpack.c.bf16 %v1144, %v1141
        %v1270 = vpack.c.bf16 %v1152, %v1149
        %v1271 = vpack.c.bf16 %v1160, %v1157
        %v1272 = vpack.c.bf16 %v1168, %v1165
        %v1273 = vpack.c.bf16 %v1176, %v1173
        %v1274 = vpack.c.bf16 %v1184, %v1181
        %v1275 = vpack.c.bf16 %v1192, %v1189
        %v1276 = vpack.c.bf16 %v1200, %v1197
        %v1277 = vpack.c.bf16 %v1208, %v1205
        %v1278 = vpack.c.bf16 %v1216, %v1213
        %v1279 = vpack.c.bf16 %v1224, %v1221
        %v1280 = vpack.c.bf16 %v1232, %v1229
        %v1281 = vpack.c.bf16 %v1240, %v1237
        %v1282 = vpack.c.bf16 %v1248, %v1245
        %1283 = vst [vmem:[#allocation2] sm:$0xff] %v1251
        %1284 = vst [vmem:[#allocation2 + $0x20] sm:$0xff] %v1252
        %1285 = vst [vmem:[#allocation2 + $0x40] sm:$0xff] %v1253
        %1286 = vst [vmem:[#allocation2 + $0x60] sm:$0xff] %v1254
        %1287 = vst [vmem:[#allocation2 + $0x80] sm:$0xff] %v1255
        %1288 = vst [vmem:[#allocation2 + $0xa0] sm:$0xff] %v1256
        %1289 = vst [vmem:[#allocation2 + $0xc0] sm:$0xff] %v1257
        %1290 = vst [vmem:[#allocation2 + $0xe0] sm:$0xff] %v1258
        %1291 = vst [vmem:[#allocation2 + $0x8] sm:$0xff] %v1259
        %1292 = vst [vmem:[#allocation2 + $0x28] sm:$0xff] %v1260
        %1293 = vst [vmem:[#allocation2 + $0x48] sm:$0xff] %v1261
        %1294 = vst [vmem:[#allocation2 + $0x68] sm:$0xff] %v1262
        %1295 = vst [vmem:[#allocation2 + $0x88] sm:$0xff] %v1263
        %1296 = vst [vmem:[#allocation2 + $0xa8] sm:$0xff] %v1264
        %1297 = vst [vmem:[#allocation2 + $0xc8] sm:$0xff] %v1265
        %1298 = vst [vmem:[#allocation2 + $0xe8] sm:$0xff] %v1266
        %1299 = vst [vmem:[#allocation2 + $0x10] sm:$0xff] %v1267
        %1300 = vst [vmem:[#allocation2 + $0x30] sm:$0xff] %v1268
        %1301 = vst [vmem:[#allocation2 + $0x50] sm:$0xff] %v1269
        %1302 = vst [vmem:[#allocation2 + $0x70] sm:$0xff] %v1270
        %1303 = vst [vmem:[#allocation2 + $0x90] sm:$0xff] %v1271
        %1304 = vst [vmem:[#allocation2 + $0xb0] sm:$0xff] %v1272
        %1305 = vst [vmem:[#allocation2 + $0xd0] sm:$0xff] %v1273
        %1306 = vst [vmem:[#allocation2 + $0xf0] sm:$0xff] %v1274
        %1307 = vst [vmem:[#allocation2 + $0x18] sm:$0xff] %v1275
        %1308 = vst [vmem:[#allocation2 + $0x38] sm:$0xff] %v1276
        %1309 = vst [vmem:[#allocation2 + $0x58] sm:$0xff] %v1277
        %1310 = vst [vmem:[#allocation2 + $0x78] sm:$0xff] %v1278
        %1311 = vst [vmem:[#allocation2 + $0x98] sm:$0xff] %v1279
        %1312 = vst [vmem:[#allocation2 + $0xb8] sm:$0xff] %v1280
        %1313 = vst [vmem:[#allocation2 + $0xd8] sm:$0xff] %v1281
        %1314 = vst [vmem:[#allocation2 + $0xf8] sm:$0xff] %v1282
        %v1315 = vld [vmem:[#allocation2] sm:$0xff]
        %v1316 = vld [vmem:[#allocation2 + $0x8] sm:$0xff]
        %v1317 = vld [vmem:[#allocation2 + $0x10] sm:$0xff]
        %v1318 = vld [vmem:[#allocation2 + $0x18] sm:$0xff]
        %v1319 = vld [vmem:[#allocation2 + $0x20] sm:$0xff]
        %v1320 = vld [vmem:[#allocation2 + $0x28] sm:$0xff]
        %v1321 = vld [vmem:[#allocation2 + $0x30] sm:$0xff]
        %v1322 = vld [vmem:[#allocation2 + $0x38] sm:$0xff]
        %v1323 = vld [vmem:[#allocation2 + $0x40] sm:$0xff]
        %v1324 = vld [vmem:[#allocation2 + $0x48] sm:$0xff]
        %v1325 = vld [vmem:[#allocation2 + $0x50] sm:$0xff]
        %v1326 = vld [vmem:[#allocation2 + $0x58] sm:$0xff]
        %v1327 = vld [vmem:[#allocation2 + $0x60] sm:$0xff]
        %v1328 = vld [vmem:[#allocation2 + $0x68] sm:$0xff]
        %v1329 = vld [vmem:[#allocation2 + $0x70] sm:$0xff]
        %v1330 = vld [vmem:[#allocation2 + $0x78] sm:$0xff]
        %v1331 = vld [vmem:[#allocation2 + $0x80] sm:$0xff]
        %v1332 = vld [vmem:[#allocation2 + $0x88] sm:$0xff]
        %v1333 = vld [vmem:[#allocation2 + $0x90] sm:$0xff]
        %v1334 = vld [vmem:[#allocation2 + $0x98] sm:$0xff]
        %v1335 = vld [vmem:[#allocation2 + $0xa0] sm:$0xff]
        %v1336 = vld [vmem:[#allocation2 + $0xa8] sm:$0xff]
        %v1337 = vld [vmem:[#allocation2 + $0xb0] sm:$0xff]
        %v1338 = vld [vmem:[#allocation2 + $0xb8] sm:$0xff]
        %v1339 = vld [vmem:[#allocation2 + $0xc0] sm:$0xff]
        %v1340 = vld [vmem:[#allocation2 + $0xc8] sm:$0xff]
        %v1341 = vld [vmem:[#allocation2 + $0xd0] sm:$0xff]
        %v1342 = vld [vmem:[#allocation2 + $0xd8] sm:$0xff]
        %v1343 = vld [vmem:[#allocation2 + $0xe0] sm:$0xff]
        %v1344 = vld [vmem:[#allocation2 + $0xe8] sm:$0xff]
        %v1345 = vld [vmem:[#allocation2 + $0xf0] sm:$0xff]
        %v1346 = vld [vmem:[#allocation2 + $0xf8] sm:$0xff]
        %v1363 = vunpack.c.l.b16 %v434
        %v1364 = vunpack.c.l.b16 %v435
        %v1365 = vunpack.c.l.b16 %v436
        %v1366 = vunpack.c.l.b16 %v437
        %v1367 = vunpack.c.l.b16 %v438
        %v1368 = vunpack.c.l.b16 %v439
        %v1369 = vunpack.c.l.b16 %v440
        %v1370 = vunpack.c.l.b16 %v441
        %v1371 = vunpack.c.l.b16 %v442
        %v1372 = vunpack.c.l.b16 %v443
        %v1373 = vunpack.c.l.b16 %v444
        %v1374 = vunpack.c.l.b16 %v445
        %v1375 = vunpack.c.l.b16 %v446
        %v1376 = vunpack.c.l.b16 %v447
        %v1377 = vunpack.c.l.b16 %v448
        %v1378 = vunpack.c.l.b16 %v449
        %v1379 = vpack.c.b16 %v1364, %v1363
        %v1380 = vpack.c.b16 %v1366, %v1365
        %v1381 = vpack.c.b16 %v1368, %v1367
        %v1382 = vpack.c.b16 %v1370, %v1369
        %v1383 = vpack.c.b16 %v1372, %v1371
        %v1384 = vpack.c.b16 %v1374, %v1373
        %v1385 = vpack.c.b16 %v1376, %v1375
        %v1386 = vpack.c.b16 %v1378, %v1377
        %1395 = vmatprep.subr.bf16.mxu0 %v1316
        %1396 = vmatpush1.bf16.msra.mxu0 %v1315
        %1397 = vmatprep.subr.bf16.mxu0 %v1320
        %1398 = vmatpush1.bf16.msra.mxu0 %v1319
        %1399 = vmatprep.subr.bf16.mxu0 %v1324
        %1400 = vmatpush1.bf16.msra.mxu0 %v1323
        %1401 = vmatprep.subr.bf16.mxu0 %v1328
        %1402 = vmatpush1.bf16.msra.mxu0 %v1327
        %1403 = vmatprep.subr.bf16.mxu0 %v1332
        %1404 = vmatpush1.bf16.msra.mxu0 %v1331
        %1405 = vmatprep.subr.bf16.mxu0 %v1336
        %1406 = vmatpush1.bf16.msra.mxu0 %v1335
        %1407 = vmatprep.subr.bf16.mxu0 %v1340
        %1408 = vmatpush1.bf16.msra.mxu0 %v1339
        %1409 = vmatprep.subr.bf16.mxu0 %v1344
        %1410 = vmatpush1.bf16.msra.mxu0 %v1343
        %1411 = vmatprep.subr.bf16.mxu0 0
        %1412 = vmatpush1.bf16.msra.mxu0 0
        %1413 = vmatprep.subr.bf16.mxu0 0
        %1414 = vmatpush1.bf16.msra.mxu0 0
        %1415 = vmatprep.subr.bf16.mxu0 0
        %1416 = vmatpush1.bf16.msra.mxu0 0
        %1417 = vmatprep.subr.bf16.mxu0 0
        %1418 = vmatpush1.bf16.msra.mxu0 0
        %1419 = vmatprep.subr.bf16.mxu0 0
        %1420 = vmatpush1.bf16.msra.mxu0 0
        %1421 = vmatprep.subr.bf16.mxu0 0
        %1422 = vmatpush1.bf16.msra.mxu0 0
        %1423 = vmatprep.subr.bf16.mxu0 0
        %1424 = vmatpush1.bf16.msra.mxu0 0
        %1425 = vmatprep.subr.bf16.mxu0 0
        %1426 = vmatpush1.bf16.msra.mxu0 0
        %1427 = vmatprep.mubr.bf16.mxu0 0
        %1428 = vmatmul.mubr.bf16.gmra.mrb[0].mxu0 %v1379
        %v1429 = vpop.f32.mrb[0].mxu0
        %v1430 = vadd.f32 0.0, %v1429
        %v1431 = vpop.f32.mrb[0].mxu0
        %v1432 = vadd.f32 0.0, %v1431
        %v1433 = vpop.f32.mrb[0].mxu0
        %v1434 = vadd.f32 0.0, %v1433
        %v1435 = vpop.f32.mrb[0].mxu0
        %v1436 = vadd.f32 0.0, %v1435
        %1437 = vmatprep.mubr.bf16.mxu0 0
        %1438 = vmatmul.mubr.bf16.gmra.mrb[0].mxu0 %v1380
        %v1439 = vpop.f32.mrb[0].mxu0
        %v1440 = vadd.f32 0.0, %v1439
        %v1441 = vpop.f32.mrb[0].mxu0
        %v1442 = vadd.f32 0.0, %v1441
        %v1443 = vpop.f32.mrb[0].mxu0
        %v1444 = vadd.f32 0.0, %v1443
        %v1445 = vpop.f32.mrb[0].mxu0
        %v1446 = vadd.f32 0.0, %v1445
        %1447 = vmatprep.mubr.bf16.mxu0 0
        %1448 = vmatmul.mubr.bf16.gmra.mrb[0].mxu0 %v1381
        %v1449 = vpop.f32.mrb[0].mxu0
        %v1450 = vadd.f32 0.0, %v1449
        %v1451 = vpop.f32.mrb[0].mxu0
        %v1452 = vadd.f32 0.0, %v1451
        %v1453 = vpop.f32.mrb[0].mxu0
        %v1454 = vadd.f32 0.0, %v1453
        %v1455 = vpop.f32.mrb[0].mxu0
        %v1456 = vadd.f32 0.0, %v1455
        %1457 = vmatprep.mubr.bf16.mxu0 0
        %1458 = vmatmul.mubr.bf16.gmra.mrb[0].mxu0 %v1382
        %v1459 = vpop.f32.mrb[0].mxu0
        %v1460 = vadd.f32 0.0, %v1459
        %v1461 = vpop.f32.mrb[0].mxu0
        %v1462 = vadd.f32 0.0, %v1461
        %v1463 = vpop.f32.mrb[0].mxu0
        %v1464 = vadd.f32 0.0, %v1463
        %v1465 = vpop.f32.mrb[0].mxu0
        %v1466 = vadd.f32 0.0, %v1465
        %1467 = vmatprep.mubr.bf16.mxu0 0
        %1468 = vmatmul.mubr.bf16.gmra.mrb[0].mxu0 %v1383
        %v1469 = vpop.f32.mrb[0].mxu0
        %v1470 = vadd.f32 0.0, %v1469
        %v1471 = vpop.f32.mrb[0].mxu0
        %v1472 = vadd.f32 0.0, %v1471
        %v1473 = vpop.f32.mrb[0].mxu0
        %v1474 = vadd.f32 0.0, %v1473
        %v1475 = vpop.f32.mrb[0].mxu0
        %v1476 = vadd.f32 0.0, %v1475
        %1477 = vmatprep.mubr.bf16.mxu0 0
        %1478 = vmatmul.mubr.bf16.gmra.mrb[0].mxu0 %v1384
        %v1479 = vpop.f32.mrb[0].mxu0
        %v1480 = vadd.f32 0.0, %v1479
        %v1481 = vpop.f32.mrb[0].mxu0
        %v1482 = vadd.f32 0.0, %v1481
        %v1483 = vpop.f32.mrb[0].mxu0
        %v1484 = vadd.f32 0.0, %v1483
        %v1485 = vpop.f32.mrb[0].mxu0
        %v1486 = vadd.f32 0.0, %v1485
        %1487 = vmatprep.mubr.bf16.mxu0 0
        %1488 = vmatmul.mubr.bf16.gmra.mrb[0].mxu0 %v1385
        %v1489 = vpop.f32.mrb[0].mxu0
        %v1490 = vadd.f32 0.0, %v1489
        %v1491 = vpop.f32.mrb[0].mxu0
        %v1492 = vadd.f32 0.0, %v1491
        %v1493 = vpop.f32.mrb[0].mxu0
        %v1494 = vadd.f32 0.0, %v1493
        %v1495 = vpop.f32.mrb[0].mxu0
        %v1496 = vadd.f32 0.0, %v1495
        %1497 = vmatprep.mubr.bf16.mxu0 0
        %1498 = vmatmul.mubr.bf16.gmra.mrb[0].mxu0 %v1386
        %v1499 = vpop.f32.mrb[0].mxu0
        %v1500 = vadd.f32 0.0, %v1499
        %v1501 = vpop.f32.mrb[0].mxu0
        %v1502 = vadd.f32 0.0, %v1501
        %v1503 = vpop.f32.mrb[0].mxu0
        %v1504 = vadd.f32 0.0, %v1503
        %v1505 = vpop.f32.mrb[0].mxu0
        %v1506 = vadd.f32 0.0, %v1505
        %1507 = vdwg.mxu0
        %1508 = vmatprep.subr.bf16.mxu0 %v1318
        %1509 = vmatpush1.bf16.msra.mxu0 %v1317
        %1510 = vmatprep.subr.bf16.mxu0 %v1322
        %1511 = vmatpush1.bf16.msra.mxu0 %v1321
        %1512 = vmatprep.subr.bf16.mxu0 %v1326
        %1513 = vmatpush1.bf16.msra.mxu0 %v1325
        %1514 = vmatprep.subr.bf16.mxu0 %v1330
        %1515 = vmatpush1.bf16.msra.mxu0 %v1329
        %1516 = vmatprep.subr.bf16.mxu0 %v1334
        %1517 = vmatpush1.bf16.msra.mxu0 %v1333
        %1518 = vmatprep.subr.bf16.mxu0 %v1338
        %1519 = vmatpush1.bf16.msra.mxu0 %v1337
        %1520 = vmatprep.subr.bf16.mxu0 %v1342
        %1521 = vmatpush1.bf16.msra.mxu0 %v1341
        %1522 = vmatprep.subr.bf16.mxu0 %v1346
        %1523 = vmatpush1.bf16.msra.mxu0 %v1345
        %1524 = vmatprep.subr.bf16.mxu0 0
        %1525 = vmatpush1.bf16.msra.mxu0 0
        %1526 = vmatprep.subr.bf16.mxu0 0
        %1527 = vmatpush1.bf16.msra.mxu0 0
        %1528 = vmatprep.subr.bf16.mxu0 0
        %1529 = vmatpush1.bf16.msra.mxu0 0
        %1530 = vmatprep.subr.bf16.mxu0 0
        %1531 = vmatpush1.bf16.msra.mxu0 0
        %1532 = vmatprep.subr.bf16.mxu0 0
        %1533 = vmatpush1.bf16.msra.mxu0 0
        %1534 = vmatprep.subr.bf16.mxu0 0
        %1535 = vmatpush1.bf16.msra.mxu0 0
        %1536 = vmatprep.subr.bf16.mxu0 0
        %1537 = vmatpush1.bf16.msra.mxu0 0
        %1538 = vmatprep.subr.bf16.mxu0 0
        %1539 = vmatpush1.bf16.msra.mxu0 0
        %1540 = vmatprep.mubr.bf16.mxu0 0
        %1541 = vmatmul.mubr.bf16.gmra.mrb[0].mxu0 %v1379
        %v1542 = vpop.f32.mrb[0].mxu0
        %v1543 = vadd.f32 0.0, %v1542
        %v1544 = vpop.f32.mrb[0].mxu0
        %v1545 = vadd.f32 0.0, %v1544
        %v1546 = vpop.f32.mrb[0].mxu0
        %v1547 = vadd.f32 0.0, %v1546
        %v1548 = vpop.f32.mrb[0].mxu0
        %v1549 = vadd.f32 0.0, %v1548
        %1550 = vmatprep.mubr.bf16.mxu0 0
        %1551 = vmatmul.mubr.bf16.gmra.mrb[0].mxu0 %v1380
        %v1552 = vpop.f32.mrb[0].mxu0
        %v1553 = vadd.f32 0.0, %v1552
        %v1554 = vpop.f32.mrb[0].mxu0
        %v1555 = vadd.f32 0.0, %v1554
        %v1556 = vpop.f32.mrb[0].mxu0
        %v1557 = vadd.f32 0.0, %v1556
        %v1558 = vpop.f32.mrb[0].mxu0
        %v1559 = vadd.f32 0.0, %v1558
        %1560 = vmatprep.mubr.bf16.mxu0 0
        %1561 = vmatmul.mubr.bf16.gmra.mrb[0].mxu0 %v1381
        %v1562 = vpop.f32.mrb[0].mxu0
        %v1563 = vadd.f32 0.0, %v1562
        %v1564 = vpop.f32.mrb[0].mxu0
        %v1565 = vadd.f32 0.0, %v1564
        %v1566 = vpop.f32.mrb[0].mxu0
        %v1567 = vadd.f32 0.0, %v1566
        %v1568 = vpop.f32.mrb[0].mxu0
        %v1569 = vadd.f32 0.0, %v1568
        %1570 = vmatprep.mubr.bf16.mxu0 0
        %1571 = vmatmul.mubr.bf16.gmra.mrb[0].mxu0 %v1382
        %v1572 = vpop.f32.mrb[0].mxu0
        %v1573 = vadd.f32 0.0, %v1572
        %v1574 = vpop.f32.mrb[0].mxu0
        %v1575 = vadd.f32 0.0, %v1574
        %v1576 = vpop.f32.mrb[0].mxu0
        %v1577 = vadd.f32 0.0, %v1576
        %v1578 = vpop.f32.mrb[0].mxu0
        %v1579 = vadd.f32 0.0, %v1578
        %1580 = vmatprep.mubr.bf16.mxu0 0
        %1581 = vmatmul.mubr.bf16.gmra.mrb[0].mxu0 %v1383
        %v1582 = vpop.f32.mrb[0].mxu0
        %v1583 = vadd.f32 0.0, %v1582
        %v1584 = vpop.f32.mrb[0].mxu0
        %v1585 = vadd.f32 0.0, %v1584
        %v1586 = vpop.f32.mrb[0].mxu0
        %v1587 = vadd.f32 0.0, %v1586
        %v1588 = vpop.f32.mrb[0].mxu0
        %v1589 = vadd.f32 0.0, %v1588
        %1590 = vmatprep.mubr.bf16.mxu0 0
        %1591 = vmatmul.mubr.bf16.gmra.mrb[0].mxu0 %v1384
        %v1592 = vpop.f32.mrb[0].mxu0
        %v1593 = vadd.f32 0.0, %v1592
        %v1594 = vpop.f32.mrb[0].mxu0
        %v1595 = vadd.f32 0.0, %v1594
        %v1596 = vpop.f32.mrb[0].mxu0
        %v1597 = vadd.f32 0.0, %v1596
        %v1598 = vpop.f32.mrb[0].mxu0
        %v1599 = vadd.f32 0.0, %v1598
        %1600 = vmatprep.mubr.bf16.mxu0 0
        %1601 = vmatmul.mubr.bf16.gmra.mrb[0].mxu0 %v1385
        %v1602 = vpop.f32.mrb[0].mxu0
        %v1603 = vadd.f32 0.0, %v1602
        %v1604 = vpop.f32.mrb[0].mxu0
        %v1605 = vadd.f32 0.0, %v1604
        %v1606 = vpop.f32.mrb[0].mxu0
        %v1607 = vadd.f32 0.0, %v1606
        %v1608 = vpop.f32.mrb[0].mxu0
        %v1609 = vadd.f32 0.0, %v1608
        %1610 = vmatprep.mubr.bf16.mxu0 0
        %1611 = vmatmul.mubr.bf16.gmra.mrb[0].mxu0 %v1386
        %v1612 = vpop.f32.mrb[0].mxu0
        %v1613 = vadd.f32 0.0, %v1612
        %v1614 = vpop.f32.mrb[0].mxu0
        %v1615 = vadd.f32 0.0, %v1614
        %v1616 = vpop.f32.mrb[0].mxu0
        %v1617 = vadd.f32 0.0, %v1616
        %v1618 = vpop.f32.mrb[0].mxu0
        %v1619 = vadd.f32 0.0, %v1618
        %1620 = vdwg.mxu0
        %s1621 = sld [smem:[#allocation3]]
        %v1622 = vstv %s1621
        %s1623 = sld [smem:[#allocation3 + $0x1]]
        %v1624 = vstv %s1623
        %s1625 = sld [smem:[#allocation3 + $0x2]]
        %v1626 = vstv %s1625
        %s1627 = sld [smem:[#allocation3 + $0x3]]
        %v1628 = vstv %s1627
        %v1629 = vsub.f32 1.0, %v562
        %v1630 = vsub.f32 1.0, %v563
        %v1631 = vsub.f32 1.0, %v564
        %v1632 = vsub.f32 1.0, %v565
        %v1633 = vsub.f32 1.0, %v566
        %v1634 = vsub.f32 1.0, %v567
        %v1635 = vsub.f32 1.0, %v568
        %v1636 = vsub.f32 1.0, %v569
        %v1637 = vsub.f32 1.0, %v570
        %v1638 = vsub.f32 1.0, %v571
        %v1639 = vsub.f32 1.0, %v572
        %v1640 = vsub.f32 1.0, %v573
        %v1641 = vsub.f32 1.0, %v574
        %v1642 = vsub.f32 1.0, %v575
        %v1643 = vsub.f32 1.0, %v576
        %v1644 = vsub.f32 1.0, %v577
        %v1645 = vsub.f32 1.0, %v578
        %v1646 = vsub.f32 1.0, %v579
        %v1647 = vsub.f32 1.0, %v580
        %v1648 = vsub.f32 1.0, %v581
        %v1649 = vsub.f32 1.0, %v582
        %v1650 = vsub.f32 1.0, %v583
        %v1651 = vsub.f32 1.0, %v584
        %v1652 = vsub.f32 1.0, %v585
        %v1653 = vsub.f32 1.0, %v586
        %v1654 = vsub.f32 1.0, %v587
        %v1655 = vsub.f32 1.0, %v588
        %v1656 = vsub.f32 1.0, %v589
        %v1657 = vsub.f32 1.0, %v590
        %v1658 = vsub.f32 1.0, %v591
        %v1659 = vsub.f32 1.0, %v592
        %v1660 = vsub.f32 1.0, %v593
        %v1661 = vsub.f32 1.0, %v594
        %v1662 = vsub.f32 1.0, %v595
        %v1663 = vsub.f32 1.0, %v596
        %v1664 = vsub.f32 1.0, %v597
        %v1665 = vsub.f32 1.0, %v598
        %v1666 = vsub.f32 1.0, %v599
        %v1667 = vsub.f32 1.0, %v600
        %v1668 = vsub.f32 1.0, %v601
        %v1669 = vsub.f32 1.0, %v602
        %v1670 = vsub.f32 1.0, %v603
        %v1671 = vsub.f32 1.0, %v604
        %v1672 = vsub.f32 1.0, %v605
        %v1673 = vsub.f32 1.0, %v606
        %v1674 = vsub.f32 1.0, %v607
        %v1675 = vsub.f32 1.0, %v608
        %v1676 = vsub.f32 1.0, %v609
        %v1677 = vsub.f32 1.0, %v610
        %v1678 = vsub.f32 1.0, %v611
        %v1679 = vsub.f32 1.0, %v612
        %v1680 = vsub.f32 1.0, %v613
        %v1681 = vsub.f32 1.0, %v614
        %v1682 = vsub.f32 1.0, %v615
        %v1683 = vsub.f32 1.0, %v616
        %v1684 = vsub.f32 1.0, %v617
        %v1685 = vsub.f32 1.0, %v618
        %v1686 = vsub.f32 1.0, %v619
        %v1687 = vsub.f32 1.0, %v620
        %v1688 = vsub.f32 1.0, %v621
        %v1689 = vsub.f32 1.0, %v622
        %v1690 = vsub.f32 1.0, %v623
        %v1691 = vsub.f32 1.0, %v624
        %v1692 = vsub.f32 1.0, %v625
        %v1693 = vmul.f32 %v1629, -1024.0
        %v1694 = vmul.f32 %v1630, -1024.0
        %v1695 = vmul.f32 %v1631, -1024.0
        %v1696 = vmul.f32 %v1632, -1024.0
        %v1697 = vmul.f32 %v1633, -1024.0
        %v1698 = vmul.f32 %v1634, -1024.0
        %v1699 = vmul.f32 %v1635, -1024.0
        %v1700 = vmul.f32 %v1636, -1024.0
        %v1701 = vmul.f32 %v1637, -1024.0
        %v1702 = vmul.f32 %v1638, -1024.0
        %v1703 = vmul.f32 %v1639, -1024.0
        %v1704 = vmul.f32 %v1640, -1024.0
        %v1705 = vmul.f32 %v1641, -1024.0
        %v1706 = vmul.f32 %v1642, -1024.0
        %v1707 = vmul.f32 %v1643, -1024.0
        %v1708 = vmul.f32 %v1644, -1024.0
        %v1709 = vmul.f32 %v1645, -1024.0
        %v1710 = vmul.f32 %v1646, -1024.0
        %v1711 = vmul.f32 %v1647, -1024.0
        %v1712 = vmul.f32 %v1648, -1024.0
        %v1713 = vmul.f32 %v1649, -1024.0
        %v1714 = vmul.f32 %v1650, -1024.0
        %v1715 = vmul.f32 %v1651, -1024.0
        %v1716 = vmul.f32 %v1652, -1024.0
        %v1717 = vmul.f32 %v1653, -1024.0
        %v1718 = vmul.f32 %v1654, -1024.0
        %v1719 = vmul.f32 %v1655, -1024.0
        %v1720 = vmul.f32 %v1656, -1024.0
        %v1721 = vmul.f32 %v1657, -1024.0
        %v1722 = vmul.f32 %v1658, -1024.0
        %v1723 = vmul.f32 %v1659, -1024.0
        %v1724 = vmul.f32 %v1660, -1024.0
        %v1725 = vmul.f32 %v1661, -1024.0
        %v1726 = vmul.f32 %v1662, -1024.0
        %v1727 = vmul.f32 %v1663, -1024.0
        %v1728 = vmul.f32 %v1664, -1024.0
        %v1729 = vmul.f32 %v1665, -1024.0
        %v1730 = vmul.f32 %v1666, -1024.0
        %v1731 = vmul.f32 %v1667, -1024.0
        %v1732 = vmul.f32 %v1668, -1024.0
        %v1733 = vmul.f32 %v1669, -1024.0
        %v1734 = vmul.f32 %v1670, -1024.0
        %v1735 = vmul.f32 %v1671, -1024.0
        %v1736 = vmul.f32 %v1672, -1024.0
        %v1737 = vmul.f32 %v1673, -1024.0
        %v1738 = vmul.f32 %v1674, -1024.0
        %v1739 = vmul.f32 %v1675, -1024.0
        %v1740 = vmul.f32 %v1676, -1024.0
        %v1741 = vmul.f32 %v1677, -1024.0
        %v1742 = vmul.f32 %v1678, -1024.0
        %v1743 = vmul.f32 %v1679, -1024.0
        %v1744 = vmul.f32 %v1680, -1024.0
        %v1745 = vmul.f32 %v1681, -1024.0
        %v1746 = vmul.f32 %v1682, -1024.0
        %v1747 = vmul.f32 %v1683, -1024.0
        %v1748 = vmul.f32 %v1684, -1024.0
        %v1749 = vmul.f32 %v1685, -1024.0
        %v1750 = vmul.f32 %v1686, -1024.0
        %v1751 = vmul.f32 %v1687, -1024.0
        %v1752 = vmul.f32 %v1688, -1024.0
        %v1753 = vmul.f32 %v1689, -1024.0
        %v1754 = vmul.f32 %v1690, -1024.0
        %v1755 = vmul.f32 %v1691, -1024.0
        %v1756 = vmul.f32 %v1692, -1024.0
        %v1757 = vadd.f32 %v1622, 1.0
        %v1758 = vadd.f32 %v1624, 1.0
        %v1759 = vadd.f32 %v1626, 1.0
        %v1760 = vadd.f32 %v1628, 1.0
        %v1761 = vlaneseq
        %v1762 = vshrl.u32 %v1761, 7
        %v1763 = vsub.s32 0, %v1762
        %v1764 = vrot.slane %v1757, %v1763
        %v1765 = vlaneseq
        %v1766 = vshrl.u32 %v1765, 7
        %v1767 = vsub.s32 0, %v1766
        %v1768 = vrot.slane %v1758, %v1767
        %v1769 = vlaneseq
        %v1770 = vshrl.u32 %v1769, 7
        %v1771 = vsub.s32 0, %v1770
        %v1772 = vrot.slane %v1759, %v1771
        %v1773 = vlaneseq
        %v1774 = vshrl.u32 %v1773, 7
        %v1775 = vsub.s32 0, %v1774
        %v1776 = vrot.slane %v1760, %v1775
        %v1777 = vmul.f32 %v1764, %v1693
        %v1778 = vmul.f32 %v1768, %v1694
        %v1779 = vmul.f32 %v1772, %v1695
        %v1780 = vmul.f32 %v1776, %v1696
        %v1781 = vmul.f32 %v1764, %v1697
        %v1782 = vmul.f32 %v1768, %v1698
        %v1783 = vmul.f32 %v1772, %v1699
        %v1784 = vmul.f32 %v1776, %v1700
        %v1785 = vmul.f32 %v1764, %v1701
        %v1786 = vmul.f32 %v1768, %v1702
        %v1787 = vmul.f32 %v1772, %v1703
        %v1788 = vmul.f32 %v1776, %v1704
        %v1789 = vmul.f32 %v1764, %v1705
        %v1790 = vmul.f32 %v1768, %v1706
        %v1791 = vmul.f32 %v1772, %v1707
        %v1792 = vmul.f32 %v1776, %v1708
        %v1793 = vmul.f32 %v1764, %v1709
        %v1794 = vmul.f32 %v1768, %v1710
        %v1795 = vmul.f32 %v1772, %v1711
        %v1796 = vmul.f32 %v1776, %v1712
        %v1797 = vmul.f32 %v1764, %v1713
        %v1798 = vmul.f32 %v1768, %v1714
        %v1799 = vmul.f32 %v1772, %v1715
        %v1800 = vmul.f32 %v1776, %v1716
        %v1801 = vmul.f32 %v1764, %v1717
        %v1802 = vmul.f32 %v1768, %v1718
        %v1803 = vmul.f32 %v1772, %v1719
        %v1804 = vmul.f32 %v1776, %v1720
        %v1805 = vmul.f32 %v1764, %v1721
        %v1806 = vmul.f32 %v1768, %v1722
        %v1807 = vmul.f32 %v1772, %v1723
        %v1808 = vmul.f32 %v1776, %v1724
        %v1809 = vmul.f32 %v1764, %v1725
        %v1810 = vmul.f32 %v1768, %v1726
        %v1811 = vmul.f32 %v1772, %v1727
        %v1812 = vmul.f32 %v1776, %v1728
        %v1813 = vmul.f32 %v1764, %v1729
        %v1814 = vmul.f32 %v1768, %v1730
        %v1815 = vmul.f32 %v1772, %v1731
        %v1816 = vmul.f32 %v1776, %v1732
        %v1817 = vmul.f32 %v1764, %v1733
        %v1818 = vmul.f32 %v1768, %v1734
        %v1819 = vmul.f32 %v1772, %v1735
        %v1820 = vmul.f32 %v1776, %v1736
        %v1821 = vmul.f32 %v1764, %v1737
        %v1822 = vmul.f32 %v1768, %v1738
        %v1823 = vmul.f32 %v1772, %v1739
        %v1824 = vmul.f32 %v1776, %v1740
        %v1825 = vmul.f32 %v1764, %v1741
        %v1826 = vmul.f32 %v1768, %v1742
        %v1827 = vmul.f32 %v1772, %v1743
        %v1828 = vmul.f32 %v1776, %v1744
        %v1829 = vmul.f32 %v1764, %v1745
        %v1830 = vmul.f32 %v1768, %v1746
        %v1831 = vmul.f32 %v1772, %v1747
        %v1832 = vmul.f32 %v1776, %v1748
        %v1833 = vmul.f32 %v1764, %v1749
        %v1834 = vmul.f32 %v1768, %v1750
        %v1835 = vmul.f32 %v1772, %v1751
        %v1836 = vmul.f32 %v1776, %v1752
        %v1837 = vmul.f32 %v1764, %v1753
        %v1838 = vmul.f32 %v1768, %v1754
        %v1839 = vmul.f32 %v1772, %v1755
        %v1840 = vmul.f32 %v1776, %v1756
        %v1841 = vadd.f32 %v1430, %v1777
        %v1842 = vadd.f32 %v1432, %v1778
        %v1843 = vadd.f32 %v1543, %v1779
        %v1844 = vadd.f32 %v1545, %v1780
        %v1845 = vadd.f32 %v1434, %v1781
        %v1846 = vadd.f32 %v1436, %v1782
        %v1847 = vadd.f32 %v1547, %v1783
        %v1848 = vadd.f32 %v1549, %v1784
        %v1849 = vadd.f32 %v1440, %v1785
        %v1850 = vadd.f32 %v1442, %v1786
        %v1851 = vadd.f32 %v1553, %v1787
        %v1852 = vadd.f32 %v1555, %v1788
        %v1853 = vadd.f32 %v1444, %v1789
        %v1854 = vadd.f32 %v1446, %v1790
        %v1855 = vadd.f32 %v1557, %v1791
        %v1856 = vadd.f32 %v1559, %v1792
        %v1857 = vadd.f32 %v1450, %v1793
        %v1858 = vadd.f32 %v1452, %v1794
        %v1859 = vadd.f32 %v1563, %v1795
        %v1860 = vadd.f32 %v1565, %v1796
        %v1861 = vadd.f32 %v1454, %v1797
        %v1862 = vadd.f32 %v1456, %v1798
        %v1863 = vadd.f32 %v1567, %v1799
        %v1864 = vadd.f32 %v1569, %v1800
        %v1865 = vadd.f32 %v1460, %v1801
        %v1866 = vadd.f32 %v1462, %v1802
        %v1867 = vadd.f32 %v1573, %v1803
        %v1868 = vadd.f32 %v1575, %v1804
        %v1869 = vadd.f32 %v1464, %v1805
        %v1870 = vadd.f32 %v1466, %v1806
        %v1871 = vadd.f32 %v1577, %v1807
        %v1872 = vadd.f32 %v1579, %v1808
        %v1873 = vadd.f32 %v1470, %v1809
        %v1874 = vadd.f32 %v1472, %v1810
        %v1875 = vadd.f32 %v1583, %v1811
        %v1876 = vadd.f32 %v1585, %v1812
        %v1877 = vadd.f32 %v1474, %v1813
        %v1878 = vadd.f32 %v1476, %v1814
        %v1879 = vadd.f32 %v1587, %v1815
        %v1880 = vadd.f32 %v1589, %v1816
        %v1881 = vadd.f32 %v1480, %v1817
        %v1882 = vadd.f32 %v1482, %v1818
        %v1883 = vadd.f32 %v1593, %v1819
        %v1884 = vadd.f32 %v1595, %v1820
        %v1885 = vadd.f32 %v1484, %v1821
        %v1886 = vadd.f32 %v1486, %v1822
        %v1887 = vadd.f32 %v1597, %v1823
        %v1888 = vadd.f32 %v1599, %v1824
        %v1889 = vadd.f32 %v1490, %v1825
        %v1890 = vadd.f32 %v1492, %v1826
        %v1891 = vadd.f32 %v1603, %v1827
        %v1892 = vadd.f32 %v1605, %v1828
        %v1893 = vadd.f32 %v1494, %v1829
        %v1894 = vadd.f32 %v1496, %v1830
        %v1895 = vadd.f32 %v1607, %v1831
        %v1896 = vadd.f32 %v1609, %v1832
        %v1897 = vadd.f32 %v1500, %v1833
        %v1898 = vadd.f32 %v1502, %v1834
        %v1899 = vadd.f32 %v1613, %v1835
        %v1900 = vadd.f32 %v1615, %v1836
        %v1901 = vadd.f32 %v1504, %v1837
        %v1902 = vadd.f32 %v1506, %v1838
        %v1903 = vadd.f32 %v1617, %v1839
        %v1904 = vadd.f32 %v1619, %v1840
        %1905 = vst [vmem:[%s380] sm:$0xff] %v1841
        %1906 = vst [vmem:[%s380 + $0x8] sm:$0xff] %v1842
        %1907 = vst [vmem:[%s380 + $0x10] sm:$0xff] %v1843
        %1908 = vst [vmem:[%s380 + $0x18] sm:$0xff] %v1844
        %1909 = vst [vmem:[%s380 + $0x20] sm:$0xff] %v1845
        %1910 = vst [vmem:[%s380 + $0x28] sm:$0xff] %v1846
        %1911 = vst [vmem:[%s380 + $0x30] sm:$0xff] %v1847
        %1912 = vst [vmem:[%s380 + $0x38] sm:$0xff] %v1848
        %1913 = vst [vmem:[%s380 + $0x40] sm:$0xff] %v1849
        %1914 = vst [vmem:[%s380 + $0x48] sm:$0xff] %v1850
        %1915 = vst [vmem:[%s380 + $0x50] sm:$0xff] %v1851
        %1916 = vst [vmem:[%s380 + $0x58] sm:$0xff] %v1852
        %1917 = vst [vmem:[%s380 + $0x60] sm:$0xff] %v1853
        %1918 = vst [vmem:[%s380 + $0x68] sm:$0xff] %v1854
        %1919 = vst [vmem:[%s380 + $0x70] sm:$0xff] %v1855
        %1920 = vst [vmem:[%s380 + $0x78] sm:$0xff] %v1856
        %1921 = vst [vmem:[%s380 + $0x80] sm:$0xff] %v1857
        %1922 = vst [vmem:[%s380 + $0x88] sm:$0xff] %v1858
        %1923 = vst [vmem:[%s380 + $0x90] sm:$0xff] %v1859
        %1924 = vst [vmem:[%s380 + $0x98] sm:$0xff] %v1860
        %1925 = vst [vmem:[%s380 + $0xa0] sm:$0xff] %v1861
        %1926 = vst [vmem:[%s380 + $0xa8] sm:$0xff] %v1862
        %1927 = vst [vmem:[%s380 + $0xb0] sm:$0xff] %v1863
        %1928 = vst [vmem:[%s380 + $0xb8] sm:$0xff] %v1864
        %1929 = vst [vmem:[%s380 + $0xc0] sm:$0xff] %v1865
        %1930 = vst [vmem:[%s380 + $0xc8] sm:$0xff] %v1866
        %1931 = vst [vmem:[%s380 + $0xd0] sm:$0xff] %v1867
        %1932 = vst [vmem:[%s380 + $0xd8] sm:$0xff] %v1868
        %1933 = vst [vmem:[%s380 + $0xe0] sm:$0xff] %v1869
        %1934 = vst [vmem:[%s380 + $0xe8] sm:$0xff] %v1870
        %1935 = vst [vmem:[%s380 + $0xf0] sm:$0xff] %v1871
        %1936 = vst [vmem:[%s380 + $0xf8] sm:$0xff] %v1872
        %1937 = vst [vmem:[%s380 + $0x100] sm:$0xff] %v1873
        %1938 = vst [vmem:[%s380 + $0x108] sm:$0xff] %v1874
        %1939 = vst [vmem:[%s380 + $0x110] sm:$0xff] %v1875
        %1940 = vst [vmem:[%s380 + $0x118] sm:$0xff] %v1876
        %1941 = vst [vmem:[%s380 + $0x120] sm:$0xff] %v1877
        %1942 = vst [vmem:[%s380 + $0x128] sm:$0xff] %v1878
        %1943 = vst [vmem:[%s380 + $0x130] sm:$0xff] %v1879
        %1944 = vst [vmem:[%s380 + $0x138] sm:$0xff] %v1880
        %1945 = vst [vmem:[%s380 + $0x140] sm:$0xff] %v1881
        %1946 = vst [vmem:[%s380 + $0x148] sm:$0xff] %v1882
        %1947 = vst [vmem:[%s380 + $0x150] sm:$0xff] %v1883
        %1948 = vst [vmem:[%s380 + $0x158] sm:$0xff] %v1884
        %1949 = vst [vmem:[%s380 + $0x160] sm:$0xff] %v1885
        %1950 = vst [vmem:[%s380 + $0x168] sm:$0xff] %v1886
        %1951 = vst [vmem:[%s380 + $0x170] sm:$0xff] %v1887
        %1952 = vst [vmem:[%s380 + $0x178] sm:$0xff] %v1888
        %1953 = vst [vmem:[%s380 + $0x180] sm:$0xff] %v1889
        %1954 = vst [vmem:[%s380 + $0x188] sm:$0xff] %v1890
        %1955 = vst [vmem:[%s380 + $0x190] sm:$0xff] %v1891
        %1956 = vst [vmem:[%s380 + $0x198] sm:$0xff] %v1892
        %1957 = vst [vmem:[%s380 + $0x1a0] sm:$0xff] %v1893
        %1958 = vst [vmem:[%s380 + $0x1a8] sm:$0xff] %v1894
        %1959 = vst [vmem:[%s380 + $0x1b0] sm:$0xff] %v1895
        %1960 = vst [vmem:[%s380 + $0x1b8] sm:$0xff] %v1896
        %1961 = vst [vmem:[%s380 + $0x1c0] sm:$0xff] %v1897
        %1962 = vst [vmem:[%s380 + $0x1c8] sm:$0xff] %v1898
        %1963 = vst [vmem:[%s380 + $0x1d0] sm:$0xff] %v1899
        %1964 = vst [vmem:[%s380 + $0x1d8] sm:$0xff] %v1900
        %1965 = vst [vmem:[%s380 + $0x1e0] sm:$0xff] %v1901
        %1966 = vst [vmem:[%s380 + $0x1e8] sm:$0xff] %v1902
        %1967 = vst [vmem:[%s380 + $0x1f0] sm:$0xff] %v1903
        %1968 = vst [vmem:[%s380 + $0x1f8] sm:$0xff] %v1904
        %1969 = vmax.xlane.f32.xlu0 %v1841
        %v1970 = vpop.xlane.xlu0 %1969
        %1971 = vmax.xlane.f32.xlu0 %v1845
        %v1972 = vpop.xlane.xlu0 %1971
        %1973 = vmax.xlane.f32.xlu0 %v1849
        %v1974 = vpop.xlane.xlu0 %1973
        %1975 = vmax.xlane.f32.xlu0 %v1853
        %v1976 = vpop.xlane.xlu0 %1975
        %1977 = vmax.xlane.f32.xlu0 %v1857
        %v1978 = vpop.xlane.xlu0 %1977
        %1979 = vmax.xlane.f32.xlu0 %v1861
        %v1980 = vpop.xlane.xlu0 %1979
        %1981 = vmax.xlane.f32.xlu0 %v1865
        %v1982 = vpop.xlane.xlu0 %1981
        %1983 = vmax.xlane.f32.xlu0 %v1869
        %v1984 = vpop.xlane.xlu0 %1983
        %1985 = vmax.xlane.f32.xlu0 %v1873
        %v1986 = vpop.xlane.xlu0 %1985
        %1987 = vmax.xlane.f32.xlu0 %v1877
        %v1988 = vpop.xlane.xlu0 %1987
        %1989 = vmax.xlane.f32.xlu0 %v1881
        %v1990 = vpop.xlane.xlu0 %1989
        %1991 = vmax.xlane.f32.xlu0 %v1885
        %v1992 = vpop.xlane.xlu0 %1991
        %1993 = vmax.xlane.f32.xlu0 %v1889
        %v1994 = vpop.xlane.xlu0 %1993
        %1995 = vmax.xlane.f32.xlu0 %v1893
        %v1996 = vpop.xlane.xlu0 %1995
        %1997 = vmax.xlane.f32.xlu0 %v1897
        %v1998 = vpop.xlane.xlu0 %1997
        %1999 = vmax.xlane.f32.xlu0 %v1901
        %v2000 = vpop.xlane.xlu0 %1999
        %v2001 = vsub.f32 %v1841, %v1970
        %v2002 = vsub.f32 %v1845, %v1972
        %v2003 = vsub.f32 %v1849, %v1974
        %v2004 = vsub.f32 %v1853, %v1976
        %v2005 = vsub.f32 %v1857, %v1978
        %v2006 = vsub.f32 %v1861, %v1980
        %v2007 = vsub.f32 %v1865, %v1982
        %v2008 = vsub.f32 %v1869, %v1984
        %v2009 = vsub.f32 %v1873, %v1986
        %v2010 = vsub.f32 %v1877, %v1988
        %v2011 = vsub.f32 %v1881, %v1990
        %v2012 = vsub.f32 %v1885, %v1992
        %v2013 = vsub.f32 %v1889, %v1994
        %v2014 = vsub.f32 %v1893, %v1996
        %v2015 = vsub.f32 %v1897, %v1998
        %v2016 = vsub.f32 %v1901, %v2000
        %v2017 = vmul.f32 %v2001, 1.442695
        %v2018 = vpow.pop %v2017
        %v2019 = vmul.f32 %v2002, 1.442695
        %v2020 = vpow.pop %v2019
        %v2021 = vmul.f32 %v2003, 1.442695
        %v2022 = vpow.pop %v2021
        %v2023 = vmul.f32 %v2004, 1.442695
        %v2024 = vpow.pop %v2023
        %v2025 = vmul.f32 %v2005, 1.442695
        %v2026 = vpow.pop %v2025
        %v2027 = vmul.f32 %v2006, 1.442695
        %v2028 = vpow.pop %v2027
        %v2029 = vmul.f32 %v2007, 1.442695
        %v2030 = vpow.pop %v2029
        %v2031 = vmul.f32 %v2008, 1.442695
        %v2032 = vpow.pop %v2031
        %v2033 = vmul.f32 %v2009, 1.442695
        %v2034 = vpow.pop %v2033
        %v2035 = vmul.f32 %v2010, 1.442695
        %v2036 = vpow.pop %v2035
        %v2037 = vmul.f32 %v2011, 1.442695
        %v2038 = vpow.pop %v2037
        %v2039 = vmul.f32 %v2012, 1.442695
        %v2040 = vpow.pop %v2039
        %v2041 = vmul.f32 %v2013, 1.442695
        %v2042 = vpow.pop %v2041
        %v2043 = vmul.f32 %v2014, 1.442695
        %v2044 = vpow.pop %v2043
        %v2045 = vmul.f32 %v2015, 1.442695
        %v2046 = vpow.pop %v2045
        %v2047 = vmul.f32 %v2016, 1.442695
        %v2048 = vpow.pop %v2047
        %2049 = vadd.xlane.f32.xlu0 %v2018
        %v2050 = vpop.xlane.xlu0 %2049
        %2051 = vadd.xlane.f32.xlu0 %v2020
        %v2052 = vpop.xlane.xlu0 %2051
        %2053 = vadd.xlane.f32.xlu0 %v2022
        %v2054 = vpop.xlane.xlu0 %2053
        %2055 = vadd.xlane.f32.xlu0 %v2024
        %v2056 = vpop.xlane.xlu0 %2055
        %2057 = vadd.xlane.f32.xlu0 %v2026
        %v2058 = vpop.xlane.xlu0 %2057
        %2059 = vadd.xlane.f32.xlu0 %v2028
        %v2060 = vpop.xlane.xlu0 %2059
        %2061 = vadd.xlane.f32.xlu0 %v2030
        %v2062 = vpop.xlane.xlu0 %2061
        %2063 = vadd.xlane.f32.xlu0 %v2032
        %v2064 = vpop.xlane.xlu0 %2063
        %2065 = vadd.xlane.f32.xlu0 %v2034
        %v2066 = vpop.xlane.xlu0 %2065
        %2067 = vadd.xlane.f32.xlu0 %v2036
        %v2068 = vpop.xlane.xlu0 %2067
        %2069 = vadd.xlane.f32.xlu0 %v2038
        %v2070 = vpop.xlane.xlu0 %2069
        %2071 = vadd.xlane.f32.xlu0 %v2040
        %v2072 = vpop.xlane.xlu0 %2071
        %2073 = vadd.xlane.f32.xlu0 %v2042
        %v2074 = vpop.xlane.xlu0 %2073
        %2075 = vadd.xlane.f32.xlu0 %v2044
        %v2076 = vpop.xlane.xlu0 %2075
        %2077 = vadd.xlane.f32.xlu0 %v2046
        %v2078 = vpop.xlane.xlu0 %2077
        %2079 = vadd.xlane.f32.xlu0 %v2048
        %v2080 = vpop.xlane.xlu0 %2079
        %v2081 = vrcp.pop %v2050
        %v2082 = vrcp.pop %v2052
        %v2083 = vrcp.pop %v2054
        %v2084 = vrcp.pop %v2056
        %v2085 = vrcp.pop %v2058
        %v2086 = vrcp.pop %v2060
        %v2087 = vrcp.pop %v2062
        %v2088 = vrcp.pop %v2064
        %v2089 = vrcp.pop %v2066
        %v2090 = vrcp.pop %v2068
        %v2091 = vrcp.pop %v2070
        %v2092 = vrcp.pop %v2072
        %v2093 = vrcp.pop %v2074
        %v2094 = vrcp.pop %v2076
        %v2095 = vrcp.pop %v2078
        %v2096 = vrcp.pop %v2080
        %v2097 = vmul.f32 %v2018, %v2081
        %v2098 = vmul.f32 %v2020, %v2082
        %v2099 = vmul.f32 %v2022, %v2083
        %v2100 = vmul.f32 %v2024, %v2084
        %v2101 = vmul.f32 %v2026, %v2085
        %v2102 = vmul.f32 %v2028, %v2086
        %v2103 = vmul.f32 %v2030, %v2087
        %v2104 = vmul.f32 %v2032, %v2088
        %v2105 = vmul.f32 %v2034, %v2089
        %v2106 = vmul.f32 %v2036, %v2090
        %v2107 = vmul.f32 %v2038, %v2091
        %v2108 = vmul.f32 %v2040, %v2092
        %v2109 = vmul.f32 %v2042, %v2093
        %v2110 = vmul.f32 %v2044, %v2094
        %v2111 = vmul.f32 %v2046, %v2095
        %v2112 = vmul.f32 %v2048, %v2096
        %v2113 = vlog2.pop %v2050
        %v2114 = vmul.f32 %v2113, 0.6931472
        %v2115 = vlog2.pop %v2052
        %v2116 = vmul.f32 %v2115, 0.6931472
        %v2117 = vlog2.pop %v2054
        %v2118 = vmul.f32 %v2117, 0.6931472
        %v2119 = vlog2.pop %v2056
        %v2120 = vmul.f32 %v2119, 0.6931472
        %v2121 = vlog2.pop %v2058
        %v2122 = vmul.f32 %v2121, 0.6931472
        %v2123 = vlog2.pop %v2060
        %v2124 = vmul.f32 %v2123, 0.6931472
        %v2125 = vlog2.pop %v2062
        %v2126 = vmul.f32 %v2125, 0.6931472
        %v2127 = vlog2.pop %v2064
        %v2128 = vmul.f32 %v2127, 0.6931472
        %v2129 = vlog2.pop %v2066
        %v2130 = vmul.f32 %v2129, 0.6931472
        %v2131 = vlog2.pop %v2068
        %v2132 = vmul.f32 %v2131, 0.6931472
        %v2133 = vlog2.pop %v2070
        %v2134 = vmul.f32 %v2133, 0.6931472
        %v2135 = vlog2.pop %v2072
        %v2136 = vmul.f32 %v2135, 0.6931472
        %v2137 = vlog2.pop %v2074
        %v2138 = vmul.f32 %v2137, 0.6931472
        %v2139 = vlog2.pop %v2076
        %v2140 = vmul.f32 %v2139, 0.6931472
        %v2141 = vlog2.pop %v2078
        %v2142 = vmul.f32 %v2141, 0.6931472
        %v2143 = vlog2.pop %v2080
        %v2144 = vmul.f32 %v2143, 0.6931472
        %v2145 = vsub.f32 %v2001, %v2114
        %v2146 = vsub.f32 %v2002, %v2116
        %v2147 = vsub.f32 %v2003, %v2118
        %v2148 = vsub.f32 %v2004, %v2120
        %v2149 = vsub.f32 %v2005, %v2122
        %v2150 = vsub.f32 %v2006, %v2124
        %v2151 = vsub.f32 %v2007, %v2126
        %v2152 = vsub.f32 %v2008, %v2128
        %v2153 = vsub.f32 %v2009, %v2130
        %v2154 = vsub.f32 %v2010, %v2132
        %v2155 = vsub.f32 %v2011, %v2134
        %v2156 = vsub.f32 %v2012, %v2136
        %v2157 = vsub.f32 %v2013, %v2138
        %v2158 = vsub.f32 %v2014, %v2140
        %v2159 = vsub.f32 %v2015, %v2142
        %v2160 = vsub.f32 %v2016, %v2144
        %v2161 = vsub.f32 0.0, %v2145
        %v2162 = vsub.f32 0.0, %v2146
        %v2163 = vsub.f32 0.0, %v2147
        %v2164 = vsub.f32 0.0, %v2148
        %v2165 = vsub.f32 0.0, %v2149
        %v2166 = vsub.f32 0.0, %v2150
        %v2167 = vsub.f32 0.0, %v2151
        %v2168 = vsub.f32 0.0, %v2152
        %v2169 = vsub.f32 0.0, %v2153
        %v2170 = vsub.f32 0.0, %v2154
        %v2171 = vsub.f32 0.0, %v2155
        %v2172 = vsub.f32 0.0, %v2156
        %v2173 = vsub.f32 0.0, %v2157
        %v2174 = vsub.f32 0.0, %v2158
        %v2175 = vsub.f32 0.0, %v2159
        %v2176 = vsub.f32 0.0, %v2160
        %v2177 = vmul.f32 %v2161, %v658
        %v2178 = vmul.f32 %v2162, %v662
        %v2179 = vmul.f32 %v2163, %v666
        %v2180 = vmul.f32 %v2164, %v670
        %v2181 = vmul.f32 %v2165, %v674
        %v2182 = vmul.f32 %v2166, %v678
        %v2183 = vmul.f32 %v2167, %v682
        %v2184 = vmul.f32 %v2168, %v686
        %v2185 = vmul.f32 %v2169, %v690
        %v2186 = vmul.f32 %v2170, %v694
        %v2187 = vmul.f32 %v2171, %v698
        %v2188 = vmul.f32 %v2172, %v702
        %v2189 = vmul.f32 %v2173, %v706
        %v2190 = vmul.f32 %v2174, %v710
        %v2191 = vmul.f32 %v2175, %v714
        %v2192 = vmul.f32 %v2176, %v718
        %v2193 = vsub.f32 1.0, %v2097
        %v2194 = vsub.f32 1.0, %v2098
        %v2195 = vsub.f32 1.0, %v2099
        %v2196 = vsub.f32 1.0, %v2100
        %v2197 = vsub.f32 1.0, %v2101
        %v2198 = vsub.f32 1.0, %v2102
        %v2199 = vsub.f32 1.0, %v2103
        %v2200 = vsub.f32 1.0, %v2104
        %v2201 = vsub.f32 1.0, %v2105
        %v2202 = vsub.f32 1.0, %v2106
        %v2203 = vsub.f32 1.0, %v2107
        %v2204 = vsub.f32 1.0, %v2108
        %v2205 = vsub.f32 1.0, %v2109
        %v2206 = vsub.f32 1.0, %v2110
        %v2207 = vsub.f32 1.0, %v2111
        %v2208 = vsub.f32 1.0, %v2112
        %v2209 = vmul.f32 %v2177, %v2193
        %v2210 = vmul.f32 %v2178, %v2194
        %v2211 = vmul.f32 %v2179, %v2195
        %v2212 = vmul.f32 %v2180, %v2196
        %v2213 = vmul.f32 %v2181, %v2197
        %v2214 = vmul.f32 %v2182, %v2198
        %v2215 = vmul.f32 %v2183, %v2199
        %v2216 = vmul.f32 %v2184, %v2200
        %v2217 = vmul.f32 %v2185, %v2201
        %v2218 = vmul.f32 %v2186, %v2202
        %v2219 = vmul.f32 %v2187, %v2203
        %v2220 = vmul.f32 %v2188, %v2204
        %v2221 = vmul.f32 %v2189, %v2205
        %v2222 = vmul.f32 %v2190, %v2206
        %v2223 = vmul.f32 %v2191, %v2207
        %v2224 = vmul.f32 %v2192, %v2208
        %v2225 = vadd.f32 %v2209, %v2210
        %v2226 = vadd.f32 %v2225, %v2211
        %v2227 = vadd.f32 %v2226, %v2212
        %v2228 = vadd.f32 %v2227, %v2213
        %v2229 = vadd.f32 %v2228, %v2214
        %v2230 = vadd.f32 %v2229, %v2215
        %v2231 = vadd.f32 %v2230, %v2216
        %v2232 = vadd.f32 %v2231, %v2217
        %v2233 = vadd.f32 %v2232, %v2218
        %v2234 = vadd.f32 %v2233, %v2219
        %v2235 = vadd.f32 %v2234, %v2220
        %v2236 = vadd.f32 %v2235, %v2221
        %v2237 = vadd.f32 %v2236, %v2222
        %v2238 = vadd.f32 %v2237, %v2223
        %v2239 = vadd.f32 %v2238, %v2224
        %v2240 = vrot.slane %v2239, 4
        %v2241 = vadd.f32 %v2239, %v2240
        %v2242 = vrot.slane %v2241, 2
        %v2243 = vadd.f32 %v2241, %v2242
        %v2244 = vrot.slane %v2243, 1
        %v2245 = vadd.f32 %v2243, %v2244
        %v2246 = vadd.f32 %v2245, 0.0
        %2247 = vmax.xlane.f32.xlu0 %v1842
        %v2248 = vpop.xlane.xlu0 %2247
        %2249 = vmax.xlane.f32.xlu0 %v1846
        %v2250 = vpop.xlane.xlu0 %2249
        %2251 = vmax.xlane.f32.xlu0 %v1850
        %v2252 = vpop.xlane.xlu0 %2251
        %2253 = vmax.xlane.f32.xlu0 %v1854
        %v2254 = vpop.xlane.xlu0 %2253
        %2255 = vmax.xlane.f32.xlu0 %v1858
        %v2256 = vpop.xlane.xlu0 %2255
        %2257 = vmax.xlane.f32.xlu0 %v1862
        %v2258 = vpop.xlane.xlu0 %2257
        %2259 = vmax.xlane.f32.xlu0 %v1866
        %v2260 = vpop.xlane.xlu0 %2259
        %2261 = vmax.xlane.f32.xlu0 %v1870
        %v2262 = vpop.xlane.xlu0 %2261
        %2263 = vmax.xlane.f32.xlu0 %v1874
        %v2264 = vpop.xlane.xlu0 %2263
        %2265 = vmax.xlane.f32.xlu0 %v1878
        %v2266 = vpop.xlane.xlu0 %2265
        %2267 = vmax.xlane.f32.xlu0 %v1882
        %v2268 = vpop.xlane.xlu0 %2267
        %2269 = vmax.xlane.f32.xlu0 %v1886
        %v2270 = vpop.xlane.xlu0 %2269
        %2271 = vmax.xlane.f32.xlu0 %v1890
        %v2272 = vpop.xlane.xlu0 %2271
        %2273 = vmax.xlane.f32.xlu0 %v1894
        %v2274 = vpop.xlane.xlu0 %2273
        %2275 = vmax.xlane.f32.xlu0 %v1898
        %v2276 = vpop.xlane.xlu0 %2275
        %2277 = vmax.xlane.f32.xlu0 %v1902
        %v2278 = vpop.xlane.xlu0 %2277
        %v2279 = vsub.f32 %v1842, %v2248
        %v2280 = vsub.f32 %v1846, %v2250
        %v2281 = vsub.f32 %v1850, %v2252
        %v2282 = vsub.f32 %v1854, %v2254
        %v2283 = vsub.f32 %v1858, %v2256
        %v2284 = vsub.f32 %v1862, %v2258
        %v2285 = vsub.f32 %v1866, %v2260
        %v2286 = vsub.f32 %v1870, %v2262
        %v2287 = vsub.f32 %v1874, %v2264
        %v2288 = vsub.f32 %v1878, %v2266
        %v2289 = vsub.f32 %v1882, %v2268
        %v2290 = vsub.f32 %v1886, %v2270
        %v2291 = vsub.f32 %v1890, %v2272
        %v2292 = vsub.f32 %v1894, %v2274
        %v2293 = vsub.f32 %v1898, %v2276
        %v2294 = vsub.f32 %v1902, %v2278
        %v2295 = vmul.f32 %v2279, 1.442695
        %v2296 = vpow.pop %v2295
        %v2297 = vmul.f32 %v2280, 1.442695
        %v2298 = vpow.pop %v2297
        %v2299 = vmul.f32 %v2281, 1.442695
        %v2300 = vpow.pop %v2299
        %v2301 = vmul.f32 %v2282, 1.442695
        %v2302 = vpow.pop %v2301
        %v2303 = vmul.f32 %v2283, 1.442695
        %v2304 = vpow.pop %v2303
        %v2305 = vmul.f32 %v2284, 1.442695
        %v2306 = vpow.pop %v2305
        %v2307 = vmul.f32 %v2285, 1.442695
        %v2308 = vpow.pop %v2307
        %v2309 = vmul.f32 %v2286, 1.442695
        %v2310 = vpow.pop %v2309
        %v2311 = vmul.f32 %v2287, 1.442695
        %v2312 = vpow.pop %v2311
        %v2313 = vmul.f32 %v2288, 1.442695
        %v2314 = vpow.pop %v2313
        %v2315 = vmul.f32 %v2289, 1.442695
        %v2316 = vpow.pop %v2315
        %v2317 = vmul.f32 %v2290, 1.442695
        %v2318 = vpow.pop %v2317
        %v2319 = vmul.f32 %v2291, 1.442695
        %v2320 = vpow.pop %v2319
        %v2321 = vmul.f32 %v2292, 1.442695
        %v2322 = vpow.pop %v2321
        %v2323 = vmul.f32 %v2293, 1.442695
        %v2324 = vpow.pop %v2323
        %v2325 = vmul.f32 %v2294, 1.442695
        %v2326 = vpow.pop %v2325
        %2327 = vadd.xlane.f32.xlu0 %v2296
        %v2328 = vpop.xlane.xlu0 %2327
        %2329 = vadd.xlane.f32.xlu0 %v2298
        %v2330 = vpop.xlane.xlu0 %2329
        %2331 = vadd.xlane.f32.xlu0 %v2300
        %v2332 = vpop.xlane.xlu0 %2331
        %2333 = vadd.xlane.f32.xlu0 %v2302
        %v2334 = vpop.xlane.xlu0 %2333
        %2335 = vadd.xlane.f32.xlu0 %v2304
        %v2336 = vpop.xlane.xlu0 %2335
        %2337 = vadd.xlane.f32.xlu0 %v2306
        %v2338 = vpop.xlane.xlu0 %2337
        %2339 = vadd.xlane.f32.xlu0 %v2308
        %v2340 = vpop.xlane.xlu0 %2339
        %2341 = vadd.xlane.f32.xlu0 %v2310
        %v2342 = vpop.xlane.xlu0 %2341
        %2343 = vadd.xlane.f32.xlu0 %v2312
        %v2344 = vpop.xlane.xlu0 %2343
        %2345 = vadd.xlane.f32.xlu0 %v2314
        %v2346 = vpop.xlane.xlu0 %2345
        %2347 = vadd.xlane.f32.xlu0 %v2316
        %v2348 = vpop.xlane.xlu0 %2347
        %2349 = vadd.xlane.f32.xlu0 %v2318
        %v2350 = vpop.xlane.xlu0 %2349
        %2351 = vadd.xlane.f32.xlu0 %v2320
        %v2352 = vpop.xlane.xlu0 %2351
        %2353 = vadd.xlane.f32.xlu0 %v2322
        %v2354 = vpop.xlane.xlu0 %2353
        %2355 = vadd.xlane.f32.xlu0 %v2324
        %v2356 = vpop.xlane.xlu0 %2355
        %2357 = vadd.xlane.f32.xlu0 %v2326
        %v2358 = vpop.xlane.xlu0 %2357
        %v2359 = vrcp.pop %v2328
        %v2360 = vrcp.pop %v2330
        %v2361 = vrcp.pop %v2332
        %v2362 = vrcp.pop %v2334
        %v2363 = vrcp.pop %v2336
        %v2364 = vrcp.pop %v2338
        %v2365 = vrcp.pop %v2340
        %v2366 = vrcp.pop %v2342
        %v2367 = vrcp.pop %v2344
        %v2368 = vrcp.pop %v2346
        %v2369 = vrcp.pop %v2348
        %v2370 = vrcp.pop %v2350
        %v2371 = vrcp.pop %v2352
        %v2372 = vrcp.pop %v2354
        %v2373 = vrcp.pop %v2356
        %v2374 = vrcp.pop %v2358
        %v2375 = vmul.f32 %v2296, %v2359
        %v2376 = vmul.f32 %v2298, %v2360
        %v2377 = vmul.f32 %v2300, %v2361
        %v2378 = vmul.f32 %v2302, %v2362
        %v2379 = vmul.f32 %v2304, %v2363
        %v2380 = vmul.f32 %v2306, %v2364
        %v2381 = vmul.f32 %v2308, %v2365
        %v2382 = vmul.f32 %v2310, %v2366
        %v2383 = vmul.f32 %v2312, %v2367
        %v2384 = vmul.f32 %v2314, %v2368
        %v2385 = vmul.f32 %v2316, %v2369
        %v2386 = vmul.f32 %v2318, %v2370
        %v2387 = vmul.f32 %v2320, %v2371
        %v2388 = vmul.f32 %v2322, %v2372
        %v2389 = vmul.f32 %v2324, %v2373
        %v2390 = vmul.f32 %v2326, %v2374
        %v2391 = vlog2.pop %v2328
        %v2392 = vmul.f32 %v2391, 0.6931472
        %v2393 = vlog2.pop %v2330
        %v2394 = vmul.f32 %v2393, 0.6931472
        %v2395 = vlog2.pop %v2332
        %v2396 = vmul.f32 %v2395, 0.6931472
        %v2397 = vlog2.pop %v2334
        %v2398 = vmul.f32 %v2397, 0.6931472
        %v2399 = vlog2.pop %v2336
        %v2400 = vmul.f32 %v2399, 0.6931472
        %v2401 = vlog2.pop %v2338
        %v2402 = vmul.f32 %v2401, 0.6931472
        %v2403 = vlog2.pop %v2340
        %v2404 = vmul.f32 %v2403, 0.6931472
        %v2405 = vlog2.pop %v2342
        %v2406 = vmul.f32 %v2405, 0.6931472
        %v2407 = vlog2.pop %v2344
        %v2408 = vmul.f32 %v2407, 0.6931472
        %v2409 = vlog2.pop %v2346
        %v2410 = vmul.f32 %v2409, 0.6931472
        %v2411 = vlog2.pop %v2348
        %v2412 = vmul.f32 %v2411, 0.6931472
        %v2413 = vlog2.pop %v2350
        %v2414 = vmul.f32 %v2413, 0.6931472
        %v2415 = vlog2.pop %v2352
        %v2416 = vmul.f32 %v2415, 0.6931472
        %v2417 = vlog2.pop %v2354
        %v2418 = vmul.f32 %v2417, 0.6931472
        %v2419 = vlog2.pop %v2356
        %v2420 = vmul.f32 %v2419, 0.6931472
        %v2421 = vlog2.pop %v2358
        %v2422 = vmul.f32 %v2421, 0.6931472
        %v2423 = vsub.f32 %v2279, %v2392
        %v2424 = vsub.f32 %v2280, %v2394
        %v2425 = vsub.f32 %v2281, %v2396
        %v2426 = vsub.f32 %v2282, %v2398
        %v2427 = vsub.f32 %v2283, %v2400
        %v2428 = vsub.f32 %v2284, %v2402
        %v2429 = vsub.f32 %v2285, %v2404
        %v2430 = vsub.f32 %v2286, %v2406
        %v2431 = vsub.f32 %v2287, %v2408
        %v2432 = vsub.f32 %v2288, %v2410
        %v2433 = vsub.f32 %v2289, %v2412
        %v2434 = vsub.f32 %v2290, %v2414
        %v2435 = vsub.f32 %v2291, %v2416
        %v2436 = vsub.f32 %v2292, %v2418
        %v2437 = vsub.f32 %v2293, %v2420
        %v2438 = vsub.f32 %v2294, %v2422
        %v2439 = vsub.f32 0.0, %v2423
        %v2440 = vsub.f32 0.0, %v2424
        %v2441 = vsub.f32 0.0, %v2425
        %v2442 = vsub.f32 0.0, %v2426
        %v2443 = vsub.f32 0.0, %v2427
        %v2444 = vsub.f32 0.0, %v2428
        %v2445 = vsub.f32 0.0, %v2429
        %v2446 = vsub.f32 0.0, %v2430
        %v2447 = vsub.f32 0.0, %v2431
        %v2448 = vsub.f32 0.0, %v2432
        %v2449 = vsub.f32 0.0, %v2433
        %v2450 = vsub.f32 0.0, %v2434
        %v2451 = vsub.f32 0.0, %v2435
        %v2452 = vsub.f32 0.0, %v2436
        %v2453 = vsub.f32 0.0, %v2437
        %v2454 = vsub.f32 0.0, %v2438
        %v2455 = vmul.f32 %v2439, %v659
        %v2456 = vmul.f32 %v2440, %v663
        %v2457 = vmul.f32 %v2441, %v667
        %v2458 = vmul.f32 %v2442, %v671
        %v2459 = vmul.f32 %v2443, %v675
        %v2460 = vmul.f32 %v2444, %v679
        %v2461 = vmul.f32 %v2445, %v683
        %v2462 = vmul.f32 %v2446, %v687
        %v2463 = vmul.f32 %v2447, %v691
        %v2464 = vmul.f32 %v2448, %v695
        %v2465 = vmul.f32 %v2449, %v699
        %v2466 = vmul.f32 %v2450, %v703
        %v2467 = vmul.f32 %v2451, %v707
        %v2468 = vmul.f32 %v2452, %v711
        %v2469 = vmul.f32 %v2453, %v715
        %v2470 = vmul.f32 %v2454, %v719
        %v2471 = vsub.f32 1.0, %v2375
        %v2472 = vsub.f32 1.0, %v2376
        %v2473 = vsub.f32 1.0, %v2377
        %v2474 = vsub.f32 1.0, %v2378
        %v2475 = vsub.f32 1.0, %v2379
        %v2476 = vsub.f32 1.0, %v2380
        %v2477 = vsub.f32 1.0, %v2381
        %v2478 = vsub.f32 1.0, %v2382
        %v2479 = vsub.f32 1.0, %v2383
        %v2480 = vsub.f32 1.0, %v2384
        %v2481 = vsub.f32 1.0, %v2385
        %v2482 = vsub.f32 1.0, %v2386
        %v2483 = vsub.f32 1.0, %v2387
        %v2484 = vsub.f32 1.0, %v2388
        %v2485 = vsub.f32 1.0, %v2389
        %v2486 = vsub.f32 1.0, %v2390
        %v2487 = vmul.f32 %v2455, %v2471
        %v2488 = vmul.f32 %v2456, %v2472
        %v2489 = vmul.f32 %v2457, %v2473
        %v2490 = vmul.f32 %v2458, %v2474
        %v2491 = vmul.f32 %v2459, %v2475
        %v2492 = vmul.f32 %v2460, %v2476
        %v2493 = vmul.f32 %v2461, %v2477
        %v2494 = vmul.f32 %v2462, %v2478
        %v2495 = vmul.f32 %v2463, %v2479
        %v2496 = vmul.f32 %v2464, %v2480
        %v2497 = vmul.f32 %v2465, %v2481
        %v2498 = vmul.f32 %v2466, %v2482
        %v2499 = vmul.f32 %v2467, %v2483
        %v2500 = vmul.f32 %v2468, %v2484
        %v2501 = vmul.f32 %v2469, %v2485
        %v2502 = vmul.f32 %v2470, %v2486
        %v2503 = vadd.f32 %v2487, %v2488
        %v2504 = vadd.f32 %v2503, %v2489
        %v2505 = vadd.f32 %v2504, %v2490
        %v2506 = vadd.f32 %v2505, %v2491
        %v2507 = vadd.f32 %v2506, %v2492
        %v2508 = vadd.f32 %v2507, %v2493
        %v2509 = vadd.f32 %v2508, %v2494
        %v2510 = vadd.f32 %v2509, %v2495
        %v2511 = vadd.f32 %v2510, %v2496
        %v2512 = vadd.f32 %v2511, %v2497
        %v2513 = vadd.f32 %v2512, %v2498
        %v2514 = vadd.f32 %v2513, %v2499
        %v2515 = vadd.f32 %v2514, %v2500
        %v2516 = vadd.f32 %v2515, %v2501
        %v2517 = vadd.f32 %v2516, %v2502
        %v2518 = vrot.slane %v2517, 4
        %v2519 = vadd.f32 %v2517, %v2518
        %v2520 = vrot.slane %v2519, 2
        %v2521 = vadd.f32 %v2519, %v2520
        %v2522 = vrot.slane %v2521, 1
        %v2523 = vadd.f32 %v2521, %v2522
        %v2524 = vadd.f32 %v2246, %v2523
        %2525 = vmax.xlane.f32.xlu0 %v1843
        %v2526 = vpop.xlane.xlu0 %2525
        %2527 = vmax.xlane.f32.xlu0 %v1847
        %v2528 = vpop.xlane.xlu0 %2527
        %2529 = vmax.xlane.f32.xlu0 %v1851
        %v2530 = vpop.xlane.xlu0 %2529
        %2531 = vmax.xlane.f32.xlu0 %v1855
        %v2532 = vpop.xlane.xlu0 %2531
        %2533 = vmax.xlane.f32.xlu0 %v1859
        %v2534 = vpop.xlane.xlu0 %2533
        %2535 = vmax.xlane.f32.xlu0 %v1863
        %v2536 = vpop.xlane.xlu0 %2535
        %2537 = vmax.xlane.f32.xlu0 %v1867
        %v2538 = vpop.xlane.xlu0 %2537
        %2539 = vmax.xlane.f32.xlu0 %v1871
        %v2540 = vpop.xlane.xlu0 %2539
        %2541 = vmax.xlane.f32.xlu0 %v1875
        %v2542 = vpop.xlane.xlu0 %2541
        %2543 = vmax.xlane.f32.xlu0 %v1879
        %v2544 = vpop.xlane.xlu0 %2543
        %2545 = vmax.xlane.f32.xlu0 %v1883
        %v2546 = vpop.xlane.xlu0 %2545
        %2547 = vmax.xlane.f32.xlu0 %v1887
        %v2548 = vpop.xlane.xlu0 %2547
        %2549 = vmax.xlane.f32.xlu0 %v1891
        %v2550 = vpop.xlane.xlu0 %2549
        %2551 = vmax.xlane.f32.xlu0 %v1895
        %v2552 = vpop.xlane.xlu0 %2551
        %2553 = vmax.xlane.f32.xlu0 %v1899
        %v2554 = vpop.xlane.xlu0 %2553
        %2555 = vmax.xlane.f32.xlu0 %v1903
        %v2556 = vpop.xlane.xlu0 %2555
        %v2557 = vsub.f32 %v1843, %v2526
        %v2558 = vsub.f32 %v1847, %v2528
        %v2559 = vsub.f32 %v1851, %v2530
        %v2560 = vsub.f32 %v1855, %v2532
        %v2561 = vsub.f32 %v1859, %v2534
        %v2562 = vsub.f32 %v1863, %v2536
        %v2563 = vsub.f32 %v1867, %v2538
        %v2564 = vsub.f32 %v1871, %v2540
        %v2565 = vsub.f32 %v1875, %v2542
        %v2566 = vsub.f32 %v1879, %v2544
        %v2567 = vsub.f32 %v1883, %v2546
        %v2568 = vsub.f32 %v1887, %v2548
        %v2569 = vsub.f32 %v1891, %v2550
        %v2570 = vsub.f32 %v1895, %v2552
        %v2571 = vsub.f32 %v1899, %v2554
        %v2572 = vsub.f32 %v1903, %v2556
        %v2573 = vmul.f32 %v2557, 1.442695
        %v2574 = vpow.pop %v2573
        %v2575 = vmul.f32 %v2558, 1.442695
        %v2576 = vpow.pop %v2575
        %v2577 = vmul.f32 %v2559, 1.442695
        %v2578 = vpow.pop %v2577
        %v2579 = vmul.f32 %v2560, 1.442695
        %v2580 = vpow.pop %v2579
        %v2581 = vmul.f32 %v2561, 1.442695
        %v2582 = vpow.pop %v2581
        %v2583 = vmul.f32 %v2562, 1.442695
        %v2584 = vpow.pop %v2583
        %v2585 = vmul.f32 %v2563, 1.442695
        %v2586 = vpow.pop %v2585
        %v2587 = vmul.f32 %v2564, 1.442695
        %v2588 = vpow.pop %v2587
        %v2589 = vmul.f32 %v2565, 1.442695
        %v2590 = vpow.pop %v2589
        %v2591 = vmul.f32 %v2566, 1.442695
        %v2592 = vpow.pop %v2591
        %v2593 = vmul.f32 %v2567, 1.442695
        %v2594 = vpow.pop %v2593
        %v2595 = vmul.f32 %v2568, 1.442695
        %v2596 = vpow.pop %v2595
        %v2597 = vmul.f32 %v2569, 1.442695
        %v2598 = vpow.pop %v2597
        %v2599 = vmul.f32 %v2570, 1.442695
        %v2600 = vpow.pop %v2599
        %v2601 = vmul.f32 %v2571, 1.442695
        %v2602 = vpow.pop %v2601
        %v2603 = vmul.f32 %v2572, 1.442695
        %v2604 = vpow.pop %v2603
        %2605 = vadd.xlane.f32.xlu0 %v2574
        %v2606 = vpop.xlane.xlu0 %2605
        %2607 = vadd.xlane.f32.xlu0 %v2576
        %v2608 = vpop.xlane.xlu0 %2607
        %2609 = vadd.xlane.f32.xlu0 %v2578
        %v2610 = vpop.xlane.xlu0 %2609
        %2611 = vadd.xlane.f32.xlu0 %v2580
        %v2612 = vpop.xlane.xlu0 %2611
        %2613 = vadd.xlane.f32.xlu0 %v2582
        %v2614 = vpop.xlane.xlu0 %2613
        %2615 = vadd.xlane.f32.xlu0 %v2584
        %v2616 = vpop.xlane.xlu0 %2615
        %2617 = vadd.xlane.f32.xlu0 %v2586
        %v2618 = vpop.xlane.xlu0 %2617
        %2619 = vadd.xlane.f32.xlu0 %v2588
        %v2620 = vpop.xlane.xlu0 %2619
        %2621 = vadd.xlane.f32.xlu0 %v2590
        %v2622 = vpop.xlane.xlu0 %2621
        %2623 = vadd.xlane.f32.xlu0 %v2592
        %v2624 = vpop.xlane.xlu0 %2623
        %2625 = vadd.xlane.f32.xlu0 %v2594
        %v2626 = vpop.xlane.xlu0 %2625
        %2627 = vadd.xlane.f32.xlu0 %v2596
        %v2628 = vpop.xlane.xlu0 %2627
        %2629 = vadd.xlane.f32.xlu0 %v2598
        %v2630 = vpop.xlane.xlu0 %2629
        %2631 = vadd.xlane.f32.xlu0 %v2600
        %v2632 = vpop.xlane.xlu0 %2631
        %2633 = vadd.xlane.f32.xlu0 %v2602
        %v2634 = vpop.xlane.xlu0 %2633
        %2635 = vadd.xlane.f32.xlu0 %v2604
        %v2636 = vpop.xlane.xlu0 %2635
        %v2637 = vrcp.pop %v2606
        %v2638 = vrcp.pop %v2608
        %v2639 = vrcp.pop %v2610
        %v2640 = vrcp.pop %v2612
        %v2641 = vrcp.pop %v2614
        %v2642 = vrcp.pop %v2616
        %v2643 = vrcp.pop %v2618
        %v2644 = vrcp.pop %v2620
        %v2645 = vrcp.pop %v2622
        %v2646 = vrcp.pop %v2624
        %v2647 = vrcp.pop %v2626
        %v2648 = vrcp.pop %v2628
        %v2649 = vrcp.pop %v2630
        %v2650 = vrcp.pop %v2632
        %v2651 = vrcp.pop %v2634
        %v2652 = vrcp.pop %v2636
        %v2653 = vmul.f32 %v2574, %v2637
        %v2654 = vmul.f32 %v2576, %v2638
        %v2655 = vmul.f32 %v2578, %v2639
        %v2656 = vmul.f32 %v2580, %v2640
        %v2657 = vmul.f32 %v2582, %v2641
        %v2658 = vmul.f32 %v2584, %v2642
        %v2659 = vmul.f32 %v2586, %v2643
        %v2660 = vmul.f32 %v2588, %v2644
        %v2661 = vmul.f32 %v2590, %v2645
        %v2662 = vmul.f32 %v2592, %v2646
        %v2663 = vmul.f32 %v2594, %v2647
        %v2664 = vmul.f32 %v2596, %v2648
        %v2665 = vmul.f32 %v2598, %v2649
        %v2666 = vmul.f32 %v2600, %v2650
        %v2667 = vmul.f32 %v2602, %v2651
        %v2668 = vmul.f32 %v2604, %v2652
        %v2669 = vlog2.pop %v2606
        %v2670 = vmul.f32 %v2669, 0.6931472
        %v2671 = vlog2.pop %v2608
        %v2672 = vmul.f32 %v2671, 0.6931472
        %v2673 = vlog2.pop %v2610
        %v2674 = vmul.f32 %v2673, 0.6931472
        %v2675 = vlog2.pop %v2612
        %v2676 = vmul.f32 %v2675, 0.6931472
        %v2677 = vlog2.pop %v2614
        %v2678 = vmul.f32 %v2677, 0.6931472
        %v2679 = vlog2.pop %v2616
        %v2680 = vmul.f32 %v2679, 0.6931472
        %v2681 = vlog2.pop %v2618
        %v2682 = vmul.f32 %v2681, 0.6931472
        %v2683 = vlog2.pop %v2620
        %v2684 = vmul.f32 %v2683, 0.6931472
        %v2685 = vlog2.pop %v2622
        %v2686 = vmul.f32 %v2685, 0.6931472
        %v2687 = vlog2.pop %v2624
        %v2688 = vmul.f32 %v2687, 0.6931472
        %v2689 = vlog2.pop %v2626
        %v2690 = vmul.f32 %v2689, 0.6931472
        %v2691 = vlog2.pop %v2628
        %v2692 = vmul.f32 %v2691, 0.6931472
        %v2693 = vlog2.pop %v2630
        %v2694 = vmul.f32 %v2693, 0.6931472
        %v2695 = vlog2.pop %v2632
        %v2696 = vmul.f32 %v2695, 0.6931472
        %v2697 = vlog2.pop %v2634
        %v2698 = vmul.f32 %v2697, 0.6931472
        %v2699 = vlog2.pop %v2636
        %v2700 = vmul.f32 %v2699, 0.6931472
        %v2701 = vsub.f32 %v2557, %v2670
        %v2702 = vsub.f32 %v2558, %v2672
        %v2703 = vsub.f32 %v2559, %v2674
        %v2704 = vsub.f32 %v2560, %v2676
        %v2705 = vsub.f32 %v2561, %v2678
        %v2706 = vsub.f32 %v2562, %v2680
        %v2707 = vsub.f32 %v2563, %v2682
        %v2708 = vsub.f32 %v2564, %v2684
        %v2709 = vsub.f32 %v2565, %v2686
        %v2710 = vsub.f32 %v2566, %v2688
        %v2711 = vsub.f32 %v2567, %v2690
        %v2712 = vsub.f32 %v2568, %v2692
        %v2713 = vsub.f32 %v2569, %v2694
        %v2714 = vsub.f32 %v2570, %v2696
        %v2715 = vsub.f32 %v2571, %v2698
        %v2716 = vsub.f32 %v2572, %v2700
        %v2717 = vsub.f32 0.0, %v2701
        %v2718 = vsub.f32 0.0, %v2702
        %v2719 = vsub.f32 0.0, %v2703
        %v2720 = vsub.f32 0.0, %v2704
        %v2721 = vsub.f32 0.0, %v2705
        %v2722 = vsub.f32 0.0, %v2706
        %v2723 = vsub.f32 0.0, %v2707
        %v2724 = vsub.f32 0.0, %v2708
        %v2725 = vsub.f32 0.0, %v2709
        %v2726 = vsub.f32 0.0, %v2710
        %v2727 = vsub.f32 0.0, %v2711
        %v2728 = vsub.f32 0.0, %v2712
        %v2729 = vsub.f32 0.0, %v2713
        %v2730 = vsub.f32 0.0, %v2714
        %v2731 = vsub.f32 0.0, %v2715
        %v2732 = vsub.f32 0.0, %v2716
        %v2733 = vmul.f32 %v2717, %v660
        %v2734 = vmul.f32 %v2718, %v664
        %v2735 = vmul.f32 %v2719, %v668
        %v2736 = vmul.f32 %v2720, %v672
        %v2737 = vmul.f32 %v2721, %v676
        %v2738 = vmul.f32 %v2722, %v680
        %v2739 = vmul.f32 %v2723, %v684
        %v2740 = vmul.f32 %v2724, %v688
        %v2741 = vmul.f32 %v2725, %v692
        %v2742 = vmul.f32 %v2726, %v696
        %v2743 = vmul.f32 %v2727, %v700
        %v2744 = vmul.f32 %v2728, %v704
        %v2745 = vmul.f32 %v2729, %v708
        %v2746 = vmul.f32 %v2730, %v712
        %v2747 = vmul.f32 %v2731, %v716
        %v2748 = vmul.f32 %v2732, %v720
        %v2749 = vsub.f32 1.0, %v2653
        %v2750 = vsub.f32 1.0, %v2654
        %v2751 = vsub.f32 1.0, %v2655
        %v2752 = vsub.f32 1.0, %v2656
        %v2753 = vsub.f32 1.0, %v2657
        %v2754 = vsub.f32 1.0, %v2658
        %v2755 = vsub.f32 1.0, %v2659
        %v2756 = vsub.f32 1.0, %v2660
        %v2757 = vsub.f32 1.0, %v2661
        %v2758 = vsub.f32 1.0, %v2662
        %v2759 = vsub.f32 1.0, %v2663
        %v2760 = vsub.f32 1.0, %v2664
        %v2761 = vsub.f32 1.0, %v2665
        %v2762 = vsub.f32 1.0, %v2666
        %v2763 = vsub.f32 1.0, %v2667
        %v2764 = vsub.f32 1.0, %v2668
        %v2765 = vmul.f32 %v2733, %v2749
        %v2766 = vmul.f32 %v2734, %v2750
        %v2767 = vmul.f32 %v2735, %v2751
        %v2768 = vmul.f32 %v2736, %v2752
        %v2769 = vmul.f32 %v2737, %v2753
        %v2770 = vmul.f32 %v2738, %v2754
        %v2771 = vmul.f32 %v2739, %v2755
        %v2772 = vmul.f32 %v2740, %v2756
        %v2773 = vmul.f32 %v2741, %v2757
        %v2774 = vmul.f32 %v2742, %v2758
        %v2775 = vmul.f32 %v2743, %v2759
        %v2776 = vmul.f32 %v2744, %v2760
        %v2777 = vmul.f32 %v2745, %v2761
        %v2778 = vmul.f32 %v2746, %v2762
        %v2779 = vmul.f32 %v2747, %v2763
        %v2780 = vmul.f32 %v2748, %v2764
        %v2781 = vadd.f32 %v2765, %v2766
        %v2782 = vadd.f32 %v2781, %v2767
        %v2783 = vadd.f32 %v2782, %v2768
        %v2784 = vadd.f32 %v2783, %v2769
        %v2785 = vadd.f32 %v2784, %v2770
        %v2786 = vadd.f32 %v2785, %v2771
        %v2787 = vadd.f32 %v2786, %v2772
        %v2788 = vadd.f32 %v2787, %v2773
        %v2789 = vadd.f32 %v2788, %v2774
        %v2790 = vadd.f32 %v2789, %v2775
        %v2791 = vadd.f32 %v2790, %v2776
        %v2792 = vadd.f32 %v2791, %v2777
        %v2793 = vadd.f32 %v2792, %v2778
        %v2794 = vadd.f32 %v2793, %v2779
        %v2795 = vadd.f32 %v2794, %v2780
        %v2796 = vrot.slane %v2795, 4
        %v2797 = vadd.f32 %v2795, %v2796
        %v2798 = vrot.slane %v2797, 2
        %v2799 = vadd.f32 %v2797, %v2798
        %v2800 = vrot.slane %v2799, 1
        %v2801 = vadd.f32 %v2799, %v2800
        %v2802 = vadd.f32 %v2524, %v2801
        %2803 = vmax.xlane.f32.xlu0 %v1844
        %v2804 = vpop.xlane.xlu0 %2803
        %2805 = vmax.xlane.f32.xlu0 %v1848
        %v2806 = vpop.xlane.xlu0 %2805
        %2807 = vmax.xlane.f32.xlu0 %v1852
        %v2808 = vpop.xlane.xlu0 %2807
        %2809 = vmax.xlane.f32.xlu0 %v1856
        %v2810 = vpop.xlane.xlu0 %2809
        %2811 = vmax.xlane.f32.xlu0 %v1860
        %v2812 = vpop.xlane.xlu0 %2811
        %2813 = vmax.xlane.f32.xlu0 %v1864
        %v2814 = vpop.xlane.xlu0 %2813
        %2815 = vmax.xlane.f32.xlu0 %v1868
        %v2816 = vpop.xlane.xlu0 %2815
        %2817 = vmax.xlane.f32.xlu0 %v1872
        %v2818 = vpop.xlane.xlu0 %2817
        %2819 = vmax.xlane.f32.xlu0 %v1876
        %v2820 = vpop.xlane.xlu0 %2819
        %2821 = vmax.xlane.f32.xlu0 %v1880
        %v2822 = vpop.xlane.xlu0 %2821
        %2823 = vmax.xlane.f32.xlu0 %v1884
        %v2824 = vpop.xlane.xlu0 %2823
        %2825 = vmax.xlane.f32.xlu0 %v1888
        %v2826 = vpop.xlane.xlu0 %2825
        %2827 = vmax.xlane.f32.xlu0 %v1892
        %v2828 = vpop.xlane.xlu0 %2827
        %2829 = vmax.xlane.f32.xlu0 %v1896
        %v2830 = vpop.xlane.xlu0 %2829
        %2831 = vmax.xlane.f32.xlu0 %v1900
        %v2832 = vpop.xlane.xlu0 %2831
        %2833 = vmax.xlane.f32.xlu0 %v1904
        %v2834 = vpop.xlane.xlu0 %2833
        %v2835 = vsub.f32 %v1844, %v2804
        %v2836 = vsub.f32 %v1848, %v2806
        %v2837 = vsub.f32 %v1852, %v2808
        %v2838 = vsub.f32 %v1856, %v2810
        %v2839 = vsub.f32 %v1860, %v2812
        %v2840 = vsub.f32 %v1864, %v2814
        %v2841 = vsub.f32 %v1868, %v2816
        %v2842 = vsub.f32 %v1872, %v2818
        %v2843 = vsub.f32 %v1876, %v2820
        %v2844 = vsub.f32 %v1880, %v2822
        %v2845 = vsub.f32 %v1884, %v2824
        %v2846 = vsub.f32 %v1888, %v2826
        %v2847 = vsub.f32 %v1892, %v2828
        %v2848 = vsub.f32 %v1896, %v2830
        %v2849 = vsub.f32 %v1900, %v2832
        %v2850 = vsub.f32 %v1904, %v2834
        %v2851 = vmul.f32 %v2835, 1.442695
        %v2852 = vpow.pop %v2851
        %v2853 = vmul.f32 %v2836, 1.442695
        %v2854 = vpow.pop %v2853
        %v2855 = vmul.f32 %v2837, 1.442695
        %v2856 = vpow.pop %v2855
        %v2857 = vmul.f32 %v2838, 1.442695
        %v2858 = vpow.pop %v2857
        %v2859 = vmul.f32 %v2839, 1.442695
        %v2860 = vpow.pop %v2859
        %v2861 = vmul.f32 %v2840, 1.442695
        %v2862 = vpow.pop %v2861
        %v2863 = vmul.f32 %v2841, 1.442695
        %v2864 = vpow.pop %v2863
        %v2865 = vmul.f32 %v2842, 1.442695
        %v2866 = vpow.pop %v2865
        %v2867 = vmul.f32 %v2843, 1.442695
        %v2868 = vpow.pop %v2867
        %v2869 = vmul.f32 %v2844, 1.442695
        %v2870 = vpow.pop %v2869
        %v2871 = vmul.f32 %v2845, 1.442695
        %v2872 = vpow.pop %v2871
        %v2873 = vmul.f32 %v2846, 1.442695
        %v2874 = vpow.pop %v2873
        %v2875 = vmul.f32 %v2847, 1.442695
        %v2876 = vpow.pop %v2875
        %v2877 = vmul.f32 %v2848, 1.442695
        %v2878 = vpow.pop %v2877
        %v2879 = vmul.f32 %v2849, 1.442695
        %v2880 = vpow.pop %v2879
        %v2881 = vmul.f32 %v2850, 1.442695
        %v2882 = vpow.pop %v2881
        %2883 = vadd.xlane.f32.xlu0 %v2852
        %v2884 = vpop.xlane.xlu0 %2883
        %2885 = vadd.xlane.f32.xlu0 %v2854
        %v2886 = vpop.xlane.xlu0 %2885
        %2887 = vadd.xlane.f32.xlu0 %v2856
        %v2888 = vpop.xlane.xlu0 %2887
        %2889 = vadd.xlane.f32.xlu0 %v2858
        %v2890 = vpop.xlane.xlu0 %2889
        %2891 = vadd.xlane.f32.xlu0 %v2860
        %v2892 = vpop.xlane.xlu0 %2891
        %2893 = vadd.xlane.f32.xlu0 %v2862
        %v2894 = vpop.xlane.xlu0 %2893
        %2895 = vadd.xlane.f32.xlu0 %v2864
        %v2896 = vpop.xlane.xlu0 %2895
        %2897 = vadd.xlane.f32.xlu0 %v2866
        %v2898 = vpop.xlane.xlu0 %2897
        %2899 = vadd.xlane.f32.xlu0 %v2868
        %v2900 = vpop.xlane.xlu0 %2899
        %2901 = vadd.xlane.f32.xlu0 %v2870
        %v2902 = vpop.xlane.xlu0 %2901
        %2903 = vadd.xlane.f32.xlu0 %v2872
        %v2904 = vpop.xlane.xlu0 %2903
        %2905 = vadd.xlane.f32.xlu0 %v2874
        %v2906 = vpop.xlane.xlu0 %2905
        %2907 = vadd.xlane.f32.xlu0 %v2876
        %v2908 = vpop.xlane.xlu0 %2907
        %2909 = vadd.xlane.f32.xlu0 %v2878
        %v2910 = vpop.xlane.xlu0 %2909
        %2911 = vadd.xlane.f32.xlu0 %v2880
        %v2912 = vpop.xlane.xlu0 %2911
        %2913 = vadd.xlane.f32.xlu0 %v2882
        %v2914 = vpop.xlane.xlu0 %2913
        %v2915 = vrcp.pop %v2884
        %v2916 = vrcp.pop %v2886
        %v2917 = vrcp.pop %v2888
        %v2918 = vrcp.pop %v2890
        %v2919 = vrcp.pop %v2892
        %v2920 = vrcp.pop %v2894
        %v2921 = vrcp.pop %v2896
        %v2922 = vrcp.pop %v2898
        %v2923 = vrcp.pop %v2900
        %v2924 = vrcp.pop %v2902
        %v2925 = vrcp.pop %v2904
        %v2926 = vrcp.pop %v2906
        %v2927 = vrcp.pop %v2908
        %v2928 = vrcp.pop %v2910
        %v2929 = vrcp.pop %v2912
        %v2930 = vrcp.pop %v2914
        %v2931 = vmul.f32 %v2852, %v2915
        %v2932 = vmul.f32 %v2854, %v2916
        %v2933 = vmul.f32 %v2856, %v2917
        %v2934 = vmul.f32 %v2858, %v2918
        %v2935 = vmul.f32 %v2860, %v2919
        %v2936 = vmul.f32 %v2862, %v2920
        %v2937 = vmul.f32 %v2864, %v2921
        %v2938 = vmul.f32 %v2866, %v2922
        %v2939 = vmul.f32 %v2868, %v2923
        %v2940 = vmul.f32 %v2870, %v2924
        %v2941 = vmul.f32 %v2872, %v2925
        %v2942 = vmul.f32 %v2874, %v2926
        %v2943 = vmul.f32 %v2876, %v2927
        %v2944 = vmul.f32 %v2878, %v2928
        %v2945 = vmul.f32 %v2880, %v2929
        %v2946 = vmul.f32 %v2882, %v2930
        %v2947 = vlog2.pop %v2884
        %v2948 = vmul.f32 %v2947, 0.6931472
        %v2949 = vlog2.pop %v2886
        %v2950 = vmul.f32 %v2949, 0.6931472
        %v2951 = vlog2.pop %v2888
        %v2952 = vmul.f32 %v2951, 0.6931472
        %v2953 = vlog2.pop %v2890
        %v2954 = vmul.f32 %v2953, 0.6931472
        %v2955 = vlog2.pop %v2892
        %v2956 = vmul.f32 %v2955, 0.6931472
        %v2957 = vlog2.pop %v2894
        %v2958 = vmul.f32 %v2957, 0.6931472
        %v2959 = vlog2.pop %v2896
        %v2960 = vmul.f32 %v2959, 0.6931472
        %v2961 = vlog2.pop %v2898
        %v2962 = vmul.f32 %v2961, 0.6931472
        %v2963 = vlog2.pop %v2900
        %v2964 = vmul.f32 %v2963, 0.6931472
        %v2965 = vlog2.pop %v2902
        %v2966 = vmul.f32 %v2965, 0.6931472
        %v2967 = vlog2.pop %v2904
        %v2968 = vmul.f32 %v2967, 0.6931472
        %v2969 = vlog2.pop %v2906
        %v2970 = vmul.f32 %v2969, 0.6931472
        %v2971 = vlog2.pop %v2908
        %v2972 = vmul.f32 %v2971, 0.6931472
        %v2973 = vlog2.pop %v2910
        %v2974 = vmul.f32 %v2973, 0.6931472
        %v2975 = vlog2.pop %v2912
        %v2976 = vmul.f32 %v2975, 0.6931472
        %v2977 = vlog2.pop %v2914
        %v2978 = vmul.f32 %v2977, 0.6931472
        %v2979 = vsub.f32 %v2835, %v2948
        %v2980 = vsub.f32 %v2836, %v2950
        %v2981 = vsub.f32 %v2837, %v2952
        %v2982 = vsub.f32 %v2838, %v2954
        %v2983 = vsub.f32 %v2839, %v2956
        %v2984 = vsub.f32 %v2840, %v2958
        %v2985 = vsub.f32 %v2841, %v2960
        %v2986 = vsub.f32 %v2842, %v2962
        %v2987 = vsub.f32 %v2843, %v2964
        %v2988 = vsub.f32 %v2844, %v2966
        %v2989 = vsub.f32 %v2845, %v2968
        %v2990 = vsub.f32 %v2846, %v2970
        %v2991 = vsub.f32 %v2847, %v2972
        %v2992 = vsub.f32 %v2848, %v2974
        %v2993 = vsub.f32 %v2849, %v2976
        %v2994 = vsub.f32 %v2850, %v2978
        %v2995 = vsub.f32 0.0, %v2979
        %v2996 = vsub.f32 0.0, %v2980
        %v2997 = vsub.f32 0.0, %v2981
        %v2998 = vsub.f32 0.0, %v2982
        %v2999 = vsub.f32 0.0, %v2983
        %v3000 = vsub.f32 0.0, %v2984
        %v3001 = vsub.f32 0.0, %v2985
        %v3002 = vsub.f32 0.0, %v2986
        %v3003 = vsub.f32 0.0, %v2987
        %v3004 = vsub.f32 0.0, %v2988
        %v3005 = vsub.f32 0.0, %v2989
        %v3006 = vsub.f32 0.0, %v2990
        %v3007 = vsub.f32 0.0, %v2991
        %v3008 = vsub.f32 0.0, %v2992
        %v3009 = vsub.f32 0.0, %v2993
        %v3010 = vsub.f32 0.0, %v2994
        %v3011 = vmul.f32 %v2995, %v661
        %v3012 = vmul.f32 %v2996, %v665
        %v3013 = vmul.f32 %v2997, %v669
        %v3014 = vmul.f32 %v2998, %v673
        %v3015 = vmul.f32 %v2999, %v677
        %v3016 = vmul.f32 %v3000, %v681
        %v3017 = vmul.f32 %v3001, %v685
        %v3018 = vmul.f32 %v3002, %v689
        %v3019 = vmul.f32 %v3003, %v693
        %v3020 = vmul.f32 %v3004, %v697
        %v3021 = vmul.f32 %v3005, %v701
        %v3022 = vmul.f32 %v3006, %v705
        %v3023 = vmul.f32 %v3007, %v709
        %v3024 = vmul.f32 %v3008, %v713
        %v3025 = vmul.f32 %v3009, %v717
        %v3026 = vmul.f32 %v3010, %v721
        %v3027 = vsub.f32 1.0, %v2931
        %v3028 = vsub.f32 1.0, %v2932
        %v3029 = vsub.f32 1.0, %v2933
        %v3030 = vsub.f32 1.0, %v2934
        %v3031 = vsub.f32 1.0, %v2935
        %v3032 = vsub.f32 1.0, %v2936
        %v3033 = vsub.f32 1.0, %v2937
        %v3034 = vsub.f32 1.0, %v2938
        %v3035 = vsub.f32 1.0, %v2939
        %v3036 = vsub.f32 1.0, %v2940
        %v3037 = vsub.f32 1.0, %v2941
        %v3038 = vsub.f32 1.0, %v2942
        %v3039 = vsub.f32 1.0, %v2943
        %v3040 = vsub.f32 1.0, %v2944
        %v3041 = vsub.f32 1.0, %v2945
        %v3042 = vsub.f32 1.0, %v2946
        %v3043 = vmul.f32 %v3011, %v3027
        %v3044 = vmul.f32 %v3012, %v3028
        %v3045 = vmul.f32 %v3013, %v3029
        %v3046 = vmul.f32 %v3014, %v3030
        %v3047 = vmul.f32 %v3015, %v3031
        %v3048 = vmul.f32 %v3016, %v3032
        %v3049 = vmul.f32 %v3017, %v3033
        %v3050 = vmul.f32 %v3018, %v3034
        %v3051 = vmul.f32 %v3019, %v3035
        %v3052 = vmul.f32 %v3020, %v3036
        %v3053 = vmul.f32 %v3021, %v3037
        %v3054 = vmul.f32 %v3022, %v3038
        %v3055 = vmul.f32 %v3023, %v3039
        %v3056 = vmul.f32 %v3024, %v3040
        %v3057 = vmul.f32 %v3025, %v3041
        %v3058 = vmul.f32 %v3026, %v3042
        %v3059 = vadd.f32 %v3043, %v3044
        %v3060 = vadd.f32 %v3059, %v3045
        %v3061 = vadd.f32 %v3060, %v3046
        %v3062 = vadd.f32 %v3061, %v3047
        %v3063 = vadd.f32 %v3062, %v3048
        %v3064 = vadd.f32 %v3063, %v3049
        %v3065 = vadd.f32 %v3064, %v3050
        %v3066 = vadd.f32 %v3065, %v3051
        %v3067 = vadd.f32 %v3066, %v3052
        %v3068 = vadd.f32 %v3067, %v3053
        %v3069 = vadd.f32 %v3068, %v3054
        %v3070 = vadd.f32 %v3069, %v3055
        %v3071 = vadd.f32 %v3070, %v3056
        %v3072 = vadd.f32 %v3071, %v3057
        %v3073 = vadd.f32 %v3072, %v3058
        %v3074 = vrot.slane %v3073, 4
        %v3075 = vadd.f32 %v3073, %v3074
        %v3076 = vrot.slane %v3075, 2
        %v3077 = vadd.f32 %v3075, %v3076
        %v3078 = vrot.slane %v3077, 1
        %v3079 = vadd.f32 %v3077, %v3078
        %v3080 = vadd.f32 %v2802, %v3079
        %v3081 = vlaneseq
        %v3082 = vshrl.u32 %v3081, 7
        %v3083 = vsub.s32 0, %v3082
        %v3084 = vlaneseq
        %v3085 = vshrl.u32 %v3084, 7
        %v3086 = vsub.s32 0, %v3085
        %v3087 = vlaneseq
        %v3088 = vshrl.u32 %v3087, 7
        %v3089 = vsub.s32 0, %v3088
        %v3090 = vlaneseq
        %v3091 = vshrl.u32 %v3090, 7
        %v3092 = vsub.s32 0, %v3091
        %v3093 = vmul.f32 %v1622, %v1841
        %v3094 = vmul.f32 %v1624, %v1842
        %v3095 = vmul.f32 %v1626, %v1843
        %v3096 = vmul.f32 %v1628, %v1844
        %v3097 = vmul.f32 %v1622, %v1845
        %v3098 = vmul.f32 %v1624, %v1846
        %v3099 = vmul.f32 %v1626, %v1847
        %v3100 = vmul.f32 %v1628, %v1848
        %v3101 = vmul.f32 %v1622, %v1849
        %v3102 = vmul.f32 %v1624, %v1850
        %v3103 = vmul.f32 %v1626, %v1851
        %v3104 = vmul.f32 %v1628, %v1852
        %v3105 = vmul.f32 %v1622, %v1853
        %v3106 = vmul.f32 %v1624, %v1854
        %v3107 = vmul.f32 %v1626, %v1855
        %v3108 = vmul.f32 %v1628, %v1856
        %v3109 = vmul.f32 %v1622, %v1857
        %v3110 = vmul.f32 %v1624, %v1858
        %v3111 = vmul.f32 %v1626, %v1859
        %v3112 = vmul.f32 %v1628, %v1860
        %v3113 = vmul.f32 %v1622, %v1861
        %v3114 = vmul.f32 %v1624, %v1862
        %v3115 = vmul.f32 %v1626, %v1863
        %v3116 = vmul.f32 %v1628, %v1864
        %v3117 = vmul.f32 %v1622, %v1865
        %v3118 = vmul.f32 %v1624, %v1866
        %v3119 = vmul.f32 %v1626, %v1867
        %v3120 = vmul.f32 %v1628, %v1868
        %v3121 = vmul.f32 %v1622, %v1869
        %v3122 = vmul.f32 %v1624, %v1870
        %v3123 = vmul.f32 %v1626, %v1871
        %v3124 = vmul.f32 %v1628, %v1872
        %v3125 = vmul.f32 %v1622, %v1873
        %v3126 = vmul.f32 %v1624, %v1874
        %v3127 = vmul.f32 %v1626, %v1875
        %v3128 = vmul.f32 %v1628, %v1876
        %v3129 = vmul.f32 %v1622, %v1877
        %v3130 = vmul.f32 %v1624, %v1878
        %v3131 = vmul.f32 %v1626, %v1879
        %v3132 = vmul.f32 %v1628, %v1880
        %v3133 = vmul.f32 %v1622, %v1881
        %v3134 = vmul.f32 %v1624, %v1882
        %v3135 = vmul.f32 %v1626, %v1883
        %v3136 = vmul.f32 %v1628, %v1884
        %v3137 = vmul.f32 %v1622, %v1885
        %v3138 = vmul.f32 %v1624, %v1886
        %v3139 = vmul.f32 %v1626, %v1887
        %v3140 = vmul.f32 %v1628, %v1888
        %v3141 = vmul.f32 %v1622, %v1889
        %v3142 = vmul.f32 %v1624, %v1890
        %v3143 = vmul.f32 %v1626, %v1891
        %v3144 = vmul.f32 %v1628, %v1892
        %v3145 = vmul.f32 %v1622, %v1893
        %v3146 = vmul.f32 %v1624, %v1894
        %v3147 = vmul.f32 %v1626, %v1895
        %v3148 = vmul.f32 %v1628, %v1896
        %v3149 = vmul.f32 %v1622, %v1897
        %v3150 = vmul.f32 %v1624, %v1898
        %v3151 = vmul.f32 %v1626, %v1899
        %v3152 = vmul.f32 %v1628, %v1900
        %v3153 = vmul.f32 %v1622, %v1901
        %v3154 = vmul.f32 %v1624, %v1902
        %v3155 = vmul.f32 %v1626, %v1903
        %v3156 = vmul.f32 %v1628, %v1904
        %v3157 = vadd.f32 %v1430, %v3093
        %v3158 = vadd.f32 %v1432, %v3094
        %v3159 = vadd.f32 %v1543, %v3095
        %v3160 = vadd.f32 %v1545, %v3096
        %v3161 = vadd.f32 %v1434, %v3097
        %v3162 = vadd.f32 %v1436, %v3098
        %v3163 = vadd.f32 %v1547, %v3099
        %v3164 = vadd.f32 %v1549, %v3100
        %v3165 = vadd.f32 %v1440, %v3101
        %v3166 = vadd.f32 %v1442, %v3102
        %v3167 = vadd.f32 %v1553, %v3103
        %v3168 = vadd.f32 %v1555, %v3104
        %v3169 = vadd.f32 %v1444, %v3105
        %v3170 = vadd.f32 %v1446, %v3106
        %v3171 = vadd.f32 %v1557, %v3107
        %v3172 = vadd.f32 %v1559, %v3108
        %v3173 = vadd.f32 %v1450, %v3109
        %v3174 = vadd.f32 %v1452, %v3110
        %v3175 = vadd.f32 %v1563, %v3111
        %v3176 = vadd.f32 %v1565, %v3112
        %v3177 = vadd.f32 %v1454, %v3113
        %v3178 = vadd.f32 %v1456, %v3114
        %v3179 = vadd.f32 %v1567, %v3115
        %v3180 = vadd.f32 %v1569, %v3116
        %v3181 = vadd.f32 %v1460, %v3117
        %v3182 = vadd.f32 %v1462, %v3118
        %v3183 = vadd.f32 %v1573, %v3119
        %v3184 = vadd.f32 %v1575, %v3120
        %v3185 = vadd.f32 %v1464, %v3121
        %v3186 = vadd.f32 %v1466, %v3122
        %v3187 = vadd.f32 %v1577, %v3123
        %v3188 = vadd.f32 %v1579, %v3124
        %v3189 = vadd.f32 %v1470, %v3125
        %v3190 = vadd.f32 %v1472, %v3126
        %v3191 = vadd.f32 %v1583, %v3127
        %v3192 = vadd.f32 %v1585, %v3128
        %v3193 = vadd.f32 %v1474, %v3129
        %v3194 = vadd.f32 %v1476, %v3130
        %v3195 = vadd.f32 %v1587, %v3131
        %v3196 = vadd.f32 %v1589, %v3132
        %v3197 = vadd.f32 %v1480, %v3133
        %v3198 = vadd.f32 %v1482, %v3134
        %v3199 = vadd.f32 %v1593, %v3135
        %v3200 = vadd.f32 %v1595, %v3136
        %v3201 = vadd.f32 %v1484, %v3137
        %v3202 = vadd.f32 %v1486, %v3138
        %v3203 = vadd.f32 %v1597, %v3139
        %v3204 = vadd.f32 %v1599, %v3140
        %v3205 = vadd.f32 %v1490, %v3141
        %v3206 = vadd.f32 %v1492, %v3142
        %v3207 = vadd.f32 %v1603, %v3143
        %v3208 = vadd.f32 %v1605, %v3144
        %v3209 = vadd.f32 %v1494, %v3145
        %v3210 = vadd.f32 %v1496, %v3146
        %v3211 = vadd.f32 %v1607, %v3147
        %v3212 = vadd.f32 %v1609, %v3148
        %v3213 = vadd.f32 %v1500, %v3149
        %v3214 = vadd.f32 %v1502, %v3150
        %v3215 = vadd.f32 %v1613, %v3151
        %v3216 = vadd.f32 %v1615, %v3152
        %v3217 = vadd.f32 %v1504, %v3153
        %v3218 = vadd.f32 %v1506, %v3154
        %v3219 = vadd.f32 %v1617, %v3155
        %v3220 = vadd.f32 %v1619, %v3156
        %v3221 = vadd.f32 %v3157, %v1693
        %v3222 = vadd.f32 %v3158, %v1694
        %v3223 = vadd.f32 %v3159, %v1695
        %v3224 = vadd.f32 %v3160, %v1696
        %v3225 = vadd.f32 %v3161, %v1697
        %v3226 = vadd.f32 %v3162, %v1698
        %v3227 = vadd.f32 %v3163, %v1699
        %v3228 = vadd.f32 %v3164, %v1700
        %v3229 = vadd.f32 %v3165, %v1701
        %v3230 = vadd.f32 %v3166, %v1702
        %v3231 = vadd.f32 %v3167, %v1703
        %v3232 = vadd.f32 %v3168, %v1704
        %v3233 = vadd.f32 %v3169, %v1705
        %v3234 = vadd.f32 %v3170, %v1706
        %v3235 = vadd.f32 %v3171, %v1707
        %v3236 = vadd.f32 %v3172, %v1708
        %v3237 = vadd.f32 %v3173, %v1709
        %v3238 = vadd.f32 %v3174, %v1710
        %v3239 = vadd.f32 %v3175, %v1711
        %v3240 = vadd.f32 %v3176, %v1712
        %v3241 = vadd.f32 %v3177, %v1713
        %v3242 = vadd.f32 %v3178, %v1714
        %v3243 = vadd.f32 %v3179, %v1715
        %v3244 = vadd.f32 %v3180, %v1716
        %v3245 = vadd.f32 %v3181, %v1717
        %v3246 = vadd.f32 %v3182, %v1718
        %v3247 = vadd.f32 %v3183, %v1719
        %v3248 = vadd.f32 %v3184, %v1720
        %v3249 = vadd.f32 %v3185, %v1721
        %v3250 = vadd.f32 %v3186, %v1722
        %v3251 = vadd.f32 %v3187, %v1723
        %v3252 = vadd.f32 %v3188, %v1724
        %v3253 = vadd.f32 %v3189, %v1725
        %v3254 = vadd.f32 %v3190, %v1726
        %v3255 = vadd.f32 %v3191, %v1727
        %v3256 = vadd.f32 %v3192, %v1728
        %v3257 = vadd.f32 %v3193, %v1729
        %v3258 = vadd.f32 %v3194, %v1730
        %v3259 = vadd.f32 %v3195, %v1731
        %v3260 = vadd.f32 %v3196, %v1732
        %v3261 = vadd.f32 %v3197, %v1733
        %v3262 = vadd.f32 %v3198, %v1734
        %v3263 = vadd.f32 %v3199, %v1735
        %v3264 = vadd.f32 %v3200, %v1736
        %v3265 = vadd.f32 %v3201, %v1737
        %v3266 = vadd.f32 %v3202, %v1738
        %v3267 = vadd.f32 %v3203, %v1739
        %v3268 = vadd.f32 %v3204, %v1740
        %v3269 = vadd.f32 %v3205, %v1741
        %v3270 = vadd.f32 %v3206, %v1742
        %v3271 = vadd.f32 %v3207, %v1743
        %v3272 = vadd.f32 %v3208, %v1744
        %v3273 = vadd.f32 %v3209, %v1745
        %v3274 = vadd.f32 %v3210, %v1746
        %v3275 = vadd.f32 %v3211, %v1747
        %v3276 = vadd.f32 %v3212, %v1748
        %v3277 = vadd.f32 %v3213, %v1749
        %v3278 = vadd.f32 %v3214, %v1750
        %v3279 = vadd.f32 %v3215, %v1751
        %v3280 = vadd.f32 %v3216, %v1752
        %v3281 = vadd.f32 %v3217, %v1753
        %v3282 = vadd.f32 %v3218, %v1754
        %v3283 = vadd.f32 %v3219, %v1755
        %v3284 = vadd.f32 %v3220, %v1756
        %s3285 = scalar_lea.vmem %s380, 512 [#allocation5]
        %3286 = vst [vmem:[%s3285] sm:$0xff] %v3221
        %3287 = vst [vmem:[%s3285 + $0x8] sm:$0xff] %v3222
        %3288 = vst [vmem:[%s3285 + $0x10] sm:$0xff] %v3223
        %3289 = vst [vmem:[%s3285 + $0x18] sm:$0xff] %v3224
        %3290 = vst [vmem:[%s3285 + $0x20] sm:$0xff] %v3225
        %3291 = vst [vmem:[%s3285 + $0x28] sm:$0xff] %v3226
        %3292 = vst [vmem:[%s3285 + $0x30] sm:$0xff] %v3227
        %3293 = vst [vmem:[%s3285 + $0x38] sm:$0xff] %v3228
        %3294 = vst [vmem:[%s3285 + $0x40] sm:$0xff] %v3229
        %3295 = vst [vmem:[%s3285 + $0x48] sm:$0xff] %v3230
        %3296 = vst [vmem:[%s3285 + $0x50] sm:$0xff] %v3231
        %3297 = vst [vmem:[%s3285 + $0x58] sm:$0xff] %v3232
        %3298 = vst [vmem:[%s3285 + $0x60] sm:$0xff] %v3233
        %3299 = vst [vmem:[%s3285 + $0x68] sm:$0xff] %v3234
        %3300 = vst [vmem:[%s3285 + $0x70] sm:$0xff] %v3235
        %3301 = vst [vmem:[%s3285 + $0x78] sm:$0xff] %v3236
        %3302 = vst [vmem:[%s3285 + $0x80] sm:$0xff] %v3237
        %3303 = vst [vmem:[%s3285 + $0x88] sm:$0xff] %v3238
        %3304 = vst [vmem:[%s3285 + $0x90] sm:$0xff] %v3239
        %3305 = vst [vmem:[%s3285 + $0x98] sm:$0xff] %v3240
        %3306 = vst [vmem:[%s3285 + $0xa0] sm:$0xff] %v3241
        %3307 = vst [vmem:[%s3285 + $0xa8] sm:$0xff] %v3242
        %3308 = vst [vmem:[%s3285 + $0xb0] sm:$0xff] %v3243
        %3309 = vst [vmem:[%s3285 + $0xb8] sm:$0xff] %v3244
        %3310 = vst [vmem:[%s3285 + $0xc0] sm:$0xff] %v3245
        %3311 = vst [vmem:[%s3285 + $0xc8] sm:$0xff] %v3246
        %3312 = vst [vmem:[%s3285 + $0xd0] sm:$0xff] %v3247
        %3313 = vst [vmem:[%s3285 + $0xd8] sm:$0xff] %v3248
        %3314 = vst [vmem:[%s3285 + $0xe0] sm:$0xff] %v3249
        %3315 = vst [vmem:[%s3285 + $0xe8] sm:$0xff] %v3250
        %3316 = vst [vmem:[%s3285 + $0xf0] sm:$0xff] %v3251
        %3317 = vst [vmem:[%s3285 + $0xf8] sm:$0xff] %v3252
        %3318 = vst [vmem:[%s3285 + $0x100] sm:$0xff] %v3253
        %3319 = vst [vmem:[%s3285 + $0x108] sm:$0xff] %v3254
        %3320 = vst [vmem:[%s3285 + $0x110] sm:$0xff] %v3255
        %3321 = vst [vmem:[%s3285 + $0x118] sm:$0xff] %v3256
        %3322 = vst [vmem:[%s3285 + $0x120] sm:$0xff] %v3257
        %3323 = vst [vmem:[%s3285 + $0x128] sm:$0xff] %v3258
        %3324 = vst [vmem:[%s3285 + $0x130] sm:$0xff] %v3259
        %3325 = vst [vmem:[%s3285 + $0x138] sm:$0xff] %v3260
        %3326 = vst [vmem:[%s3285 + $0x140] sm:$0xff] %v3261
        %3327 = vst [vmem:[%s3285 + $0x148] sm:$0xff] %v3262
        %3328 = vst [vmem:[%s3285 + $0x150] sm:$0xff] %v3263
        %3329 = vst [vmem:[%s3285 + $0x158] sm:$0xff] %v3264
        %3330 = vst [vmem:[%s3285 + $0x160] sm:$0xff] %v3265
        %3331 = vst [vmem:[%s3285 + $0x168] sm:$0xff] %v3266
        %3332 = vst [vmem:[%s3285 + $0x170] sm:$0xff] %v3267
        %3333 = vst [vmem:[%s3285 + $0x178] sm:$0xff] %v3268
        %3334 = vst [vmem:[%s3285 + $0x180] sm:$0xff] %v3269
        %3335 = vst [vmem:[%s3285 + $0x188] sm:$0xff] %v3270
        %3336 = vst [vmem:[%s3285 + $0x190] sm:$0xff] %v3271
        %3337 = vst [vmem:[%s3285 + $0x198] sm:$0xff] %v3272
        %3338 = vst [vmem:[%s3285 + $0x1a0] sm:$0xff] %v3273
        %3339 = vst [vmem:[%s3285 + $0x1a8] sm:$0xff] %v3274
        %3340 = vst [vmem:[%s3285 + $0x1b0] sm:$0xff] %v3275
        %3341 = vst [vmem:[%s3285 + $0x1b8] sm:$0xff] %v3276
        %3342 = vst [vmem:[%s3285 + $0x1c0] sm:$0xff] %v3277
        %3343 = vst [vmem:[%s3285 + $0x1c8] sm:$0xff] %v3278
        %3344 = vst [vmem:[%s3285 + $0x1d0] sm:$0xff] %v3279
        %3345 = vst [vmem:[%s3285 + $0x1d8] sm:$0xff] %v3280
        %3346 = vst [vmem:[%s3285 + $0x1e0] sm:$0xff] %v3281
        %3347 = vst [vmem:[%s3285 + $0x1e8] sm:$0xff] %v3282
        %3348 = vst [vmem:[%s3285 + $0x1f0] sm:$0xff] %v3283
        %3349 = vst [vmem:[%s3285 + $0x1f8] sm:$0xff] %v3284
        %3350 = vmax.xlane.f32.xlu0 %v3221
        %v3351 = vpop.xlane.xlu0 %3350
        %3352 = vmax.xlane.f32.xlu0 %v3225
        %v3353 = vpop.xlane.xlu0 %3352
        %3354 = vmax.xlane.f32.xlu0 %v3229
        %v3355 = vpop.xlane.xlu0 %3354
        %3356 = vmax.xlane.f32.xlu0 %v3233
        %v3357 = vpop.xlane.xlu0 %3356
        %3358 = vmax.xlane.f32.xlu0 %v3237
        %v3359 = vpop.xlane.xlu0 %3358
        %3360 = vmax.xlane.f32.xlu0 %v3241
        %v3361 = vpop.xlane.xlu0 %3360
        %3362 = vmax.xlane.f32.xlu0 %v3245
        %v3363 = vpop.xlane.xlu0 %3362
        %3364 = vmax.xlane.f32.xlu0 %v3249
        %v3365 = vpop.xlane.xlu0 %3364
        %3366 = vmax.xlane.f32.xlu0 %v3253
        %v3367 = vpop.xlane.xlu0 %3366
        %3368 = vmax.xlane.f32.xlu0 %v3257
        %v3369 = vpop.xlane.xlu0 %3368
        %3370 = vmax.xlane.f32.xlu0 %v3261
        %v3371 = vpop.xlane.xlu0 %3370
        %3372 = vmax.xlane.f32.xlu0 %v3265
        %v3373 = vpop.xlane.xlu0 %3372
        %3374 = vmax.xlane.f32.xlu0 %v3269
        %v3375 = vpop.xlane.xlu0 %3374
        %3376 = vmax.xlane.f32.xlu0 %v3273
        %v3377 = vpop.xlane.xlu0 %3376
        %3378 = vmax.xlane.f32.xlu0 %v3277
        %v3379 = vpop.xlane.xlu0 %3378
        %3380 = vmax.xlane.f32.xlu0 %v3281
        %v3381 = vpop.xlane.xlu0 %3380
        %v3382 = vsub.f32 %v3221, %v3351
        %v3383 = vsub.f32 %v3225, %v3353
        %v3384 = vsub.f32 %v3229, %v3355
        %v3385 = vsub.f32 %v3233, %v3357
        %v3386 = vsub.f32 %v3237, %v3359
        %v3387 = vsub.f32 %v3241, %v3361
        %v3388 = vsub.f32 %v3245, %v3363
        %v3389 = vsub.f32 %v3249, %v3365
        %v3390 = vsub.f32 %v3253, %v3367
        %v3391 = vsub.f32 %v3257, %v3369
        %v3392 = vsub.f32 %v3261, %v3371
        %v3393 = vsub.f32 %v3265, %v3373
        %v3394 = vsub.f32 %v3269, %v3375
        %v3395 = vsub.f32 %v3273, %v3377
        %v3396 = vsub.f32 %v3277, %v3379
        %v3397 = vsub.f32 %v3281, %v3381
        %v3398 = vmul.f32 %v3382, 1.442695
        %v3399 = vpow.pop %v3398
        %v3400 = vmul.f32 %v3383, 1.442695
        %v3401 = vpow.pop %v3400
        %v3402 = vmul.f32 %v3384, 1.442695
        %v3403 = vpow.pop %v3402
        %v3404 = vmul.f32 %v3385, 1.442695
        %v3405 = vpow.pop %v3404
        %v3406 = vmul.f32 %v3386, 1.442695
        %v3407 = vpow.pop %v3406
        %v3408 = vmul.f32 %v3387, 1.442695
        %v3409 = vpow.pop %v3408
        %v3410 = vmul.f32 %v3388, 1.442695
        %v3411 = vpow.pop %v3410
        %v3412 = vmul.f32 %v3389, 1.442695
        %v3413 = vpow.pop %v3412
        %v3414 = vmul.f32 %v3390, 1.442695
        %v3415 = vpow.pop %v3414
        %v3416 = vmul.f32 %v3391, 1.442695
        %v3417 = vpow.pop %v3416
        %v3418 = vmul.f32 %v3392, 1.442695
        %v3419 = vpow.pop %v3418
        %v3420 = vmul.f32 %v3393, 1.442695
        %v3421 = vpow.pop %v3420
        %v3422 = vmul.f32 %v3394, 1.442695
        %v3423 = vpow.pop %v3422
        %v3424 = vmul.f32 %v3395, 1.442695
        %v3425 = vpow.pop %v3424
        %v3426 = vmul.f32 %v3396, 1.442695
        %v3427 = vpow.pop %v3426
        %v3428 = vmul.f32 %v3397, 1.442695
        %v3429 = vpow.pop %v3428
        %3430 = vadd.xlane.f32.xlu0 %v3399
        %v3431 = vpop.xlane.xlu0 %3430
        %3432 = vadd.xlane.f32.xlu0 %v3401
        %v3433 = vpop.xlane.xlu0 %3432
        %3434 = vadd.xlane.f32.xlu0 %v3403
        %v3435 = vpop.xlane.xlu0 %3434
        %3436 = vadd.xlane.f32.xlu0 %v3405
        %v3437 = vpop.xlane.xlu0 %3436
        %3438 = vadd.xlane.f32.xlu0 %v3407
        %v3439 = vpop.xlane.xlu0 %3438
        %3440 = vadd.xlane.f32.xlu0 %v3409
        %v3441 = vpop.xlane.xlu0 %3440
        %3442 = vadd.xlane.f32.xlu0 %v3411
        %v3443 = vpop.xlane.xlu0 %3442
        %3444 = vadd.xlane.f32.xlu0 %v3413
        %v3445 = vpop.xlane.xlu0 %3444
        %3446 = vadd.xlane.f32.xlu0 %v3415
        %v3447 = vpop.xlane.xlu0 %3446
        %3448 = vadd.xlane.f32.xlu0 %v3417
        %v3449 = vpop.xlane.xlu0 %3448
        %3450 = vadd.xlane.f32.xlu0 %v3419
        %v3451 = vpop.xlane.xlu0 %3450
        %3452 = vadd.xlane.f32.xlu0 %v3421
        %v3453 = vpop.xlane.xlu0 %3452
        %3454 = vadd.xlane.f32.xlu0 %v3423
        %v3455 = vpop.xlane.xlu0 %3454
        %3456 = vadd.xlane.f32.xlu0 %v3425
        %v3457 = vpop.xlane.xlu0 %3456
        %3458 = vadd.xlane.f32.xlu0 %v3427
        %v3459 = vpop.xlane.xlu0 %3458
        %3460 = vadd.xlane.f32.xlu0 %v3429
        %v3461 = vpop.xlane.xlu0 %3460
        %v3462 = vrcp.pop %v3431
        %v3463 = vrcp.pop %v3433
        %v3464 = vrcp.pop %v3435
        %v3465 = vrcp.pop %v3437
        %v3466 = vrcp.pop %v3439
        %v3467 = vrcp.pop %v3441
        %v3468 = vrcp.pop %v3443
        %v3469 = vrcp.pop %v3445
        %v3470 = vrcp.pop %v3447
        %v3471 = vrcp.pop %v3449
        %v3472 = vrcp.pop %v3451
        %v3473 = vrcp.pop %v3453
        %v3474 = vrcp.pop %v3455
        %v3475 = vrcp.pop %v3457
        %v3476 = vrcp.pop %v3459
        %v3477 = vrcp.pop %v3461
        %v3478 = vmul.f32 %v3399, %v3462
        %v3479 = vmul.f32 %v3401, %v3463
        %v3480 = vmul.f32 %v3403, %v3464
        %v3481 = vmul.f32 %v3405, %v3465
        %v3482 = vmul.f32 %v3407, %v3466
        %v3483 = vmul.f32 %v3409, %v3467
        %v3484 = vmul.f32 %v3411, %v3468
        %v3485 = vmul.f32 %v3413, %v3469
        %v3486 = vmul.f32 %v3415, %v3470
        %v3487 = vmul.f32 %v3417, %v3471
        %v3488 = vmul.f32 %v3419, %v3472
        %v3489 = vmul.f32 %v3421, %v3473
        %v3490 = vmul.f32 %v3423, %v3474
        %v3491 = vmul.f32 %v3425, %v3475
        %v3492 = vmul.f32 %v3427, %v3476
        %v3493 = vmul.f32 %v3429, %v3477
        %v3494 = vlog2.pop %v3431
        %v3495 = vmul.f32 %v3494, 0.6931472
        %v3496 = vlog2.pop %v3433
        %v3497 = vmul.f32 %v3496, 0.6931472
        %v3498 = vlog2.pop %v3435
        %v3499 = vmul.f32 %v3498, 0.6931472
        %v3500 = vlog2.pop %v3437
        %v3501 = vmul.f32 %v3500, 0.6931472
        %v3502 = vlog2.pop %v3439
        %v3503 = vmul.f32 %v3502, 0.6931472
        %v3504 = vlog2.pop %v3441
        %v3505 = vmul.f32 %v3504, 0.6931472
        %v3506 = vlog2.pop %v3443
        %v3507 = vmul.f32 %v3506, 0.6931472
        %v3508 = vlog2.pop %v3445
        %v3509 = vmul.f32 %v3508, 0.6931472
        %v3510 = vlog2.pop %v3447
        %v3511 = vmul.f32 %v3510, 0.6931472
        %v3512 = vlog2.pop %v3449
        %v3513 = vmul.f32 %v3512, 0.6931472
        %v3514 = vlog2.pop %v3451
        %v3515 = vmul.f32 %v3514, 0.6931472
        %v3516 = vlog2.pop %v3453
        %v3517 = vmul.f32 %v3516, 0.6931472
        %v3518 = vlog2.pop %v3455
        %v3519 = vmul.f32 %v3518, 0.6931472
        %v3520 = vlog2.pop %v3457
        %v3521 = vmul.f32 %v3520, 0.6931472
        %v3522 = vlog2.pop %v3459
        %v3523 = vmul.f32 %v3522, 0.6931472
        %v3524 = vlog2.pop %v3461
        %v3525 = vmul.f32 %v3524, 0.6931472
        %v3526 = vsub.f32 %v3382, %v3495
        %v3527 = vsub.f32 %v3383, %v3497
        %v3528 = vsub.f32 %v3384, %v3499
        %v3529 = vsub.f32 %v3385, %v3501
        %v3530 = vsub.f32 %v3386, %v3503
        %v3531 = vsub.f32 %v3387, %v3505
        %v3532 = vsub.f32 %v3388, %v3507
        %v3533 = vsub.f32 %v3389, %v3509
        %v3534 = vsub.f32 %v3390, %v3511
        %v3535 = vsub.f32 %v3391, %v3513
        %v3536 = vsub.f32 %v3392, %v3515
        %v3537 = vsub.f32 %v3393, %v3517
        %v3538 = vsub.f32 %v3394, %v3519
        %v3539 = vsub.f32 %v3395, %v3521
        %v3540 = vsub.f32 %v3396, %v3523
        %v3541 = vsub.f32 %v3397, %v3525
        %v3542 = vsub.f32 0.0, %v3526
        %v3543 = vsub.f32 0.0, %v3527
        %v3544 = vsub.f32 0.0, %v3528
        %v3545 = vsub.f32 0.0, %v3529
        %v3546 = vsub.f32 0.0, %v3530
        %v3547 = vsub.f32 0.0, %v3531
        %v3548 = vsub.f32 0.0, %v3532
        %v3549 = vsub.f32 0.0, %v3533
        %v3550 = vsub.f32 0.0, %v3534
        %v3551 = vsub.f32 0.0, %v3535
        %v3552 = vsub.f32 0.0, %v3536
        %v3553 = vsub.f32 0.0, %v3537
        %v3554 = vsub.f32 0.0, %v3538
        %v3555 = vsub.f32 0.0, %v3539
        %v3556 = vsub.f32 0.0, %v3540
        %v3557 = vsub.f32 0.0, %v3541
        %v3558 = vmul.f32 %v3542, %v658
        %v3559 = vmul.f32 %v3543, %v662
        %v3560 = vmul.f32 %v3544, %v666
        %v3561 = vmul.f32 %v3545, %v670
        %v3562 = vmul.f32 %v3546, %v674
        %v3563 = vmul.f32 %v3547, %v678
        %v3564 = vmul.f32 %v3548, %v682
        %v3565 = vmul.f32 %v3549, %v686
        %v3566 = vmul.f32 %v3550, %v690
        %v3567 = vmul.f32 %v3551, %v694
        %v3568 = vmul.f32 %v3552, %v698
        %v3569 = vmul.f32 %v3553, %v702
        %v3570 = vmul.f32 %v3554, %v706
        %v3571 = vmul.f32 %v3555, %v710
        %v3572 = vmul.f32 %v3556, %v714
        %v3573 = vmul.f32 %v3557, %v718
        %v3574 = vsub.f32 1.0, %v3478
        %v3575 = vsub.f32 1.0, %v3479
        %v3576 = vsub.f32 1.0, %v3480
        %v3577 = vsub.f32 1.0, %v3481
        %v3578 = vsub.f32 1.0, %v3482
        %v3579 = vsub.f32 1.0, %v3483
        %v3580 = vsub.f32 1.0, %v3484
        %v3581 = vsub.f32 1.0, %v3485
        %v3582 = vsub.f32 1.0, %v3486
        %v3583 = vsub.f32 1.0, %v3487
        %v3584 = vsub.f32 1.0, %v3488
        %v3585 = vsub.f32 1.0, %v3489
        %v3586 = vsub.f32 1.0, %v3490
        %v3587 = vsub.f32 1.0, %v3491
        %v3588 = vsub.f32 1.0, %v3492
        %v3589 = vsub.f32 1.0, %v3493
        %v3590 = vmul.f32 %v3558, %v3574
        %v3591 = vmul.f32 %v3559, %v3575
        %v3592 = vmul.f32 %v3560, %v3576
        %v3593 = vmul.f32 %v3561, %v3577
        %v3594 = vmul.f32 %v3562, %v3578
        %v3595 = vmul.f32 %v3563, %v3579
        %v3596 = vmul.f32 %v3564, %v3580
        %v3597 = vmul.f32 %v3565, %v3581
        %v3598 = vmul.f32 %v3566, %v3582
        %v3599 = vmul.f32 %v3567, %v3583
        %v3600 = vmul.f32 %v3568, %v3584
        %v3601 = vmul.f32 %v3569, %v3585
        %v3602 = vmul.f32 %v3570, %v3586
        %v3603 = vmul.f32 %v3571, %v3587
        %v3604 = vmul.f32 %v3572, %v3588
        %v3605 = vmul.f32 %v3573, %v3589
        %v3606 = vadd.f32 %v3590, %v3591
        %v3607 = vadd.f32 %v3606, %v3592
        %v3608 = vadd.f32 %v3607, %v3593
        %v3609 = vadd.f32 %v3608, %v3594
        %v3610 = vadd.f32 %v3609, %v3595
        %v3611 = vadd.f32 %v3610, %v3596
        %v3612 = vadd.f32 %v3611, %v3597
        %v3613 = vadd.f32 %v3612, %v3598
        %v3614 = vadd.f32 %v3613, %v3599
        %v3615 = vadd.f32 %v3614, %v3600
        %v3616 = vadd.f32 %v3615, %v3601
        %v3617 = vadd.f32 %v3616, %v3602
        %v3618 = vadd.f32 %v3617, %v3603
        %v3619 = vadd.f32 %v3618, %v3604
        %v3620 = vadd.f32 %v3619, %v3605
        %v3621 = vrot.slane %v3620, 4
        %v3622 = vadd.f32 %v3620, %v3621
        %v3623 = vrot.slane %v3622, 2
        %v3624 = vadd.f32 %v3622, %v3623
        %v3625 = vrot.slane %v3624, 1
        %v3626 = vadd.f32 %v3624, %v3625
        %v3627 = vadd.f32 %v3080, %v3626
        %3628 = vmax.xlane.f32.xlu0 %v3222
        %v3629 = vpop.xlane.xlu0 %3628
        %3630 = vmax.xlane.f32.xlu0 %v3226
        %v3631 = vpop.xlane.xlu0 %3630
        %3632 = vmax.xlane.f32.xlu0 %v3230
        %v3633 = vpop.xlane.xlu0 %3632
        %3634 = vmax.xlane.f32.xlu0 %v3234
        %v3635 = vpop.xlane.xlu0 %3634
        %3636 = vmax.xlane.f32.xlu0 %v3238
        %v3637 = vpop.xlane.xlu0 %3636
        %3638 = vmax.xlane.f32.xlu0 %v3242
        %v3639 = vpop.xlane.xlu0 %3638
        %3640 = vmax.xlane.f32.xlu0 %v3246
        %v3641 = vpop.xlane.xlu0 %3640
        %3642 = vmax.xlane.f32.xlu0 %v3250
        %v3643 = vpop.xlane.xlu0 %3642
        %3644 = vmax.xlane.f32.xlu0 %v3254
        %v3645 = vpop.xlane.xlu0 %3644
        %3646 = vmax.xlane.f32.xlu0 %v3258
        %v3647 = vpop.xlane.xlu0 %3646
        %3648 = vmax.xlane.f32.xlu0 %v3262
        %v3649 = vpop.xlane.xlu0 %3648
        %3650 = vmax.xlane.f32.xlu0 %v3266
        %v3651 = vpop.xlane.xlu0 %3650
        %3652 = vmax.xlane.f32.xlu0 %v3270
        %v3653 = vpop.xlane.xlu0 %3652
        %3654 = vmax.xlane.f32.xlu0 %v3274
        %v3655 = vpop.xlane.xlu0 %3654
        %3656 = vmax.xlane.f32.xlu0 %v3278
        %v3657 = vpop.xlane.xlu0 %3656
        %3658 = vmax.xlane.f32.xlu0 %v3282
        %v3659 = vpop.xlane.xlu0 %3658
        %v3660 = vsub.f32 %v3222, %v3629
        %v3661 = vsub.f32 %v3226, %v3631
        %v3662 = vsub.f32 %v3230, %v3633
        %v3663 = vsub.f32 %v3234, %v3635
        %v3664 = vsub.f32 %v3238, %v3637
        %v3665 = vsub.f32 %v3242, %v3639
        %v3666 = vsub.f32 %v3246, %v3641
        %v3667 = vsub.f32 %v3250, %v3643
        %v3668 = vsub.f32 %v3254, %v3645
        %v3669 = vsub.f32 %v3258, %v3647
        %v3670 = vsub.f32 %v3262, %v3649
        %v3671 = vsub.f32 %v3266, %v3651
        %v3672 = vsub.f32 %v3270, %v3653
        %v3673 = vsub.f32 %v3274, %v3655
        %v3674 = vsub.f32 %v3278, %v3657
        %v3675 = vsub.f32 %v3282, %v3659
        %v3676 = vmul.f32 %v3660, 1.442695
        %v3677 = vpow.pop %v3676
        %v3678 = vmul.f32 %v3661, 1.442695
        %v3679 = vpow.pop %v3678
        %v3680 = vmul.f32 %v3662, 1.442695
        %v3681 = vpow.pop %v3680
        %v3682 = vmul.f32 %v3663, 1.442695
        %v3683 = vpow.pop %v3682
        %v3684 = vmul.f32 %v3664, 1.442695
        %v3685 = vpow.pop %v3684
        %v3686 = vmul.f32 %v3665, 1.442695
        %v3687 = vpow.pop %v3686
        %v3688 = vmul.f32 %v3666, 1.442695
        %v3689 = vpow.pop %v3688
        %v3690 = vmul.f32 %v3667, 1.442695
        %v3691 = vpow.pop %v3690
        %v3692 = vmul.f32 %v3668, 1.442695
        %v3693 = vpow.pop %v3692
        %v3694 = vmul.f32 %v3669, 1.442695
        %v3695 = vpow.pop %v3694
        %v3696 = vmul.f32 %v3670, 1.442695
        %v3697 = vpow.pop %v3696
        %v3698 = vmul.f32 %v3671, 1.442695
        %v3699 = vpow.pop %v3698
        %v3700 = vmul.f32 %v3672, 1.442695
        %v3701 = vpow.pop %v3700
        %v3702 = vmul.f32 %v3673, 1.442695
        %v3703 = vpow.pop %v3702
        %v3704 = vmul.f32 %v3674, 1.442695
        %v3705 = vpow.pop %v3704
        %v3706 = vmul.f32 %v3675, 1.442695
        %v3707 = vpow.pop %v3706
        %3708 = vadd.xlane.f32.xlu0 %v3677
        %v3709 = vpop.xlane.xlu0 %3708
        %3710 = vadd.xlane.f32.xlu0 %v3679
        %v3711 = vpop.xlane.xlu0 %3710
        %3712 = vadd.xlane.f32.xlu0 %v3681
        %v3713 = vpop.xlane.xlu0 %3712
        %3714 = vadd.xlane.f32.xlu0 %v3683
        %v3715 = vpop.xlane.xlu0 %3714
        %3716 = vadd.xlane.f32.xlu0 %v3685
        %v3717 = vpop.xlane.xlu0 %3716
        %3718 = vadd.xlane.f32.xlu0 %v3687
        %v3719 = vpop.xlane.xlu0 %3718
        %3720 = vadd.xlane.f32.xlu0 %v3689
        %v3721 = vpop.xlane.xlu0 %3720
        %3722 = vadd.xlane.f32.xlu0 %v3691
        %v3723 = vpop.xlane.xlu0 %3722
        %3724 = vadd.xlane.f32.xlu0 %v3693
        %v3725 = vpop.xlane.xlu0 %3724
        %3726 = vadd.xlane.f32.xlu0 %v3695
        %v3727 = vpop.xlane.xlu0 %3726
        %3728 = vadd.xlane.f32.xlu0 %v3697
        %v3729 = vpop.xlane.xlu0 %3728
        %3730 = vadd.xlane.f32.xlu0 %v3699
        %v3731 = vpop.xlane.xlu0 %3730
        %3732 = vadd.xlane.f32.xlu0 %v3701
        %v3733 = vpop.xlane.xlu0 %3732
        %3734 = vadd.xlane.f32.xlu0 %v3703
        %v3735 = vpop.xlane.xlu0 %3734
        %3736 = vadd.xlane.f32.xlu0 %v3705
        %v3737 = vpop.xlane.xlu0 %3736
        %3738 = vadd.xlane.f32.xlu0 %v3707
        %v3739 = vpop.xlane.xlu0 %3738
        %v3740 = vrcp.pop %v3709
        %v3741 = vrcp.pop %v3711
        %v3742 = vrcp.pop %v3713
        %v3743 = vrcp.pop %v3715
        %v3744 = vrcp.pop %v3717
        %v3745 = vrcp.pop %v3719
        %v3746 = vrcp.pop %v3721
        %v3747 = vrcp.pop %v3723
        %v3748 = vrcp.pop %v3725
        %v3749 = vrcp.pop %v3727
        %v3750 = vrcp.pop %v3729
        %v3751 = vrcp.pop %v3731
        %v3752 = vrcp.pop %v3733
        %v3753 = vrcp.pop %v3735
        %v3754 = vrcp.pop %v3737
        %v3755 = vrcp.pop %v3739
        %v3756 = vmul.f32 %v3677, %v3740
        %v3757 = vmul.f32 %v3679, %v3741
        %v3758 = vmul.f32 %v3681, %v3742
        %v3759 = vmul.f32 %v3683, %v3743
        %v3760 = vmul.f32 %v3685, %v3744
        %v3761 = vmul.f32 %v3687, %v3745
        %v3762 = vmul.f32 %v3689, %v3746
        %v3763 = vmul.f32 %v3691, %v3747
        %v3764 = vmul.f32 %v3693, %v3748
        %v3765 = vmul.f32 %v3695, %v3749
        %v3766 = vmul.f32 %v3697, %v3750
        %v3767 = vmul.f32 %v3699, %v3751
        %v3768 = vmul.f32 %v3701, %v3752
        %v3769 = vmul.f32 %v3703, %v3753
        %v3770 = vmul.f32 %v3705, %v3754
        %v3771 = vmul.f32 %v3707, %v3755
        %v3772 = vlog2.pop %v3709
        %v3773 = vmul.f32 %v3772, 0.6931472
        %v3774 = vlog2.pop %v3711
        %v3775 = vmul.f32 %v3774, 0.6931472
        %v3776 = vlog2.pop %v3713
        %v3777 = vmul.f32 %v3776, 0.6931472
        %v3778 = vlog2.pop %v3715
        %v3779 = vmul.f32 %v3778, 0.6931472
        %v3780 = vlog2.pop %v3717
        %v3781 = vmul.f32 %v3780, 0.6931472
        %v3782 = vlog2.pop %v3719
        %v3783 = vmul.f32 %v3782, 0.6931472
        %v3784 = vlog2.pop %v3721
        %v3785 = vmul.f32 %v3784, 0.6931472
        %v3786 = vlog2.pop %v3723
        %v3787 = vmul.f32 %v3786, 0.6931472
        %v3788 = vlog2.pop %v3725
        %v3789 = vmul.f32 %v3788, 0.6931472
        %v3790 = vlog2.pop %v3727
        %v3791 = vmul.f32 %v3790, 0.6931472
        %v3792 = vlog2.pop %v3729
        %v3793 = vmul.f32 %v3792, 0.6931472
        %v3794 = vlog2.pop %v3731
        %v3795 = vmul.f32 %v3794, 0.6931472
        %v3796 = vlog2.pop %v3733
        %v3797 = vmul.f32 %v3796, 0.6931472
        %v3798 = vlog2.pop %v3735
        %v3799 = vmul.f32 %v3798, 0.6931472
        %v3800 = vlog2.pop %v3737
        %v3801 = vmul.f32 %v3800, 0.6931472
        %v3802 = vlog2.pop %v3739
        %v3803 = vmul.f32 %v3802, 0.6931472
        %v3804 = vsub.f32 %v3660, %v3773
        %v3805 = vsub.f32 %v3661, %v3775
        %v3806 = vsub.f32 %v3662, %v3777
        %v3807 = vsub.f32 %v3663, %v3779
        %v3808 = vsub.f32 %v3664, %v3781
        %v3809 = vsub.f32 %v3665, %v3783
        %v3810 = vsub.f32 %v3666, %v3785
        %v3811 = vsub.f32 %v3667, %v3787
        %v3812 = vsub.f32 %v3668, %v3789
        %v3813 = vsub.f32 %v3669, %v3791
        %v3814 = vsub.f32 %v3670, %v3793
        %v3815 = vsub.f32 %v3671, %v3795
        %v3816 = vsub.f32 %v3672, %v3797
        %v3817 = vsub.f32 %v3673, %v3799
        %v3818 = vsub.f32 %v3674, %v3801
        %v3819 = vsub.f32 %v3675, %v3803
        %v3820 = vsub.f32 0.0, %v3804
        %v3821 = vsub.f32 0.0, %v3805
        %v3822 = vsub.f32 0.0, %v3806
        %v3823 = vsub.f32 0.0, %v3807
        %v3824 = vsub.f32 0.0, %v3808
        %v3825 = vsub.f32 0.0, %v3809
        %v3826 = vsub.f32 0.0, %v3810
        %v3827 = vsub.f32 0.0, %v3811
        %v3828 = vsub.f32 0.0, %v3812
        %v3829 = vsub.f32 0.0, %v3813
        %v3830 = vsub.f32 0.0, %v3814
        %v3831 = vsub.f32 0.0, %v3815
        %v3832 = vsub.f32 0.0, %v3816
        %v3833 = vsub.f32 0.0, %v3817
        %v3834 = vsub.f32 0.0, %v3818
        %v3835 = vsub.f32 0.0, %v3819
        %v3836 = vmul.f32 %v3820, %v659
        %v3837 = vmul.f32 %v3821, %v663
        %v3838 = vmul.f32 %v3822, %v667
        %v3839 = vmul.f32 %v3823, %v671
        %v3840 = vmul.f32 %v3824, %v675
        %v3841 = vmul.f32 %v3825, %v679
        %v3842 = vmul.f32 %v3826, %v683
        %v3843 = vmul.f32 %v3827, %v687
        %v3844 = vmul.f32 %v3828, %v691
        %v3845 = vmul.f32 %v3829, %v695
        %v3846 = vmul.f32 %v3830, %v699
        %v3847 = vmul.f32 %v3831, %v703
        %v3848 = vmul.f32 %v3832, %v707
        %v3849 = vmul.f32 %v3833, %v711
        %v3850 = vmul.f32 %v3834, %v715
        %v3851 = vmul.f32 %v3835, %v719
        %v3852 = vsub.f32 1.0, %v3756
        %v3853 = vsub.f32 1.0, %v3757
        %v3854 = vsub.f32 1.0, %v3758
        %v3855 = vsub.f32 1.0, %v3759
        %v3856 = vsub.f32 1.0, %v3760
        %v3857 = vsub.f32 1.0, %v3761
        %v3858 = vsub.f32 1.0, %v3762
        %v3859 = vsub.f32 1.0, %v3763
        %v3860 = vsub.f32 1.0, %v3764
        %v3861 = vsub.f32 1.0, %v3765
        %v3862 = vsub.f32 1.0, %v3766
        %v3863 = vsub.f32 1.0, %v3767
        %v3864 = vsub.f32 1.0, %v3768
        %v3865 = vsub.f32 1.0, %v3769
        %v3866 = vsub.f32 1.0, %v3770
        %v3867 = vsub.f32 1.0, %v3771
        %v3868 = vmul.f32 %v3836, %v3852
        %v3869 = vmul.f32 %v3837, %v3853
        %v3870 = vmul.f32 %v3838, %v3854
        %v3871 = vmul.f32 %v3839, %v3855
        %v3872 = vmul.f32 %v3840, %v3856
        %v3873 = vmul.f32 %v3841, %v3857
        %v3874 = vmul.f32 %v3842, %v3858
        %v3875 = vmul.f32 %v3843, %v3859
        %v3876 = vmul.f32 %v3844, %v3860
        %v3877 = vmul.f32 %v3845, %v3861
        %v3878 = vmul.f32 %v3846, %v3862
        %v3879 = vmul.f32 %v3847, %v3863
        %v3880 = vmul.f32 %v3848, %v3864
        %v3881 = vmul.f32 %v3849, %v3865
        %v3882 = vmul.f32 %v3850, %v3866
        %v3883 = vmul.f32 %v3851, %v3867
        %v3884 = vadd.f32 %v3868, %v3869
        %v3885 = vadd.f32 %v3884, %v3870
        %v3886 = vadd.f32 %v3885, %v3871
        %v3887 = vadd.f32 %v3886, %v3872
        %v3888 = vadd.f32 %v3887, %v3873
        %v3889 = vadd.f32 %v3888, %v3874
        %v3890 = vadd.f32 %v3889, %v3875
        %v3891 = vadd.f32 %v3890, %v3876
        %v3892 = vadd.f32 %v3891, %v3877
        %v3893 = vadd.f32 %v3892, %v3878
        %v3894 = vadd.f32 %v3893, %v3879
        %v3895 = vadd.f32 %v3894, %v3880
        %v3896 = vadd.f32 %v3895, %v3881
        %v3897 = vadd.f32 %v3896, %v3882
        %v3898 = vadd.f32 %v3897, %v3883
        %v3899 = vrot.slane %v3898, 4
        %v3900 = vadd.f32 %v3898, %v3899
        %v3901 = vrot.slane %v3900, 2
        %v3902 = vadd.f32 %v3900, %v3901
        %v3903 = vrot.slane %v3902, 1
        %v3904 = vadd.f32 %v3902, %v3903
        %v3905 = vadd.f32 %v3627, %v3904
        %3906 = vmax.xlane.f32.xlu0 %v3223
        %v3907 = vpop.xlane.xlu0 %3906
        %3908 = vmax.xlane.f32.xlu0 %v3227
        %v3909 = vpop.xlane.xlu0 %3908
        %3910 = vmax.xlane.f32.xlu0 %v3231
        %v3911 = vpop.xlane.xlu0 %3910
        %3912 = vmax.xlane.f32.xlu0 %v3235
        %v3913 = vpop.xlane.xlu0 %3912
        %3914 = vmax.xlane.f32.xlu0 %v3239
        %v3915 = vpop.xlane.xlu0 %3914
        %3916 = vmax.xlane.f32.xlu0 %v3243
        %v3917 = vpop.xlane.xlu0 %3916
        %3918 = vmax.xlane.f32.xlu0 %v3247
        %v3919 = vpop.xlane.xlu0 %3918
        %3920 = vmax.xlane.f32.xlu0 %v3251
        %v3921 = vpop.xlane.xlu0 %3920
        %3922 = vmax.xlane.f32.xlu0 %v3255
        %v3923 = vpop.xlane.xlu0 %3922
        %3924 = vmax.xlane.f32.xlu0 %v3259
        %v3925 = vpop.xlane.xlu0 %3924
        %3926 = vmax.xlane.f32.xlu0 %v3263
        %v3927 = vpop.xlane.xlu0 %3926
        %3928 = vmax.xlane.f32.xlu0 %v3267
        %v3929 = vpop.xlane.xlu0 %3928
        %3930 = vmax.xlane.f32.xlu0 %v3271
        %v3931 = vpop.xlane.xlu0 %3930
        %3932 = vmax.xlane.f32.xlu0 %v3275
        %v3933 = vpop.xlane.xlu0 %3932
        %3934 = vmax.xlane.f32.xlu0 %v3279
        %v3935 = vpop.xlane.xlu0 %3934
        %3936 = vmax.xlane.f32.xlu0 %v3283
        %v3937 = vpop.xlane.xlu0 %3936
        %v3938 = vsub.f32 %v3223, %v3907
        %v3939 = vsub.f32 %v3227, %v3909
        %v3940 = vsub.f32 %v3231, %v3911
        %v3941 = vsub.f32 %v3235, %v3913
        %v3942 = vsub.f32 %v3239, %v3915
        %v3943 = vsub.f32 %v3243, %v3917
        %v3944 = vsub.f32 %v3247, %v3919
        %v3945 = vsub.f32 %v3251, %v3921
        %v3946 = vsub.f32 %v3255, %v3923
        %v3947 = vsub.f32 %v3259, %v3925
        %v3948 = vsub.f32 %v3263, %v3927
        %v3949 = vsub.f32 %v3267, %v3929
        %v3950 = vsub.f32 %v3271, %v3931
        %v3951 = vsub.f32 %v3275, %v3933
        %v3952 = vsub.f32 %v3279, %v3935
        %v3953 = vsub.f32 %v3283, %v3937
        %v3954 = vmul.f32 %v3938, 1.442695
        %v3955 = vpow.pop %v3954
        %v3956 = vmul.f32 %v3939, 1.442695
        %v3957 = vpow.pop %v3956
        %v3958 = vmul.f32 %v3940, 1.442695
        %v3959 = vpow.pop %v3958
        %v3960 = vmul.f32 %v3941, 1.442695
        %v3961 = vpow.pop %v3960
        %v3962 = vmul.f32 %v3942, 1.442695
        %v3963 = vpow.pop %v3962
        %v3964 = vmul.f32 %v3943, 1.442695
        %v3965 = vpow.pop %v3964
        %v3966 = vmul.f32 %v3944, 1.442695
        %v3967 = vpow.pop %v3966
        %v3968 = vmul.f32 %v3945, 1.442695
        %v3969 = vpow.pop %v3968
        %v3970 = vmul.f32 %v3946, 1.442695
        %v3971 = vpow.pop %v3970
        %v3972 = vmul.f32 %v3947, 1.442695
        %v3973 = vpow.pop %v3972
        %v3974 = vmul.f32 %v3948, 1.442695
        %v3975 = vpow.pop %v3974
        %v3976 = vmul.f32 %v3949, 1.442695
        %v3977 = vpow.pop %v3976
        %v3978 = vmul.f32 %v3950, 1.442695
        %v3979 = vpow.pop %v3978
        %v3980 = vmul.f32 %v3951, 1.442695
        %v3981 = vpow.pop %v3980
        %v3982 = vmul.f32 %v3952, 1.442695
        %v3983 = vpow.pop %v3982
        %v3984 = vmul.f32 %v3953, 1.442695
        %v3985 = vpow.pop %v3984
        %3986 = vadd.xlane.f32.xlu0 %v3955
        %v3987 = vpop.xlane.xlu0 %3986
        %3988 = vadd.xlane.f32.xlu0 %v3957
        %v3989 = vpop.xlane.xlu0 %3988
        %3990 = vadd.xlane.f32.xlu0 %v3959
        %v3991 = vpop.xlane.xlu0 %3990
        %3992 = vadd.xlane.f32.xlu0 %v3961
        %v3993 = vpop.xlane.xlu0 %3992
        %3994 = vadd.xlane.f32.xlu0 %v3963
        %v3995 = vpop.xlane.xlu0 %3994
        %3996 = vadd.xlane.f32.xlu0 %v3965
        %v3997 = vpop.xlane.xlu0 %3996
        %3998 = vadd.xlane.f32.xlu0 %v3967
        %v3999 = vpop.xlane.xlu0 %3998
        %4000 = vadd.xlane.f32.xlu0 %v3969
        %v4001 = vpop.xlane.xlu0 %4000
        %4002 = vadd.xlane.f32.xlu0 %v3971
        %v4003 = vpop.xlane.xlu0 %4002
        %4004 = vadd.xlane.f32.xlu0 %v3973
        %v4005 = vpop.xlane.xlu0 %4004
        %4006 = vadd.xlane.f32.xlu0 %v3975
        %v4007 = vpop.xlane.xlu0 %4006
        %4008 = vadd.xlane.f32.xlu0 %v3977
        %v4009 = vpop.xlane.xlu0 %4008
        %4010 = vadd.xlane.f32.xlu0 %v3979
        %v4011 = vpop.xlane.xlu0 %4010
        %4012 = vadd.xlane.f32.xlu0 %v3981
        %v4013 = vpop.xlane.xlu0 %4012
        %4014 = vadd.xlane.f32.xlu0 %v3983
        %v4015 = vpop.xlane.xlu0 %4014
        %4016 = vadd.xlane.f32.xlu0 %v3985
        %v4017 = vpop.xlane.xlu0 %4016
        %v4018 = vrcp.pop %v3987
        %v4019 = vrcp.pop %v3989
        %v4020 = vrcp.pop %v3991
        %v4021 = vrcp.pop %v3993
        %v4022 = vrcp.pop %v3995
        %v4023 = vrcp.pop %v3997
        %v4024 = vrcp.pop %v3999
        %v4025 = vrcp.pop %v4001
        %v4026 = vrcp.pop %v4003
        %v4027 = vrcp.pop %v4005
        %v4028 = vrcp.pop %v4007
        %v4029 = vrcp.pop %v4009
        %v4030 = vrcp.pop %v4011
        %v4031 = vrcp.pop %v4013
        %v4032 = vrcp.pop %v4015
        %v4033 = vrcp.pop %v4017
        %v4034 = vmul.f32 %v3955, %v4018
        %v4035 = vmul.f32 %v3957, %v4019
        %v4036 = vmul.f32 %v3959, %v4020
        %v4037 = vmul.f32 %v3961, %v4021
        %v4038 = vmul.f32 %v3963, %v4022
        %v4039 = vmul.f32 %v3965, %v4023
        %v4040 = vmul.f32 %v3967, %v4024
        %v4041 = vmul.f32 %v3969, %v4025
        %v4042 = vmul.f32 %v3971, %v4026
        %v4043 = vmul.f32 %v3973, %v4027
        %v4044 = vmul.f32 %v3975, %v4028
        %v4045 = vmul.f32 %v3977, %v4029
        %v4046 = vmul.f32 %v3979, %v4030
        %v4047 = vmul.f32 %v3981, %v4031
        %v4048 = vmul.f32 %v3983, %v4032
        %v4049 = vmul.f32 %v3985, %v4033
        %v4050 = vlog2.pop %v3987
        %v4051 = vmul.f32 %v4050, 0.6931472
        %v4052 = vlog2.pop %v3989
        %v4053 = vmul.f32 %v4052, 0.6931472
        %v4054 = vlog2.pop %v3991
        %v4055 = vmul.f32 %v4054, 0.6931472
        %v4056 = vlog2.pop %v3993
        %v4057 = vmul.f32 %v4056, 0.6931472
        %v4058 = vlog2.pop %v3995
        %v4059 = vmul.f32 %v4058, 0.6931472
        %v4060 = vlog2.pop %v3997
        %v4061 = vmul.f32 %v4060, 0.6931472
        %v4062 = vlog2.pop %v3999
        %v4063 = vmul.f32 %v4062, 0.6931472
        %v4064 = vlog2.pop %v4001
        %v4065 = vmul.f32 %v4064, 0.6931472
        %v4066 = vlog2.pop %v4003
        %v4067 = vmul.f32 %v4066, 0.6931472
        %v4068 = vlog2.pop %v4005
        %v4069 = vmul.f32 %v4068, 0.6931472
        %v4070 = vlog2.pop %v4007
        %v4071 = vmul.f32 %v4070, 0.6931472
        %v4072 = vlog2.pop %v4009
        %v4073 = vmul.f32 %v4072, 0.6931472
        %v4074 = vlog2.pop %v4011
        %v4075 = vmul.f32 %v4074, 0.6931472
        %v4076 = vlog2.pop %v4013
        %v4077 = vmul.f32 %v4076, 0.6931472
        %v4078 = vlog2.pop %v4015
        %v4079 = vmul.f32 %v4078, 0.6931472
        %v4080 = vlog2.pop %v4017
        %v4081 = vmul.f32 %v4080, 0.6931472
        %v4082 = vsub.f32 %v3938, %v4051
        %v4083 = vsub.f32 %v3939, %v4053
        %v4084 = vsub.f32 %v3940, %v4055
        %v4085 = vsub.f32 %v3941, %v4057
        %v4086 = vsub.f32 %v3942, %v4059
        %v4087 = vsub.f32 %v3943, %v4061
        %v4088 = vsub.f32 %v3944, %v4063
        %v4089 = vsub.f32 %v3945, %v4065
        %v4090 = vsub.f32 %v3946, %v4067
        %v4091 = vsub.f32 %v3947, %v4069
        %v4092 = vsub.f32 %v3948, %v4071
        %v4093 = vsub.f32 %v3949, %v4073
        %v4094 = vsub.f32 %v3950, %v4075
        %v4095 = vsub.f32 %v3951, %v4077
        %v4096 = vsub.f32 %v3952, %v4079
        %v4097 = vsub.f32 %v3953, %v4081
        %v4098 = vsub.f32 0.0, %v4082
        %v4099 = vsub.f32 0.0, %v4083
        %v4100 = vsub.f32 0.0, %v4084
        %v4101 = vsub.f32 0.0, %v4085
        %v4102 = vsub.f32 0.0, %v4086
        %v4103 = vsub.f32 0.0, %v4087
        %v4104 = vsub.f32 0.0, %v4088
        %v4105 = vsub.f32 0.0, %v4089
        %v4106 = vsub.f32 0.0, %v4090
        %v4107 = vsub.f32 0.0, %v4091
        %v4108 = vsub.f32 0.0, %v4092
        %v4109 = vsub.f32 0.0, %v4093
        %v4110 = vsub.f32 0.0, %v4094
        %v4111 = vsub.f32 0.0, %v4095
        %v4112 = vsub.f32 0.0, %v4096
        %v4113 = vsub.f32 0.0, %v4097
        %v4114 = vmul.f32 %v4098, %v660
        %v4115 = vmul.f32 %v4099, %v664
        %v4116 = vmul.f32 %v4100, %v668
        %v4117 = vmul.f32 %v4101, %v672
        %v4118 = vmul.f32 %v4102, %v676
        %v4119 = vmul.f32 %v4103, %v680
        %v4120 = vmul.f32 %v4104, %v684
        %v4121 = vmul.f32 %v4105, %v688
        %v4122 = vmul.f32 %v4106, %v692
        %v4123 = vmul.f32 %v4107, %v696
        %v4124 = vmul.f32 %v4108, %v700
        %v4125 = vmul.f32 %v4109, %v704
        %v4126 = vmul.f32 %v4110, %v708
        %v4127 = vmul.f32 %v4111, %v712
        %v4128 = vmul.f32 %v4112, %v716
        %v4129 = vmul.f32 %v4113, %v720
        %v4130 = vsub.f32 1.0, %v4034
        %v4131 = vsub.f32 1.0, %v4035
        %v4132 = vsub.f32 1.0, %v4036
        %v4133 = vsub.f32 1.0, %v4037
        %v4134 = vsub.f32 1.0, %v4038
        %v4135 = vsub.f32 1.0, %v4039
        %v4136 = vsub.f32 1.0, %v4040
        %v4137 = vsub.f32 1.0, %v4041
        %v4138 = vsub.f32 1.0, %v4042
        %v4139 = vsub.f32 1.0, %v4043
        %v4140 = vsub.f32 1.0, %v4044
        %v4141 = vsub.f32 1.0, %v4045
        %v4142 = vsub.f32 1.0, %v4046
        %v4143 = vsub.f32 1.0, %v4047
        %v4144 = vsub.f32 1.0, %v4048
        %v4145 = vsub.f32 1.0, %v4049
        %v4146 = vmul.f32 %v4114, %v4130
        %v4147 = vmul.f32 %v4115, %v4131
        %v4148 = vmul.f32 %v4116, %v4132
        %v4149 = vmul.f32 %v4117, %v4133
        %v4150 = vmul.f32 %v4118, %v4134
        %v4151 = vmul.f32 %v4119, %v4135
        %v4152 = vmul.f32 %v4120, %v4136
        %v4153 = vmul.f32 %v4121, %v4137
        %v4154 = vmul.f32 %v4122, %v4138
        %v4155 = vmul.f32 %v4123, %v4139
        %v4156 = vmul.f32 %v4124, %v4140
        %v4157 = vmul.f32 %v4125, %v4141
        %v4158 = vmul.f32 %v4126, %v4142
        %v4159 = vmul.f32 %v4127, %v4143
        %v4160 = vmul.f32 %v4128, %v4144
        %v4161 = vmul.f32 %v4129, %v4145
        %v4162 = vadd.f32 %v4146, %v4147
        %v4163 = vadd.f32 %v4162, %v4148
        %v4164 = vadd.f32 %v4163, %v4149
        %v4165 = vadd.f32 %v4164, %v4150
        %v4166 = vadd.f32 %v4165, %v4151
        %v4167 = vadd.f32 %v4166, %v4152
        %v4168 = vadd.f32 %v4167, %v4153
        %v4169 = vadd.f32 %v4168, %v4154
        %v4170 = vadd.f32 %v4169, %v4155
        %v4171 = vadd.f32 %v4170, %v4156
        %v4172 = vadd.f32 %v4171, %v4157
        %v4173 = vadd.f32 %v4172, %v4158
        %v4174 = vadd.f32 %v4173, %v4159
        %v4175 = vadd.f32 %v4174, %v4160
        %v4176 = vadd.f32 %v4175, %v4161
        %v4177 = vrot.slane %v4176, 4
        %v4178 = vadd.f32 %v4176, %v4177
        %v4179 = vrot.slane %v4178, 2
        %v4180 = vadd.f32 %v4178, %v4179
        %v4181 = vrot.slane %v4180, 1
        %v4182 = vadd.f32 %v4180, %v4181
        %v4183 = vadd.f32 %v3905, %v4182
        %4184 = vmax.xlane.f32.xlu0 %v3224
        %v4185 = vpop.xlane.xlu0 %4184
        %4186 = vmax.xlane.f32.xlu0 %v3228
        %v4187 = vpop.xlane.xlu0 %4186
        %4188 = vmax.xlane.f32.xlu0 %v3232
        %v4189 = vpop.xlane.xlu0 %4188
        %4190 = vmax.xlane.f32.xlu0 %v3236
        %v4191 = vpop.xlane.xlu0 %4190
        %4192 = vmax.xlane.f32.xlu0 %v3240
        %v4193 = vpop.xlane.xlu0 %4192
        %4194 = vmax.xlane.f32.xlu0 %v3244
        %v4195 = vpop.xlane.xlu0 %4194
        %4196 = vmax.xlane.f32.xlu0 %v3248
        %v4197 = vpop.xlane.xlu0 %4196
        %4198 = vmax.xlane.f32.xlu0 %v3252
        %v4199 = vpop.xlane.xlu0 %4198
        %4200 = vmax.xlane.f32.xlu0 %v3256
        %v4201 = vpop.xlane.xlu0 %4200
        %4202 = vmax.xlane.f32.xlu0 %v3260
        %v4203 = vpop.xlane.xlu0 %4202
        %4204 = vmax.xlane.f32.xlu0 %v3264
        %v4205 = vpop.xlane.xlu0 %4204
        %4206 = vmax.xlane.f32.xlu0 %v3268
        %v4207 = vpop.xlane.xlu0 %4206
        %4208 = vmax.xlane.f32.xlu0 %v3272
        %v4209 = vpop.xlane.xlu0 %4208
        %4210 = vmax.xlane.f32.xlu0 %v3276
        %v4211 = vpop.xlane.xlu0 %4210
        %4212 = vmax.xlane.f32.xlu0 %v3280
        %v4213 = vpop.xlane.xlu0 %4212
        %4214 = vmax.xlane.f32.xlu0 %v3284
        %v4215 = vpop.xlane.xlu0 %4214
        %v4216 = vsub.f32 %v3224, %v4185
        %v4217 = vsub.f32 %v3228, %v4187
        %v4218 = vsub.f32 %v3232, %v4189
        %v4219 = vsub.f32 %v3236, %v4191
        %v4220 = vsub.f32 %v3240, %v4193
        %v4221 = vsub.f32 %v3244, %v4195
        %v4222 = vsub.f32 %v3248, %v4197
        %v4223 = vsub.f32 %v3252, %v4199
        %v4224 = vsub.f32 %v3256, %v4201
        %v4225 = vsub.f32 %v3260, %v4203
        %v4226 = vsub.f32 %v3264, %v4205
        %v4227 = vsub.f32 %v3268, %v4207
        %v4228 = vsub.f32 %v3272, %v4209
        %v4229 = vsub.f32 %v3276, %v4211
        %v4230 = vsub.f32 %v3280, %v4213
        %v4231 = vsub.f32 %v3284, %v4215
        %v4232 = vmul.f32 %v4216, 1.442695
        %v4233 = vpow.pop %v4232
        %v4234 = vmul.f32 %v4217, 1.442695
        %v4235 = vpow.pop %v4234
        %v4236 = vmul.f32 %v4218, 1.442695
        %v4237 = vpow.pop %v4236
        %v4238 = vmul.f32 %v4219, 1.442695
        %v4239 = vpow.pop %v4238
        %v4240 = vmul.f32 %v4220, 1.442695
        %v4241 = vpow.pop %v4240
        %v4242 = vmul.f32 %v4221, 1.442695
        %v4243 = vpow.pop %v4242
        %v4244 = vmul.f32 %v4222, 1.442695
        %v4245 = vpow.pop %v4244
        %v4246 = vmul.f32 %v4223, 1.442695
        %v4247 = vpow.pop %v4246
        %v4248 = vmul.f32 %v4224, 1.442695
        %v4249 = vpow.pop %v4248
        %v4250 = vmul.f32 %v4225, 1.442695
        %v4251 = vpow.pop %v4250
        %v4252 = vmul.f32 %v4226, 1.442695
        %v4253 = vpow.pop %v4252
        %v4254 = vmul.f32 %v4227, 1.442695
        %v4255 = vpow.pop %v4254
        %v4256 = vmul.f32 %v4228, 1.442695
        %v4257 = vpow.pop %v4256
        %v4258 = vmul.f32 %v4229, 1.442695
        %v4259 = vpow.pop %v4258
        %v4260 = vmul.f32 %v4230, 1.442695
        %v4261 = vpow.pop %v4260
        %v4262 = vmul.f32 %v4231, 1.442695
        %v4263 = vpow.pop %v4262
        %4264 = vadd.xlane.f32.xlu0 %v4233
        %v4265 = vpop.xlane.xlu0 %4264
        %4266 = vadd.xlane.f32.xlu0 %v4235
        %v4267 = vpop.xlane.xlu0 %4266
        %4268 = vadd.xlane.f32.xlu0 %v4237
        %v4269 = vpop.xlane.xlu0 %4268
        %4270 = vadd.xlane.f32.xlu0 %v4239
        %v4271 = vpop.xlane.xlu0 %4270
        %4272 = vadd.xlane.f32.xlu0 %v4241
        %v4273 = vpop.xlane.xlu0 %4272
        %4274 = vadd.xlane.f32.xlu0 %v4243
        %v4275 = vpop.xlane.xlu0 %4274
        %4276 = vadd.xlane.f32.xlu0 %v4245
        %v4277 = vpop.xlane.xlu0 %4276
        %4278 = vadd.xlane.f32.xlu0 %v4247
        %v4279 = vpop.xlane.xlu0 %4278
        %4280 = vadd.xlane.f32.xlu0 %v4249
        %v4281 = vpop.xlane.xlu0 %4280
        %4282 = vadd.xlane.f32.xlu0 %v4251
        %v4283 = vpop.xlane.xlu0 %4282
        %4284 = vadd.xlane.f32.xlu0 %v4253
        %v4285 = vpop.xlane.xlu0 %4284
        %4286 = vadd.xlane.f32.xlu0 %v4255
        %v4287 = vpop.xlane.xlu0 %4286
        %4288 = vadd.xlane.f32.xlu0 %v4257
        %v4289 = vpop.xlane.xlu0 %4288
        %4290 = vadd.xlane.f32.xlu0 %v4259
        %v4291 = vpop.xlane.xlu0 %4290
        %4292 = vadd.xlane.f32.xlu0 %v4261
        %v4293 = vpop.xlane.xlu0 %4292
        %4294 = vadd.xlane.f32.xlu0 %v4263
        %v4295 = vpop.xlane.xlu0 %4294
        %v4296 = vrcp.pop %v4265
        %v4297 = vrcp.pop %v4267
        %v4298 = vrcp.pop %v4269
        %v4299 = vrcp.pop %v4271
        %v4300 = vrcp.pop %v4273
        %v4301 = vrcp.pop %v4275
        %v4302 = vrcp.pop %v4277
        %v4303 = vrcp.pop %v4279
        %v4304 = vrcp.pop %v4281
        %v4305 = vrcp.pop %v4283
        %v4306 = vrcp.pop %v4285
        %v4307 = vrcp.pop %v4287
        %v4308 = vrcp.pop %v4289
        %v4309 = vrcp.pop %v4291
        %v4310 = vrcp.pop %v4293
        %v4311 = vrcp.pop %v4295
        %v4312 = vmul.f32 %v4233, %v4296
        %v4313 = vmul.f32 %v4235, %v4297
        %v4314 = vmul.f32 %v4237, %v4298
        %v4315 = vmul.f32 %v4239, %v4299
        %v4316 = vmul.f32 %v4241, %v4300
        %v4317 = vmul.f32 %v4243, %v4301
        %v4318 = vmul.f32 %v4245, %v4302
        %v4319 = vmul.f32 %v4247, %v4303
        %v4320 = vmul.f32 %v4249, %v4304
        %v4321 = vmul.f32 %v4251, %v4305
        %v4322 = vmul.f32 %v4253, %v4306
        %v4323 = vmul.f32 %v4255, %v4307
        %v4324 = vmul.f32 %v4257, %v4308
        %v4325 = vmul.f32 %v4259, %v4309
        %v4326 = vmul.f32 %v4261, %v4310
        %v4327 = vmul.f32 %v4263, %v4311
        %v4328 = vlog2.pop %v4265
        %v4329 = vmul.f32 %v4328, 0.6931472
        %v4330 = vlog2.pop %v4267
        %v4331 = vmul.f32 %v4330, 0.6931472
        %v4332 = vlog2.pop %v4269
        %v4333 = vmul.f32 %v4332, 0.6931472
        %v4334 = vlog2.pop %v4271
        %v4335 = vmul.f32 %v4334, 0.6931472
        %v4336 = vlog2.pop %v4273
        %v4337 = vmul.f32 %v4336, 0.6931472
        %v4338 = vlog2.pop %v4275
        %v4339 = vmul.f32 %v4338, 0.6931472
        %v4340 = vlog2.pop %v4277
        %v4341 = vmul.f32 %v4340, 0.6931472
        %v4342 = vlog2.pop %v4279
        %v4343 = vmul.f32 %v4342, 0.6931472
        %v4344 = vlog2.pop %v4281
        %v4345 = vmul.f32 %v4344, 0.6931472
        %v4346 = vlog2.pop %v4283
        %v4347 = vmul.f32 %v4346, 0.6931472
        %v4348 = vlog2.pop %v4285
        %v4349 = vmul.f32 %v4348, 0.6931472
        %v4350 = vlog2.pop %v4287
        %v4351 = vmul.f32 %v4350, 0.6931472
        %v4352 = vlog2.pop %v4289
        %v4353 = vmul.f32 %v4352, 0.6931472
        %v4354 = vlog2.pop %v4291
        %v4355 = vmul.f32 %v4354, 0.6931472
        %v4356 = vlog2.pop %v4293
        %v4357 = vmul.f32 %v4356, 0.6931472
        %v4358 = vlog2.pop %v4295
        %v4359 = vmul.f32 %v4358, 0.6931472
        %v4360 = vsub.f32 %v4216, %v4329
        %v4361 = vsub.f32 %v4217, %v4331
        %v4362 = vsub.f32 %v4218, %v4333
        %v4363 = vsub.f32 %v4219, %v4335
        %v4364 = vsub.f32 %v4220, %v4337
        %v4365 = vsub.f32 %v4221, %v4339
        %v4366 = vsub.f32 %v4222, %v4341
        %v4367 = vsub.f32 %v4223, %v4343
        %v4368 = vsub.f32 %v4224, %v4345
        %v4369 = vsub.f32 %v4225, %v4347
        %v4370 = vsub.f32 %v4226, %v4349
        %v4371 = vsub.f32 %v4227, %v4351
        %v4372 = vsub.f32 %v4228, %v4353
        %v4373 = vsub.f32 %v4229, %v4355
        %v4374 = vsub.f32 %v4230, %v4357
        %v4375 = vsub.f32 %v4231, %v4359
        %v4376 = vsub.f32 0.0, %v4360
        %v4377 = vsub.f32 0.0, %v4361
        %v4378 = vsub.f32 0.0, %v4362
        %v4379 = vsub.f32 0.0, %v4363
        %v4380 = vsub.f32 0.0, %v4364
        %v4381 = vsub.f32 0.0, %v4365
        %v4382 = vsub.f32 0.0, %v4366
        %v4383 = vsub.f32 0.0, %v4367
        %v4384 = vsub.f32 0.0, %v4368
        %v4385 = vsub.f32 0.0, %v4369
        %v4386 = vsub.f32 0.0, %v4370
        %v4387 = vsub.f32 0.0, %v4371
        %v4388 = vsub.f32 0.0, %v4372
        %v4389 = vsub.f32 0.0, %v4373
        %v4390 = vsub.f32 0.0, %v4374
        %v4391 = vsub.f32 0.0, %v4375
        %v4392 = vmul.f32 %v4376, %v661
        %v4393 = vmul.f32 %v4377, %v665
        %v4394 = vmul.f32 %v4378, %v669
        %v4395 = vmul.f32 %v4379, %v673
        %v4396 = vmul.f32 %v4380, %v677
        %v4397 = vmul.f32 %v4381, %v681
        %v4398 = vmul.f32 %v4382, %v685
        %v4399 = vmul.f32 %v4383, %v689
        %v4400 = vmul.f32 %v4384, %v693
        %v4401 = vmul.f32 %v4385, %v697
        %v4402 = vmul.f32 %v4386, %v701
        %v4403 = vmul.f32 %v4387, %v705
        %v4404 = vmul.f32 %v4388, %v709
        %v4405 = vmul.f32 %v4389, %v713
        %v4406 = vmul.f32 %v4390, %v717
        %v4407 = vmul.f32 %v4391, %v721
        %v4408 = vsub.f32 1.0, %v4312
        %v4409 = vsub.f32 1.0, %v4313
        %v4410 = vsub.f32 1.0, %v4314
        %v4411 = vsub.f32 1.0, %v4315
        %v4412 = vsub.f32 1.0, %v4316
        %v4413 = vsub.f32 1.0, %v4317
        %v4414 = vsub.f32 1.0, %v4318
        %v4415 = vsub.f32 1.0, %v4319
        %v4416 = vsub.f32 1.0, %v4320
        %v4417 = vsub.f32 1.0, %v4321
        %v4418 = vsub.f32 1.0, %v4322
        %v4419 = vsub.f32 1.0, %v4323
        %v4420 = vsub.f32 1.0, %v4324
        %v4421 = vsub.f32 1.0, %v4325
        %v4422 = vsub.f32 1.0, %v4326
        %v4423 = vsub.f32 1.0, %v4327
        %v4424 = vmul.f32 %v4392, %v4408
        %v4425 = vmul.f32 %v4393, %v4409
        %v4426 = vmul.f32 %v4394, %v4410
        %v4427 = vmul.f32 %v4395, %v4411
        %v4428 = vmul.f32 %v4396, %v4412
        %v4429 = vmul.f32 %v4397, %v4413
        %v4430 = vmul.f32 %v4398, %v4414
        %v4431 = vmul.f32 %v4399, %v4415
        %v4432 = vmul.f32 %v4400, %v4416
        %v4433 = vmul.f32 %v4401, %v4417
        %v4434 = vmul.f32 %v4402, %v4418
        %v4435 = vmul.f32 %v4403, %v4419
        %v4436 = vmul.f32 %v4404, %v4420
        %v4437 = vmul.f32 %v4405, %v4421
        %v4438 = vmul.f32 %v4406, %v4422
        %v4439 = vmul.f32 %v4407, %v4423
        %v4440 = vadd.f32 %v4424, %v4425
        %v4441 = vadd.f32 %v4440, %v4426
        %v4442 = vadd.f32 %v4441, %v4427
        %v4443 = vadd.f32 %v4442, %v4428
        %v4444 = vadd.f32 %v4443, %v4429
        %v4445 = vadd.f32 %v4444, %v4430
        %v4446 = vadd.f32 %v4445, %v4431
        %v4447 = vadd.f32 %v4446, %v4432
        %v4448 = vadd.f32 %v4447, %v4433
        %v4449 = vadd.f32 %v4448, %v4434
        %v4450 = vadd.f32 %v4449, %v4435
        %v4451 = vadd.f32 %v4450, %v4436
        %v4452 = vadd.f32 %v4451, %v4437
        %v4453 = vadd.f32 %v4452, %v4438
        %v4454 = vadd.f32 %v4453, %v4439
        %v4455 = vrot.slane %v4454, 4
        %v4456 = vadd.f32 %v4454, %v4455
        %v4457 = vrot.slane %v4456, 2
        %v4458 = vadd.f32 %v4456, %v4457
        %v4459 = vrot.slane %v4458, 1
        %v4460 = vadd.f32 %v4458, %v4459
        %v4461 = vadd.f32 %v4183, %v4460
        %4462 = vst [vmem:[%s432] sm:$0x1] %v4461
        %s4463 = sand.u32 %s194, 1
        %s4464 = sand.u32 %s194, 1
        %s4465 = smul.addr %s4464, 1024
        %s4466 = scalar_lea.vmem [#allocation5], %s4465
        %p4467 = scmp.lt.s32.totalorder %s24, 1
        %s4468 = scalar_select %p4467, %s24, 1
        %p4469 = scmp.lt.s32.totalorder %s25, 0
        %s4470 = scalar_select %p4469, %s25, 0
        %s4471 = sadd.s32 %s4470, %s4468
        %s4472 = scalar_lea.vmem %s7, %s4471
        // Predicated region
        $region49: #{weighted_iterative_refinement_forward.1} parent=43 // pred_check
          %p4473 = pneg %p204
        $region50: #{weighted_iterative_refinement_forward.1} parent=43 // pred_check_branch
          %4475 = sbr.rel (%p4473) target = $region52
        $region51: #{weighted_iterative_refinement_forward.1} parent=43 // pred_region
          %s4476 = smul.u32 16, %s25
          %s4477 = smul.addr %s4476, 4
          %s4478 = smul.addr %s24, 64
          %s4479 = sadd.s32 %s4477, %s4478
          %s4480 = smul.addr %s4479, 8
          %s4481 = scalar_lea.vmem %s6, %s4480
          // Predicated region
          $region53: #{weighted_iterative_refinement_forward.1} parent=51 // pred_check
            _
          $region54: #{weighted_iterative_refinement_forward.1} parent=51 // pred_check_branch
            %4483 = sbr.rel (0) target = $region56
          $region55: #{weighted_iterative_refinement_forward.1} parent=51 // pred_region
            // Predicated region
            $region57: #{weighted_iterative_refinement_forward.1} parent=55 // pred_check
              _
            $region58: #{weighted_iterative_refinement_forward.1} parent=55 // pred_check_branch
              %4485 = sbr.rel (0) target = $region60
            $region59: #{weighted_iterative_refinement_forward.1} parent=55 // pred_region
              loop: start=0, step=1, limit=1
              $region61: #{weighted_iterative_refinement_forward.1} parent=59 // loop_pre_header
                _
              $region62: #{weighted_iterative_refinement_forward.1} parent=59 // loop_header
                %s4487 = sphi 0, %s4491
                %p4488 = scmp.ge.s32.totalorder %s4487, 1
                %s4492 = sphi %s4466, %s4466
                %s4493 = sphi %s4481, %s4481
              $region63: #{weighted_iterative_refinement_forward.1} parent=59 // loop_header_branch
                %4490 = sbr.rel (%p4488) target = $region67
              $region64: #{weighted_iterative_refinement_forward.1} parent=59 // loop_body
                %v4494 = vld [vmem:[%s4492] sm:$0xff]
                %4495 = vst [vmem:[%s4493] sm:$0xff] %v4494
                %v4496 = vld [vmem:[%s4492 + $0x8] sm:$0xff]
                %4497 = vst [vmem:[%s4493 + $0x8] sm:$0xff] %v4496
                %v4498 = vld [vmem:[%s4492 + $0x10] sm:$0xff]
                %4499 = vst [vmem:[%s4493 + $0x10] sm:$0xff] %v4498
                %v4500 = vld [vmem:[%s4492 + $0x18] sm:$0xff]
                %4501 = vst [vmem:[%s4493 + $0x18] sm:$0xff] %v4500
                %v4502 = vld [vmem:[%s4492 + $0x20] sm:$0xff]
                %4503 = vst [vmem:[%s4493 + $0x20] sm:$0xff] %v4502
                %v4504 = vld [vmem:[%s4492 + $0x28] sm:$0xff]
                %4505 = vst [vmem:[%s4493 + $0x28] sm:$0xff] %v4504
                %v4506 = vld [vmem:[%s4492 + $0x30] sm:$0xff]
                %4507 = vst [vmem:[%s4493 + $0x30] sm:$0xff] %v4506
                %v4508 = vld [vmem:[%s4492 + $0x38] sm:$0xff]
                %4509 = vst [vmem:[%s4493 + $0x38] sm:$0xff] %v4508
                %v4510 = vld [vmem:[%s4492 + $0x40] sm:$0xff]
                %4511 = vst [vmem:[%s4493 + $0x40] sm:$0xff] %v4510
                %v4512 = vld [vmem:[%s4492 + $0x48] sm:$0xff]
                %4513 = vst [vmem:[%s4493 + $0x48] sm:$0xff] %v4512
                %v4514 = vld [vmem:[%s4492 + $0x50] sm:$0xff]
                %4515 = vst [vmem:[%s4493 + $0x50] sm:$0xff] %v4514
                %v4516 = vld [vmem:[%s4492 + $0x58] sm:$0xff]
                %4517 = vst [vmem:[%s4493 + $0x58] sm:$0xff] %v4516
                %v4518 = vld [vmem:[%s4492 + $0x60] sm:$0xff]
                %4519 = vst [vmem:[%s4493 + $0x60] sm:$0xff] %v4518
                %v4520 = vld [vmem:[%s4492 + $0x68] sm:$0xff]
                %4521 = vst [vmem:[%s4493 + $0x68] sm:$0xff] %v4520
                %v4522 = vld [vmem:[%s4492 + $0x70] sm:$0xff]
                %4523 = vst [vmem:[%s4493 + $0x70] sm:$0xff] %v4522
                %v4524 = vld [vmem:[%s4492 + $0x78] sm:$0xff]
                %4525 = vst [vmem:[%s4493 + $0x78] sm:$0xff] %v4524
                %v4526 = vld [vmem:[%s4492 + $0x80] sm:$0xff]
                %4527 = vst [vmem:[%s4493 + $0x80] sm:$0xff] %v4526
                %v4528 = vld [vmem:[%s4492 + $0x88] sm:$0xff]
                %4529 = vst [vmem:[%s4493 + $0x88] sm:$0xff] %v4528
                %v4530 = vld [vmem:[%s4492 + $0x90] sm:$0xff]
                %4531 = vst [vmem:[%s4493 + $0x90] sm:$0xff] %v4530
                %v4532 = vld [vmem:[%s4492 + $0x98] sm:$0xff]
                %4533 = vst [vmem:[%s4493 + $0x98] sm:$0xff] %v4532
                %v4534 = vld [vmem:[%s4492 + $0xa0] sm:$0xff]
                %4535 = vst [vmem:[%s4493 + $0xa0] sm:$0xff] %v4534
                %v4536 = vld [vmem:[%s4492 + $0xa8] sm:$0xff]
                %4537 = vst [vmem:[%s4493 + $0xa8] sm:$0xff] %v4536
                %v4538 = vld [vmem:[%s4492 + $0xb0] sm:$0xff]
                %4539 = vst [vmem:[%s4493 + $0xb0] sm:$0xff] %v4538
                %v4540 = vld [vmem:[%s4492 + $0xb8] sm:$0xff]
                %4541 = vst [vmem:[%s4493 + $0xb8] sm:$0xff] %v4540
                %v4542 = vld [vmem:[%s4492 + $0xc0] sm:$0xff]
                %4543 = vst [vmem:[%s4493 + $0xc0] sm:$0xff] %v4542
                %v4544 = vld [vmem:[%s4492 + $0xc8] sm:$0xff]
                %4545 = vst [vmem:[%s4493 + $0xc8] sm:$0xff] %v4544
                %v4546 = vld [vmem:[%s4492 + $0xd0] sm:$0xff]
                %4547 = vst [vmem:[%s4493 + $0xd0] sm:$0xff] %v4546
                %v4548 = vld [vmem:[%s4492 + $0xd8] sm:$0xff]
                %4549 = vst [vmem:[%s4493 + $0xd8] sm:$0xff] %v4548
                %v4550 = vld [vmem:[%s4492 + $0xe0] sm:$0xff]
                %4551 = vst [vmem:[%s4493 + $0xe0] sm:$0xff] %v4550
                %v4552 = vld [vmem:[%s4492 + $0xe8] sm:$0xff]
                %4553 = vst [vmem:[%s4493 + $0xe8] sm:$0xff] %v4552
                %v4554 = vld [vmem:[%s4492 + $0xf0] sm:$0xff]
                %4555 = vst [vmem:[%s4493 + $0xf0] sm:$0xff] %v4554
                %v4556 = vld [vmem:[%s4492 + $0xf8] sm:$0xff]
                %4557 = vst [vmem:[%s4493 + $0xf8] sm:$0xff] %v4556
                %v4558 = vld [vmem:[%s4492 + $0x100] sm:$0xff]
                %4559 = vst [vmem:[%s4493 + $0x100] sm:$0xff] %v4558
                %v4560 = vld [vmem:[%s4492 + $0x108] sm:$0xff]
                %4561 = vst [vmem:[%s4493 + $0x108] sm:$0xff] %v4560
                %v4562 = vld [vmem:[%s4492 + $0x110] sm:$0xff]
                %4563 = vst [vmem:[%s4493 + $0x110] sm:$0xff] %v4562
                %v4564 = vld [vmem:[%s4492 + $0x118] sm:$0xff]
                %4565 = vst [vmem:[%s4493 + $0x118] sm:$0xff] %v4564
                %v4566 = vld [vmem:[%s4492 + $0x120] sm:$0xff]
                %4567 = vst [vmem:[%s4493 + $0x120] sm:$0xff] %v4566
                %v4568 = vld [vmem:[%s4492 + $0x128] sm:$0xff]
                %4569 = vst [vmem:[%s4493 + $0x128] sm:$0xff] %v4568
                %v4570 = vld [vmem:[%s4492 + $0x130] sm:$0xff]
                %4571 = vst [vmem:[%s4493 + $0x130] sm:$0xff] %v4570
                %v4572 = vld [vmem:[%s4492 + $0x138] sm:$0xff]
                %4573 = vst [vmem:[%s4493 + $0x138] sm:$0xff] %v4572
                %v4574 = vld [vmem:[%s4492 + $0x140] sm:$0xff]
                %4575 = vst [vmem:[%s4493 + $0x140] sm:$0xff] %v4574
                %v4576 = vld [vmem:[%s4492 + $0x148] sm:$0xff]
                %4577 = vst [vmem:[%s4493 + $0x148] sm:$0xff] %v4576
                %v4578 = vld [vmem:[%s4492 + $0x150] sm:$0xff]
                %4579 = vst [vmem:[%s4493 + $0x150] sm:$0xff] %v4578
                %v4580 = vld [vmem:[%s4492 + $0x158] sm:$0xff]
                %4581 = vst [vmem:[%s4493 + $0x158] sm:$0xff] %v4580
                %v4582 = vld [vmem:[%s4492 + $0x160] sm:$0xff]
                %4583 = vst [vmem:[%s4493 + $0x160] sm:$0xff] %v4582
                %v4584 = vld [vmem:[%s4492 + $0x168] sm:$0xff]
                %4585 = vst [vmem:[%s4493 + $0x168] sm:$0xff] %v4584
                %v4586 = vld [vmem:[%s4492 + $0x170] sm:$0xff]
                %4587 = vst [vmem:[%s4493 + $0x170] sm:$0xff] %v4586
                %v4588 = vld [vmem:[%s4492 + $0x178] sm:$0xff]
                %4589 = vst [vmem:[%s4493 + $0x178] sm:$0xff] %v4588
                %v4590 = vld [vmem:[%s4492 + $0x180] sm:$0xff]
                %4591 = vst [vmem:[%s4493 + $0x180] sm:$0xff] %v4590
                %v4592 = vld [vmem:[%s4492 + $0x188] sm:$0xff]
                %4593 = vst [vmem:[%s4493 + $0x188] sm:$0xff] %v4592
                %v4594 = vld [vmem:[%s4492 + $0x190] sm:$0xff]
                %4595 = vst [vmem:[%s4493 + $0x190] sm:$0xff] %v4594
                %v4596 = vld [vmem:[%s4492 + $0x198] sm:$0xff]
                %4597 = vst [vmem:[%s4493 + $0x198] sm:$0xff] %v4596
                %v4598 = vld [vmem:[%s4492 + $0x1a0] sm:$0xff]
                %4599 = vst [vmem:[%s4493 + $0x1a0] sm:$0xff] %v4598
                %v4600 = vld [vmem:[%s4492 + $0x1a8] sm:$0xff]
                %4601 = vst [vmem:[%s4493 + $0x1a8] sm:$0xff] %v4600
                %v4602 = vld [vmem:[%s4492 + $0x1b0] sm:$0xff]
                %4603 = vst [vmem:[%s4493 + $0x1b0] sm:$0xff] %v4602
                %v4604 = vld [vmem:[%s4492 + $0x1b8] sm:$0xff]
                %4605 = vst [vmem:[%s4493 + $0x1b8] sm:$0xff] %v4604
                %v4606 = vld [vmem:[%s4492 + $0x1c0] sm:$0xff]
                %4607 = vst [vmem:[%s4493 + $0x1c0] sm:$0xff] %v4606
                %v4608 = vld [vmem:[%s4492 + $0x1c8] sm:$0xff]
                %4609 = vst [vmem:[%s4493 + $0x1c8] sm:$0xff] %v4608
                %v4610 = vld [vmem:[%s4492 + $0x1d0] sm:$0xff]
                %4611 = vst [vmem:[%s4493 + $0x1d0] sm:$0xff] %v4610
                %v4612 = vld [vmem:[%s4492 + $0x1d8] sm:$0xff]
                %4613 = vst [vmem:[%s4493 + $0x1d8] sm:$0xff] %v4612
                %v4614 = vld [vmem:[%s4492 + $0x1e0] sm:$0xff]
                %4615 = vst [vmem:[%s4493 + $0x1e0] sm:$0xff] %v4614
                %v4616 = vld [vmem:[%s4492 + $0x1e8] sm:$0xff]
                %4617 = vst [vmem:[%s4493 + $0x1e8] sm:$0xff] %v4616
                %v4618 = vld [vmem:[%s4492 + $0x1f0] sm:$0xff]
                %4619 = vst [vmem:[%s4493 + $0x1f0] sm:$0xff] %v4618
                %v4620 = vld [vmem:[%s4492 + $0x1f8] sm:$0xff]
                %4621 = vst [vmem:[%s4493 + $0x1f8] sm:$0xff] %v4620
                %v4622 = vld [vmem:[%s4492 + $0x200] sm:$0xff]
                %4623 = vst [vmem:[%s4493 + $0x400] sm:$0xff] %v4622
                %v4624 = vld [vmem:[%s4492 + $0x208] sm:$0xff]
                %4625 = vst [vmem:[%s4493 + $0x408] sm:$0xff] %v4624
                %v4626 = vld [vmem:[%s4492 + $0x210] sm:$0xff]
                %4627 = vst [vmem:[%s4493 + $0x410] sm:$0xff] %v4626
                %v4628 = vld [vmem:[%s4492 + $0x218] sm:$0xff]
                %4629 = vst [vmem:[%s4493 + $0x418] sm:$0xff] %v4628
                %v4630 = vld [vmem:[%s4492 + $0x220] sm:$0xff]
                %4631 = vst [vmem:[%s4493 + $0x420] sm:$0xff] %v4630
                %v4632 = vld [vmem:[%s4492 + $0x228] sm:$0xff]
                %4633 = vst [vmem:[%s4493 + $0x428] sm:$0xff] %v4632
                %v4634 = vld [vmem:[%s4492 + $0x230] sm:$0xff]
                %4635 = vst [vmem:[%s4493 + $0x430] sm:$0xff] %v4634
                %v4636 = vld [vmem:[%s4492 + $0x238] sm:$0xff]
                %4637 = vst [vmem:[%s4493 + $0x438] sm:$0xff] %v4636
                %v4638 = vld [vmem:[%s4492 + $0x240] sm:$0xff]
                %4639 = vst [vmem:[%s4493 + $0x440] sm:$0xff] %v4638
                %v4640 = vld [vmem:[%s4492 + $0x248] sm:$0xff]
                %4641 = vst [vmem:[%s4493 + $0x448] sm:$0xff] %v4640
                %v4642 = vld [vmem:[%s4492 + $0x250] sm:$0xff]
                %4643 = vst [vmem:[%s4493 + $0x450] sm:$0xff] %v4642
                %v4644 = vld [vmem:[%s4492 + $0x258] sm:$0xff]
                %4645 = vst [vmem:[%s4493 + $0x458] sm:$0xff] %v4644
                %v4646 = vld [vmem:[%s4492 + $0x260] sm:$0xff]
                %4647 = vst [vmem:[%s4493 + $0x460] sm:$0xff] %v4646
                %v4648 = vld [vmem:[%s4492 + $0x268] sm:$0xff]
                %4649 = vst [vmem:[%s4493 + $0x468] sm:$0xff] %v4648
                %v4650 = vld [vmem:[%s4492 + $0x270] sm:$0xff]
                %4651 = vst [vmem:[%s4493 + $0x470] sm:$0xff] %v4650
                %v4652 = vld [vmem:[%s4492 + $0x278] sm:$0xff]
                %4653 = vst [vmem:[%s4493 + $0x478] sm:$0xff] %v4652
                %v4654 = vld [vmem:[%s4492 + $0x280] sm:$0xff]
                %4655 = vst [vmem:[%s4493 + $0x480] sm:$0xff] %v4654
                %v4656 = vld [vmem:[%s4492 + $0x288] sm:$0xff]
                %4657 = vst [vmem:[%s4493 + $0x488] sm:$0xff] %v4656
                %v4658 = vld [vmem:[%s4492 + $0x290] sm:$0xff]
                %4659 = vst [vmem:[%s4493 + $0x490] sm:$0xff] %v4658
                %v4660 = vld [vmem:[%s4492 + $0x298] sm:$0xff]
                %4661 = vst [vmem:[%s4493 + $0x498] sm:$0xff] %v4660
                %v4662 = vld [vmem:[%s4492 + $0x2a0] sm:$0xff]
                %4663 = vst [vmem:[%s4493 + $0x4a0] sm:$0xff] %v4662
                %v4664 = vld [vmem:[%s4492 + $0x2a8] sm:$0xff]
                %4665 = vst [vmem:[%s4493 + $0x4a8] sm:$0xff] %v4664
                %v4666 = vld [vmem:[%s4492 + $0x2b0] sm:$0xff]
                %4667 = vst [vmem:[%s4493 + $0x4b0] sm:$0xff] %v4666
                %v4668 = vld [vmem:[%s4492 + $0x2b8] sm:$0xff]
                %4669 = vst [vmem:[%s4493 + $0x4b8] sm:$0xff] %v4668
                %v4670 = vld [vmem:[%s4492 + $0x2c0] sm:$0xff]
                %4671 = vst [vmem:[%s4493 + $0x4c0] sm:$0xff] %v4670
                %v4672 = vld [vmem:[%s4492 + $0x2c8] sm:$0xff]
                %4673 = vst [vmem:[%s4493 + $0x4c8] sm:$0xff] %v4672
                %v4674 = vld [vmem:[%s4492 + $0x2d0] sm:$0xff]
                %4675 = vst [vmem:[%s4493 + $0x4d0] sm:$0xff] %v4674
                %v4676 = vld [vmem:[%s4492 + $0x2d8] sm:$0xff]
                %4677 = vst [vmem:[%s4493 + $0x4d8] sm:$0xff] %v4676
                %v4678 = vld [vmem:[%s4492 + $0x2e0] sm:$0xff]
                %4679 = vst [vmem:[%s4493 + $0x4e0] sm:$0xff] %v4678
                %v4680 = vld [vmem:[%s4492 + $0x2e8] sm:$0xff]
                %4681 = vst [vmem:[%s4493 + $0x4e8] sm:$0xff] %v4680
                %v4682 = vld [vmem:[%s4492 + $0x2f0] sm:$0xff]
                %4683 = vst [vmem:[%s4493 + $0x4f0] sm:$0xff] %v4682
                %v4684 = vld [vmem:[%s4492 + $0x2f8] sm:$0xff]
                %4685 = vst [vmem:[%s4493 + $0x4f8] sm:$0xff] %v4684
                %v4686 = vld [vmem:[%s4492 + $0x300] sm:$0xff]
                %4687 = vst [vmem:[%s4493 + $0x500] sm:$0xff] %v4686
                %v4688 = vld [vmem:[%s4492 + $0x308] sm:$0xff]
                %4689 = vst [vmem:[%s4493 + $0x508] sm:$0xff] %v4688
                %v4690 = vld [vmem:[%s4492 + $0x310] sm:$0xff]
                %4691 = vst [vmem:[%s4493 + $0x510] sm:$0xff] %v4690
                %v4692 = vld [vmem:[%s4492 + $0x318] sm:$0xff]
                %4693 = vst [vmem:[%s4493 + $0x518] sm:$0xff] %v4692
                %v4694 = vld [vmem:[%s4492 + $0x320] sm:$0xff]
                %4695 = vst [vmem:[%s4493 + $0x520] sm:$0xff] %v4694
                %v4696 = vld [vmem:[%s4492 + $0x328] sm:$0xff]
                %4697 = vst [vmem:[%s4493 + $0x528] sm:$0xff] %v4696
                %v4698 = vld [vmem:[%s4492 + $0x330] sm:$0xff]
                %4699 = vst [vmem:[%s4493 + $0x530] sm:$0xff] %v4698
                %v4700 = vld [vmem:[%s4492 + $0x338] sm:$0xff]
                %4701 = vst [vmem:[%s4493 + $0x538] sm:$0xff] %v4700
                %v4702 = vld [vmem:[%s4492 + $0x340] sm:$0xff]
                %4703 = vst [vmem:[%s4493 + $0x540] sm:$0xff] %v4702
                %v4704 = vld [vmem:[%s4492 + $0x348] sm:$0xff]
                %4705 = vst [vmem:[%s4493 + $0x548] sm:$0xff] %v4704
                %v4706 = vld [vmem:[%s4492 + $0x350] sm:$0xff]
                %4707 = vst [vmem:[%s4493 + $0x550] sm:$0xff] %v4706
                %v4708 = vld [vmem:[%s4492 + $0x358] sm:$0xff]
                %4709 = vst [vmem:[%s4493 + $0x558] sm:$0xff] %v4708
                %v4710 = vld [vmem:[%s4492 + $0x360] sm:$0xff]
                %4711 = vst [vmem:[%s4493 + $0x560] sm:$0xff] %v4710
                %v4712 = vld [vmem:[%s4492 + $0x368] sm:$0xff]
                %4713 = vst [vmem:[%s4493 + $0x568] sm:$0xff] %v4712
                %v4714 = vld [vmem:[%s4492 + $0x370] sm:$0xff]
                %4715 = vst [vmem:[%s4493 + $0x570] sm:$0xff] %v4714
                %v4716 = vld [vmem:[%s4492 + $0x378] sm:$0xff]
                %4717 = vst [vmem:[%s4493 + $0x578] sm:$0xff] %v4716
                %v4718 = vld [vmem:[%s4492 + $0x380] sm:$0xff]
                %4719 = vst [vmem:[%s4493 + $0x580] sm:$0xff] %v4718
                %v4720 = vld [vmem:[%s4492 + $0x388] sm:$0xff]
                %4721 = vst [vmem:[%s4493 + $0x588] sm:$0xff] %v4720
                %v4722 = vld [vmem:[%s4492 + $0x390] sm:$0xff]
                %4723 = vst [vmem:[%s4493 + $0x590] sm:$0xff] %v4722
                %v4724 = vld [vmem:[%s4492 + $0x398] sm:$0xff]
                %4725 = vst [vmem:[%s4493 + $0x598] sm:$0xff] %v4724
                %v4726 = vld [vmem:[%s4492 + $0x3a0] sm:$0xff]
                %4727 = vst [vmem:[%s4493 + $0x5a0] sm:$0xff] %v4726
                %v4728 = vld [vmem:[%s4492 + $0x3a8] sm:$0xff]
                %4729 = vst [vmem:[%s4493 + $0x5a8] sm:$0xff] %v4728
                %v4730 = vld [vmem:[%s4492 + $0x3b0] sm:$0xff]
                %4731 = vst [vmem:[%s4493 + $0x5b0] sm:$0xff] %v4730
                %v4732 = vld [vmem:[%s4492 + $0x3b8] sm:$0xff]
                %4733 = vst [vmem:[%s4493 + $0x5b8] sm:$0xff] %v4732
                %v4734 = vld [vmem:[%s4492 + $0x3c0] sm:$0xff]
                %4735 = vst [vmem:[%s4493 + $0x5c0] sm:$0xff] %v4734
                %v4736 = vld [vmem:[%s4492 + $0x3c8] sm:$0xff]
                %4737 = vst [vmem:[%s4493 + $0x5c8] sm:$0xff] %v4736
                %v4738 = vld [vmem:[%s4492 + $0x3d0] sm:$0xff]
                %4739 = vst [vmem:[%s4493 + $0x5d0] sm:$0xff] %v4738
                %v4740 = vld [vmem:[%s4492 + $0x3d8] sm:$0xff]
                %4741 = vst [vmem:[%s4493 + $0x5d8] sm:$0xff] %v4740
                %v4742 = vld [vmem:[%s4492 + $0x3e0] sm:$0xff]
                %4743 = vst [vmem:[%s4493 + $0x5e0] sm:$0xff] %v4742
                %v4744 = vld [vmem:[%s4492 + $0x3e8] sm:$0xff]
                %4745 = vst [vmem:[%s4493 + $0x5e8] sm:$0xff] %v4744
                %v4746 = vld [vmem:[%s4492 + $0x3f0] sm:$0xff]
                %4747 = vst [vmem:[%s4493 + $0x5f0] sm:$0xff] %v4746
                %v4748 = vld [vmem:[%s4492 + $0x3f8] sm:$0xff]
                %4749 = vst [vmem:[%s4493 + $0x5f8] sm:$0xff] %v4748
              $region65: #{weighted_iterative_refinement_forward.1} parent=59 // loop_footer
                %s4491 = sadd.s32 1, %s4487
              $region66: #{weighted_iterative_refinement_forward.1} parent=59 // loop_footer_branch
                %4486 = sbr.rel target = $region62
              $region67: #{weighted_iterative_refinement_forward.1} parent=59 // loop_exit
                _
            $region60: #{weighted_iterative_refinement_forward.1} parent=55 // pred_fallthru
              _
            // Predicated region
            $region68: #{weighted_iterative_refinement_forward.1} parent=55 // pred_check
              _
            $region69: #{weighted_iterative_refinement_forward.1} parent=55 // pred_check_branch
              %4751 = sbr.rel target = $region71
            $region70: #{weighted_iterative_refinement_forward.1} parent=55 // pred_region
              _
            $region71: #{weighted_iterative_refinement_forward.1} parent=55 // pred_fallthru
              _
          $region56: #{weighted_iterative_refinement_forward.1} parent=51 // pred_fallthru
            _
          %4752 = vnop
        $region52: #{weighted_iterative_refinement_forward.1} parent=43 // pred_fallthru
          _
        // Predicated region
        $region72: #{weighted_iterative_refinement_forward.1} parent=43 // pred_check
          %p4753 = pneg %p232
        $region73: #{weighted_iterative_refinement_forward.1} parent=43 // pred_check_branch
          %4755 = sbr.rel (%p4753) target = $region75
        $region74: #{weighted_iterative_refinement_forward.1} parent=43 // pred_region
          _
        $region75: #{weighted_iterative_refinement_forward.1} parent=43 // pred_fallthru
          _
      $region44: #{weighted_iterative_refinement_forward.1} parent=5 // pred_fallthru
        _
      %p4756 = scmp.le.s32.totalorder 2, %s15
      // Predicated region
      $region76: #{weighted_iterative_refinement_forward.1} parent=5 // pred_check
        %p4757 = pneg %p4756
      $region77: #{weighted_iterative_refinement_forward.1} parent=5 // pred_check_branch
        %4759 = sbr.rel (%p4757) target = $region79
      $region78: #{weighted_iterative_refinement_forward.1} parent=5 // pred_region
        %s4760 = ssub.s32 %s15, 2
        // Predicated region
        $region80: #{weighted_iterative_refinement_forward.1} parent=78 // pred_check
          %p4761 = pneg %p210
        $region81: #{weighted_iterative_refinement_forward.1} parent=78 // pred_check_branch
          %4763 = sbr.rel (%p4761) target = $region83
        $region82: #{weighted_iterative_refinement_forward.1} parent=78 // pred_region
          %s4764 = sand.u32 %s195, 1
          %s4765 = sand.u32 %s195, 1
          %s4766 = smul.addr %s4765, 1024
          %s4767 = scalar_lea.vmem [#allocation5], %s4766
        $region83: #{weighted_iterative_refinement_forward.1} parent=78 // pred_fallthru
          _
        // Predicated region
        $region84: #{weighted_iterative_refinement_forward.1} parent=78 // pred_check
          %p4768 = pneg %p238
        $region85: #{weighted_iterative_refinement_forward.1} parent=78 // pred_check_branch
          %4770 = sbr.rel (%p4768) target = $region87
        $region86: #{weighted_iterative_refinement_forward.1} parent=78 // pred_region
          %p4771 = scmp.lt.s32.totalorder %s26, 1
          %s4772 = scalar_select %p4771, %s26, 1
          %p4773 = scmp.lt.s32.totalorder %s27, 0
          %s4774 = scalar_select %p4773, %s27, 0
          %s4775 = sadd.s32 %s4774, %s4772
          %s4776 = scalar_lea.vmem %s7, %s4775
        $region87: #{weighted_iterative_refinement_forward.1} parent=78 // pred_fallthru
          _
      $region79: #{weighted_iterative_refinement_forward.1} parent=5 // pred_fallthru
        _
    $region6: #{weighted_iterative_refinement_forward.1} parent=1 // loop_footer
      %s19 = sadd.s32 1, %s15
    $region7: #{weighted_iterative_refinement_forward.1} parent=1 // loop_footer_branch
      %14 = sbr.rel target = $region3
    $region8: #{weighted_iterative_refinement_forward.1} parent=1 // loop_exit
      _
    %4777 = vsyncpa [#allocation4], 1
    %s4778 = scalar_lea.sflag [#allocation4], 1
    %4779 = vsyncpa %s4778, 1

</llo_original>
